<compile_context>
chip_gen: v6e
topology: v6e:2x2x1
jax: 0.10.0
libtpu: 0.0.40
codegen_flags: <defaults>
</compile_context>

<pallas_src>
import functools

import jax
import jax.numpy as jnp
from jax.experimental import pallas as pl
from jax.experimental.pallas import tpu as pltpu


LANE = 128
EPS = 1e-5


def _round_up(x, m):
    return ((x + m - 1) // m) * m


# ----------------------------------------------------------------------------
# Kernel 1: direct Conv3d (tap-accumulated matmuls) + bias + per-channel stats
# ----------------------------------------------------------------------------

def conv3d_stats_kernel(x_ref, w_ref, b_ref, y_ref, ssum_ref, ssq_ref,
                        *, taps, do, ho, wo, cin, cout_p):
    # x_ref   : (1, G*Dq, Hq, Wq, Cin)  f32, parity-folded, spatially zero-padded
    # w_ref   : (k^3, Cin, Cout_p)      bf16 (Cin/Cout zero-padded)
    # b_ref   : (1, Cout_p)             f32
    # y_ref   : (1, S, Cout_p)          f32, S = Do*Ho*Wo
    # ssum/ssq: (1, 1, Cout_p)          f32 per-channel spatial sum / sum-of-squares
    s = do * ho * wo
    acc = jnp.zeros((s, cout_p), jnp.float32)
    for t, (r0, h0, w0) in enumerate(taps):
        slab = x_ref[0, pl.ds(r0, do), pl.ds(h0, ho), pl.ds(w0, wo), :]
        a = slab.reshape(s, cin).astype(jnp.bfloat16)          # MXU operand
        acc = acc + jnp.dot(a, w_ref[t], preferred_element_type=jnp.float32)
    y = acc + b_ref[...]                                        # (S, Cout_p) f32
    y_ref[...] = y.reshape(1, s, cout_p)
    # InstanceNorm stats fused into the conv epilogue (saves an HBM stats pass).
    ssum_ref[...] = jnp.sum(y, axis=0).reshape(1, 1, cout_p)
    ssq_ref[...] = jnp.sum(y * y, axis=0).reshape(1, 1, cout_p)


def conv3d_in_pallas(x, w, b, *, stride, padding, cout_pad):
    """Direct Conv3d on channels-last input.

    x : (N, D, H, W, Cx) f32  (Cx may already be lane-padded; extra channels are 0)
    w : PyTorch layout (Cout, Cin_real, k, k, k)
    b : (Cout,)
    Returns y:(N, S, cout_pad) f32, ssum/ssq:(N, 1, cout_pad) f32, (Do, Ho, Wo).
    """
    n, d, h, wdim, cx = x.shape
    cout, cin_real, k = w.shape[0], w.shape[1], w.shape[2]
    s = stride
    do = (d + 2 * padding - k) // s + 1
    ho = (h + 2 * padding - k) // s + 1
    wo = (wdim + 2 * padding - k) // s + 1

    # Spatial zero-pad + parity fold so the stride is handled with contiguous
    # static slices inside the kernel (no strided gathers, no 27x im2col).
    xp = jnp.pad(x, ((0, 0), (padding, padding), (padding, padding),
                     (padding, padding), (0, 0)))
    dp, hp, wp = xp.shape[1:4]
    dq, hq, wq = -(-dp // s), -(-hp // s), -(-wp // s)
    xp = jnp.pad(xp, ((0, 0), (0, dq * s - dp), (0, hq * s - hp),
                      (0, wq * s - wp), (0, 0)))
    xr = xp.reshape(n, dq, s, hq, s, wq, s, cx)
    xr = jnp.transpose(xr, (0, 2, 4, 6, 1, 3, 5, 7))            # (N,s,s,s,Dq,Hq,Wq,C)
    x_par = xr.reshape(n, s * s * s * dq, hq, wq, cx)           # (N, G*Dq, Hq, Wq, C)

    # Static tap table: (depth-row start in folded buffer, h start, w start).
    taps = []
    for kd in range(k):
        for kh in range(k):
            for kw in range(k):
                g = (kd % s) * s * s + (kh % s) * s + (kw % s)
                taps.append((g * dq + kd // s, kh // s, kw // s))
    taps = tuple(taps)

    # Weights: (Cout, Cin, kd, kh, kw) -> (k^3, Cx, cout_pad), zero-padded, bf16.
    w_mat = jnp.transpose(w, (2, 3, 4, 1, 0)).reshape(k * k * k, cin_real, cout)
    w_mat = jnp.pad(w_mat, ((0, 0), (0, cx - cin_real), (0, cout_pad - cout)))
    w_mat = w_mat.astype(jnp.bfloat16)
    b_p = jnp.pad(b, (0, cout_pad - cout)).astype(jnp.float32).reshape(1, cout_pad)

    s_out = do * ho * wo
    kernel = functools.partial(conv3d_stats_kernel, taps=taps, do=do, ho=ho,
                               wo=wo, cin=cx, cout_p=cout_pad)
    y, ssum, ssq = pl.pallas_call(
        kernel,
        out_shape=(jax.ShapeDtypeStruct((n, s_out, cout_pad), jnp.float32),
                   jax.ShapeDtypeStruct((n, 1, cout_pad), jnp.float32),
                   jax.ShapeDtypeStruct((n, 1, cout_pad), jnp.float32)),
        grid=(n,),
        in_specs=[
            pl.BlockSpec((1,) + x_par.shape[1:], lambda i: (i, 0, 0, 0, 0)),
            pl.BlockSpec(w_mat.shape, lambda i: (0, 0, 0)),
            pl.BlockSpec((1, cout_pad), lambda i: (0, 0)),
        ],
        out_specs=(
            pl.BlockSpec((1, s_out, cout_pad), lambda i: (i, 0, 0)),
            pl.BlockSpec((1, 1, cout_pad), lambda i: (i, 0, 0)),
            pl.BlockSpec((1, 1, cout_pad), lambda i: (i, 0, 0)),
        ),
        compiler_params=pltpu.CompilerParams(
            dimension_semantics=("parallel",),
            vmem_limit_bytes=32 * 1024 * 1024),
    )(x_par, w_mat, b_p)
    return y, ssum, ssq, (do, ho, wo)


# ----------------------------------------------------------------------------
# Kernel 2/3: fused InstanceNorm (folded to y*scale+shift) epilogues
# ----------------------------------------------------------------------------

def affine_act_kernel(y_ref, scale_ref, shift_ref, o_ref):
    # relu(y * scale + shift)  ==  relu(InstanceNorm(y))      per (n, c)
    o_ref[...] = jnp.maximum(
        y_ref[...] * scale_ref[...] + shift_ref[...], 0.0).astype(o_ref.dtype)


def affine_residual_act_kernel(y_ref, scale_ref, shift_ref, skip_ref, o_ref):
    # relu(se_gate * InstanceNorm(y) + skip)   (gate folded into scale/shift)
    o_ref[...] = jnp.maximum(
        y_ref[...] * scale_ref[...] + shift_ref[...] + skip_ref[...], 0.0
    ).astype(o_ref.dtype)


def _pick_spatial_tile(s_total, cap=2048):
    if s_total <= cap:
        return s_total
    for t in range(cap, 7, -1):
        if s_total % t == 0 and t % 8 == 0:
            return t
    return s_total


def affine_act_pallas(y, scale, shift, skip=None):
    # y, skip: (N, S, Cp);  scale, shift: (N, 1, Cp)
    n, s_total, cp = y.shape
    ts = _pick_spatial_tile(s_total)
    grid = (n, s_total // ts)
    row_spec = pl.BlockSpec((1, ts, cp), lambda i, j: (i, j, 0))
    vec_spec = pl.BlockSpec((1, 1, cp), lambda i, j: (i, 0, 0))
    if skip is None:
        kernel = affine_act_kernel
        ins = (y, scale, shift)
        specs = [row_spec, vec_spec, vec_spec]
    else:
        kernel = affine_residual_act_kernel
        ins = (y, scale, shift, skip)
        specs = [row_spec, vec_spec, vec_spec, row_spec]
    return pl.pallas_call(
        kernel,
        out_shape=jax.ShapeDtypeStruct((n, s_total, cp), jnp.float32),
        grid=grid,
        in_specs=specs,
        out_specs=row_spec,
        compiler_params=pltpu.CompilerParams(
            dimension_semantics=("parallel", "parallel")),
    )(*ins)


# ----------------------------------------------------------------------------
# DownBlock forward (in_channels -> out_channels, stride-2 down + 1 ResBlock)
# ----------------------------------------------------------------------------

def init_downblock_params(key, in_channels, out_channels, bottleneck_ratio=0.5,
                          se_ratio=0.5):
    bottleneck = int(out_channels * bottleneck_ratio)
    excitation = int(se_ratio * out_channels)
    ks = jax.random.split(key, 10)
    n = lambda k, shape, scale=0.1: scale * jax.random.normal(k, shape, jnp.float32)
    return {
        # ConvNormReLU(in, out, stride=2)
        "down_w": n(ks[0], (out_channels, in_channels, 3, 3, 3)),
        "down_b": n(ks[1], (out_channels,)),
        # ResBlock conv1 (out -> bottleneck)
        "res1_w": n(ks[2], (bottleneck, out_channels, 3, 3, 3)),
        "res1_b": n(ks[3], (bottleneck,)),
        # ResBlock conv2 (bottleneck -> out, no activation)
        "res2_w": n(ks[4], (out_channels, bottleneck, 3, 3, 3)),
        "res2_b": n(ks[5], (out_channels,)),
        # SE block: Linear(out, excitation), Linear(excitation, out)
        "se_w1": n(ks[6], (excitation, out_channels)),
        "se_b1": n(ks[7], (excitation,)),
        "se_w2": n(ks[8], (out_channels, excitation)),
        "se_b2": n(ks[9], (out_channels,)),
    }


def _norm_affine(ssum, ssq, s_total):
    # InstanceNorm3d (affine=False, eps=1e-5, biased variance) from fused stats.
    mean = ssum / s_total
    var = jnp.maximum(ssq / s_total - mean * mean, 0.0)
    inv = jax.lax.rsqrt(var + EPS)
    return mean, inv


def down_block_forward(x_ncdhw, params):
    # PyTorch NCDHW -> channels-last NDHWC for the kernels.
    x = jnp.transpose(x_ncdhw, (0, 2, 3, 4, 1)).astype(jnp.float32)
    n = x.shape[0]
    cout = params["down_w"].shape[0]
    cp = _round_up(cout, LANE)     # lane-dense channel padding used throughout

    # --- ConvNormReLU(in, out, stride=2) ---
    y, ssum, ssq, (do, ho, wo) = conv3d_in_pallas(
        x, params["down_w"], params["down_b"], stride=2, padding=1, cout_pad=cp)
    s_total = do * ho * wo
    mean, inv = _norm_affine(ssum, ssq, s_total)
    y = affine_act_pallas(y, inv, -mean * inv)          # relu(instnorm(y)); (N,S,Cp)

    # --- ResBlock(out) ---
    skip = y
    y4 = y.reshape(n, do, ho, wo, cp)
    h, ssum1, ssq1, _ = conv3d_in_pallas(
        y4, params["res1_w"], params["res1_b"], stride=1, padding=1, cout_pad=cp)
    mean1, inv1 = _norm_affine(ssum1, ssq1, s_total)
    h = affine_act_pallas(h, inv1, -mean1 * inv1)

    h4 = h.reshape(n, do, ho, wo, cp)
    h2, ssum2, ssq2, _ = conv3d_in_pallas(
        h4, params["res2_w"], params["res2_b"], stride=1, padding=1, cout_pad=cp)
    mean2, inv2 = _norm_affine(ssum2, ssq2, s_total)

    # SE squeeze: GlobalAverage(InstanceNorm(h2)) per (n, c).  With affine=False
    # this equals (mean(h2) - mean(h2)) * inv_std == 0 analytically; compute it
    # from the already-fused statistics so no extra pass over h2 is needed.
    squeeze = ((ssum2[:, 0, :cout] / s_total) - mean2[:, 0, :cout]) * inv2[:, 0, :cout]
    e = jax.nn.relu(squeeze @ params["se_w1"].T + params["se_b1"])
    gate = jax.nn.sigmoid(e @ params["se_w2"].T + params["se_b2"])   # (N, cout)
    gate = jnp.pad(gate, ((0, 0), (0, cp - cout))).reshape(n, 1, cp)

    # Fused epilogue: relu(gate * InstanceNorm(h2) + skip)
    scale = gate * inv2
    shift = -mean2 * scale
    out = affine_act_pallas(h2, scale, shift, skip=skip)             # (N, S, Cp)

    # Drop channel padding, back to PyTorch NCDHW.
    out = out[..., :cout].reshape(n, do, ho, wo, cout)
    return jnp.transpose(out, (0, 4, 1, 2, 3))


if __name__ == "__main__":
    key = jax.random.PRNGKey(0)
    k_x, k_p = jax.random.split(key)

    in_channels, out_channels = 4, 8
    # Small 5-D input (N, C, D, H, W) for Conv3d.
    x = jax.random.normal(k_x, (2, in_channels, 8, 8, 8), jnp.float32)
    params = init_downblock_params(k_p, in_channels, out_channels)

    fwd = jax.jit(down_block_forward)
    out = fwd(x, params)
    out = jax.block_until_ready(out)

    assert out.shape == (2, out_channels, 4, 4, 4), out.shape
    assert bool(jnp.all(jnp.isfinite(out)))
    print("KERNEL_OK")
</pallas_src>

<mosaic_0001>
module attributes {stable_mosaic.version = 11 : i64} {
  func.func @affine_act_kernel(%arg0: i32, %arg1: i32, %arg2: memref<1x64x128xf32, #tpu.memory_space<vmem>>, %arg3: memref<1x1x128xf32, #tpu.memory_space<vmem>>, %arg4: memref<1x1x128xf32, #tpu.memory_space<vmem>>, %arg5: memref<1x64x128xf32, #tpu.memory_space<vmem>>) attributes {dimension_semantics = [#tpu.dimension_semantics<parallel>, #tpu.dimension_semantics<parallel>], iteration_bounds = array<i64: 2, 1>, scalar_prefetch = 0 : i64, scratch_operands = 0 : i64, tpu.core_type = #tpu.core_type<tc>, window_params = [{transform_indices = @transform_0, window_bounds = array<i64: 1, 64, 128>}, {transform_indices = @transform_1, window_bounds = array<i64: 1, 1, 128>}, {transform_indices = @transform_2, window_bounds = array<i64: 1, 1, 128>}, {transform_indices = @transform_3, window_bounds = array<i64: 1, 64, 128>}]} {
    %c0 = arith.constant 0 : index
    %c0_0 = arith.constant 0 : index
    %c0_1 = arith.constant 0 : index
    %0 = vector.load %arg2[%c0, %c0_0, %c0_1] : memref<1x64x128xf32, #tpu.memory_space<vmem>>, vector<1x64x128xf32>
    %c0_2 = arith.constant 0 : index
    %c0_3 = arith.constant 0 : index
    %c0_4 = arith.constant 0 : index
    %1 = vector.load %arg3[%c0_2, %c0_3, %c0_4] : memref<1x1x128xf32, #tpu.memory_space<vmem>>, vector<1x1x128xf32>
    %2 = vector.broadcast %1 : vector<1x1x128xf32> to vector<1x64x128xf32>
    %3 = arith.mulf %0, %2 : vector<1x64x128xf32>
    %c0_5 = arith.constant 0 : index
    %c0_6 = arith.constant 0 : index
    %c0_7 = arith.constant 0 : index
    %4 = vector.load %arg4[%c0_5, %c0_6, %c0_7] : memref<1x1x128xf32, #tpu.memory_space<vmem>>, vector<1x1x128xf32>
    %5 = vector.broadcast %4 : vector<1x1x128xf32> to vector<1x64x128xf32>
    %6 = arith.addf %3, %5 : vector<1x64x128xf32>
    %cst = arith.constant 0.000000e+00 : f32
    %7 = vector.broadcast %cst : f32 to vector<1x64x128xf32>
    %8 = arith.maximumf %6, %7 : vector<1x64x128xf32>
    %c0_8 = arith.constant 0 : index
    %c0_9 = arith.constant 0 : index
    %c0_10 = arith.constant 0 : index
    %9 = vector.load %arg5[%c0_8, %c0_9, %c0_10] : memref<1x64x128xf32, #tpu.memory_space<vmem>>, vector<1x64x128xf32>
    tpu.vector_store %arg5[%c0_8, %c0_9, %c0_10], %8 {strides = array<i32>} : memref<1x64x128xf32, #tpu.memory_space<vmem>>, vector<1x64x128xf32>,
    return
  }
  func.func @transform_0(%arg0: i32, %arg1: i32) -> (i32, i32, i32) {
    %c0_i32 = arith.constant 0 : i32
    %c0_i32_0 = arith.constant 0 : i32
    return %arg0, %arg1, %c0_i32 : i32, i32, i32
  }
  func.func @transform_1(%arg0: i32, %arg1: i32) -> (i32, i32, i32) {
    %c0_i32 = arith.constant 0 : i32
    %c0_i32_0 = arith.constant 0 : i32
    %c0_i32_1 = arith.constant 0 : i32
    return %arg0, %c0_i32, %c0_i32_0 : i32, i32, i32
  }
  func.func @transform_2(%arg0: i32, %arg1: i32) -> (i32, i32, i32) {
    %c0_i32 = arith.constant 0 : i32
    %c0_i32_0 = arith.constant 0 : i32
    %c0_i32_1 = arith.constant 0 : i32
    return %arg0, %c0_i32, %c0_i32_0 : i32, i32, i32
  }
  func.func @transform_3(%arg0: i32, %arg1: i32) -> (i32, i32, i32) {
    %c0_i32 = arith.constant 0 : i32
    %c0_i32_0 = arith.constant 0 : i32
    return %arg0, %arg1, %c0_i32 : i32, i32, i32
  }
}

module attributes {stable_mosaic.version = 11 : i64} {
  func.func @conv3d_stats_kernel(%arg0: i32, %arg1: memref<1x40x5x5x4xf32, #tpu.memory_space<vmem>>, %arg2: memref<27x4x128xbf16, #tpu.memory_space<vmem>>, %arg3: memref<1x128xf32, #tpu.memory_space<vmem>>, %arg4: memref<1x64x128xf32, #tpu.memory_space<vmem>>, %arg5: memref<1x1x128xf32, #tpu.memory_space<vmem>>, %arg6: memref<1x1x128xf32, #tpu.memory_space<vmem>>) attributes {dimension_semantics = [#tpu.dimension_semantics<parallel>], iteration_bounds = array<i64: 2>, scalar_prefetch = 0 : i64, scratch_operands = 0 : i64, tpu.core_type = #tpu.core_type<tc>, window_params = [{transform_indices = @transform_0, window_bounds = array<i64: 1, 40, 5, 5, 4>}, {pipeline_mode = #tpu.pipeline_mode<synchronous>, transform_indices = @transform_1, window_bounds = array<i64: 27, 4, 128>}, {pipeline_mode = #tpu.pipeline_mode<synchronous>, transform_indices = @transform_2, window_bounds = array<i64: 1, 128>}, {transform_indices = @transform_3, window_bounds = array<i64: 1, 64, 128>}, {transform_indices = @transform_4, window_bounds = array<i64: 1, 1, 128>}, {transform_indices = @transform_5, window_bounds = array<i64: 1, 1, 128>}]} {
    %cst = arith.constant 0.000000e+00 : f32
    %0 = vector.broadcast %cst : f32 to vector<64x128xf32>
    %c0 = arith.constant 0 : index
    %c0_0 = arith.constant 0 : index
    %c0_1 = arith.constant 0 : index
    %c0_2 = arith.constant 0 : index
    %c0_3 = arith.constant 0 : index
    %1 = vector.load %arg1[%c0, %c0_0, %c0_1, %c0_2, %c0_3] : memref<1x40x5x5x4xf32, #tpu.memory_space<vmem>>, vector<1x4x4x4x4xf32>
    %2 = vector.shape_cast %1 : vector<1x4x4x4x4xf32> to vector<4x4x4x4xf32>
    %3 = vector.shape_cast %2 : vector<4x4x4x4xf32> to vector<64x4xf32>
    %4 = arith.truncf %3 : vector<64x4xf32> to vector<64x4xbf16>
    %c0_4 = arith.constant 0 : index
    %c0_5 = arith.constant 0 : index
    %c0_6 = arith.constant 0 : index
    %5 = vector.load %arg2[%c0_4, %c0_5, %c0_6] : memref<27x4x128xbf16, #tpu.memory_space<vmem>>, vector<1x4x128xbf16>
    %6 = vector.shape_cast %5 : vector<1x4x128xbf16> to vector<4x128xbf16>
    %cst_7 = arith.constant dense<0.000000e+00> : vector<64x128xf32>
    %7 = tpu.matmul %4, %6, %cst_7 {dimension_numbers = #tpu.dot_dimension_numbers<[1], [0], [0], [1], [0, 0, 1, 1], [], []>} : vector<64x4xbf16>, vector<4x128xbf16>, vector<64x128xf32> -> vector<64x128xf32>
    %8 = arith.addf %0, %7 : vector<64x128xf32>
    %c0_8 = arith.constant 0 : index
    %c5 = arith.constant 5 : index
    %c0_9 = arith.constant 0 : index
    %c0_10 = arith.constant 0 : index
    %c0_11 = arith.constant 0 : index
    %9 = vector.load %arg1[%c0_8, %c5, %c0_9, %c0_10, %c0_11] : memref<1x40x5x5x4xf32, #tpu.memory_space<vmem>>, vector<1x4x4x4x4xf32>
    %10 = vector.shape_cast %9 : vector<1x4x4x4x4xf32> to vector<4x4x4x4xf32>
    %11 = vector.shape_cast %10 : vector<4x4x4x4xf32> to vector<64x4xf32>
    %12 = arith.truncf %11 : vector<64x4xf32> to vector<64x4xbf16>
    %c1 = arith.constant 1 : index
    %c0_12 = arith.constant 0 : index
    %c0_13 = arith.constant 0 : index
    %13 = vector.load %arg2[%c1, %c0_12, %c0_13] : memref<27x4x128xbf16, #tpu.memory_space<vmem>>, vector<1x4x128xbf16>
    %14 = vector.shape_cast %13 : vector<1x4x128xbf16> to vector<4x128xbf16>
    %cst_14 = arith.constant dense<0.000000e+00> : vector<64x128xf32>
    %15 = tpu.matmul %12, %14, %cst_14 {dimension_numbers = #tpu.dot_dimension_numbers<[1], [0], [0], [1], [0, 0, 1, 1], [], []>} : vector<64x4xbf16>, vector<4x128xbf16>, vector<64x128xf32> -> vector<64x128xf32>
    %16 = arith.addf %8, %15 : vector<64x128xf32>
    %c0_15 = arith.constant 0 : index
    %c0_16 = arith.constant 0 : index
    %c0_17 = arith.constant 0 : index
    %c1_18 = arith.constant 1 : index
    %c0_19 = arith.constant 0 : index
    %17 = vector.load %arg1[%c0_15, %c0_16, %c0_17, %c1_18, %c0_19] : memref<1x40x5x5x4xf32, #tpu.memory_space<vmem>>, vector<1x4x4x4x4xf32>
    %18 = vector.shape_cast %17 : vector<1x4x4x4x4xf32> to vector<4x4x4x4xf32>
    %19 = vector.shape_cast %18 : vector<4x4x4x4xf32> to vector<64x4xf32>
    %20 = arith.truncf %19 : vector<64x4xf32> to vector<64x4xbf16>
    %c2 = arith.constant 2 : index
    %c0_20 = arith.constant 0 : index
    %c0_21 = arith.constant 0 : index
    %21 = vector.load %arg2[%c2, %c0_20, %c0_21] : memref<27x4x128xbf16, #tpu.memory_space<vmem>>, vector<1x4x128xbf16>
    %22 = vector.shape_cast %21 : vector<1x4x128xbf16> to vector<4x128xbf16>
    %cst_22 = arith.constant dense<0.000000e+00> : vector<64x128xf32>
    %23 = tpu.matmul %20, %22, %cst_22 {dimension_numbers = #tpu.dot_dimension_numbers<[1], [0], [0], [1], [0, 0, 1, 1], [], []>} : vector<64x4xbf16>, vector<4x128xbf16>, vector<64x128xf32> -> vector<64x128xf32>
    %24 = arith.addf %16, %23 : vector<64x128xf32>
    %c0_23 = arith.constant 0 : index
    %c10 = arith.constant 10 : index
    %c0_24 = arith.constant 0 : index
    %c0_25 = arith.constant 0 : index
    %c0_26 = arith.constant 0 : index
    %25 = vector.load %arg1[%c0_23, %c10, %c0_24, %c0_25, %c0_26] : memref<1x40x5x5x4xf32, #tpu.memory_space<vmem>>, vector<1x4x4x4x4xf32>
    %26 = vector.shape_cast %25 : vector<1x4x4x4x4xf32> to vector<4x4x4x4xf32>
    %27 = vector.shape_cast %26 : vector<4x4x4x4xf32> to vector<64x4xf32>
    %28 = arith.truncf %27 : vector<64x4xf32> to vector<64x4xbf16>
    %c3 = arith.constant 3 : index
    %c0_27 = arith.constant 0 : index
    %c0_28 = arith.constant 0 : index
    %29 = vector.load %arg2[%c3, %c0_27, %c0_28] : memref<27x4x128xbf16, #tpu.memory_space<vmem>>, vector<1x4x128xbf16>
    %30 = vector.shape_cast %29 : vector<1x4x128xbf16> to vector<4x128xbf16>
    %cst_29 = arith.constant dense<0.000000e+00> : vector<64x128xf32>
    %31 = tpu.matmul %28, %30, %cst_29 {dimension_numbers = #tpu.dot_dimension_numbers<[1], [0], [0], [1], [0, 0, 1, 1], [], []>} : vector<64x4xbf16>, vector<4x128xbf16>, vector<64x128xf32> -> vector<64x128xf32>
    %32 = arith.addf %24, %31 : vector<64x128xf32>
    %c0_30 = arith.constant 0 : index
    %c15 = arith.constant 15 : index
    %c0_31 = arith.constant 0 : index
    %c0_32 = arith.constant 0 : index
    %c0_33 = arith.constant 0 : index
    %33 = vector.load %arg1[%c0_30, %c15, %c0_31, %c0_32, %c0_33] : memref<1x40x5x5x4xf32, #tpu.memory_space<vmem>>, vector<1x4x4x4x4xf32>
    %34 = vector.shape_cast %33 : vector<1x4x4x4x4xf32> to vector<4x4x4x4xf32>
    %35 = vector.shape_cast %34 : vector<4x4x4x4xf32> to vector<64x4xf32>
    %36 = arith.truncf %35 : vector<64x4xf32> to vector<64x4xbf16>
    %c4 = arith.constant 4 : index
    %c0_34 = arith.constant 0 : index
    %c0_35 = arith.constant 0 : index
    %37 = vector.load %arg2[%c4, %c0_34, %c0_35] : memref<27x4x128xbf16, #tpu.memory_space<vmem>>, vector<1x4x128xbf16>
    %38 = vector.shape_cast %37 : vector<1x4x128xbf16> to vector<4x128xbf16>
    %cst_36 = arith.constant dense<0.000000e+00> : vector<64x128xf32>
    %39 = tpu.matmul %36, %38, %cst_36 {dimension_numbers = #tpu.dot_dimension_numbers<[1], [0], [0], [1], [0, 0, 1, 1], [], []>} : vector<64x4xbf16>, vector<4x128xbf16>, vector<64x128xf32> -> vector<64x128xf32>
    %40 = arith.addf %32, %39 : vector<64x128xf32>
    %c0_37 = arith.constant 0 : index
    %c10_38 = arith.constant 10 : index
    %c0_39 = arith.constant 0 : index
    %c1_40 = arith.constant 1 : index
    %c0_41 = arith.constant 0 : index
    %41 = vector.load %arg1[%c0_37, %c10_38, %c0_39, %c1_40, %c0_41] : memref<1x40x5x5x4xf32, #tpu.memory_space<vmem>>, vector<1x4x4x4x4xf32>
    %42 = vector.shape_cast %41 : vector<1x4x4x4x4xf32> to vector<4x4x4x4xf32>
    %43 = vector.shape_cast %42 : vector<4x4x4x4xf32> to vector<64x4xf32>
    %44 = arith.truncf %43 : vector<64x4xf32> to vector<64x4xbf16>
    %c5_42 = arith.constant 5 : index
    %c0_43 = arith.constant 0 : index
    %c0_44 = arith.constant 0 : index
    %45 = vector.load %arg2[%c5_42, %c0_43, %c0_44] : memref<27x4x128xbf16, #tpu.memory_space<vmem>>, vector<1x4x128xbf16>
    %46 = vector.shape_cast %45 : vector<1x4x128xbf16> to vector<4x128xbf16>
    %cst_45 = arith.constant dense<0.000000e+00> : vector<64x128xf32>
    %47 = tpu.matmul %44, %46, %cst_45 {dimension_numbers = #tpu.dot_dimension_numbers<[1], [0], [0], [1], [0, 0, 1, 1], [], []>} : vector<64x4xbf16>, vector<4x128xbf16>, vector<64x128xf32> -> vector<64x128xf32>
    %48 = arith.addf %40, %47 : vector<64x128xf32>
    %c0_46 = arith.constant 0 : index
    %c0_47 = arith.constant 0 : index
    %c1_48 = arith.constant 1 : index
    %c0_49 = arith.constant 0 : index
    %c0_50 = arith.constant 0 : index
    %49 = vector.load %arg1[%c0_46, %c0_47, %c1_48, %c0_49, %c0_50] : memref<1x40x5x5x4xf32, #tpu.memory_space<vmem>>, vector<1x4x4x4x4xf32>
    %50 = vector.shape_cast %49 : vector<1x4x4x4x4xf32> to vector<4x4x4x4xf32>
    %51 = vector.shape_cast %50 : vector<4x4x4x4xf32> to vector<64x4xf32>
    %52 = arith.truncf %51 : vector<64x4xf32> to vector<64x4xbf16>
    %c6 = arith.constant 6 : index
    %c0_51 = arith.constant 0 : index
    %c0_52 = arith.constant 0 : index
    %53 = vector.load %arg2[%c6, %c0_51, %c0_52] : memref<27x4x128xbf16, #tpu.memory_space<vmem>>, vector<1x4x128xbf16>
    %54 = vector.shape_cast %53 : vector<1x4x128xbf16> to vector<4x128xbf16>
    %cst_53 = arith.constant dense<0.000000e+00> : vector<64x128xf32>
    %55 = tpu.matmul %52, %54, %cst_53 {dimension_numbers = #tpu.dot_dimension_numbers<[1], [0], [0], [1], [0, 0, 1, 1], [], []>} : vector<64x4xbf16>, vector<4x128xbf16>, vector<64x128xf32> -> vector<64x128xf32>
    %56 = arith.addf %48, %55 : vector<64x128xf32>
    %c0_54 = arith.constant 0 : index
    %c5_55 = arith.constant 5 : index
    %c1_56 = arith.constant 1 : index
    %c0_57 = arith.constant 0 : index
    %c0_58 = arith.constant 0 : index
    %57 = vector.load %arg1[%c0_54, %c5_55, %c1_56, %c0_57, %c0_58] : memref<1x40x5x5x4xf32, #tpu.memory_space<vmem>>, vector<1x4x4x4x4xf32>
    %58 = vector.shape_cast %57 : vector<1x4x4x4x4xf32> to vector<4x4x4x4xf32>
    %59 = vector.shape_cast %58 : vector<4x4x4x4xf32> to vector<64x4xf32>
    %60 = arith.truncf %59 : vector<64x4xf32> to vector<64x4xbf16>
    %c7 = arith.constant 7 : index
    %c0_59 = arith.constant 0 : index
    %c0_60 = arith.constant 0 : index
    %61 = vector.load %arg2[%c7, %c0_59, %c0_60] : memref<27x4x128xbf16, #tpu.memory_space<vmem>>, vector<1x4x128xbf16>
    %62 = vector.shape_cast %61 : vector<1x4x128xbf16> to vector<4x128xbf16>
    %cst_61 = arith.constant dense<0.000000e+00> : vector<64x128xf32>
    %63 = tpu.matmul %60, %62, %cst_61 {dimension_numbers = #tpu.dot_dimension_numbers<[1], [0], [0], [1], [0, 0, 1, 1], [], []>} : vector<64x4xbf16>, vector<4x128xbf16>, vector<64x128xf32> -> vector<64x128xf32>
    %64 = arith.addf %56, %63 : vector<64x128xf32>
    %c0_62 = arith.constant 0 : index
    %c0_63 = arith.constant 0 : index
    %c1_64 = arith.constant 1 : index
    %c1_65 = arith.constant 1 : index
    %c0_66 = arith.constant 0 : index
    %65 = vector.load %arg1[%c0_62, %c0_63, %c1_64, %c1_65, %c0_66] : memref<1x40x5x5x4xf32, #tpu.memory_space<vmem>>, vector<1x4x4x4x4xf32>
    %66 = vector.shape_cast %65 : vector<1x4x4x4x4xf32> to vector<4x4x4x4xf32>
    %67 = vector.shape_cast %66 : vector<4x4x4x4xf32> to vector<64x4xf32>
    %68 = arith.truncf %67 : vector<64x4xf32> to vector<64x4xbf16>
    %c8 = arith.constant 8 : index
    %c0_67 = arith.constant 0 : index
    %c0_68 = arith.constant 0 : index
    %69 = vector.load %arg2[%c8, %c0_67, %c0_68] : memref<27x4x128xbf16, #tpu.memory_space<vmem>>, vector<1x4x128xbf16>
    %70 = vector.shape_cast %69 : vector<1x4x128xbf16> to vector<4x128xbf16>
    %cst_69 = arith.constant dense<0.000000e+00> : vector<64x128xf32>
    %71 = tpu.matmul %68, %70, %cst_69 {dimension_numbers = #tpu.dot_dimension_numbers<[1], [0], [0], [1], [0, 0, 1, 1], [], []>} : vector<64x4xbf16>, vector<4x128xbf16>, vector<64x128xf32> -> vector<64x128xf32>
    %72 = arith.addf %64, %71 : vector<64x128xf32>
    %c0_70 = arith.constant 0 : index
    %c20 = arith.constant 20 : index
    %c0_71 = arith.constant 0 : index
    %c0_72 = arith.constant 0 : index
    %c0_73 = arith.constant 0 : index
    %73 = vector.load %arg1[%c0_70, %c20, %c0_71, %c0_72, %c0_73] : memref<1x40x5x5x4xf32, #tpu.memory_space<vmem>>, vector<1x4x4x4x4xf32>
    %74 = vector.shape_cast %73 : vector<1x4x4x4x4xf32> to vector<4x4x4x4xf32>
    %75 = vector.shape_cast %74 : vector<4x4x4x4xf32> to vector<64x4xf32>
    %76 = arith.truncf %75 : vector<64x4xf32> to vector<64x4xbf16>
    %c9 = arith.constant 9 : index
    %c0_74 = arith.constant 0 : index
    %c0_75 = arith.constant 0 : index
    %77 = vector.load %arg2[%c9, %c0_74, %c0_75] : memref<27x4x128xbf16, #tpu.memory_space<vmem>>, vector<1x4x128xbf16>
    %78 = vector.shape_cast %77 : vector<1x4x128xbf16> to vector<4x128xbf16>
    %cst_76 = arith.constant dense<0.000000e+00> : vector<64x128xf32>
    %79 = tpu.matmul %76, %78, %cst_76 {dimension_numbers = #tpu.dot_dimension_numbers<[1], [0], [0], [1], [0, 0, 1, 1], [], []>} : vector<64x4xbf16>, vector<4x128xbf16>, vector<64x128xf32> -> vector<64x128xf32>
    %80 = arith.addf %72, %79 : vector<64x128xf32>
    %c0_77 = arith.constant 0 : index
    %c25 = arith.constant 25 : index
    %c0_78 = arith.constant 0 : index
    %c0_79 = arith.constant 0 : index
    %c0_80 = arith.constant 0 : index
    %81 = vector.load %arg1[%c0_77, %c25, %c0_78, %c0_79, %c0_80] : memref<1x40x5x5x4xf32, #tpu.memory_space<vmem>>, vector<1x4x4x4x4xf32>
    %82 = vector.shape_cast %81 : vector<1x4x4x4x4xf32> to vector<4x4x4x4xf32>
    %83 = vector.shape_cast %82 : vector<4x4x4x4xf32> to vector<64x4xf32>
    %84 = arith.truncf %83 : vector<64x4xf32> to vector<64x4xbf16>
    %c10_81 = arith.constant 10 : index
    %c0_82 = arith.constant 0 : index
    %c0_83 = arith.constant 0 : index
    %85 = vector.load %arg2[%c10_81, %c0_82, %c0_83] : memref<27x4x128xbf16, #tpu.memory_space<vmem>>, vector<1x4x128xbf16>
    %86 = vector.shape_cast %85 : vector<1x4x128xbf16> to vector<4x128xbf16>
    %cst_84 = arith.constant dense<0.000000e+00> : vector<64x128xf32>
    %87 = tpu.matmul %84, %86, %cst_84 {dimension_numbers = #tpu.dot_dimension_numbers<[1], [0], [0], [1], [0, 0, 1, 1], [], []>} : vector<64x4xbf16>, vector<4x128xbf16>, vector<64x128xf32> -> vector<64x128xf32>
    %88 = arith.addf %80, %87 : vector<64x128xf32>
    %c0_85 = arith.constant 0 : index
    %c20_86 = arith.constant 20 : index
    %c0_87 = arith.constant 0 : index
    %c1_88 = arith.constant 1 : index
    %c0_89 = arith.constant 0 : index
    %89 = vector.load %arg1[%c0_85, %c20_86, %c0_87, %c1_88, %c0_89] : memref<1x40x5x5x4xf32, #tpu.memory_space<vmem>>, vector<1x4x4x4x4xf32>
    %90 = vector.shape_cast %89 : vector<1x4x4x4x4xf32> to vector<4x4x4x4xf32>
    %91 = vector.shape_cast %90 : vector<4x4x4x4xf32> to vector<64x4xf32>
    %92 = arith.truncf %91 : vector<64x4xf32> to vector<64x4xbf16>
    %c11 = arith.constant 11 : index
    %c0_90 = arith.constant 0 : index
    %c0_91 = arith.constant 0 : index
    %93 = vector.load %arg2[%c11, %c0_90, %c0_91] : memref<27x4x128xbf16, #tpu.memory_space<vmem>>, vector<1x4x128xbf16>
    %94 = vector.shape_cast %93 : vector<1x4x128xbf16> to vector<4x128xbf16>
    %cst_92 = arith.constant dense<0.000000e+00> : vector<64x128xf32>
    %95 = tpu.matmul %92, %94, %cst_92 {dimension_numbers = #tpu.dot_dimension_numbers<[1], [0], [0], [1], [0, 0, 1, 1], [], []>} : vector<64x4xbf16>, vector<4x128xbf16>, vector<64x128xf32> -> vector<64x128xf32>
    %96 = arith.addf %88, %95 : vector<64x128xf32>
    %c0_93 = arith.constant 0 : index
    %c30 = arith.constant 30 : index
    %c0_94 = arith.constant 0 : index
    %c0_95 = arith.constant 0 : index
    %c0_96 = arith.constant 0 : index
    %97 = vector.load %arg1[%c0_93, %c30, %c0_94, %c0_95, %c0_96] : memref<1x40x5x5x4xf32, #tpu.memory_space<vmem>>, vector<1x4x4x4x4xf32>
    %98 = vector.shape_cast %97 : vector<1x4x4x4x4xf32> to vector<4x4x4x4xf32>
    %99 = vector.shape_cast %98 : vector<4x4x4x4xf32> to vector<64x4xf32>
    %100 = arith.truncf %99 : vector<64x4xf32> to vector<64x4xbf16>
    %c12 = arith.constant 12 : index
    %c0_97 = arith.constant 0 : index
    %c0_98 = arith.constant 0 : index
    %101 = vector.load %arg2[%c12, %c0_97, %c0_98] : memref<27x4x128xbf16, #tpu.memory_space<vmem>>, vector<1x4x128xbf16>
    %102 = vector.shape_cast %101 : vector<1x4x128xbf16> to vector<4x128xbf16>
    %cst_99 = arith.constant dense<0.000000e+00> : vector<64x128xf32>
    %103 = tpu.matmul %100, %102, %cst_99 {dimension_numbers = #tpu.dot_dimension_numbers<[1], [0], [0], [1], [0, 0, 1, 1], [], []>} : vector<64x4xbf16>, vector<4x128xbf16>, vector<64x128xf32> -> vector<64x128xf32>
    %104 = arith.addf %96, %103 : vector<64x128xf32>
    %c0_100 = arith.constant 0 : index
    %c35 = arith.constant 35 : index
    %c0_101 = arith.constant 0 : index
    %c0_102 = arith.constant 0 : index
    %c0_103 = arith.constant 0 : index
    %105 = vector.load %arg1[%c0_100, %c35, %c0_101, %c0_102, %c0_103] : memref<1x40x5x5x4xf32, #tpu.memory_space<vmem>>, vector<1x4x4x4x4xf32>
    %106 = vector.shape_cast %105 : vector<1x4x4x4x4xf32> to vector<4x4x4x4xf32>
    %107 = vector.shape_cast %106 : vector<4x4x4x4xf32> to vector<64x4xf32>
    %108 = arith.truncf %107 : vector<64x4xf32> to vector<64x4xbf16>
    %c13 = arith.constant 13 : index
    %c0_104 = arith.constant 0 : index
    %c0_105 = arith.constant 0 : index
    %109 = vector.load %arg2[%c13, %c0_104, %c0_105] : memref<27x4x128xbf16, #tpu.memory_space<vmem>>, vector<1x4x128xbf16>
    %110 = vector.shape_cast %109 : vector<1x4x128xbf16> to vector<4x128xbf16>
    %cst_106 = arith.constant dense<0.000000e+00> : vector<64x128xf32>
    %111 = tpu.matmul %108, %110, %cst_106 {dimension_numbers = #tpu.dot_dimension_numbers<[1], [0], [0], [1], [0, 0, 1, 1], [], []>} : vector<64x4xbf16>, vector<4x128xbf16>, vector<64x128xf32> -> vector<64x128xf32>
    %112 = arith.addf %104, %111 : vector<64x128xf32>
    %c0_107 = arith.constant 0 : index
    %c30_108 = arith.constant 30 : index
    %c0_109 = arith.constant 0 : index
    %c1_110 = arith.constant 1 : index
    %c0_111 = arith.constant 0 : index
    %113 = vector.load %arg1[%c0_107, %c30_108, %c0_109, %c1_110, %c0_111] : memref<1x40x5x5x4xf32, #tpu.memory_space<vmem>>, vector<1x4x4x4x4xf32>
    %114 = vector.shape_cast %113 : vector<1x4x4x4x4xf32> to vector<4x4x4x4xf32>
    %115 = vector.shape_cast %114 : vector<4x4x4x4xf32> to vector<64x4xf32>
    %116 = arith.truncf %115 : vector<64x4xf32> to vector<64x4xbf16>
    %c14 = arith.constant 14 : index
    %c0_112 = arith.constant 0 : index
    %c0_113 = arith.constant 0 : index
    %117 = vector.load %arg2[%c14, %c0_112, %c0_113] : memref<27x4x128xbf16, #tpu.memory_space<vmem>>, vector<1x4x128xbf16>
    %118 = vector.shape_cast %117 : vector<1x4x128xbf16> to vector<4x128xbf16>
    %cst_114 = arith.constant dense<0.000000e+00> : vector<64x128xf32>
    %119 = tpu.matmul %116, %118, %cst_114 {dimension_numbers = #tpu.dot_dimension_numbers<[1], [0], [0], [1], [0, 0, 1, 1], [], []>} : vector<64x4xbf16>, vector<4x128xbf16>, vector<64x128xf32> -> vector<64x128xf32>
    %120 = arith.addf %112, %119 : vector<64x128xf32>
    %c0_115 = arith.constant 0 : index
    %c20_116 = arith.constant 20 : index
    %c1_117 = arith.constant 1 : index
    %c0_118 = arith.constant 0 : index
    %c0_119 = arith.constant 0 : index
    %121 = vector.load %arg1[%c0_115, %c20_116, %c1_117, %c0_118, %c0_119] : memref<1x40x5x5x4xf32, #tpu.memory_space<vmem>>, vector<1x4x4x4x4xf32>
    %122 = vector.shape_cast %121 : vector<1x4x4x4x4xf32> to vector<4x4x4x4xf32>
    %123 = vector.shape_cast %122 : vector<4x4x4x4xf32> to vector<64x4xf32>
    %124 = arith.truncf %123 : vector<64x4xf32> to vector<64x4xbf16>
    %c15_120 = arith.constant 15 : index
    %c0_121 = arith.constant 0 : index
    %c0_122 = arith.constant 0 : index
    %125 = vector.load %arg2[%c15_120, %c0_121, %c0_122] : memref<27x4x128xbf16, #tpu.memory_space<vmem>>, vector<1x4x128xbf16>
    %126 = vector.shape_cast %125 : vector<1x4x128xbf16> to vector<4x128xbf16>
    %cst_123 = arith.constant dense<0.000000e+00> : vector<64x128xf32>
    %127 = tpu.matmul %124, %126, %cst_123 {dimension_numbers = #tpu.dot_dimension_numbers<[1], [0], [0], [1], [0, 0, 1, 1], [], []>} : vector<64x4xbf16>, vector<4x128xbf16>, vector<64x128xf32> -> vector<64x128xf32>
    %128 = arith.addf %120, %127 : vector<64x128xf32>
    %c0_124 = arith.constant 0 : index
    %c25_125 = arith.constant 25 : index
    %c1_126 = arith.constant 1 : index
    %c0_127 = arith.constant 0 : index
    %c0_128 = arith.constant 0 : index
    %129 = vector.load %arg1[%c0_124, %c25_125, %c1_126, %c0_127, %c0_128] : memref<1x40x5x5x4xf32, #tpu.memory_space<vmem>>, vector<1x4x4x4x4xf32>
    %130 = vector.shape_cast %129 : vector<1x4x4x4x4xf32> to vector<4x4x4x4xf32>
    %131 = vector.shape_cast %130 : vector<4x4x4x4xf32> to vector<64x4xf32>
    %132 = arith.truncf %131 : vector<64x4xf32> to vector<64x4xbf16>
    %c16 = arith.constant 16 : index
    %c0_129 = arith.constant 0 : index
    %c0_130 = arith.constant 0 : index
    %133 = vector.load %arg2[%c16, %c0_129, %c0_130] : memref<27x4x128xbf16, #tpu.memory_space<vmem>>, vector<1x4x128xbf16>
    %134 = vector.shape_cast %133 : vector<1x4x128xbf16> to vector<4x128xbf16>
    %cst_131 = arith.constant dense<0.000000e+00> : vector<64x128xf32>
    %135 = tpu.matmul %132, %134, %cst_131 {dimension_numbers = #tpu.dot_dimension_numbers<[1], [0], [0], [1], [0, 0, 1, 1], [], []>} : vector<64x4xbf16>, vector<4x128xbf16>, vector<64x128xf32> -> vector<64x128xf32>
    %136 = arith.addf %128, %135 : vector<64x128xf32>
    %c0_132 = arith.constant 0 : index
    %c20_133 = arith.constant 20 : index
    %c1_134 = arith.constant 1 : index
    %c1_135 = arith.constant 1 : index
    %c0_136 = arith.constant 0 : index
    %137 = vector.load %arg1[%c0_132, %c20_133, %c1_134, %c1_135, %c0_136] : memref<1x40x5x5x4xf32, #tpu.memory_space<vmem>>, vector<1x4x4x4x4xf32>
    %138 = vector.shape_cast %137 : vector<1x4x4x4x4xf32> to vector<4x4x4x4xf32>
    %139 = vector.shape_cast %138 : vector<4x4x4x4xf32> to vector<64x4xf32>
    %140 = arith.truncf %139 : vector<64x4xf32> to vector<64x4xbf16>
    %c17 = arith.constant 17 : index
    %c0_137 = arith.constant 0 : index
    %c0_138 = arith.constant 0 : index
    %141 = vector.load %arg2[%c17, %c0_137, %c0_138] : memref<27x4x128xbf16, #tpu.memory_space<vmem>>, vector<1x4x128xbf16>
    %142 = vector.shape_cast %141 : vector<1x4x128xbf16> to vector<4x128xbf16>
    %cst_139 = arith.constant dense<0.000000e+00> : vector<64x128xf32>
    %143 = tpu.matmul %140, %142, %cst_139 {dimension_numbers = #tpu.dot_dimension_numbers<[1], [0], [0], [1], [0, 0, 1, 1], [], []>} : vector<64x4xbf16>, vector<4x128xbf16>, vector<64x128xf32> -> vector<64x128xf32>
    %144 = arith.addf %136, %143 : vector<64x128xf32>
    %c0_140 = arith.constant 0 : index
    %c1_141 = arith.constant 1 : index
    %c0_142 = arith.constant 0 : index
    %c0_143 = arith.constant 0 : index
    %c0_144 = arith.constant 0 : index
    %145 = vector.load %arg1[%c0_140, %c1_141, %c0_142, %c0_143, %c0_144] : memref<1x40x5x5x4xf32, #tpu.memory_space<vmem>>, vector<1x4x4x4x4xf32>
    %146 = vector.shape_cast %145 : vector<1x4x4x4x4xf32> to vector<4x4x4x4xf32>
    %147 = vector.shape_cast %146 : vector<4x4x4x4xf32> to vector<64x4xf32>
    %148 = arith.truncf %147 : vector<64x4xf32> to vector<64x4xbf16>
    %c18 = arith.constant 18 : index
    %c0_145 = arith.constant 0 : index
    %c0_146 = arith.constant 0 : index
    %149 = vector.load %arg2[%c18, %c0_145, %c0_146] : memref<27x4x128xbf16, #tpu.memory_space<vmem>>, vector<1x4x128xbf16>
    %150 = vector.shape_cast %149 : vector<1x4x128xbf16> to vector<4x128xbf16>
    %cst_147 = arith.constant dense<0.000000e+00> : vector<64x128xf32>
    %151 = tpu.matmul %148, %150, %cst_147 {dimension_numbers = #tpu.dot_dimension_numbers<[1], [0], [0], [1], [0, 0, 1, 1], [], []>} : vector<64x4xbf16>, vector<4x128xbf16>, vector<64x128xf32> -> vector<64x128xf32>
    %152 = arith.addf %144, %151 : vector<64x128xf32>
    %c0_148 = arith.constant 0 : index
    %c6_149 = arith.constant 6 : index
    %c0_150 = arith.constant 0 : index
    %c0_151 = arith.constant 0 : index
    %c0_152 = arith.constant 0 : index
    %153 = vector.load %arg1[%c0_148, %c6_149, %c0_150, %c0_151, %c0_152] : memref<1x40x5x5x4xf32, #tpu.memory_space<vmem>>, vector<1x4x4x4x4xf32>
    %154 = vector.shape_cast %153 : vector<1x4x4x4x4xf32> to vector<4x4x4x4xf32>
    %155 = vector.shape_cast %154 : vector<4x4x4x4xf32> to vector<64x4xf32>
    %156 = arith.truncf %155 : vector<64x4xf32> to vector<64x4xbf16>
    %c19 = arith.constant 19 : index
    %c0_153 = arith.constant 0 : index
    %c0_154 = arith.constant 0 : index
    %157 = vector.load %arg2[%c19, %c0_153, %c0_154] : memref<27x4x128xbf16, #tpu.memory_space<vmem>>, vector<1x4x128xbf16>
    %158 = vector.shape_cast %157 : vector<1x4x128xbf16> to vector<4x128xbf16>
    %cst_155 = arith.constant dense<0.000000e+00> : vector<64x128xf32>
    %159 = tpu.matmul %156, %158, %cst_155 {dimension_numbers = #tpu.dot_dimension_numbers<[1], [0], [0], [1], [0, 0, 1, 1], [], []>} : vector<64x4xbf16>, vector<4x128xbf16>, vector<64x128xf32> -> vector<64x128xf32>
    %160 = arith.addf %152, %159 : vector<64x128xf32>
    %c0_156 = arith.constant 0 : index
    %c1_157 = arith.constant 1 : index
    %c0_158 = arith.constant 0 : index
    %c1_159 = arith.constant 1 : index
    %c0_160 = arith.constant 0 : index
    %161 = vector.load %arg1[%c0_156, %c1_157, %c0_158, %c1_159, %c0_160] : memref<1x40x5x5x4xf32, #tpu.memory_space<vmem>>, vector<1x4x4x4x4xf32>
    %162 = vector.shape_cast %161 : vector<1x4x4x4x4xf32> to vector<4x4x4x4xf32>
    %163 = vector.shape_cast %162 : vector<4x4x4x4xf32> to vector<64x4xf32>
    %164 = arith.truncf %163 : vector<64x4xf32> to vector<64x4xbf16>
    %c20_161 = arith.constant 20 : index
    %c0_162 = arith.constant 0 : index
    %c0_163 = arith.constant 0 : index
    %165 = vector.load %arg2[%c20_161, %c0_162, %c0_163] : memref<27x4x128xbf16, #tpu.memory_space<vmem>>, vector<1x4x128xbf16>
    %166 = vector.shape_cast %165 : vector<1x4x128xbf16> to vector<4x128xbf16>
    %cst_164 = arith.constant dense<0.000000e+00> : vector<64x128xf32>
    %167 = tpu.matmul %164, %166, %cst_164 {dimension_numbers = #tpu.dot_dimension_numbers<[1], [0], [0], [1], [0, 0, 1, 1], [], []>} : vector<64x4xbf16>, vector<4x128xbf16>, vector<64x128xf32> -> vector<64x128xf32>
    %168 = arith.addf %160, %167 : vector<64x128xf32>
    %c0_165 = arith.constant 0 : index
    %c11_166 = arith.constant 11 : index
    %c0_167 = arith.constant 0 : index
    %c0_168 = arith.constant 0 : index
    %c0_169 = arith.constant 0 : index
    %169 = vector.load %arg1[%c0_165, %c11_166, %c0_167, %c0_168, %c0_169] : memref<1x40x5x5x4xf32, #tpu.memory_space<vmem>>, vector<1x4x4x4x4xf32>
    %170 = vector.shape_cast %169 : vector<1x4x4x4x4xf32> to vector<4x4x4x4xf32>
    %171 = vector.shape_cast %170 : vector<4x4x4x4xf32> to vector<64x4xf32>
    %172 = arith.truncf %171 : vector<64x4xf32> to vector<64x4xbf16>
    %c21 = arith.constant 21 : index
    %c0_170 = arith.constant 0 : index
    %c0_171 = arith.constant 0 : index
    %173 = vector.load %arg2[%c21, %c0_170, %c0_171] : memref<27x4x128xbf16, #tpu.memory_space<vmem>>, vector<1x4x128xbf16>
    %174 = vector.shape_cast %173 : vector<1x4x128xbf16> to vector<4x128xbf16>
    %cst_172 = arith.constant dense<0.000000e+00> : vector<64x128xf32>
    %175 = tpu.matmul %172, %174, %cst_172 {dimension_numbers = #tpu.dot_dimension_numbers<[1], [0], [0], [1], [0, 0, 1, 1], [], []>} : vector<64x4xbf16>, vector<4x128xbf16>, vector<64x128xf32> -> vector<64x128xf32>
    %176 = arith.addf %168, %175 : vector<64x128xf32>
    %c0_173 = arith.constant 0 : index
    %c16_174 = arith.constant 16 : index
    %c0_175 = arith.constant 0 : index
    %c0_176 = arith.constant 0 : index
    %c0_177 = arith.constant 0 : index
    %177 = vector.load %arg1[%c0_173, %c16_174, %c0_175, %c0_176, %c0_177] : memref<1x40x5x5x4xf32, #tpu.memory_space<vmem>>, vector<1x4x4x4x4xf32>
    %178 = vector.shape_cast %177 : vector<1x4x4x4x4xf32> to vector<4x4x4x4xf32>
    %179 = vector.shape_cast %178 : vector<4x4x4x4xf32> to vector<64x4xf32>
    %180 = arith.truncf %179 : vector<64x4xf32> to vector<64x4xbf16>
    %c22 = arith.constant 22 : index
    %c0_178 = arith.constant 0 : index
    %c0_179 = arith.constant 0 : index
    %181 = vector.load %arg2[%c22, %c0_178, %c0_179] : memref<27x4x128xbf16, #tpu.memory_space<vmem>>, vector<1x4x128xbf16>
    %182 = vector.shape_cast %181 : vector<1x4x128xbf16> to vector<4x128xbf16>
    %cst_180 = arith.constant dense<0.000000e+00> : vector<64x128xf32>
    %183 = tpu.matmul %180, %182, %cst_180 {dimension_numbers = #tpu.dot_dimension_numbers<[1], [0], [0], [1], [0, 0, 1, 1], [], []>} : vector<64x4xbf16>, vector<4x128xbf16>, vector<64x128xf32> -> vector<64x128xf32>
    %184 = arith.addf %176, %183 : vector<64x128xf32>
    %c0_181 = arith.constant 0 : index
    %c11_182 = arith.constant 11 : index
    %c0_183 = arith.constant 0 : index
    %c1_184 = arith.constant 1 : index
    %c0_185 = arith.constant 0 : index
    %185 = vector.load %arg1[%c0_181, %c11_182, %c0_183, %c1_184, %c0_185] : memref<1x40x5x5x4xf32, #tpu.memory_space<vmem>>, vector<1x4x4x4x4xf32>
    %186 = vector.shape_cast %185 : vector<1x4x4x4x4xf32> to vector<4x4x4x4xf32>
    %187 = vector.shape_cast %186 : vector<4x4x4x4xf32> to vector<64x4xf32>
    %188 = arith.truncf %187 : vector<64x4xf32> to vector<64x4xbf16>
    %c23 = arith.constant 23 : index
    %c0_186 = arith.constant 0 : index
    %c0_187 = arith.constant 0 : index
    %189 = vector.load %arg2[%c23, %c0_186, %c0_187] : memref<27x4x128xbf16, #tpu.memory_space<vmem>>, vector<1x4x128xbf16>
    %190 = vector.shape_cast %189 : vector<1x4x128xbf16> to vector<4x128xbf16>
    %cst_188 = arith.constant dense<0.000000e+00> : vector<64x128xf32>
    %191 = tpu.matmul %188, %190, %cst_188 {dimension_numbers = #tpu.dot_dimension_numbers<[1], [0], [0], [1], [0, 0, 1, 1], [], []>} : vector<64x4xbf16>, vector<4x128xbf16>, vector<64x128xf32> -> vector<64x128xf32>
    %192 = arith.addf %184, %191 : vector<64x128xf32>
    %c0_189 = arith.constant 0 : index
    %c1_190 = arith.constant 1 : index
    %c1_191 = arith.constant 1 : index
    %c0_192 = arith.constant 0 : index
    %c0_193 = arith.constant 0 : index
    %193 = vector.load %arg1[%c0_189, %c1_190, %c1_191, %c0_192, %c0_193] : memref<1x40x5x5x4xf32, #tpu.memory_space<vmem>>, vector<1x4x4x4x4xf32>
    %194 = vector.shape_cast %193 : vector<1x4x4x4x4xf32> to vector<4x4x4x4xf32>
    %195 = vector.shape_cast %194 : vector<4x4x4x4xf32> to vector<64x4xf32>
    %196 = arith.truncf %195 : vector<64x4xf32> to vector<64x4xbf16>
    %c24 = arith.constant 24 : index
    %c0_194 = arith.constant 0 : index
    %c0_195 = arith.constant 0 : index
    %197 = vector.load %arg2[%c24, %c0_194, %c0_195] : memref<27x4x128xbf16, #tpu.memory_space<vmem>>, vector<1x4x128xbf16>
    %198 = vector.shape_cast %197 : vector<1x4x128xbf16> to vector<4x128xbf16>
    %cst_196 = arith.constant dense<0.000000e+00> : vector<64x128xf32>
    %199 = tpu.matmul %196, %198, %cst_196 {dimension_numbers = #tpu.dot_dimension_numbers<[1], [0], [0], [1], [0, 0, 1, 1], [], []>} : vector<64x4xbf16>, vector<4x128xbf16>, vector<64x128xf32> -> vector<64x128xf32>
    %200 = arith.addf %192, %199 : vector<64x128xf32>
    %c0_197 = arith.constant 0 : index
    %c6_198 = arith.constant 6 : index
    %c1_199 = arith.constant 1 : index
    %c0_200 = arith.constant 0 : index
    %c0_201 = arith.constant 0 : index
    %201 = vector.load %arg1[%c0_197, %c6_198, %c1_199, %c0_200, %c0_201] : memref<1x40x5x5x4xf32, #tpu.memory_space<vmem>>, vector<1x4x4x4x4xf32>
    %202 = vector.shape_cast %201 : vector<1x4x4x4x4xf32> to vector<4x4x4x4xf32>
    %203 = vector.shape_cast %202 : vector<4x4x4x4xf32> to vector<64x4xf32>
    %204 = arith.truncf %203 : vector<64x4xf32> to vector<64x4xbf16>
    %c25_202 = arith.constant 25 : index
    %c0_203 = arith.constant 0 : index
    %c0_204 = arith.constant 0 : index
    %205 = vector.load %arg2[%c25_202, %c0_203, %c0_204] : memref<27x4x128xbf16, #tpu.memory_space<vmem>>, vector<1x4x128xbf16>
    %206 = vector.shape_cast %205 : vector<1x4x128xbf16> to vector<4x128xbf16>
    %cst_205 = arith.constant dense<0.000000e+00> : vector<64x128xf32>
    %207 = tpu.matmul %204, %206, %cst_205 {dimension_numbers = #tpu.dot_dimension_numbers<[1], [0], [0], [1], [0, 0, 1, 1], [], []>} : vector<64x4xbf16>, vector<4x128xbf16>, vector<64x128xf32> -> vector<64x128xf32>
    %208 = arith.addf %200, %207 : vector<64x128xf32>
    %c0_206 = arith.constant 0 : index
    %c1_207 = arith.constant 1 : index
    %c1_208 = arith.constant 1 : index
    %c1_209 = arith.constant 1 : index
    %c0_210 = arith.constant 0 : index
    %209 = vector.load %arg1[%c0_206, %c1_207, %c1_208, %c1_209, %c0_210] : memref<1x40x5x5x4xf32, #tpu.memory_space<vmem>>, vector<1x4x4x4x4xf32>
    %210 = vector.shape_cast %209 : vector<1x4x4x4x4xf32> to vector<4x4x4x4xf32>
    %211 = vector.shape_cast %210 : vector<4x4x4x4xf32> to vector<64x4xf32>
    %212 = arith.truncf %211 : vector<64x4xf32> to vector<64x4xbf16>
    %c26 = arith.constant 26 : index
    %c0_211 = arith.constant 0 : index
    %c0_212 = arith.constant 0 : index
    %213 = vector.load %arg2[%c26, %c0_211, %c0_212] : memref<27x4x128xbf16, #tpu.memory_space<vmem>>, vector<1x4x128xbf16>
    %214 = vector.shape_cast %213 : vector<1x4x128xbf16> to vector<4x128xbf16>
    %cst_213 = arith.constant dense<0.000000e+00> : vector<64x128xf32>
    %215 = tpu.matmul %212, %214, %cst_213 {dimension_numbers = #tpu.dot_dimension_numbers<[1], [0], [0], [1], [0, 0, 1, 1], [], []>} : vector<64x4xbf16>, vector<4x128xbf16>, vector<64x128xf32> -> vector<64x128xf32>
    %216 = arith.addf %208, %215 : vector<64x128xf32>
    %c0_214 = arith.constant 0 : index
    %c0_215 = arith.constant 0 : index
    %217 = vector.load %arg3[%c0_214, %c0_215] : memref<1x128xf32, #tpu.memory_space<vmem>>, vector<1x128xf32>
    %218 = vector.broadcast %217 : vector<1x128xf32> to vector<64x128xf32>
    %219 = arith.addf %216, %218 : vector<64x128xf32>
    %220 = vector.shape_cast %219 : vector<64x128xf32> to vector<1x64x128xf32>
    %c0_216 = arith.constant 0 : index
    %c0_217 = arith.constant 0 : index
    %c0_218 = arith.constant 0 : index
    %221 = vector.load %arg4[%c0_216, %c0_217, %c0_218] : memref<1x64x128xf32, #tpu.memory_space<vmem>>, vector<1x64x128xf32>
    tpu.vector_store %arg4[%c0_216, %c0_217, %c0_218], %220 {strides = array<i32>} : memref<1x64x128xf32, #tpu.memory_space<vmem>>, vector<1x64x128xf32>,
    %cst_219 = arith.constant dense<0.000000e+00> : vector<128xf32>
    %222 = vector.multi_reduction <add>, %219, %cst_219 [0] : vector<64x128xf32> to vector<128xf32>
    %223 = vector.shape_cast %222 : vector<128xf32> to vector<1x1x128xf32>
    %c0_220 = arith.constant 0 : index
    %c0_221 = arith.constant 0 : index
    %c0_222 = arith.constant 0 : index
    %224 = vector.load %arg5[%c0_220, %c0_221, %c0_222] : memref<1x1x128xf32, #tpu.memory_space<vmem>>, vector<1x1x128xf32>
    tpu.vector_store %arg5[%c0_220, %c0_221, %c0_222], %223 {strides = array<i32>} : memref<1x1x128xf32, #tpu.memory_space<vmem>>, vector<1x1x128xf32>,
    %225 = arith.mulf %219, %219 : vector<64x128xf32>
    %cst_223 = arith.constant dense<0.000000e+00> : vector<128xf32>
    %226 = vector.multi_reduction <add>, %225, %cst_223 [0] : vector<64x128xf32> to vector<128xf32>
    %227 = vector.shape_cast %226 : vector<128xf32> to vector<1x1x128xf32>
    %c0_224 = arith.constant 0 : index
    %c0_225 = arith.constant 0 : index
    %c0_226 = arith.constant 0 : index
    %228 = vector.load %arg6[%c0_224, %c0_225, %c0_226] : memref<1x1x128xf32, #tpu.memory_space<vmem>>, vector<1x1x128xf32>
    tpu.vector_store %arg6[%c0_224, %c0_225, %c0_226], %227 {strides = array<i32>} : memref<1x1x128xf32, #tpu.memory_space<vmem>>, vector<1x1x128xf32>,
    return
  }
  func.func @transform_0(%arg0: i32) -> (i32, i32, i32, i32, i32) {
    %c0_i32 = arith.constant 0 : i32
    %c0_i32_0 = arith.constant 0 : i32
    %c0_i32_1 = arith.constant 0 : i32
    %c0_i32_2 = arith.constant 0 : i32
    %c0_i32_3 = arith.constant 0 : i32
    return %arg0, %c0_i32, %c0_i32_0, %c0_i32_1, %c0_i32_2 : i32, i32, i32, i32, i32
  }
  func.func @transform_1(%arg0: i32) -> (i32, i32, i32) {
    %c0_i32 = arith.constant 0 : i32
    %c0_i32_0 = arith.constant 0 : i32
    %c0_i32_1 = arith.constant 0 : i32
    %c0_i32_2 = arith.constant 0 : i32
    return %c0_i32, %c0_i32_0, %c0_i32_1 : i32, i32, i32
  }
  func.func @transform_2(%arg0: i32) -> (i32, i32) {
    %c0_i32 = arith.constant 0 : i32
    %c0_i32_0 = arith.constant 0 : i32
    %c0_i32_1 = arith.constant 0 : i32
    return %c0_i32, %c0_i32_0 : i32, i32
  }
  func.func @transform_3(%arg0: i32) -> (i32, i32, i32) {
    %c0_i32 = arith.constant 0 : i32
    %c0_i32_0 = arith.constant 0 : i32
    %c0_i32_1 = arith.constant 0 : i32
    return %arg0, %c0_i32, %c0_i32_0 : i32, i32, i32
  }
  func.func @transform_4(%arg0: i32) -> (i32, i32, i32) {
    %c0_i32 = arith.constant 0 : i32
    %c0_i32_0 = arith.constant 0 : i32
    %c0_i32_1 = arith.constant 0 : i32
    return %arg0, %c0_i32, %c0_i32_0 : i32, i32, i32
  }
  func.func @transform_5(%arg0: i32) -> (i32, i32, i32) {
    %c0_i32 = arith.constant 0 : i32
    %c0_i32_0 = arith.constant 0 : i32
    %c0_i32_1 = arith.constant 0 : i32
    return %arg0, %c0_i32, %c0_i32_0 : i32, i32, i32
  }
}

module attributes {stable_mosaic.version = 11 : i64} {
  func.func @conv3d_stats_kernel(%arg0: i32, %arg1: memref<1x6x6x6x128xf32, #tpu.memory_space<vmem>>, %arg2: memref<27x128x128xbf16, #tpu.memory_space<vmem>>, %arg3: memref<1x128xf32, #tpu.memory_space<vmem>>, %arg4: memref<1x64x128xf32, #tpu.memory_space<vmem>>, %arg5: memref<1x1x128xf32, #tpu.memory_space<vmem>>, %arg6: memref<1x1x128xf32, #tpu.memory_space<vmem>>) attributes {dimension_semantics = [#tpu.dimension_semantics<parallel>], iteration_bounds = array<i64: 2>, scalar_prefetch = 0 : i64, scratch_operands = 0 : i64, tpu.core_type = #tpu.core_type<tc>, window_params = [{transform_indices = @transform_0, window_bounds = array<i64: 1, 6, 6, 6, 128>}, {pipeline_mode = #tpu.pipeline_mode<synchronous>, transform_indices = @transform_1, window_bounds = array<i64: 27, 128, 128>}, {pipeline_mode = #tpu.pipeline_mode<synchronous>, transform_indices = @transform_2, window_bounds = array<i64: 1, 128>}, {transform_indices = @transform_3, window_bounds = array<i64: 1, 64, 128>}, {transform_indices = @transform_4, window_bounds = array<i64: 1, 1, 128>}, {transform_indices = @transform_5, window_bounds = array<i64: 1, 1, 128>}]} {
    %cst = arith.constant 0.000000e+00 : f32
    %0 = vector.broadcast %cst : f32 to vector<64x128xf32>
    %c0 = arith.constant 0 : index
    %c0_0 = arith.constant 0 : index
    %c0_1 = arith.constant 0 : index
    %c0_2 = arith.constant 0 : index
    %c0_3 = arith.constant 0 : index
    %1 = vector.load %arg1[%c0, %c0_0, %c0_1, %c0_2, %c0_3] : memref<1x6x6x6x128xf32, #tpu.memory_space<vmem>>, vector<1x4x4x4x128xf32>
    %2 = vector.shape_cast %1 : vector<1x4x4x4x128xf32> to vector<4x4x4x128xf32>
    %3 = vector.shape_cast %2 : vector<4x4x4x128xf32> to vector<64x128xf32>
    %4 = arith.truncf %3 : vector<64x128xf32> to vector<64x128xbf16>
    %c0_4 = arith.constant 0 : index
    %c0_5 = arith.constant 0 : index
    %c0_6 = arith.constant 0 : index
    %5 = vector.load %arg2[%c0_4, %c0_5, %c0_6] : memref<27x128x128xbf16, #tpu.memory_space<vmem>>, vector<1x128x128xbf16>
    %6 = vector.shape_cast %5 : vector<1x128x128xbf16> to vector<128x128xbf16>
    %cst_7 = arith.constant dense<0.000000e+00> : vector<64x128xf32>
    %7 = tpu.matmul %4, %6, %cst_7 {dimension_numbers = #tpu.dot_dimension_numbers<[1], [0], [0], [1], [0, 0, 1, 1], [], []>} : vector<64x128xbf16>, vector<128x128xbf16>, vector<64x128xf32> -> vector<64x128xf32>
    %8 = arith.addf %0, %7 : vector<64x128xf32>
    %c0_8 = arith.constant 0 : index
    %c0_9 = arith.constant 0 : index
    %c0_10 = arith.constant 0 : index
    %c1 = arith.constant 1 : index
    %c0_11 = arith.constant 0 : index
    %9 = vector.load %arg1[%c0_8, %c0_9, %c0_10, %c1, %c0_11] : memref<1x6x6x6x128xf32, #tpu.memory_space<vmem>>, vector<1x4x4x4x128xf32>
    %10 = vector.shape_cast %9 : vector<1x4x4x4x128xf32> to vector<4x4x4x128xf32>
    %11 = vector.shape_cast %10 : vector<4x4x4x128xf32> to vector<64x128xf32>
    %12 = arith.truncf %11 : vector<64x128xf32> to vector<64x128xbf16>
    %c1_12 = arith.constant 1 : index
    %c0_13 = arith.constant 0 : index
    %c0_14 = arith.constant 0 : index
    %13 = vector.load %arg2[%c1_12, %c0_13, %c0_14] : memref<27x128x128xbf16, #tpu.memory_space<vmem>>, vector<1x128x128xbf16>
    %14 = vector.shape_cast %13 : vector<1x128x128xbf16> to vector<128x128xbf16>
    %cst_15 = arith.constant dense<0.000000e+00> : vector<64x128xf32>
    %15 = tpu.matmul %12, %14, %cst_15 {dimension_numbers = #tpu.dot_dimension_numbers<[1], [0], [0], [1], [0, 0, 1, 1], [], []>} : vector<64x128xbf16>, vector<128x128xbf16>, vector<64x128xf32> -> vector<64x128xf32>
    %16 = arith.addf %8, %15 : vector<64x128xf32>
    %c0_16 = arith.constant 0 : index
    %c0_17 = arith.constant 0 : index
    %c0_18 = arith.constant 0 : index
    %c2 = arith.constant 2 : index
    %c0_19 = arith.constant 0 : index
    %17 = vector.load %arg1[%c0_16, %c0_17, %c0_18, %c2, %c0_19] : memref<1x6x6x6x128xf32, #tpu.memory_space<vmem>>, vector<1x4x4x4x128xf32>
    %18 = vector.shape_cast %17 : vector<1x4x4x4x128xf32> to vector<4x4x4x128xf32>
    %19 = vector.shape_cast %18 : vector<4x4x4x128xf32> to vector<64x128xf32>
    %20 = arith.truncf %19 : vector<64x128xf32> to vector<64x128xbf16>
    %c2_20 = arith.constant 2 : index
    %c0_21 = arith.constant 0 : index
    %c0_22 = arith.constant 0 : index
    %21 = vector.load %arg2[%c2_20, %c0_21, %c0_22] : memref<27x128x128xbf16, #tpu.memory_space<vmem>>, vector<1x128x128xbf16>
    %22 = vector.shape_cast %21 : vector<1x128x128xbf16> to vector<128x128xbf16>
    %cst_23 = arith.constant dense<0.000000e+00> : vector<64x128xf32>
    %23 = tpu.matmul %20, %22, %cst_23 {dimension_numbers = #tpu.dot_dimension_numbers<[1], [0], [0], [1], [0, 0, 1, 1], [], []>} : vector<64x128xbf16>, vector<128x128xbf16>, vector<64x128xf32> -> vector<64x128xf32>
    %24 = arith.addf %16, %23 : vector<64x128xf32>
    %c0_24 = arith.constant 0 : index
    %c0_25 = arith.constant 0 : index
    %c1_26 = arith.constant 1 : index
    %c0_27 = arith.constant 0 : index
    %c0_28 = arith.constant 0 : index
    %25 = vector.load %arg1[%c0_24, %c0_25, %c1_26, %c0_27, %c0_28] : memref<1x6x6x6x128xf32, #tpu.memory_space<vmem>>, vector<1x4x4x4x128xf32>
    %26 = vector.shape_cast %25 : vector<1x4x4x4x128xf32> to vector<4x4x4x128xf32>
    %27 = vector.shape_cast %26 : vector<4x4x4x128xf32> to vector<64x128xf32>
    %28 = arith.truncf %27 : vector<64x128xf32> to vector<64x128xbf16>
    %c3 = arith.constant 3 : index
    %c0_29 = arith.constant 0 : index
    %c0_30 = arith.constant 0 : index
    %29 = vector.load %arg2[%c3, %c0_29, %c0_30] : memref<27x128x128xbf16, #tpu.memory_space<vmem>>, vector<1x128x128xbf16>
    %30 = vector.shape_cast %29 : vector<1x128x128xbf16> to vector<128x128xbf16>
    %cst_31 = arith.constant dense<0.000000e+00> : vector<64x128xf32>
    %31 = tpu.matmul %28, %30, %cst_31 {dimension_numbers = #tpu.dot_dimension_numbers<[1], [0], [0], [1], [0, 0, 1, 1], [], []>} : vector<64x128xbf16>, vector<128x128xbf16>, vector<64x128xf32> -> vector<64x128xf32>
    %32 = arith.addf %24, %31 : vector<64x128xf32>
    %c0_32 = arith.constant 0 : index
    %c0_33 = arith.constant 0 : index
    %c1_34 = arith.constant 1 : index
    %c1_35 = arith.constant 1 : index
    %c0_36 = arith.constant 0 : index
    %33 = vector.load %arg1[%c0_32, %c0_33, %c1_34, %c1_35, %c0_36] : memref<1x6x6x6x128xf32, #tpu.memory_space<vmem>>, vector<1x4x4x4x128xf32>
    %34 = vector.shape_cast %33 : vector<1x4x4x4x128xf32> to vector<4x4x4x128xf32>
    %35 = vector.shape_cast %34 : vector<4x4x4x128xf32> to vector<64x128xf32>
    %36 = arith.truncf %35 : vector<64x128xf32> to vector<64x128xbf16>
    %c4 = arith.constant 4 : index
    %c0_37 = arith.constant 0 : index
    %c0_38 = arith.constant 0 : index
    %37 = vector.load %arg2[%c4, %c0_37, %c0_38] : memref<27x128x128xbf16, #tpu.memory_space<vmem>>, vector<1x128x128xbf16>
    %38 = vector.shape_cast %37 : vector<1x128x128xbf16> to vector<128x128xbf16>
    %cst_39 = arith.constant dense<0.000000e+00> : vector<64x128xf32>
    %39 = tpu.matmul %36, %38, %cst_39 {dimension_numbers = #tpu.dot_dimension_numbers<[1], [0], [0], [1], [0, 0, 1, 1], [], []>} : vector<64x128xbf16>, vector<128x128xbf16>, vector<64x128xf32> -> vector<64x128xf32>
    %40 = arith.addf %32, %39 : vector<64x128xf32>
    %c0_40 = arith.constant 0 : index
    %c0_41 = arith.constant 0 : index
    %c1_42 = arith.constant 1 : index
    %c2_43 = arith.constant 2 : index
    %c0_44 = arith.constant 0 : index
    %41 = vector.load %arg1[%c0_40, %c0_41, %c1_42, %c2_43, %c0_44] : memref<1x6x6x6x128xf32, #tpu.memory_space<vmem>>, vector<1x4x4x4x128xf32>
    %42 = vector.shape_cast %41 : vector<1x4x4x4x128xf32> to vector<4x4x4x128xf32>
    %43 = vector.shape_cast %42 : vector<4x4x4x128xf32> to vector<64x128xf32>
    %44 = arith.truncf %43 : vector<64x128xf32> to vector<64x128xbf16>
    %c5 = arith.constant 5 : index
    %c0_45 = arith.constant 0 : index
    %c0_46 = arith.constant 0 : index
    %45 = vector.load %arg2[%c5, %c0_45, %c0_46] : memref<27x128x128xbf16, #tpu.memory_space<vmem>>, vector<1x128x128xbf16>
    %46 = vector.shape_cast %45 : vector<1x128x128xbf16> to vector<128x128xbf16>
    %cst_47 = arith.constant dense<0.000000e+00> : vector<64x128xf32>
    %47 = tpu.matmul %44, %46, %cst_47 {dimension_numbers = #tpu.dot_dimension_numbers<[1], [0], [0], [1], [0, 0, 1, 1], [], []>} : vector<64x128xbf16>, vector<128x128xbf16>, vector<64x128xf32> -> vector<64x128xf32>
    %48 = arith.addf %40, %47 : vector<64x128xf32>
    %c0_48 = arith.constant 0 : index
    %c0_49 = arith.constant 0 : index
    %c2_50 = arith.constant 2 : index
    %c0_51 = arith.constant 0 : index
    %c0_52 = arith.constant 0 : index
    %49 = vector.load %arg1[%c0_48, %c0_49, %c2_50, %c0_51, %c0_52] : memref<1x6x6x6x128xf32, #tpu.memory_space<vmem>>, vector<1x4x4x4x128xf32>
    %50 = vector.shape_cast %49 : vector<1x4x4x4x128xf32> to vector<4x4x4x128xf32>
    %51 = vector.shape_cast %50 : vector<4x4x4x128xf32> to vector<64x128xf32>
    %52 = arith.truncf %51 : vector<64x128xf32> to vector<64x128xbf16>
    %c6 = arith.constant 6 : index
    %c0_53 = arith.constant 0 : index
    %c0_54 = arith.constant 0 : index
    %53 = vector.load %arg2[%c6, %c0_53, %c0_54] : memref<27x128x128xbf16, #tpu.memory_space<vmem>>, vector<1x128x128xbf16>
    %54 = vector.shape_cast %53 : vector<1x128x128xbf16> to vector<128x128xbf16>
    %cst_55 = arith.constant dense<0.000000e+00> : vector<64x128xf32>
    %55 = tpu.matmul %52, %54, %cst_55 {dimension_numbers = #tpu.dot_dimension_numbers<[1], [0], [0], [1], [0, 0, 1, 1], [], []>} : vector<64x128xbf16>, vector<128x128xbf16>, vector<64x128xf32> -> vector<64x128xf32>
    %56 = arith.addf %48, %55 : vector<64x128xf32>
    %c0_56 = arith.constant 0 : index
    %c0_57 = arith.constant 0 : index
    %c2_58 = arith.constant 2 : index
    %c1_59 = arith.constant 1 : index
    %c0_60 = arith.constant 0 : index
    %57 = vector.load %arg1[%c0_56, %c0_57, %c2_58, %c1_59, %c0_60] : memref<1x6x6x6x128xf32, #tpu.memory_space<vmem>>, vector<1x4x4x4x128xf32>
    %58 = vector.shape_cast %57 : vector<1x4x4x4x128xf32> to vector<4x4x4x128xf32>
    %59 = vector.shape_cast %58 : vector<4x4x4x128xf32> to vector<64x128xf32>
    %60 = arith.truncf %59 : vector<64x128xf32> to vector<64x128xbf16>
    %c7 = arith.constant 7 : index
    %c0_61 = arith.constant 0 : index
    %c0_62 = arith.constant 0 : index
    %61 = vector.load %arg2[%c7, %c0_61, %c0_62] : memref<27x128x128xbf16, #tpu.memory_space<vmem>>, vector<1x128x128xbf16>
    %62 = vector.shape_cast %61 : vector<1x128x128xbf16> to vector<128x128xbf16>
    %cst_63 = arith.constant dense<0.000000e+00> : vector<64x128xf32>
    %63 = tpu.matmul %60, %62, %cst_63 {dimension_numbers = #tpu.dot_dimension_numbers<[1], [0], [0], [1], [0, 0, 1, 1], [], []>} : vector<64x128xbf16>, vector<128x128xbf16>, vector<64x128xf32> -> vector<64x128xf32>
    %64 = arith.addf %56, %63 : vector<64x128xf32>
    %c0_64 = arith.constant 0 : index
    %c0_65 = arith.constant 0 : index
    %c2_66 = arith.constant 2 : index
    %c2_67 = arith.constant 2 : index
    %c0_68 = arith.constant 0 : index
    %65 = vector.load %arg1[%c0_64, %c0_65, %c2_66, %c2_67, %c0_68] : memref<1x6x6x6x128xf32, #tpu.memory_space<vmem>>, vector<1x4x4x4x128xf32>
    %66 = vector.shape_cast %65 : vector<1x4x4x4x128xf32> to vector<4x4x4x128xf32>
    %67 = vector.shape_cast %66 : vector<4x4x4x128xf32> to vector<64x128xf32>
    %68 = arith.truncf %67 : vector<64x128xf32> to vector<64x128xbf16>
    %c8 = arith.constant 8 : index
    %c0_69 = arith.constant 0 : index
    %c0_70 = arith.constant 0 : index
    %69 = vector.load %arg2[%c8, %c0_69, %c0_70] : memref<27x128x128xbf16, #tpu.memory_space<vmem>>, vector<1x128x128xbf16>
    %70 = vector.shape_cast %69 : vector<1x128x128xbf16> to vector<128x128xbf16>
    %cst_71 = arith.constant dense<0.000000e+00> : vector<64x128xf32>
    %71 = tpu.matmul %68, %70, %cst_71 {dimension_numbers = #tpu.dot_dimension_numbers<[1], [0], [0], [1], [0, 0, 1, 1], [], []>} : vector<64x128xbf16>, vector<128x128xbf16>, vector<64x128xf32> -> vector<64x128xf32>
    %72 = arith.addf %64, %71 : vector<64x128xf32>
    %c0_72 = arith.constant 0 : index
    %c1_73 = arith.constant 1 : index
    %c0_74 = arith.constant 0 : index
    %c0_75 = arith.constant 0 : index
    %c0_76 = arith.constant 0 : index
    %73 = vector.load %arg1[%c0_72, %c1_73, %c0_74, %c0_75, %c0_76] : memref<1x6x6x6x128xf32, #tpu.memory_space<vmem>>, vector<1x4x4x4x128xf32>
    %74 = vector.shape_cast %73 : vector<1x4x4x4x128xf32> to vector<4x4x4x128xf32>
    %75 = vector.shape_cast %74 : vector<4x4x4x128xf32> to vector<64x128xf32>
    %76 = arith.truncf %75 : vector<64x128xf32> to vector<64x128xbf16>
    %c9 = arith.constant 9 : index
    %c0_77 = arith.constant 0 : index
    %c0_78 = arith.constant 0 : index
    %77 = vector.load %arg2[%c9, %c0_77, %c0_78] : memref<27x128x128xbf16, #tpu.memory_space<vmem>>, vector<1x128x128xbf16>
    %78 = vector.shape_cast %77 : vector<1x128x128xbf16> to vector<128x128xbf16>
    %cst_79 = arith.constant dense<0.000000e+00> : vector<64x128xf32>
    %79 = tpu.matmul %76, %78, %cst_79 {dimension_numbers = #tpu.dot_dimension_numbers<[1], [0], [0], [1], [0, 0, 1, 1], [], []>} : vector<64x128xbf16>, vector<128x128xbf16>, vector<64x128xf32> -> vector<64x128xf32>
    %80 = arith.addf %72, %79 : vector<64x128xf32>
    %c0_80 = arith.constant 0 : index
    %c1_81 = arith.constant 1 : index
    %c0_82 = arith.constant 0 : index
    %c1_83 = arith.constant 1 : index
    %c0_84 = arith.constant 0 : index
    %81 = vector.load %arg1[%c0_80, %c1_81, %c0_82, %c1_83, %c0_84] : memref<1x6x6x6x128xf32, #tpu.memory_space<vmem>>, vector<1x4x4x4x128xf32>
    %82 = vector.shape_cast %81 : vector<1x4x4x4x128xf32> to vector<4x4x4x128xf32>
    %83 = vector.shape_cast %82 : vector<4x4x4x128xf32> to vector<64x128xf32>
    %84 = arith.truncf %83 : vector<64x128xf32> to vector<64x128xbf16>
    %c10 = arith.constant 10 : index
    %c0_85 = arith.constant 0 : index
    %c0_86 = arith.constant 0 : index
    %85 = vector.load %arg2[%c10, %c0_85, %c0_86] : memref<27x128x128xbf16, #tpu.memory_space<vmem>>, vector<1x128x128xbf16>
    %86 = vector.shape_cast %85 : vector<1x128x128xbf16> to vector<128x128xbf16>
    %cst_87 = arith.constant dense<0.000000e+00> : vector<64x128xf32>
    %87 = tpu.matmul %84, %86, %cst_87 {dimension_numbers = #tpu.dot_dimension_numbers<[1], [0], [0], [1], [0, 0, 1, 1], [], []>} : vector<64x128xbf16>, vector<128x128xbf16>, vector<64x128xf32> -> vector<64x128xf32>
    %88 = arith.addf %80, %87 : vector<64x128xf32>
    %c0_88 = arith.constant 0 : index
    %c1_89 = arith.constant 1 : index
    %c0_90 = arith.constant 0 : index
    %c2_91 = arith.constant 2 : index
    %c0_92 = arith.constant 0 : index
    %89 = vector.load %arg1[%c0_88, %c1_89, %c0_90, %c2_91, %c0_92] : memref<1x6x6x6x128xf32, #tpu.memory_space<vmem>>, vector<1x4x4x4x128xf32>
    %90 = vector.shape_cast %89 : vector<1x4x4x4x128xf32> to vector<4x4x4x128xf32>
    %91 = vector.shape_cast %90 : vector<4x4x4x128xf32> to vector<64x128xf32>
    %92 = arith.truncf %91 : vector<64x128xf32> to vector<64x128xbf16>
    %c11 = arith.constant 11 : index
    %c0_93 = arith.constant 0 : index
    %c0_94 = arith.constant 0 : index
    %93 = vector.load %arg2[%c11, %c0_93, %c0_94] : memref<27x128x128xbf16, #tpu.memory_space<vmem>>, vector<1x128x128xbf16>
    %94 = vector.shape_cast %93 : vector<1x128x128xbf16> to vector<128x128xbf16>
    %cst_95 = arith.constant dense<0.000000e+00> : vector<64x128xf32>
    %95 = tpu.matmul %92, %94, %cst_95 {dimension_numbers = #tpu.dot_dimension_numbers<[1], [0], [0], [1], [0, 0, 1, 1], [], []>} : vector<64x128xbf16>, vector<128x128xbf16>, vector<64x128xf32> -> vector<64x128xf32>
    %96 = arith.addf %88, %95 : vector<64x128xf32>
    %c0_96 = arith.constant 0 : index
    %c1_97 = arith.constant 1 : index
    %c1_98 = arith.constant 1 : index
    %c0_99 = arith.constant 0 : index
    %c0_100 = arith.constant 0 : index
    %97 = vector.load %arg1[%c0_96, %c1_97, %c1_98, %c0_99, %c0_100] : memref<1x6x6x6x128xf32, #tpu.memory_space<vmem>>, vector<1x4x4x4x128xf32>
    %98 = vector.shape_cast %97 : vector<1x4x4x4x128xf32> to vector<4x4x4x128xf32>
    %99 = vector.shape_cast %98 : vector<4x4x4x128xf32> to vector<64x128xf32>
    %100 = arith.truncf %99 : vector<64x128xf32> to vector<64x128xbf16>
    %c12 = arith.constant 12 : index
    %c0_101 = arith.constant 0 : index
    %c0_102 = arith.constant 0 : index
    %101 = vector.load %arg2[%c12, %c0_101, %c0_102] : memref<27x128x128xbf16, #tpu.memory_space<vmem>>, vector<1x128x128xbf16>
    %102 = vector.shape_cast %101 : vector<1x128x128xbf16> to vector<128x128xbf16>
    %cst_103 = arith.constant dense<0.000000e+00> : vector<64x128xf32>
    %103 = tpu.matmul %100, %102, %cst_103 {dimension_numbers = #tpu.dot_dimension_numbers<[1], [0], [0], [1], [0, 0, 1, 1], [], []>} : vector<64x128xbf16>, vector<128x128xbf16>, vector<64x128xf32> -> vector<64x128xf32>
    %104 = arith.addf %96, %103 : vector<64x128xf32>
    %c0_104 = arith.constant 0 : index
    %c1_105 = arith.constant 1 : index
    %c1_106 = arith.constant 1 : index
    %c1_107 = arith.constant 1 : index
    %c0_108 = arith.constant 0 : index
    %105 = vector.load %arg1[%c0_104, %c1_105, %c1_106, %c1_107, %c0_108] : memref<1x6x6x6x128xf32, #tpu.memory_space<vmem>>, vector<1x4x4x4x128xf32>
    %106 = vector.shape_cast %105 : vector<1x4x4x4x128xf32> to vector<4x4x4x128xf32>
    %107 = vector.shape_cast %106 : vector<4x4x4x128xf32> to vector<64x128xf32>
    %108 = arith.truncf %107 : vector<64x128xf32> to vector<64x128xbf16>
    %c13 = arith.constant 13 : index
    %c0_109 = arith.constant 0 : index
    %c0_110 = arith.constant 0 : index
    %109 = vector.load %arg2[%c13, %c0_109, %c0_110] : memref<27x128x128xbf16, #tpu.memory_space<vmem>>, vector<1x128x128xbf16>
    %110 = vector.shape_cast %109 : vector<1x128x128xbf16> to vector<128x128xbf16>
    %cst_111 = arith.constant dense<0.000000e+00> : vector<64x128xf32>
    %111 = tpu.matmul %108, %110, %cst_111 {dimension_numbers = #tpu.dot_dimension_numbers<[1], [0], [0], [1], [0, 0, 1, 1], [], []>} : vector<64x128xbf16>, vector<128x128xbf16>, vector<64x128xf32> -> vector<64x128xf32>
    %112 = arith.addf %104, %111 : vector<64x128xf32>
    %c0_112 = arith.constant 0 : index
    %c1_113 = arith.constant 1 : index
    %c1_114 = arith.constant 1 : index
    %c2_115 = arith.constant 2 : index
    %c0_116 = arith.constant 0 : index
    %113 = vector.load %arg1[%c0_112, %c1_113, %c1_114, %c2_115, %c0_116] : memref<1x6x6x6x128xf32, #tpu.memory_space<vmem>>, vector<1x4x4x4x128xf32>
    %114 = vector.shape_cast %113 : vector<1x4x4x4x128xf32> to vector<4x4x4x128xf32>
    %115 = vector.shape_cast %114 : vector<4x4x4x128xf32> to vector<64x128xf32>
    %116 = arith.truncf %115 : vector<64x128xf32> to vector<64x128xbf16>
    %c14 = arith.constant 14 : index
    %c0_117 = arith.constant 0 : index
    %c0_118 = arith.constant 0 : index
    %117 = vector.load %arg2[%c14, %c0_117, %c0_118] : memref<27x128x128xbf16, #tpu.memory_space<vmem>>, vector<1x128x128xbf16>
    %118 = vector.shape_cast %117 : vector<1x128x128xbf16> to vector<128x128xbf16>
    %cst_119 = arith.constant dense<0.000000e+00> : vector<64x128xf32>
    %119 = tpu.matmul %116, %118, %cst_119 {dimension_numbers = #tpu.dot_dimension_numbers<[1], [0], [0], [1], [0, 0, 1, 1], [], []>} : vector<64x128xbf16>, vector<128x128xbf16>, vector<64x128xf32> -> vector<64x128xf32>
    %120 = arith.addf %112, %119 : vector<64x128xf32>
    %c0_120 = arith.constant 0 : index
    %c1_121 = arith.constant 1 : index
    %c2_122 = arith.constant 2 : index
    %c0_123 = arith.constant 0 : index
    %c0_124 = arith.constant 0 : index
    %121 = vector.load %arg1[%c0_120, %c1_121, %c2_122, %c0_123, %c0_124] : memref<1x6x6x6x128xf32, #tpu.memory_space<vmem>>, vector<1x4x4x4x128xf32>
    %122 = vector.shape_cast %121 : vector<1x4x4x4x128xf32> to vector<4x4x4x128xf32>
    %123 = vector.shape_cast %122 : vector<4x4x4x128xf32> to vector<64x128xf32>
    %124 = arith.truncf %123 : vector<64x128xf32> to vector<64x128xbf16>
    %c15 = arith.constant 15 : index
    %c0_125 = arith.constant 0 : index
    %c0_126 = arith.constant 0 : index
    %125 = vector.load %arg2[%c15, %c0_125, %c0_126] : memref<27x128x128xbf16, #tpu.memory_space<vmem>>, vector<1x128x128xbf16>
    %126 = vector.shape_cast %125 : vector<1x128x128xbf16> to vector<128x128xbf16>
    %cst_127 = arith.constant dense<0.000000e+00> : vector<64x128xf32>
    %127 = tpu.matmul %124, %126, %cst_127 {dimension_numbers = #tpu.dot_dimension_numbers<[1], [0], [0], [1], [0, 0, 1, 1], [], []>} : vector<64x128xbf16>, vector<128x128xbf16>, vector<64x128xf32> -> vector<64x128xf32>
    %128 = arith.addf %120, %127 : vector<64x128xf32>
    %c0_128 = arith.constant 0 : index
    %c1_129 = arith.constant 1 : index
    %c2_130 = arith.constant 2 : index
    %c1_131 = arith.constant 1 : index
    %c0_132 = arith.constant 0 : index
    %129 = vector.load %arg1[%c0_128, %c1_129, %c2_130, %c1_131, %c0_132] : memref<1x6x6x6x128xf32, #tpu.memory_space<vmem>>, vector<1x4x4x4x128xf32>
    %130 = vector.shape_cast %129 : vector<1x4x4x4x128xf32> to vector<4x4x4x128xf32>
    %131 = vector.shape_cast %130 : vector<4x4x4x128xf32> to vector<64x128xf32>
    %132 = arith.truncf %131 : vector<64x128xf32> to vector<64x128xbf16>
    %c16 = arith.constant 16 : index
    %c0_133 = arith.constant 0 : index
    %c0_134 = arith.constant 0 : index
    %133 = vector.load %arg2[%c16, %c0_133, %c0_134] : memref<27x128x128xbf16, #tpu.memory_space<vmem>>, vector<1x128x128xbf16>
    %134 = vector.shape_cast %133 : vector<1x128x128xbf16> to vector<128x128xbf16>
    %cst_135 = arith.constant dense<0.000000e+00> : vector<64x128xf32>
    %135 = tpu.matmul %132, %134, %cst_135 {dimension_numbers = #tpu.dot_dimension_numbers<[1], [0], [0], [1], [0, 0, 1, 1], [], []>} : vector<64x128xbf16>, vector<128x128xbf16>, vector<64x128xf32> -> vector<64x128xf32>
    %136 = arith.addf %128, %135 : vector<64x128xf32>
    %c0_136 = arith.constant 0 : index
    %c1_137 = arith.constant 1 : index
    %c2_138 = arith.constant 2 : index
    %c2_139 = arith.constant 2 : index
    %c0_140 = arith.constant 0 : index
    %137 = vector.load %arg1[%c0_136, %c1_137, %c2_138, %c2_139, %c0_140] : memref<1x6x6x6x128xf32, #tpu.memory_space<vmem>>, vector<1x4x4x4x128xf32>
    %138 = vector.shape_cast %137 : vector<1x4x4x4x128xf32> to vector<4x4x4x128xf32>
    %139 = vector.shape_cast %138 : vector<4x4x4x128xf32> to vector<64x128xf32>
    %140 = arith.truncf %139 : vector<64x128xf32> to vector<64x128xbf16>
    %c17 = arith.constant 17 : index
    %c0_141 = arith.constant 0 : index
    %c0_142 = arith.constant 0 : index
    %141 = vector.load %arg2[%c17, %c0_141, %c0_142] : memref<27x128x128xbf16, #tpu.memory_space<vmem>>, vector<1x128x128xbf16>
    %142 = vector.shape_cast %141 : vector<1x128x128xbf16> to vector<128x128xbf16>
    %cst_143 = arith.constant dense<0.000000e+00> : vector<64x128xf32>
    %143 = tpu.matmul %140, %142, %cst_143 {dimension_numbers = #tpu.dot_dimension_numbers<[1], [0], [0], [1], [0, 0, 1, 1], [], []>} : vector<64x128xbf16>, vector<128x128xbf16>, vector<64x128xf32> -> vector<64x128xf32>
    %144 = arith.addf %136, %143 : vector<64x128xf32>
    %c0_144 = arith.constant 0 : index
    %c2_145 = arith.constant 2 : index
    %c0_146 = arith.constant 0 : index
    %c0_147 = arith.constant 0 : index
    %c0_148 = arith.constant 0 : index
    %145 = vector.load %arg1[%c0_144, %c2_145, %c0_146, %c0_147, %c0_148] : memref<1x6x6x6x128xf32, #tpu.memory_space<vmem>>, vector<1x4x4x4x128xf32>
    %146 = vector.shape_cast %145 : vector<1x4x4x4x128xf32> to vector<4x4x4x128xf32>
    %147 = vector.shape_cast %146 : vector<4x4x4x128xf32> to vector<64x128xf32>
    %148 = arith.truncf %147 : vector<64x128xf32> to vector<64x128xbf16>
    %c18 = arith.constant 18 : index
    %c0_149 = arith.constant 0 : index
    %c0_150 = arith.constant 0 : index
    %149 = vector.load %arg2[%c18, %c0_149, %c0_150] : memref<27x128x128xbf16, #tpu.memory_space<vmem>>, vector<1x128x128xbf16>
    %150 = vector.shape_cast %149 : vector<1x128x128xbf16> to vector<128x128xbf16>
    %cst_151 = arith.constant dense<0.000000e+00> : vector<64x128xf32>
    %151 = tpu.matmul %148, %150, %cst_151 {dimension_numbers = #tpu.dot_dimension_numbers<[1], [0], [0], [1], [0, 0, 1, 1], [], []>} : vector<64x128xbf16>, vector<128x128xbf16>, vector<64x128xf32> -> vector<64x128xf32>
    %152 = arith.addf %144, %151 : vector<64x128xf32>
    %c0_152 = arith.constant 0 : index
    %c2_153 = arith.constant 2 : index
    %c0_154 = arith.constant 0 : index
    %c1_155 = arith.constant 1 : index
    %c0_156 = arith.constant 0 : index
    %153 = vector.load %arg1[%c0_152, %c2_153, %c0_154, %c1_155, %c0_156] : memref<1x6x6x6x128xf32, #tpu.memory_space<vmem>>, vector<1x4x4x4x128xf32>
    %154 = vector.shape_cast %153 : vector<1x4x4x4x128xf32> to vector<4x4x4x128xf32>
    %155 = vector.shape_cast %154 : vector<4x4x4x128xf32> to vector<64x128xf32>
    %156 = arith.truncf %155 : vector<64x128xf32> to vector<64x128xbf16>
    %c19 = arith.constant 19 : index
    %c0_157 = arith.constant 0 : index
    %c0_158 = arith.constant 0 : index
    %157 = vector.load %arg2[%c19, %c0_157, %c0_158] : memref<27x128x128xbf16, #tpu.memory_space<vmem>>, vector<1x128x128xbf16>
    %158 = vector.shape_cast %157 : vector<1x128x128xbf16> to vector<128x128xbf16>
    %cst_159 = arith.constant dense<0.000000e+00> : vector<64x128xf32>
    %159 = tpu.matmul %156, %158, %cst_159 {dimension_numbers = #tpu.dot_dimension_numbers<[1], [0], [0], [1], [0, 0, 1, 1], [], []>} : vector<64x128xbf16>, vector<128x128xbf16>, vector<64x128xf32> -> vector<64x128xf32>
    %160 = arith.addf %152, %159 : vector<64x128xf32>
    %c0_160 = arith.constant 0 : index
    %c2_161 = arith.constant 2 : index
    %c0_162 = arith.constant 0 : index
    %c2_163 = arith.constant 2 : index
    %c0_164 = arith.constant 0 : index
    %161 = vector.load %arg1[%c0_160, %c2_161, %c0_162, %c2_163, %c0_164] : memref<1x6x6x6x128xf32, #tpu.memory_space<vmem>>, vector<1x4x4x4x128xf32>
    %162 = vector.shape_cast %161 : vector<1x4x4x4x128xf32> to vector<4x4x4x128xf32>
    %163 = vector.shape_cast %162 : vector<4x4x4x128xf32> to vector<64x128xf32>
    %164 = arith.truncf %163 : vector<64x128xf32> to vector<64x128xbf16>
    %c20 = arith.constant 20 : index
    %c0_165 = arith.constant 0 : index
    %c0_166 = arith.constant 0 : index
    %165 = vector.load %arg2[%c20, %c0_165, %c0_166] : memref<27x128x128xbf16, #tpu.memory_space<vmem>>, vector<1x128x128xbf16>
    %166 = vector.shape_cast %165 : vector<1x128x128xbf16> to vector<128x128xbf16>
    %cst_167 = arith.constant dense<0.000000e+00> : vector<64x128xf32>
    %167 = tpu.matmul %164, %166, %cst_167 {dimension_numbers = #tpu.dot_dimension_numbers<[1], [0], [0], [1], [0, 0, 1, 1], [], []>} : vector<64x128xbf16>, vector<128x128xbf16>, vector<64x128xf32> -> vector<64x128xf32>
    %168 = arith.addf %160, %167 : vector<64x128xf32>
    %c0_168 = arith.constant 0 : index
    %c2_169 = arith.constant 2 : index
    %c1_170 = arith.constant 1 : index
    %c0_171 = arith.constant 0 : index
    %c0_172 = arith.constant 0 : index
    %169 = vector.load %arg1[%c0_168, %c2_169, %c1_170, %c0_171, %c0_172] : memref<1x6x6x6x128xf32, #tpu.memory_space<vmem>>, vector<1x4x4x4x128xf32>
    %170 = vector.shape_cast %169 : vector<1x4x4x4x128xf32> to vector<4x4x4x128xf32>
    %171 = vector.shape_cast %170 : vector<4x4x4x128xf32> to vector<64x128xf32>
    %172 = arith.truncf %171 : vector<64x128xf32> to vector<64x128xbf16>
    %c21 = arith.constant 21 : index
    %c0_173 = arith.constant 0 : index
    %c0_174 = arith.constant 0 : index
    %173 = vector.load %arg2[%c21, %c0_173, %c0_174] : memref<27x128x128xbf16, #tpu.memory_space<vmem>>, vector<1x128x128xbf16>
    %174 = vector.shape_cast %173 : vector<1x128x128xbf16> to vector<128x128xbf16>
    %cst_175 = arith.constant dense<0.000000e+00> : vector<64x128xf32>
    %175 = tpu.matmul %172, %174, %cst_175 {dimension_numbers = #tpu.dot_dimension_numbers<[1], [0], [0], [1], [0, 0, 1, 1], [], []>} : vector<64x128xbf16>, vector<128x128xbf16>, vector<64x128xf32> -> vector<64x128xf32>
    %176 = arith.addf %168, %175 : vector<64x128xf32>
    %c0_176 = arith.constant 0 : index
    %c2_177 = arith.constant 2 : index
    %c1_178 = arith.constant 1 : index
    %c1_179 = arith.constant 1 : index
    %c0_180 = arith.constant 0 : index
    %177 = vector.load %arg1[%c0_176, %c2_177, %c1_178, %c1_179, %c0_180] : memref<1x6x6x6x128xf32, #tpu.memory_space<vmem>>, vector<1x4x4x4x128xf32>
    %178 = vector.shape_cast %177 : vector<1x4x4x4x128xf32> to vector<4x4x4x128xf32>
    %179 = vector.shape_cast %178 : vector<4x4x4x128xf32> to vector<64x128xf32>
    %180 = arith.truncf %179 : vector<64x128xf32> to vector<64x128xbf16>
    %c22 = arith.constant 22 : index
    %c0_181 = arith.constant 0 : index
    %c0_182 = arith.constant 0 : index
    %181 = vector.load %arg2[%c22, %c0_181, %c0_182] : memref<27x128x128xbf16, #tpu.memory_space<vmem>>, vector<1x128x128xbf16>
    %182 = vector.shape_cast %181 : vector<1x128x128xbf16> to vector<128x128xbf16>
    %cst_183 = arith.constant dense<0.000000e+00> : vector<64x128xf32>
    %183 = tpu.matmul %180, %182, %cst_183 {dimension_numbers = #tpu.dot_dimension_numbers<[1], [0], [0], [1], [0, 0, 1, 1], [], []>} : vector<64x128xbf16>, vector<128x128xbf16>, vector<64x128xf32> -> vector<64x128xf32>
    %184 = arith.addf %176, %183 : vector<64x128xf32>
    %c0_184 = arith.constant 0 : index
    %c2_185 = arith.constant 2 : index
    %c1_186 = arith.constant 1 : index
    %c2_187 = arith.constant 2 : index
    %c0_188 = arith.constant 0 : index
    %185 = vector.load %arg1[%c0_184, %c2_185, %c1_186, %c2_187, %c0_188] : memref<1x6x6x6x128xf32, #tpu.memory_space<vmem>>, vector<1x4x4x4x128xf32>
    %186 = vector.shape_cast %185 : vector<1x4x4x4x128xf32> to vector<4x4x4x128xf32>
    %187 = vector.shape_cast %186 : vector<4x4x4x128xf32> to vector<64x128xf32>
    %188 = arith.truncf %187 : vector<64x128xf32> to vector<64x128xbf16>
    %c23 = arith.constant 23 : index
    %c0_189 = arith.constant 0 : index
    %c0_190 = arith.constant 0 : index
    %189 = vector.load %arg2[%c23, %c0_189, %c0_190] : memref<27x128x128xbf16, #tpu.memory_space<vmem>>, vector<1x128x128xbf16>
    %190 = vector.shape_cast %189 : vector<1x128x128xbf16> to vector<128x128xbf16>
    %cst_191 = arith.constant dense<0.000000e+00> : vector<64x128xf32>
    %191 = tpu.matmul %188, %190, %cst_191 {dimension_numbers = #tpu.dot_dimension_numbers<[1], [0], [0], [1], [0, 0, 1, 1], [], []>} : vector<64x128xbf16>, vector<128x128xbf16>, vector<64x128xf32> -> vector<64x128xf32>
    %192 = arith.addf %184, %191 : vector<64x128xf32>
    %c0_192 = arith.constant 0 : index
    %c2_193 = arith.constant 2 : index
    %c2_194 = arith.constant 2 : index
    %c0_195 = arith.constant 0 : index
    %c0_196 = arith.constant 0 : index
    %193 = vector.load %arg1[%c0_192, %c2_193, %c2_194, %c0_195, %c0_196] : memref<1x6x6x6x128xf32, #tpu.memory_space<vmem>>, vector<1x4x4x4x128xf32>
    %194 = vector.shape_cast %193 : vector<1x4x4x4x128xf32> to vector<4x4x4x128xf32>
    %195 = vector.shape_cast %194 : vector<4x4x4x128xf32> to vector<64x128xf32>
    %196 = arith.truncf %195 : vector<64x128xf32> to vector<64x128xbf16>
    %c24 = arith.constant 24 : index
    %c0_197 = arith.constant 0 : index
    %c0_198 = arith.constant 0 : index
    %197 = vector.load %arg2[%c24, %c0_197, %c0_198] : memref<27x128x128xbf16, #tpu.memory_space<vmem>>, vector<1x128x128xbf16>
    %198 = vector.shape_cast %197 : vector<1x128x128xbf16> to vector<128x128xbf16>
    %cst_199 = arith.constant dense<0.000000e+00> : vector<64x128xf32>
    %199 = tpu.matmul %196, %198, %cst_199 {dimension_numbers = #tpu.dot_dimension_numbers<[1], [0], [0], [1], [0, 0, 1, 1], [], []>} : vector<64x128xbf16>, vector<128x128xbf16>, vector<64x128xf32> -> vector<64x128xf32>
    %200 = arith.addf %192, %199 : vector<64x128xf32>
    %c0_200 = arith.constant 0 : index
    %c2_201 = arith.constant 2 : index
    %c2_202 = arith.constant 2 : index
    %c1_203 = arith.constant 1 : index
    %c0_204 = arith.constant 0 : index
    %201 = vector.load %arg1[%c0_200, %c2_201, %c2_202, %c1_203, %c0_204] : memref<1x6x6x6x128xf32, #tpu.memory_space<vmem>>, vector<1x4x4x4x128xf32>
    %202 = vector.shape_cast %201 : vector<1x4x4x4x128xf32> to vector<4x4x4x128xf32>
    %203 = vector.shape_cast %202 : vector<4x4x4x128xf32> to vector<64x128xf32>
    %204 = arith.truncf %203 : vector<64x128xf32> to vector<64x128xbf16>
    %c25 = arith.constant 25 : index
    %c0_205 = arith.constant 0 : index
    %c0_206 = arith.constant 0 : index
    %205 = vector.load %arg2[%c25, %c0_205, %c0_206] : memref<27x128x128xbf16, #tpu.memory_space<vmem>>, vector<1x128x128xbf16>
    %206 = vector.shape_cast %205 : vector<1x128x128xbf16> to vector<128x128xbf16>
    %cst_207 = arith.constant dense<0.000000e+00> : vector<64x128xf32>
    %207 = tpu.matmul %204, %206, %cst_207 {dimension_numbers = #tpu.dot_dimension_numbers<[1], [0], [0], [1], [0, 0, 1, 1], [], []>} : vector<64x128xbf16>, vector<128x128xbf16>, vector<64x128xf32> -> vector<64x128xf32>
    %208 = arith.addf %200, %207 : vector<64x128xf32>
    %c0_208 = arith.constant 0 : index
    %c2_209 = arith.constant 2 : index
    %c2_210 = arith.constant 2 : index
    %c2_211 = arith.constant 2 : index
    %c0_212 = arith.constant 0 : index
    %209 = vector.load %arg1[%c0_208, %c2_209, %c2_210, %c2_211, %c0_212] : memref<1x6x6x6x128xf32, #tpu.memory_space<vmem>>, vector<1x4x4x4x128xf32>
    %210 = vector.shape_cast %209 : vector<1x4x4x4x128xf32> to vector<4x4x4x128xf32>
    %211 = vector.shape_cast %210 : vector<4x4x4x128xf32> to vector<64x128xf32>
    %212 = arith.truncf %211 : vector<64x128xf32> to vector<64x128xbf16>
    %c26 = arith.constant 26 : index
    %c0_213 = arith.constant 0 : index
    %c0_214 = arith.constant 0 : index
    %213 = vector.load %arg2[%c26, %c0_213, %c0_214] : memref<27x128x128xbf16, #tpu.memory_space<vmem>>, vector<1x128x128xbf16>
    %214 = vector.shape_cast %213 : vector<1x128x128xbf16> to vector<128x128xbf16>
    %cst_215 = arith.constant dense<0.000000e+00> : vector<64x128xf32>
    %215 = tpu.matmul %212, %214, %cst_215 {dimension_numbers = #tpu.dot_dimension_numbers<[1], [0], [0], [1], [0, 0, 1, 1], [], []>} : vector<64x128xbf16>, vector<128x128xbf16>, vector<64x128xf32> -> vector<64x128xf32>
    %216 = arith.addf %208, %215 : vector<64x128xf32>
    %c0_216 = arith.constant 0 : index
    %c0_217 = arith.constant 0 : index
    %217 = vector.load %arg3[%c0_216, %c0_217] : memref<1x128xf32, #tpu.memory_space<vmem>>, vector<1x128xf32>
    %218 = vector.broadcast %217 : vector<1x128xf32> to vector<64x128xf32>
    %219 = arith.addf %216, %218 : vector<64x128xf32>
    %220 = vector.shape_cast %219 : vector<64x128xf32> to vector<1x64x128xf32>
    %c0_218 = arith.constant 0 : index
    %c0_219 = arith.constant 0 : index
    %c0_220 = arith.constant 0 : index
    %221 = vector.load %arg4[%c0_218, %c0_219, %c0_220] : memref<1x64x128xf32, #tpu.memory_space<vmem>>, vector<1x64x128xf32>
    tpu.vector_store %arg4[%c0_218, %c0_219, %c0_220], %220 {strides = array<i32>} : memref<1x64x128xf32, #tpu.memory_space<vmem>>, vector<1x64x128xf32>,
    %cst_221 = arith.constant dense<0.000000e+00> : vector<128xf32>
    %222 = vector.multi_reduction <add>, %219, %cst_221 [0] : vector<64x128xf32> to vector<128xf32>
    %223 = vector.shape_cast %222 : vector<128xf32> to vector<1x1x128xf32>
    %c0_222 = arith.constant 0 : index
    %c0_223 = arith.constant 0 : index
    %c0_224 = arith.constant 0 : index
    %224 = vector.load %arg5[%c0_222, %c0_223, %c0_224] : memref<1x1x128xf32, #tpu.memory_space<vmem>>, vector<1x1x128xf32>
    tpu.vector_store %arg5[%c0_222, %c0_223, %c0_224], %223 {strides = array<i32>} : memref<1x1x128xf32, #tpu.memory_space<vmem>>, vector<1x1x128xf32>,
    %225 = arith.mulf %219, %219 : vector<64x128xf32>
    %cst_225 = arith.constant dense<0.000000e+00> : vector<128xf32>
    %226 = vector.multi_reduction <add>, %225, %cst_225 [0] : vector<64x128xf32> to vector<128xf32>
    %227 = vector.shape_cast %226 : vector<128xf32> to vector<1x1x128xf32>
    %c0_226 = arith.constant 0 : index
    %c0_227 = arith.constant 0 : index
    %c0_228 = arith.constant 0 : index
    %228 = vector.load %arg6[%c0_226, %c0_227, %c0_228] : memref<1x1x128xf32, #tpu.memory_space<vmem>>, vector<1x1x128xf32>
    tpu.vector_store %arg6[%c0_226, %c0_227, %c0_228], %227 {strides = array<i32>} : memref<1x1x128xf32, #tpu.memory_space<vmem>>, vector<1x1x128xf32>,
    return
  }
  func.func @transform_0(%arg0: i32) -> (i32, i32, i32, i32, i32) {
    %c0_i32 = arith.constant 0 : i32
    %c0_i32_0 = arith.constant 0 : i32
    %c0_i32_1 = arith.constant 0 : i32
    %c0_i32_2 = arith.constant 0 : i32
    %c0_i32_3 = arith.constant 0 : i32
    return %arg0, %c0_i32, %c0_i32_0, %c0_i32_1, %c0_i32_2 : i32, i32, i32, i32, i32
  }
  func.func @transform_1(%arg0: i32) -> (i32, i32, i32) {
    %c0_i32 = arith.constant 0 : i32
    %c0_i32_0 = arith.constant 0 : i32
    %c0_i32_1 = arith.constant 0 : i32
    %c0_i32_2 = arith.constant 0 : i32
    return %c0_i32, %c0_i32_0, %c0_i32_1 : i32, i32, i32
  }
  func.func @transform_2(%arg0: i32) -> (i32, i32) {
    %c0_i32 = arith.constant 0 : i32
    %c0_i32_0 = arith.constant 0 : i32
    %c0_i32_1 = arith.constant 0 : i32
    return %c0_i32, %c0_i32_0 : i32, i32
  }
  func.func @transform_3(%arg0: i32) -> (i32, i32, i32) {
    %c0_i32 = arith.constant 0 : i32
    %c0_i32_0 = arith.constant 0 : i32
    %c0_i32_1 = arith.constant 0 : i32
    return %arg0, %c0_i32, %c0_i32_0 : i32, i32, i32
  }
  func.func @transform_4(%arg0: i32) -> (i32, i32, i32) {
    %c0_i32 = arith.constant 0 : i32
    %c0_i32_0 = arith.constant 0 : i32
    %c0_i32_1 = arith.constant 0 : i32
    return %arg0, %c0_i32, %c0_i32_0 : i32, i32, i32
  }
  func.func @transform_5(%arg0: i32) -> (i32, i32, i32) {
    %c0_i32 = arith.constant 0 : i32
    %c0_i32_0 = arith.constant 0 : i32
    %c0_i32_1 = arith.constant 0 : i32
    return %arg0, %c0_i32, %c0_i32_0 : i32, i32, i32
  }
}

module attributes {stable_mosaic.version = 11 : i64} {
  func.func @affine_residual_act_kernel(%arg0: i32, %arg1: i32, %arg2: memref<1x64x128xf32, #tpu.memory_space<vmem>>, %arg3: memref<1x1x128xf32, #tpu.memory_space<vmem>>, %arg4: memref<1x1x128xf32, #tpu.memory_space<vmem>>, %arg5: memref<1x64x128xf32, #tpu.memory_space<vmem>>, %arg6: memref<1x64x128xf32, #tpu.memory_space<vmem>>) attributes {dimension_semantics = [#tpu.dimension_semantics<parallel>, #tpu.dimension_semantics<parallel>], iteration_bounds = array<i64: 2, 1>, scalar_prefetch = 0 : i64, scratch_operands = 0 : i64, tpu.core_type = #tpu.core_type<tc>, window_params = [{transform_indices = @transform_0, window_bounds = array<i64: 1, 64, 128>}, {transform_indices = @transform_1, window_bounds = array<i64: 1, 1, 128>}, {transform_indices = @transform_2, window_bounds = array<i64: 1, 1, 128>}, {transform_indices = @transform_3, window_bounds = array<i64: 1, 64, 128>}, {transform_indices = @transform_4, window_bounds = array<i64: 1, 64, 128>}]} {
    %c0 = arith.constant 0 : index
    %c0_0 = arith.constant 0 : index
    %c0_1 = arith.constant 0 : index
    %0 = vector.load %arg2[%c0, %c0_0, %c0_1] : memref<1x64x128xf32, #tpu.memory_space<vmem>>, vector<1x64x128xf32>
    %c0_2 = arith.constant 0 : index
    %c0_3 = arith.constant 0 : index
    %c0_4 = arith.constant 0 : index
    %1 = vector.load %arg3[%c0_2, %c0_3, %c0_4] : memref<1x1x128xf32, #tpu.memory_space<vmem>>, vector<1x1x128xf32>
    %2 = vector.broadcast %1 : vector<1x1x128xf32> to vector<1x64x128xf32>
    %3 = arith.mulf %0, %2 : vector<1x64x128xf32>
    %c0_5 = arith.constant 0 : index
    %c0_6 = arith.constant 0 : index
    %c0_7 = arith.constant 0 : index
    %4 = vector.load %arg4[%c0_5, %c0_6, %c0_7] : memref<1x1x128xf32, #tpu.memory_space<vmem>>, vector<1x1x128xf32>
    %5 = vector.broadcast %4 : vector<1x1x128xf32> to vector<1x64x128xf32>
    %6 = arith.addf %3, %5 : vector<1x64x128xf32>
    %c0_8 = arith.constant 0 : index
    %c0_9 = arith.constant 0 : index
    %c0_10 = arith.constant 0 : index
    %7 = vector.load %arg5[%c0_8, %c0_9, %c0_10] : memref<1x64x128xf32, #tpu.memory_space<vmem>>, vector<1x64x128xf32>
    %8 = arith.addf %6, %7 : vector<1x64x128xf32>
    %cst = arith.constant 0.000000e+00 : f32
    %9 = vector.broadcast %cst : f32 to vector<1x64x128xf32>
    %10 = arith.maximumf %8, %9 : vector<1x64x128xf32>
    %c0_11 = arith.constant 0 : index
    %c0_12 = arith.constant 0 : index
    %c0_13 = arith.constant 0 : index
    %11 = vector.load %arg6[%c0_11, %c0_12, %c0_13] : memref<1x64x128xf32, #tpu.memory_space<vmem>>, vector<1x64x128xf32>
    tpu.vector_store %arg6[%c0_11, %c0_12, %c0_13], %10 {strides = array<i32>} : memref<1x64x128xf32, #tpu.memory_space<vmem>>, vector<1x64x128xf32>,
    return
  }
  func.func @transform_0(%arg0: i32, %arg1: i32) -> (i32, i32, i32) {
    %c0_i32 = arith.constant 0 : i32
    %c0_i32_0 = arith.constant 0 : i32
    return %arg0, %arg1, %c0_i32 : i32, i32, i32
  }
  func.func @transform_1(%arg0: i32, %arg1: i32) -> (i32, i32, i32) {
    %c0_i32 = arith.constant 0 : i32
    %c0_i32_0 = arith.constant 0 : i32
    %c0_i32_1 = arith.constant 0 : i32
    return %arg0, %c0_i32, %c0_i32_0 : i32, i32, i32
  }
  func.func @transform_2(%arg0: i32, %arg1: i32) -> (i32, i32, i32) {
    %c0_i32 = arith.constant 0 : i32
    %c0_i32_0 = arith.constant 0 : i32
    %c0_i32_1 = arith.constant 0 : i32
    return %arg0, %c0_i32, %c0_i32_0 : i32, i32, i32
  }
  func.func @transform_3(%arg0: i32, %arg1: i32) -> (i32, i32, i32) {
    %c0_i32 = arith.constant 0 : i32
    %c0_i32_0 = arith.constant 0 : i32
    return %arg0, %arg1, %c0_i32 : i32, i32, i32
  }
  func.func @transform_4(%arg0: i32, %arg1: i32) -> (i32, i32, i32) {
    %c0_i32 = arith.constant 0 : i32
    %c0_i32_0 = arith.constant 0 : i32
    return %arg0, %arg1, %c0_i32 : i32, i32, i32
  }
}

</mosaic_0001>

<llo_original>
// kernel: down_block_forward.7
$region0: #{down_block_forward.7}
  #allocation0 [shape = 'u32[]', space=smem, size = 0x4, offset = 0x4, fixed_abs, tag = 'smem constant byte address 0x4 - core index']
  #allocation1 [shape = 'u32[144,128]{1,0:T(1,128)}', space=vmem, size = 0x12000, scoped, tag = 'internal scratch']
  %s0 = inlined_call_operand.vmem [shape: f32[2,64,128], index: 0, kind: input, shape index: {}]
  %s1 = inlined_call_operand.vmem [shape: f32[2,1,128], index: 1, kind: input, shape index: {}]
  %s2 = inlined_call_operand.vmem [shape: f32[2,1,128], index: 2, kind: input, shape index: {}]
  %s3 = inlined_call_operand.vmem [shape: f32[2,64,128], index: 3, kind: output, shape index: {}]
  %s4 = sld [smem:[#allocation0]]
  $region45: #{down_block_forward.7} parent=0
    _
  %s6 = ssub.s32 1, %s4
  %s7 = scalar_select 0, %s6, %s4
  loop: start=0, step=1, limit=4
  $region2: #{down_block_forward.7} parent=0 // loop_pre_header
    _
  $region3: #{down_block_forward.7} parent=0 // loop_header
    %s9 = sphi 0, %s13
    %p10 = scmp.ge.s32.totalorder %s9, 4
    %s16 = sphi 0, %s28
    %s17 = sphi 0, %s24
    %s18 = sphi 0, %s16
    %s19 = sphi 0, %s17
    %s20 = sphi 0, %s18
    %s21 = sphi 0, %s19
    %s33 = sphi 0, %s35
    %s36 = sphi 0, %s33
    %s37 = sphi 0, %s36
    %s53 = sphi 0, %s37
    %s59 = sphi 0, %s61
    %s62 = sphi 0, %s59
    %s63 = sphi 0, %s62
    %s79 = sphi 0, %s63
    %s85 = sphi 0, %s87
    %s88 = sphi 0, %s85
    %s89 = sphi 0, %s88
    %s105 = sphi 0, %s89
    %s113 = sphi 0, %s115
    %s116 = sphi 0, %s113
    %s117 = sphi 0, %s116
    %s133 = sphi 0, %s117
  $region4: #{down_block_forward.7} parent=0 // loop_header_branch
    %12 = sbr.rel (%p10) target = $region8
  $region5: #{down_block_forward.7} parent=0 // loop_body
    %s14 = ssub.s32 %s9, 1
    %s15 = ssub.s32 %s9, 2
    %s22 = sadd.s32 1, %s17
    %p23 = scmp.ge.s32.totalorder %s22, 1
    %s24 = scalar_select %p23, 0, %s22
    %s25 = sadd.s32 1, %s16
    %s26 = scalar_select %p23, %s25, %s16
    %p27 = scmp.ge.s32.totalorder %s26, 2
    %s28 = scalar_select %p27, 0, %s26
    %s29 = ssub.s32 %s16, %s28
    %s30 = ssub.s32 %s17, %s24
    %s31 = sor.u32 %s29, %s30
    %p32 = scmp.eq.s32.totalorder %s31, 0
    %s34 = sadd.s32 %s33, 1
    %s35 = scalar_select %p32, %s33, %s34
    %p38 = pneg %p32
    %p39 = scmp.eq.s32.totalorder %s9, 1
    %p40 = por %p38, %p39
    %p41 = scmp.ne.s32.totalorder %s33, %s36
    %p42 = scmp.eq.s32.totalorder %s9, 0
    %p43 = por %p41, %p42
    %p44 = scmp.ne.s32.totalorder %s33, %s36
    %p45 = scmp.eq.s32.totalorder %s14, 1
    %p46 = por %p44, %p45
    %p47 = scmp.ne.s32.totalorder %s36, %s37
    %p48 = scmp.eq.s32.totalorder %s14, 0
    %p49 = por %p47, %p48
    %p50 = scmp.ne.s32.totalorder %s36, %s37
    %p51 = scmp.eq.s32.totalorder %s15, 1
    %p52 = por %p50, %p51
    %p54 = scmp.ne.s32.totalorder %s37, %s53
    %p55 = scmp.eq.s32.totalorder %s15, 0
    %p56 = por %p54, %p55
    %s57 = ssub.s32 %s16, %s28
    %p58 = scmp.eq.s32.totalorder %s57, 0
    %s60 = sadd.s32 %s59, 1
    %s61 = scalar_select %p58, %s59, %s60
    %p64 = pneg %p58
    %p65 = scmp.eq.s32.totalorder %s9, 1
    %p66 = por %p64, %p65
    %p67 = scmp.ne.s32.totalorder %s59, %s62
    %p68 = scmp.eq.s32.totalorder %s9, 0
    %p69 = por %p67, %p68
    %p70 = scmp.ne.s32.totalorder %s59, %s62
    %p71 = scmp.eq.s32.totalorder %s14, 1
    %p72 = por %p70, %p71
    %p73 = scmp.ne.s32.totalorder %s62, %s63
    %p74 = scmp.eq.s32.totalorder %s14, 0
    %p75 = por %p73, %p74
    %p76 = scmp.ne.s32.totalorder %s62, %s63
    %p77 = scmp.eq.s32.totalorder %s15, 1
    %p78 = por %p76, %p77
    %p80 = scmp.ne.s32.totalorder %s63, %s79
    %p81 = scmp.eq.s32.totalorder %s15, 0
    %p82 = por %p80, %p81
    %s83 = ssub.s32 %s16, %s28
    %p84 = scmp.eq.s32.totalorder %s83, 0
    %s86 = sadd.s32 %s85, 1
    %s87 = scalar_select %p84, %s85, %s86
    %p90 = pneg %p84
    %p91 = scmp.eq.s32.totalorder %s9, 1
    %p92 = por %p90, %p91
    %p93 = scmp.ne.s32.totalorder %s85, %s88
    %p94 = scmp.eq.s32.totalorder %s9, 0
    %p95 = por %p93, %p94
    %p96 = scmp.ne.s32.totalorder %s85, %s88
    %p97 = scmp.eq.s32.totalorder %s14, 1
    %p98 = por %p96, %p97
    %p99 = scmp.ne.s32.totalorder %s88, %s89
    %p100 = scmp.eq.s32.totalorder %s14, 0
    %p101 = por %p99, %p100
    %p102 = scmp.ne.s32.totalorder %s88, %s89
    %p103 = scmp.eq.s32.totalorder %s15, 1
    %p104 = por %p102, %p103
    %p106 = scmp.ne.s32.totalorder %s89, %s105
    %p107 = scmp.eq.s32.totalorder %s15, 0
    %p108 = por %p106, %p107
    %s109 = ssub.s32 %s16, %s28
    %s110 = ssub.s32 %s17, %s24
    %s111 = sor.u32 %s109, %s110
    %p112 = scmp.eq.s32.totalorder %s111, 0
    %s114 = sadd.s32 %s113, 1
    %s115 = scalar_select %p112, %s113, %s114
    %p118 = pneg %p112
    %p119 = scmp.eq.s32.totalorder %s9, 1
    %p120 = por %p118, %p119
    %p121 = scmp.ne.s32.totalorder %s113, %s116
    %p122 = scmp.eq.s32.totalorder %s9, 0
    %p123 = por %p121, %p122
    %p124 = scmp.ne.s32.totalorder %s113, %s116
    %p125 = scmp.eq.s32.totalorder %s14, 1
    %p126 = por %p124, %p125
    %p127 = scmp.ne.s32.totalorder %s116, %s117
    %p128 = scmp.eq.s32.totalorder %s14, 0
    %p129 = por %p127, %p128
    %p130 = scmp.ne.s32.totalorder %s116, %s117
    %p131 = scmp.eq.s32.totalorder %s15, 1
    %p132 = por %p130, %p131
    %p134 = scmp.ne.s32.totalorder %s117, %s133
    %p135 = scmp.eq.s32.totalorder %s15, 0
    %p136 = por %p134, %p135
    %p137 = scmp.le.s32.totalorder 1, %s9
    %p138 = scmp.lt.s32.totalorder %s9, 3
    %p139 = pnand %p137, %p138
    %p140 = pneg %p139
    // Predicated region
    $region9: #{down_block_forward.7} parent=5 // pred_check
      _
    $region10: #{down_block_forward.7} parent=5 // pred_check_branch
      %142 = sbr.rel (%p139) target = $region12
    $region11: #{down_block_forward.7} parent=5 // pred_region
      %s143 = ssub.s32 %s9, 1
    $region12: #{down_block_forward.7} parent=5 // pred_fallthru
      _
    %p144 = scmp.lt.s32.totalorder %s9, 2
    // Predicated region
    $region13: #{down_block_forward.7} parent=5 // pred_check
      %p145 = pneg %p144
    $region14: #{down_block_forward.7} parent=5 // pred_check_branch
      %147 = sbr.rel (%p145) target = $region16
    $region15: #{down_block_forward.7} parent=5 // pred_region
      // Predicated region
      $region17: #{down_block_forward.7} parent=15 // pred_check
        %p148 = pneg %p43
      $region18: #{down_block_forward.7} parent=15 // pred_check_branch
        %150 = sbr.rel (%p148) target = $region20
      $region19: #{down_block_forward.7} parent=15 // pred_region
        %s151 = smul.u32 8, %s17
        %p152 = scmp.lt.s32.totalorder %s16, 1
        %s153 = scalar_select %p152, %s16, 1
        %p154 = scmp.lt.s32.totalorder %s151, 7
        %s155 = scalar_select %p154, %s151, 7
        %s156 = smul.addr %s153, 8
        %s157 = sadd.s32 %s155, %s156
        %s158 = smul.addr %s157, 8
        %s159 = scalar_lea.vmem %s0, %s158
        %s160 = smul.u32 8, %s17
      $region20: #{down_block_forward.7} parent=15 // pred_fallthru
        _
      // Predicated region
      $region21: #{down_block_forward.7} parent=15 // pred_check
        %p161 = pneg %p69
      $region22: #{down_block_forward.7} parent=15 // pred_check_branch
        %163 = sbr.rel (%p161) target = $region24
      $region23: #{down_block_forward.7} parent=15 // pred_region
        %p164 = scmp.lt.s32.totalorder %s16, 1
        %s165 = scalar_select %p164, %s16, 1
        %s166 = scalar_lea.vmem %s1, %s165
      $region24: #{down_block_forward.7} parent=15 // pred_fallthru
        _
      // Predicated region
      $region25: #{down_block_forward.7} parent=15 // pred_check
        %p167 = pneg %p95
      $region26: #{down_block_forward.7} parent=15 // pred_check_branch
        %169 = sbr.rel (%p167) target = $region28
      $region27: #{down_block_forward.7} parent=15 // pred_region
        %p170 = scmp.lt.s32.totalorder %s16, 1
        %s171 = scalar_select %p170, %s16, 1
        %s172 = scalar_lea.vmem %s2, %s171
      $region28: #{down_block_forward.7} parent=15 // pred_fallthru
        _
    $region16: #{down_block_forward.7} parent=5 // pred_fallthru
      _
    %p173 = scmp.le.s32.totalorder 1, %s9
    %p174 = scmp.lt.s32.totalorder %s9, 3
    %p175 = pnand %p173, %p174
    %p176 = pneg %p175
    // Predicated region
    $region29: #{down_block_forward.7} parent=5 // pred_check
      _
    $region30: #{down_block_forward.7} parent=5 // pred_check_branch
      %178 = sbr.rel (%p175) target = $region32
    $region31: #{down_block_forward.7} parent=5 // pred_region
      %s179 = ssub.s32 %s9, 1
      %s180 = smul.u32 8, %s19
      %p181 = scmp.lt.s32.totalorder %s18, 1
      %s182 = scalar_select %p181, %s18, 1
      %p183 = scmp.lt.s32.totalorder %s180, 7
      %s184 = scalar_select %p183, %s180, 7
      %s185 = smul.addr %s182, 8
      %s186 = sadd.s32 %s184, %s185
      %s187 = smul.addr %s186, 8
      %s188 = scalar_lea.vmem %s0, %s187
      %p189 = pneg %p49
      %p190 = pneg %p46
      %p191 = scmp.lt.s32.totalorder %s18, 1
      %s192 = scalar_select %p191, %s18, 1
      %s193 = scalar_lea.vmem %s1, %s192
      %p194 = pneg %p75
      %p195 = pneg %p72
      %p196 = scmp.lt.s32.totalorder %s18, 1
      %s197 = scalar_select %p196, %s18, 1
      %s198 = scalar_lea.vmem %s2, %s197
      %p199 = pneg %p101
      %p200 = pneg %p98
      %p201 = pneg %p129
      %p202 = pneg %p126
      %s203 = smul.u32 8, %s19
      %p204 = scmp.lt.s32.totalorder %s18, 1
      %s205 = scalar_select %p204, %s18, 1
      %p206 = scmp.lt.s32.totalorder %s203, 7
      %s207 = scalar_select %p206, %s203, 7
      %s208 = smul.addr %s205, 8
      %s209 = sadd.s32 %s207, %s208
      %s210 = smul.addr %s209, 8
      %s211 = scalar_lea.vmem %s3, %s210
      %s212 = smul.u32 8, %s19
      %p213 = scmp.lt.s32.totalorder %s18, 1
      %s214 = scalar_select %p213, %s18, 1
      %p215 = scmp.lt.s32.totalorder %s212, 7
      %s216 = scalar_select %p215, %s212, 7
      %s217 = smul.addr %s214, 8
      %s218 = sadd.s32 %s216, %s217
      %s219 = smul.addr %s218, 8
      %s220 = scalar_lea.vmem %s0, %s219
      %s221 = smul.u32 8, %s19
      %p222 = scmp.lt.s32.totalorder %s18, 1
      %s223 = scalar_select %p222, %s18, 1
      %s224 = scalar_lea.vmem %s1, %s223
      %p225 = scmp.lt.s32.totalorder %s18, 1
      %s226 = scalar_select %p225, %s18, 1
      %s227 = scalar_lea.vmem %s2, %s226
      %s228 = smul.u32 8, %s19
      %p229 = scmp.lt.s32.totalorder %s18, 1
      %s230 = scalar_select %p229, %s18, 1
      %p231 = scmp.lt.s32.totalorder %s228, 7
      %s232 = scalar_select %p231, %s228, 7
      %s233 = smul.addr %s230, 8
      %s234 = sadd.s32 %s232, %s233
      %s235 = smul.addr %s234, 8
      %s236 = scalar_lea.vmem %s3, %s235
      %s237 = smul.u32 8, %s19
      %v238 = vld [vmem:[%s220] sm:$0xff]
      %v239 = vld [vmem:[%s220 + $0x8] sm:$0xff]
      %v240 = vld [vmem:[%s220 + $0x10] sm:$0xff]
      %v241 = vld [vmem:[%s220 + $0x18] sm:$0xff]
      %v242 = vld [vmem:[%s220 + $0x20] sm:$0xff]
      %v243 = vld [vmem:[%s220 + $0x28] sm:$0xff]
      %v244 = vld [vmem:[%s220 + $0x30] sm:$0xff]
      %v245 = vld [vmem:[%s220 + $0x38] sm:$0xff]
      %v246 = vld [vmem:[%s224] sm:$0x1]
      %v248 = vlaneseq
      %v249 = vshrl.u32 %v248, 7
      %v250 = vsub.s32 0, %v249
      %v251 = vrot.slane %v246, %v250
      %v253 = vmul.f32 %v238, %v251
      %v254 = vmul.f32 %v239, %v251
      %v255 = vmul.f32 %v240, %v251
      %v256 = vmul.f32 %v241, %v251
      %v257 = vmul.f32 %v242, %v251
      %v258 = vmul.f32 %v243, %v251
      %v259 = vmul.f32 %v244, %v251
      %v260 = vmul.f32 %v245, %v251
      %v261 = vld [vmem:[%s227] sm:$0x1]
      %v263 = vlaneseq
      %v264 = vshrl.u32 %v263, 7
      %v265 = vsub.s32 0, %v264
      %v266 = vrot.slane %v261, %v265
      %v268 = vadd.f32 %v253, %v266
      %v269 = vadd.f32 %v254, %v266
      %v270 = vadd.f32 %v255, %v266
      %v271 = vadd.f32 %v256, %v266
      %v272 = vadd.f32 %v257, %v266
      %v273 = vadd.f32 %v258, %v266
      %v274 = vadd.f32 %v259, %v266
      %v275 = vadd.f32 %v260, %v266
      %v276 = vmax.f32 %v268, 0.0
      %v277 = vmax.f32 %v269, 0.0
      %v278 = vmax.f32 %v270, 0.0
      %v279 = vmax.f32 %v271, 0.0
      %v280 = vmax.f32 %v272, 0.0
      %v281 = vmax.f32 %v273, 0.0
      %v282 = vmax.f32 %v274, 0.0
      %v283 = vmax.f32 %v275, 0.0
      %284 = vst [vmem:[%s236] sm:$0xff] %v276
      %285 = vst [vmem:[%s236 + $0x8] sm:$0xff] %v277
      %286 = vst [vmem:[%s236 + $0x10] sm:$0xff] %v278
      %287 = vst [vmem:[%s236 + $0x18] sm:$0xff] %v279
      %288 = vst [vmem:[%s236 + $0x20] sm:$0xff] %v280
      %289 = vst [vmem:[%s236 + $0x28] sm:$0xff] %v281
      %290 = vst [vmem:[%s236 + $0x30] sm:$0xff] %v282
      %291 = vst [vmem:[%s236 + $0x38] sm:$0xff] %v283
      %s292 = smul.u32 8, %s19
      %p293 = scmp.lt.s32.totalorder %s18, 1
      %s294 = scalar_select %p293, %s18, 1
      %p295 = scmp.lt.s32.totalorder %s292, 7
      %s296 = scalar_select %p295, %s292, 7
      %s297 = smul.addr %s294, 8
      %s298 = sadd.s32 %s296, %s297
      %s299 = smul.addr %s298, 8
      %s300 = scalar_lea.vmem %s3, %s299
      // Predicated region
      $region33: #{down_block_forward.7} parent=31 // pred_check
        %p301 = pneg %p126
      $region34: #{down_block_forward.7} parent=31 // pred_check_branch
        %303 = sbr.rel (%p301) target = $region36
      $region35: #{down_block_forward.7} parent=31 // pred_region
        %s304 = smul.u32 8, %s19
      $region36: #{down_block_forward.7} parent=31 // pred_fallthru
        _
    $region32: #{down_block_forward.7} parent=5 // pred_fallthru
      _
    %p305 = scmp.le.s32.totalorder 2, %s9
    // Predicated region
    $region37: #{down_block_forward.7} parent=5 // pred_check
      %p306 = pneg %p305
    $region38: #{down_block_forward.7} parent=5 // pred_check_branch
      %308 = sbr.rel (%p306) target = $region40
    $region39: #{down_block_forward.7} parent=5 // pred_region
      %s309 = ssub.s32 %s9, 2
      // Predicated region
      $region41: #{down_block_forward.7} parent=39 // pred_check
        %p310 = pneg %p132
      $region42: #{down_block_forward.7} parent=39 // pred_check_branch
        %312 = sbr.rel (%p310) target = $region44
      $region43: #{down_block_forward.7} parent=39 // pred_region
        %s313 = smul.u32 8, %s21
        %p314 = scmp.lt.s32.totalorder %s20, 1
        %s315 = scalar_select %p314, %s20, 1
        %p316 = scmp.lt.s32.totalorder %s313, 7
        %s317 = scalar_select %p316, %s313, 7
        %s318 = smul.addr %s315, 8
        %s319 = sadd.s32 %s317, %s318
        %s320 = smul.addr %s319, 8
        %s321 = scalar_lea.vmem %s3, %s320
      $region44: #{down_block_forward.7} parent=39 // pred_fallthru
        _
    $region40: #{down_block_forward.7} parent=5 // pred_fallthru
      _
  $region6: #{down_block_forward.7} parent=0 // loop_footer
    %s13 = sadd.s32 1, %s9
  $region7: #{down_block_forward.7} parent=0 // loop_footer_branch
    %8 = sbr.rel target = $region3
  $region8: #{down_block_forward.7} parent=0 // loop_exit
    _

// kernel: down_block_forward.6
$region0: #{down_block_forward.6}
  #allocation0 [shape = 'u32[]', space=smem, size = 0x4, offset = 0x4, fixed_abs, tag = 'smem constant byte address 0x4 - core index']
  #allocation1 [shape = 'u32[144,128]{1,0:T(1,128)}', space=vmem, size = 0x12000, scoped, tag = 'internal scratch']
  %s0 = inlined_call_operand.vmem [shape: f32[2,40,5,5,4], index: 0, kind: input, shape index: {}]
  %s1 = inlined_call_operand.vmem [shape: bf16[27,4,128], index: 1, kind: input, shape index: {}]
  %s2 = inlined_call_operand.vmem [shape: f32[1,128], index: 2, kind: input, shape index: {}]
  %s3 = inlined_call_operand.vmem [shape: f32[2,64,128], index: 3, kind: output, shape index: {0}]
  %s4 = inlined_call_operand.vmem [shape: f32[2,1,128], index: 4, kind: output, shape index: {1}]
  %s5 = inlined_call_operand.vmem [shape: f32[2,1,128], index: 5, kind: output, shape index: {2}]
  %6 = xla_tuple %s3, %s4, %s5
  %s7 = sld [smem:[#allocation0]]
  $region61: #{down_block_forward.6} parent=0
    _
  %s9 = ssub.s32 1, %s7
  %s10 = scalar_select 0, %s9, %s7
  loop: start=0, step=1, limit=4
  $region2: #{down_block_forward.6} parent=0 // loop_pre_header
    _
  $region3: #{down_block_forward.6} parent=0 // loop_header
    %s12 = sphi 0, %s16
    %p13 = scmp.ge.s32.totalorder %s12, 4
    %s22 = sphi 0, %s24
    %s25 = sphi 0, %s22
    %s26 = sphi 0, %s25
    %s42 = sphi 0, %s26
    %s46 = sphi 0, %s46
    %s48 = sphi 0, %s46
    %s49 = sphi 0, %s48
    %s63 = sphi 0, %s49
    %s67 = sphi 0, %s67
    %s69 = sphi 0, %s67
    %s70 = sphi 0, %s69
    %s84 = sphi 0, %s70
    %s90 = sphi 0, %s92
    %s93 = sphi 0, %s90
    %s94 = sphi 0, %s93
    %s110 = sphi 0, %s94
    %s116 = sphi 0, %s118
    %s119 = sphi 0, %s116
    %s120 = sphi 0, %s119
    %s136 = sphi 0, %s120
    %s142 = sphi 0, %s144
    %s145 = sphi 0, %s142
    %s146 = sphi 0, %s145
    %s162 = sphi 0, %s146
  $region4: #{down_block_forward.6} parent=0 // loop_header_branch
    %15 = sbr.rel (%p13) target = $region8
  $region5: #{down_block_forward.6} parent=0 // loop_body
    %s17 = ssub.s32 %s12, 1
    %s18 = ssub.s32 %s12, 2
    %s19 = sadd.s32 %s12, 1
    %s20 = ssub.s32 %s12, %s19
    %p21 = scmp.eq.s32.totalorder %s20, 0
    %s23 = sadd.s32 %s22, 1
    %s24 = scalar_select %p21, %s22, %s23
    %p27 = pneg %p21
    %p28 = scmp.eq.s32.totalorder %s12, 1
    %p29 = por %p27, %p28
    %p30 = scmp.ne.s32.totalorder %s22, %s25
    %p31 = scmp.eq.s32.totalorder %s12, 0
    %p32 = por %p30, %p31
    %p33 = scmp.ne.s32.totalorder %s22, %s25
    %p34 = scmp.eq.s32.totalorder %s17, 1
    %p35 = por %p33, %p34
    %p36 = scmp.ne.s32.totalorder %s25, %s26
    %p37 = scmp.eq.s32.totalorder %s17, 0
    %p38 = por %p36, %p37
    %p39 = scmp.ne.s32.totalorder %s25, %s26
    %p40 = scmp.eq.s32.totalorder %s18, 1
    %p41 = por %p39, %p40
    %p43 = scmp.ne.s32.totalorder %s26, %s42
    %p44 = scmp.eq.s32.totalorder %s18, 0
    %p45 = por %p43, %p44
    %s47 = sadd.s32 %s46, 1
    %p50 = scmp.eq.s32.totalorder %s12, 1
    %p51 = scmp.ne.s32.totalorder %s46, %s48
    %p52 = scmp.eq.s32.totalorder %s12, 0
    %p53 = por %p51, %p52
    %p54 = scmp.ne.s32.totalorder %s46, %s48
    %p55 = scmp.eq.s32.totalorder %s17, 1
    %p56 = por %p54, %p55
    %p57 = scmp.ne.s32.totalorder %s48, %s49
    %p58 = scmp.eq.s32.totalorder %s17, 0
    %p59 = por %p57, %p58
    %p60 = scmp.ne.s32.totalorder %s48, %s49
    %p61 = scmp.eq.s32.totalorder %s18, 1
    %p62 = por %p60, %p61
    %p64 = scmp.ne.s32.totalorder %s49, %s63
    %p65 = scmp.eq.s32.totalorder %s18, 0
    %p66 = por %p64, %p65
    %s68 = sadd.s32 %s67, 1
    %p71 = scmp.eq.s32.totalorder %s12, 1
    %p72 = scmp.ne.s32.totalorder %s67, %s69
    %p73 = scmp.eq.s32.totalorder %s12, 0
    %p74 = por %p72, %p73
    %p75 = scmp.ne.s32.totalorder %s67, %s69
    %p76 = scmp.eq.s32.totalorder %s17, 1
    %p77 = por %p75, %p76
    %p78 = scmp.ne.s32.totalorder %s69, %s70
    %p79 = scmp.eq.s32.totalorder %s17, 0
    %p80 = por %p78, %p79
    %p81 = scmp.ne.s32.totalorder %s69, %s70
    %p82 = scmp.eq.s32.totalorder %s18, 1
    %p83 = por %p81, %p82
    %p85 = scmp.ne.s32.totalorder %s70, %s84
    %p86 = scmp.eq.s32.totalorder %s18, 0
    %p87 = por %p85, %p86
    %s88 = ssub.s32 %s12, %s19
    %p89 = scmp.eq.s32.totalorder %s88, 0
    %s91 = sadd.s32 %s90, 1
    %s92 = scalar_select %p89, %s90, %s91
    %p95 = pneg %p89
    %p96 = scmp.eq.s32.totalorder %s12, 1
    %p97 = por %p95, %p96
    %p98 = scmp.ne.s32.totalorder %s90, %s93
    %p99 = scmp.eq.s32.totalorder %s12, 0
    %p100 = por %p98, %p99
    %p101 = scmp.ne.s32.totalorder %s90, %s93
    %p102 = scmp.eq.s32.totalorder %s17, 1
    %p103 = por %p101, %p102
    %p104 = scmp.ne.s32.totalorder %s93, %s94
    %p105 = scmp.eq.s32.totalorder %s17, 0
    %p106 = por %p104, %p105
    %p107 = scmp.ne.s32.totalorder %s93, %s94
    %p108 = scmp.eq.s32.totalorder %s18, 1
    %p109 = por %p107, %p108
    %p111 = scmp.ne.s32.totalorder %s94, %s110
    %p112 = scmp.eq.s32.totalorder %s18, 0
    %p113 = por %p111, %p112
    %s114 = ssub.s32 %s12, %s19
    %p115 = scmp.eq.s32.totalorder %s114, 0
    %s117 = sadd.s32 %s116, 1
    %s118 = scalar_select %p115, %s116, %s117
    %p121 = pneg %p115
    %p122 = scmp.eq.s32.totalorder %s12, 1
    %p123 = por %p121, %p122
    %p124 = scmp.ne.s32.totalorder %s116, %s119
    %p125 = scmp.eq.s32.totalorder %s12, 0
    %p126 = por %p124, %p125
    %p127 = scmp.ne.s32.totalorder %s116, %s119
    %p128 = scmp.eq.s32.totalorder %s17, 1
    %p129 = por %p127, %p128
    %p130 = scmp.ne.s32.totalorder %s119, %s120
    %p131 = scmp.eq.s32.totalorder %s17, 0
    %p132 = por %p130, %p131
    %p133 = scmp.ne.s32.totalorder %s119, %s120
    %p134 = scmp.eq.s32.totalorder %s18, 1
    %p135 = por %p133, %p134
    %p137 = scmp.ne.s32.totalorder %s120, %s136
    %p138 = scmp.eq.s32.totalorder %s18, 0
    %p139 = por %p137, %p138
    %s140 = ssub.s32 %s12, %s19
    %p141 = scmp.eq.s32.totalorder %s140, 0
    %s143 = sadd.s32 %s142, 1
    %s144 = scalar_select %p141, %s142, %s143
    %p147 = pneg %p141
    %p148 = scmp.eq.s32.totalorder %s12, 1
    %p149 = por %p147, %p148
    %p150 = scmp.ne.s32.totalorder %s142, %s145
    %p151 = scmp.eq.s32.totalorder %s12, 0
    %p152 = por %p150, %p151
    %p153 = scmp.ne.s32.totalorder %s142, %s145
    %p154 = scmp.eq.s32.totalorder %s17, 1
    %p155 = por %p153, %p154
    %p156 = scmp.ne.s32.totalorder %s145, %s146
    %p157 = scmp.eq.s32.totalorder %s17, 0
    %p158 = por %p156, %p157
    %p159 = scmp.ne.s32.totalorder %s145, %s146
    %p160 = scmp.eq.s32.totalorder %s18, 1
    %p161 = por %p159, %p160
    %p163 = scmp.ne.s32.totalorder %s146, %s162
    %p164 = scmp.eq.s32.totalorder %s18, 0
    %p165 = por %p163, %p164
    %p166 = scmp.le.s32.totalorder 1, %s12
    %p167 = scmp.lt.s32.totalorder %s12, 3
    %p168 = pnand %p166, %p167
    %p169 = pneg %p168
    // Predicated region
    $region9: #{down_block_forward.6} parent=5 // pred_check
      _
    $region10: #{down_block_forward.6} parent=5 // pred_check_branch
      %171 = sbr.rel (%p168) target = $region12
    $region11: #{down_block_forward.6} parent=5 // pred_region
      %s172 = ssub.s32 %s12, 1
      // Predicated region
      $region13: #{down_block_forward.6} parent=11 // pred_check
        %p173 = pneg %p59
      $region14: #{down_block_forward.6} parent=11 // pred_check_branch
        %175 = sbr.rel (%p173) target = $region16
      $region15: #{down_block_forward.6} parent=11 // pred_region
        _
      $region16: #{down_block_forward.6} parent=11 // pred_fallthru
        _
      // Predicated region
      $region17: #{down_block_forward.6} parent=11 // pred_check
        %p176 = pneg %p80
      $region18: #{down_block_forward.6} parent=11 // pred_check_branch
        %178 = sbr.rel (%p176) target = $region20
      $region19: #{down_block_forward.6} parent=11 // pred_region
        _
      $region20: #{down_block_forward.6} parent=11 // pred_fallthru
        _
    $region12: #{down_block_forward.6} parent=5 // pred_fallthru
      _
    %p179 = scmp.lt.s32.totalorder %s12, 2
    // Predicated region
    $region21: #{down_block_forward.6} parent=5 // pred_check
      %p180 = pneg %p179
    $region22: #{down_block_forward.6} parent=5 // pred_check_branch
      %182 = sbr.rel (%p180) target = $region24
    $region23: #{down_block_forward.6} parent=5 // pred_region
      // Predicated region
      $region25: #{down_block_forward.6} parent=23 // pred_check
        %p183 = pneg %p32
      $region26: #{down_block_forward.6} parent=23 // pred_check_branch
        %185 = sbr.rel (%p183) target = $region28
      $region27: #{down_block_forward.6} parent=23 // pred_region
        %p186 = scmp.lt.s32.totalorder %s12, 1
        %s187 = scalar_select %p186, %s12, 1
        %s188 = smul.addr %s187, 200
        %s189 = smul.addr %s188, 8
        %s190 = scalar_lea.vmem %s0, %s189
      $region28: #{down_block_forward.6} parent=23 // pred_fallthru
        _
    $region24: #{down_block_forward.6} parent=5 // pred_fallthru
      _
    %p191 = scmp.le.s32.totalorder 1, %s12
    %p192 = scmp.lt.s32.totalorder %s12, 3
    %p193 = pnand %p191, %p192
    %p194 = pneg %p193
    // Predicated region
    $region29: #{down_block_forward.6} parent=5 // pred_check
      _
    $region30: #{down_block_forward.6} parent=5 // pred_check_branch
      %196 = sbr.rel (%p193) target = $region32
    $region31: #{down_block_forward.6} parent=5 // pred_region
      %s197 = ssub.s32 %s12, 1
      %p198 = scmp.lt.s32.totalorder %s17, 1
      %s199 = scalar_select %p198, %s17, 1
      %s200 = smul.addr %s199, 200
      %s201 = smul.addr %s200, 8
      %s202 = scalar_lea.vmem %s0, %s201
      %p203 = pneg %p38
      %p204 = pneg %p35
      %p205 = pneg %p59
      %p206 = pneg %p56
      %p207 = pneg %p80
      %p208 = pneg %p77
      %p209 = pneg %p106
      %p210 = pneg %p103
      %p211 = scmp.lt.s32.totalorder %s17, 1
      %s212 = scalar_select %p211, %s17, 1
      %s213 = smul.addr %s212, 8
      %s214 = smul.addr %s213, 8
      %s215 = scalar_lea.vmem %s3, %s214
      %p216 = pneg %p132
      %p217 = pneg %p129
      %p218 = scmp.lt.s32.totalorder %s17, 1
      %s219 = scalar_select %p218, %s17, 1
      %s220 = scalar_lea.vmem %s4, %s219
      %p221 = pneg %p158
      %p222 = pneg %p155
      %p223 = scmp.lt.s32.totalorder %s17, 1
      %s224 = scalar_select %p223, %s17, 1
      %s225 = scalar_lea.vmem %s5, %s224
      %p226 = scmp.lt.s32.totalorder %s17, 1
      %s227 = scalar_select %p226, %s17, 1
      %s228 = smul.addr %s227, 200
      %s229 = smul.addr %s228, 8
      %s230 = scalar_lea.vmem %s0, %s229
      %p231 = scmp.lt.s32.totalorder %s17, 1
      %s232 = scalar_select %p231, %s17, 1
      %s233 = smul.addr %s232, 8
      %s234 = smul.addr %s233, 8
      %s235 = scalar_lea.vmem %s3, %s234
      %p236 = scmp.lt.s32.totalorder %s17, 1
      %s237 = scalar_select %p236, %s17, 1
      %s238 = scalar_lea.vmem %s4, %s237
      %p239 = scmp.lt.s32.totalorder %s17, 1
      %s240 = scalar_select %p239, %s17, 1
      %s241 = scalar_lea.vmem %s5, %s240
      %v243 = vld [vmem:[%s230] sm:$0xf]
      %v244 = vld [vmem:[%s230 + $0x8] sm:$0xf]
      %v245 = vld [vmem:[%s230 + $0x10] sm:$0xf]
      %v246 = vld [vmem:[%s230 + $0x18] sm:$0xf]
      %v247 = vld [vmem:[%s230 + $0x28] sm:$0xf]
      %v248 = vld [vmem:[%s230 + $0x30] sm:$0xf]
      %v249 = vld [vmem:[%s230 + $0x38] sm:$0xf]
      %v250 = vld [vmem:[%s230 + $0x40] sm:$0xf]
      %v251 = vld [vmem:[%s230 + $0x50] sm:$0xf]
      %v252 = vld [vmem:[%s230 + $0x58] sm:$0xf]
      %v253 = vld [vmem:[%s230 + $0x60] sm:$0xf]
      %v254 = vld [vmem:[%s230 + $0x68] sm:$0xf]
      %v255 = vld [vmem:[%s230 + $0x78] sm:$0xf]
      %v256 = vld [vmem:[%s230 + $0x80] sm:$0xf]
      %v257 = vld [vmem:[%s230 + $0x88] sm:$0xf]
      %v258 = vld [vmem:[%s230 + $0x90] sm:$0xf]
      %v275 = vcombine.low %v243, %v244
      %v276 = vcombine.low %v245, %v246
      %v277 = vcombine.low %v247, %v248
      %v278 = vcombine.low %v249, %v250
      %v279 = vcombine.low %v251, %v252
      %v280 = vcombine.low %v253, %v254
      %v281 = vcombine.low %v255, %v256
      %v282 = vcombine.low %v257, %v258
      %v291 = vpack.c.bf16 %v276, %v275
      %v292 = vpack.c.bf16 %v278, %v277
      %v293 = vpack.c.bf16 %v280, %v279
      %v294 = vpack.c.bf16 %v282, %v281
      %v295 = vld [vmem:[%s1] sm:$0x3]
      %s296 = scalar_lea.vmem %s230, 200
      %v297 = vld [vmem:[%s296] sm:$0xf]
      %v298 = vld [vmem:[%s296 + $0x8] sm:$0xf]
      %v299 = vld [vmem:[%s296 + $0x10] sm:$0xf]
      %v300 = vld [vmem:[%s296 + $0x18] sm:$0xf]
      %v301 = vld [vmem:[%s296 + $0x28] sm:$0xf]
      %v302 = vld [vmem:[%s296 + $0x30] sm:$0xf]
      %v303 = vld [vmem:[%s296 + $0x38] sm:$0xf]
      %v304 = vld [vmem:[%s296 + $0x40] sm:$0xf]
      %v305 = vld [vmem:[%s296 + $0x50] sm:$0xf]
      %v306 = vld [vmem:[%s296 + $0x58] sm:$0xf]
      %v307 = vld [vmem:[%s296 + $0x60] sm:$0xf]
      %v308 = vld [vmem:[%s296 + $0x68] sm:$0xf]
      %v309 = vld [vmem:[%s296 + $0x78] sm:$0xf]
      %v310 = vld [vmem:[%s296 + $0x80] sm:$0xf]
      %v311 = vld [vmem:[%s296 + $0x88] sm:$0xf]
      %v312 = vld [vmem:[%s296 + $0x90] sm:$0xf]
      %v329 = vcombine.low %v297, %v298
      %v330 = vcombine.low %v299, %v300
      %v331 = vcombine.low %v301, %v302
      %v332 = vcombine.low %v303, %v304
      %v333 = vcombine.low %v305, %v306
      %v334 = vcombine.low %v307, %v308
      %v335 = vcombine.low %v309, %v310
      %v336 = vcombine.low %v311, %v312
      %v345 = vpack.c.bf16 %v330, %v329
      %v346 = vpack.c.bf16 %v332, %v331
      %v347 = vpack.c.bf16 %v334, %v333
      %v348 = vpack.c.bf16 %v336, %v335
      %s349 = scalar_lea.vmem %s1, 2
      %v350 = vld [vmem:[%s349] sm:$0x3]
      %vm351 = vcmask 31744
      %v353 = vsel %vm351, %v345, 0
      %v356 = vsel %vm351, %v346, 0
      %v359 = vsel %vm351, %v347, 0
      %v362 = vsel %vm351, %v348, 0
      %vm364 = vcmask 1041408
      %v366 = vsel %vm364, %v350, 0
      %368 = vmatprep.subr.bf16.mxu0 0
      %369 = vmatpush1.bf16.msra.mxu0 0
      %370 = vmatprep.subr.bf16.mxu0 0
      %371 = vmatpush1.bf16.msra.mxu0 0
      %372 = vmatprep.subr.bf16.mxu0 0
      %373 = vmatpush1.bf16.msra.mxu0 0
      %374 = vmatprep.subr.bf16.mxu0 0
      %375 = vmatpush1.bf16.msra.mxu0 0
      %376 = vmatprep.subr.bf16.mxu0 0
      %377 = vmatpush1.bf16.msra.mxu0 0
      %378 = vmatprep.subr.bf16.mxu0 0
      %379 = vmatpush1.bf16.msra.mxu0 0
      %380 = vmatprep.subr.bf16.mxu0 0
      %381 = vmatpush1.bf16.msra.mxu0 0
      %382 = vmatprep.subr.bf16.mxu0 0
      %383 = vmatpush1.bf16.msra.mxu0 %v366
      %384 = vmatprep.subr.bf16.mxu0 0
      %385 = vmatpush2.bf16.msra.mxu0 0
      %386 = vmatprep.subr.bf16.mxu0 0
      %387 = vmatpush2.bf16.msra.mxu0 0
      %388 = vmatprep.subr.bf16.mxu0 0
      %389 = vmatpush2.bf16.msra.mxu0 0
      %390 = vmatprep.subr.bf16.mxu0 0
      %391 = vmatpush2.bf16.msra.mxu0 0
      %392 = vmatprep.subr.bf16.mxu0 0
      %393 = vmatpush2.bf16.msra.mxu0 0
      %394 = vmatprep.subr.bf16.mxu0 0
      %395 = vmatpush2.bf16.msra.mxu0 0
      %396 = vmatprep.subr.bf16.mxu0 0
      %397 = vmatpush2.bf16.msra.mxu0 0
      %398 = vmatprep.subr.bf16.mxu0 0
      %399 = vmatpush2.bf16.msra.mxu0 0
      %400 = vmatprep.mubr.bf16.mxu0 0
      %401 = vmatmul.mubr.bf16.gmra.mxu0 %v353
      %v402 = vpop.f32.mrf.mxu0
      %v403 = vadd.f32 0.0, %v402
      %v404 = vpop.f32.mrf.mxu0
      %v405 = vpop.f32.mrf.mxu0
      %v406 = vadd.f32 0.0, %v405
      %v407 = vpop.f32.mrf.mxu0
      %408 = vmatprep.mubr.bf16.mxu0 0
      %409 = vmatmul.mubr.bf16.gmra.mxu0 %v356
      %v410 = vpop.f32.mrf.mxu0
      %v411 = vadd.f32 0.0, %v410
      %v412 = vpop.f32.mrf.mxu0
      %v413 = vpop.f32.mrf.mxu0
      %v414 = vadd.f32 0.0, %v413
      %v415 = vpop.f32.mrf.mxu0
      %416 = vmatprep.mubr.bf16.mxu0 0
      %417 = vmatmul.mubr.bf16.gmra.mxu0 %v359
      %v418 = vpop.f32.mrf.mxu0
      %v419 = vadd.f32 0.0, %v418
      %v420 = vpop.f32.mrf.mxu0
      %v421 = vpop.f32.mrf.mxu0
      %v422 = vadd.f32 0.0, %v421
      %v423 = vpop.f32.mrf.mxu0
      %424 = vmatprep.mubr.bf16.mxu0 0
      %425 = vmatmul.mubr.bf16.gmra.mxu0 %v362
      %v426 = vpop.f32.mrf.mxu0
      %v427 = vadd.f32 0.0, %v426
      %v428 = vpop.f32.mrf.mxu0
      %v429 = vpop.f32.mrf.mxu0
      %v430 = vadd.f32 0.0, %v429
      %v431 = vpop.f32.mrf.mxu0
      %432 = vdwg.mxu0
      %v434 = vsel %vm351, %v291, 0
      %v437 = vsel %vm351, %v292, 0
      %v440 = vsel %vm351, %v293, 0
      %v443 = vsel %vm351, %v294, 0
      %v446 = vsel %vm364, %v295, 0
      %448 = vmatprep.subr.bf16.mxu0 0
      %449 = vmatpush1.bf16.msra.mxu0 0
      %450 = vmatprep.subr.bf16.mxu0 0
      %451 = vmatpush1.bf16.msra.mxu0 0
      %452 = vmatprep.subr.bf16.mxu0 0
      %453 = vmatpush1.bf16.msra.mxu0 0
      %454 = vmatprep.subr.bf16.mxu0 0
      %455 = vmatpush1.bf16.msra.mxu0 0
      %456 = vmatprep.subr.bf16.mxu0 0
      %457 = vmatpush1.bf16.msra.mxu0 0
      %458 = vmatprep.subr.bf16.mxu0 0
      %459 = vmatpush1.bf16.msra.mxu0 0
      %460 = vmatprep.subr.bf16.mxu0 0
      %461 = vmatpush1.bf16.msra.mxu0 0
      %462 = vmatprep.subr.bf16.mxu0 0
      %463 = vmatpush1.bf16.msra.mxu0 %v446
      %464 = vmatprep.subr.bf16.mxu0 0
      %465 = vmatpush2.bf16.msra.mxu0 0
      %466 = vmatprep.subr.bf16.mxu0 0
      %467 = vmatpush2.bf16.msra.mxu0 0
      %468 = vmatprep.subr.bf16.mxu0 0
      %469 = vmatpush2.bf16.msra.mxu0 0
      %470 = vmatprep.subr.bf16.mxu0 0
      %471 = vmatpush2.bf16.msra.mxu0 0
      %472 = vmatprep.subr.bf16.mxu0 0
      %473 = vmatpush2.bf16.msra.mxu0 0
      %474 = vmatprep.subr.bf16.mxu0 0
      %475 = vmatpush2.bf16.msra.mxu0 0
      %476 = vmatprep.subr.bf16.mxu0 0
      %477 = vmatpush2.bf16.msra.mxu0 0
      %478 = vmatprep.subr.bf16.mxu0 0
      %479 = vmatpush2.bf16.msra.mxu0 0
      %480 = vmatprep.mubr.bf16.mxu0 0
      %481 = vmatmul.mubr.bf16.gmra.mxu0 %v434
      %v482 = vpop.f32.mrf.mxu0
      %v483 = vadd.f32 %v403, %v482
      %v484 = vpop.f32.mrf.mxu0
      %v485 = vpop.f32.mrf.mxu0
      %v486 = vadd.f32 %v406, %v485
      %v487 = vpop.f32.mrf.mxu0
      %488 = vmatprep.mubr.bf16.mxu0 0
      %489 = vmatmul.mubr.bf16.gmra.mxu0 %v437
      %v490 = vpop.f32.mrf.mxu0
      %v491 = vadd.f32 %v411, %v490
      %v492 = vpop.f32.mrf.mxu0
      %v493 = vpop.f32.mrf.mxu0
      %v494 = vadd.f32 %v414, %v493
      %v495 = vpop.f32.mrf.mxu0
      %496 = vmatprep.mubr.bf16.mxu0 0
      %497 = vmatmul.mubr.bf16.gmra.mxu0 %v440
      %v498 = vpop.f32.mrf.mxu0
      %v499 = vadd.f32 %v419, %v498
      %v500 = vpop.f32.mrf.mxu0
      %v501 = vpop.f32.mrf.mxu0
      %v502 = vadd.f32 %v422, %v501
      %v503 = vpop.f32.mrf.mxu0
      %504 = vmatprep.mubr.bf16.mxu0 0
      %505 = vmatmul.mubr.bf16.gmra.mxu0 %v443
      %v506 = vpop.f32.mrf.mxu0
      %v507 = vadd.f32 %v427, %v506
      %v508 = vpop.f32.mrf.mxu0
      %v509 = vpop.f32.mrf.mxu0
      %v510 = vadd.f32 %v430, %v509
      %v511 = vpop.f32.mrf.mxu0
      %512 = vdwg.mxu0
      %v513 = vld [vmem:[%s230 + $0x1] sm:$0xf]
      %v514 = vld [vmem:[%s230 + $0x9] sm:$0xf]
      %v515 = vld [vmem:[%s230 + $0x11] sm:$0xf]
      %v516 = vld [vmem:[%s230 + $0x19] sm:$0xf]
      %v517 = vld [vmem:[%s230 + $0x29] sm:$0xf]
      %v518 = vld [vmem:[%s230 + $0x31] sm:$0xf]
      %v519 = vld [vmem:[%s230 + $0x39] sm:$0xf]
      %v520 = vld [vmem:[%s230 + $0x41] sm:$0xf]
      %v521 = vld [vmem:[%s230 + $0x51] sm:$0xf]
      %v522 = vld [vmem:[%s230 + $0x59] sm:$0xf]
      %v523 = vld [vmem:[%s230 + $0x61] sm:$0xf]
      %v524 = vld [vmem:[%s230 + $0x69] sm:$0xf]
      %v525 = vld [vmem:[%s230 + $0x79] sm:$0xf]
      %v526 = vld [vmem:[%s230 + $0x81] sm:$0xf]
      %v527 = vld [vmem:[%s230 + $0x89] sm:$0xf]
      %v528 = vld [vmem:[%s230 + $0x91] sm:$0xf]
      %v545 = vcombine.low %v513, %v514
      %v546 = vcombine.low %v515, %v516
      %v547 = vcombine.low %v517, %v518
      %v548 = vcombine.low %v519, %v520
      %v549 = vcombine.low %v521, %v522
      %v550 = vcombine.low %v523, %v524
      %v551 = vcombine.low %v525, %v526
      %v552 = vcombine.low %v527, %v528
      %v561 = vpack.c.bf16 %v546, %v545
      %v562 = vpack.c.bf16 %v548, %v547
      %v563 = vpack.c.bf16 %v550, %v549
      %v564 = vpack.c.bf16 %v552, %v551
      %s565 = scalar_lea.vmem %s1, 4
      %v566 = vld [vmem:[%s565] sm:$0x3]
      %v568 = vsel %vm351, %v561, 0
      %v571 = vsel %vm351, %v562, 0
      %v574 = vsel %vm351, %v563, 0
      %v577 = vsel %vm351, %v564, 0
      %v580 = vsel %vm364, %v566, 0
      %582 = vmatprep.subr.bf16.mxu0 0
      %583 = vmatpush1.bf16.msra.mxu0 0
      %584 = vmatprep.subr.bf16.mxu0 0
      %585 = vmatpush1.bf16.msra.mxu0 0
      %586 = vmatprep.subr.bf16.mxu0 0
      %587 = vmatpush1.bf16.msra.mxu0 0
      %588 = vmatprep.subr.bf16.mxu0 0
      %589 = vmatpush1.bf16.msra.mxu0 0
      %590 = vmatprep.subr.bf16.mxu0 0
      %591 = vmatpush1.bf16.msra.mxu0 0
      %592 = vmatprep.subr.bf16.mxu0 0
      %593 = vmatpush1.bf16.msra.mxu0 0
      %594 = vmatprep.subr.bf16.mxu0 0
      %595 = vmatpush1.bf16.msra.mxu0 0
      %596 = vmatprep.subr.bf16.mxu0 0
      %597 = vmatpush1.bf16.msra.mxu0 %v580
      %598 = vmatprep.subr.bf16.mxu0 0
      %599 = vmatpush2.bf16.msra.mxu0 0
      %600 = vmatprep.subr.bf16.mxu0 0
      %601 = vmatpush2.bf16.msra.mxu0 0
      %602 = vmatprep.subr.bf16.mxu0 0
      %603 = vmatpush2.bf16.msra.mxu0 0
      %604 = vmatprep.subr.bf16.mxu0 0
      %605 = vmatpush2.bf16.msra.mxu0 0
      %606 = vmatprep.subr.bf16.mxu0 0
      %607 = vmatpush2.bf16.msra.mxu0 0
      %608 = vmatprep.subr.bf16.mxu0 0
      %609 = vmatpush2.bf16.msra.mxu0 0
      %610 = vmatprep.subr.bf16.mxu0 0
      %611 = vmatpush2.bf16.msra.mxu0 0
      %612 = vmatprep.subr.bf16.mxu0 0
      %613 = vmatpush2.bf16.msra.mxu0 0
      %614 = vmatprep.mubr.bf16.mxu0 0
      %615 = vmatmul.mubr.bf16.gmra.mxu0 %v568
      %v616 = vpop.f32.mrf.mxu0
      %v617 = vadd.f32 0.0, %v616
      %v618 = vpop.f32.mrf.mxu0
      %v619 = vpop.f32.mrf.mxu0
      %v620 = vadd.f32 0.0, %v619
      %v621 = vpop.f32.mrf.mxu0
      %622 = vmatprep.mubr.bf16.mxu0 0
      %623 = vmatmul.mubr.bf16.gmra.mxu0 %v571
      %v624 = vpop.f32.mrf.mxu0
      %v625 = vadd.f32 0.0, %v624
      %v626 = vpop.f32.mrf.mxu0
      %v627 = vpop.f32.mrf.mxu0
      %v628 = vadd.f32 0.0, %v627
      %v629 = vpop.f32.mrf.mxu0
      %630 = vmatprep.mubr.bf16.mxu0 0
      %631 = vmatmul.mubr.bf16.gmra.mxu0 %v574
      %v632 = vpop.f32.mrf.mxu0
      %v633 = vadd.f32 0.0, %v632
      %v634 = vpop.f32.mrf.mxu0
      %v635 = vpop.f32.mrf.mxu0
      %v636 = vadd.f32 0.0, %v635
      %v637 = vpop.f32.mrf.mxu0
      %638 = vmatprep.mubr.bf16.mxu0 0
      %639 = vmatmul.mubr.bf16.gmra.mxu0 %v577
      %v640 = vpop.f32.mrf.mxu0
      %v641 = vadd.f32 0.0, %v640
      %v642 = vpop.f32.mrf.mxu0
      %v643 = vpop.f32.mrf.mxu0
      %v644 = vadd.f32 0.0, %v643
      %v645 = vpop.f32.mrf.mxu0
      %646 = vdwg.mxu0
      %v647 = vadd.f32 %v483, %v617
      %v648 = vadd.f32 %v486, %v620
      %v649 = vadd.f32 %v491, %v625
      %v650 = vadd.f32 %v494, %v628
      %v651 = vadd.f32 %v499, %v633
      %v652 = vadd.f32 %v502, %v636
      %v653 = vadd.f32 %v507, %v641
      %v654 = vadd.f32 %v510, %v644
      %s655 = scalar_lea.vmem %s230, 400
      %v656 = vld [vmem:[%s655] sm:$0xf]
      %v657 = vld [vmem:[%s655 + $0x8] sm:$0xf]
      %v658 = vld [vmem:[%s655 + $0x10] sm:$0xf]
      %v659 = vld [vmem:[%s655 + $0x18] sm:$0xf]
      %v660 = vld [vmem:[%s655 + $0x28] sm:$0xf]
      %v661 = vld [vmem:[%s655 + $0x30] sm:$0xf]
      %v662 = vld [vmem:[%s655 + $0x38] sm:$0xf]
      %v663 = vld [vmem:[%s655 + $0x40] sm:$0xf]
      %v664 = vld [vmem:[%s655 + $0x50] sm:$0xf]
      %v665 = vld [vmem:[%s655 + $0x58] sm:$0xf]
      %v666 = vld [vmem:[%s655 + $0x60] sm:$0xf]
      %v667 = vld [vmem:[%s655 + $0x68] sm:$0xf]
      %v668 = vld [vmem:[%s655 + $0x78] sm:$0xf]
      %v669 = vld [vmem:[%s655 + $0x80] sm:$0xf]
      %v670 = vld [vmem:[%s655 + $0x88] sm:$0xf]
      %v671 = vld [vmem:[%s655 + $0x90] sm:$0xf]
      %v688 = vcombine.low %v656, %v657
      %v689 = vcombine.low %v658, %v659
      %v690 = vcombine.low %v660, %v661
      %v691 = vcombine.low %v662, %v663
      %v692 = vcombine.low %v664, %v665
      %v693 = vcombine.low %v666, %v667
      %v694 = vcombine.low %v668, %v669
      %v695 = vcombine.low %v670, %v671
      %v704 = vpack.c.bf16 %v689, %v688
      %v705 = vpack.c.bf16 %v691, %v690
      %v706 = vpack.c.bf16 %v693, %v692
      %v707 = vpack.c.bf16 %v695, %v694
      %s708 = scalar_lea.vmem %s1, 6
      %v709 = vld [vmem:[%s708] sm:$0x3]
      %v711 = vsel %vm351, %v704, 0
      %v714 = vsel %vm351, %v705, 0
      %v717 = vsel %vm351, %v706, 0
      %v720 = vsel %vm351, %v707, 0
      %v723 = vsel %vm364, %v709, 0
      %725 = vmatprep.subr.bf16.mxu0 0
      %726 = vmatpush1.bf16.msra.mxu0 0
      %727 = vmatprep.subr.bf16.mxu0 0
      %728 = vmatpush1.bf16.msra.mxu0 0
      %729 = vmatprep.subr.bf16.mxu0 0
      %730 = vmatpush1.bf16.msra.mxu0 0
      %731 = vmatprep.subr.bf16.mxu0 0
      %732 = vmatpush1.bf16.msra.mxu0 0
      %733 = vmatprep.subr.bf16.mxu0 0
      %734 = vmatpush1.bf16.msra.mxu0 0
      %735 = vmatprep.subr.bf16.mxu0 0
      %736 = vmatpush1.bf16.msra.mxu0 0
      %737 = vmatprep.subr.bf16.mxu0 0
      %738 = vmatpush1.bf16.msra.mxu0 0
      %739 = vmatprep.subr.bf16.mxu0 0
      %740 = vmatpush1.bf16.msra.mxu0 %v723
      %741 = vmatprep.subr.bf16.mxu0 0
      %742 = vmatpush2.bf16.msra.mxu0 0
      %743 = vmatprep.subr.bf16.mxu0 0
      %744 = vmatpush2.bf16.msra.mxu0 0
      %745 = vmatprep.subr.bf16.mxu0 0
      %746 = vmatpush2.bf16.msra.mxu0 0
      %747 = vmatprep.subr.bf16.mxu0 0
      %748 = vmatpush2.bf16.msra.mxu0 0
      %749 = vmatprep.subr.bf16.mxu0 0
      %750 = vmatpush2.bf16.msra.mxu0 0
      %751 = vmatprep.subr.bf16.mxu0 0
      %752 = vmatpush2.bf16.msra.mxu0 0
      %753 = vmatprep.subr.bf16.mxu0 0
      %754 = vmatpush2.bf16.msra.mxu0 0
      %755 = vmatprep.subr.bf16.mxu0 0
      %756 = vmatpush2.bf16.msra.mxu0 0
      %757 = vmatprep.mubr.bf16.mxu0 0
      %758 = vmatmul.mubr.bf16.gmra.mxu0 %v711
      %v759 = vpop.f32.mrf.mxu0
      %v760 = vadd.f32 0.0, %v759
      %v761 = vpop.f32.mrf.mxu0
      %v762 = vpop.f32.mrf.mxu0
      %v763 = vadd.f32 0.0, %v762
      %v764 = vpop.f32.mrf.mxu0
      %765 = vmatprep.mubr.bf16.mxu0 0
      %766 = vmatmul.mubr.bf16.gmra.mxu0 %v714
      %v767 = vpop.f32.mrf.mxu0
      %v768 = vadd.f32 0.0, %v767
      %v769 = vpop.f32.mrf.mxu0
      %v770 = vpop.f32.mrf.mxu0
      %v771 = vadd.f32 0.0, %v770
      %v772 = vpop.f32.mrf.mxu0
      %773 = vmatprep.mubr.bf16.mxu0 0
      %774 = vmatmul.mubr.bf16.gmra.mxu0 %v717
      %v775 = vpop.f32.mrf.mxu0
      %v776 = vadd.f32 0.0, %v775
      %v777 = vpop.f32.mrf.mxu0
      %v778 = vpop.f32.mrf.mxu0
      %v779 = vadd.f32 0.0, %v778
      %v780 = vpop.f32.mrf.mxu0
      %781 = vmatprep.mubr.bf16.mxu0 0
      %782 = vmatmul.mubr.bf16.gmra.mxu0 %v720
      %v783 = vpop.f32.mrf.mxu0
      %v784 = vadd.f32 0.0, %v783
      %v785 = vpop.f32.mrf.mxu0
      %v786 = vpop.f32.mrf.mxu0
      %v787 = vadd.f32 0.0, %v786
      %v788 = vpop.f32.mrf.mxu0
      %789 = vdwg.mxu0
      %v790 = vadd.f32 %v647, %v760
      %v791 = vadd.f32 %v648, %v763
      %v792 = vadd.f32 %v649, %v768
      %v793 = vadd.f32 %v650, %v771
      %v794 = vadd.f32 %v651, %v776
      %v795 = vadd.f32 %v652, %v779
      %v796 = vadd.f32 %v653, %v784
      %v797 = vadd.f32 %v654, %v787
      %s798 = scalar_lea.vmem %s230, 600
      %v799 = vld [vmem:[%s798] sm:$0xf]
      %v800 = vld [vmem:[%s798 + $0x8] sm:$0xf]
      %v801 = vld [vmem:[%s798 + $0x10] sm:$0xf]
      %v802 = vld [vmem:[%s798 + $0x18] sm:$0xf]
      %v803 = vld [vmem:[%s798 + $0x28] sm:$0xf]
      %v804 = vld [vmem:[%s798 + $0x30] sm:$0xf]
      %v805 = vld [vmem:[%s798 + $0x38] sm:$0xf]
      %v806 = vld [vmem:[%s798 + $0x40] sm:$0xf]
      %v807 = vld [vmem:[%s798 + $0x50] sm:$0xf]
      %v808 = vld [vmem:[%s798 + $0x58] sm:$0xf]
      %v809 = vld [vmem:[%s798 + $0x60] sm:$0xf]
      %v810 = vld [vmem:[%s798 + $0x68] sm:$0xf]
      %v811 = vld [vmem:[%s798 + $0x78] sm:$0xf]
      %v812 = vld [vmem:[%s798 + $0x80] sm:$0xf]
      %v813 = vld [vmem:[%s798 + $0x88] sm:$0xf]
      %v814 = vld [vmem:[%s798 + $0x90] sm:$0xf]
      %v831 = vcombine.low %v799, %v800
      %v832 = vcombine.low %v801, %v802
      %v833 = vcombine.low %v803, %v804
      %v834 = vcombine.low %v805, %v806
      %v835 = vcombine.low %v807, %v808
      %v836 = vcombine.low %v809, %v810
      %v837 = vcombine.low %v811, %v812
      %v838 = vcombine.low %v813, %v814
      %v847 = vpack.c.bf16 %v832, %v831
      %v848 = vpack.c.bf16 %v834, %v833
      %v849 = vpack.c.bf16 %v836, %v835
      %v850 = vpack.c.bf16 %v838, %v837
      %s851 = scalar_lea.vmem %s1, 8
      %v852 = vld [vmem:[%s851] sm:$0x3]
      %v854 = vsel %vm351, %v847, 0
      %v857 = vsel %vm351, %v848, 0
      %v860 = vsel %vm351, %v849, 0
      %v863 = vsel %vm351, %v850, 0
      %v866 = vsel %vm364, %v852, 0
      %868 = vmatprep.subr.bf16.mxu0 0
      %869 = vmatpush1.bf16.msra.mxu0 0
      %870 = vmatprep.subr.bf16.mxu0 0
      %871 = vmatpush1.bf16.msra.mxu0 0
      %872 = vmatprep.subr.bf16.mxu0 0
      %873 = vmatpush1.bf16.msra.mxu0 0
      %874 = vmatprep.subr.bf16.mxu0 0
      %875 = vmatpush1.bf16.msra.mxu0 0
      %876 = vmatprep.subr.bf16.mxu0 0
      %877 = vmatpush1.bf16.msra.mxu0 0
      %878 = vmatprep.subr.bf16.mxu0 0
      %879 = vmatpush1.bf16.msra.mxu0 0
      %880 = vmatprep.subr.bf16.mxu0 0
      %881 = vmatpush1.bf16.msra.mxu0 0
      %882 = vmatprep.subr.bf16.mxu0 0
      %883 = vmatpush1.bf16.msra.mxu0 %v866
      %884 = vmatprep.subr.bf16.mxu0 0
      %885 = vmatpush2.bf16.msra.mxu0 0
      %886 = vmatprep.subr.bf16.mxu0 0
      %887 = vmatpush2.bf16.msra.mxu0 0
      %888 = vmatprep.subr.bf16.mxu0 0
      %889 = vmatpush2.bf16.msra.mxu0 0
      %890 = vmatprep.subr.bf16.mxu0 0
      %891 = vmatpush2.bf16.msra.mxu0 0
      %892 = vmatprep.subr.bf16.mxu0 0
      %893 = vmatpush2.bf16.msra.mxu0 0
      %894 = vmatprep.subr.bf16.mxu0 0
      %895 = vmatpush2.bf16.msra.mxu0 0
      %896 = vmatprep.subr.bf16.mxu0 0
      %897 = vmatpush2.bf16.msra.mxu0 0
      %898 = vmatprep.subr.bf16.mxu0 0
      %899 = vmatpush2.bf16.msra.mxu0 0
      %900 = vmatprep.mubr.bf16.mxu0 0
      %901 = vmatmul.mubr.bf16.gmra.mxu0 %v854
      %v902 = vpop.f32.mrf.mxu0
      %v903 = vadd.f32 0.0, %v902
      %v904 = vpop.f32.mrf.mxu0
      %v905 = vpop.f32.mrf.mxu0
      %v906 = vadd.f32 0.0, %v905
      %v907 = vpop.f32.mrf.mxu0
      %908 = vmatprep.mubr.bf16.mxu0 0
      %909 = vmatmul.mubr.bf16.gmra.mxu0 %v857
      %v910 = vpop.f32.mrf.mxu0
      %v911 = vadd.f32 0.0, %v910
      %v912 = vpop.f32.mrf.mxu0
      %v913 = vpop.f32.mrf.mxu0
      %v914 = vadd.f32 0.0, %v913
      %v915 = vpop.f32.mrf.mxu0
      %916 = vmatprep.mubr.bf16.mxu0 0
      %917 = vmatmul.mubr.bf16.gmra.mxu0 %v860
      %v918 = vpop.f32.mrf.mxu0
      %v919 = vadd.f32 0.0, %v918
      %v920 = vpop.f32.mrf.mxu0
      %v921 = vpop.f32.mrf.mxu0
      %v922 = vadd.f32 0.0, %v921
      %v923 = vpop.f32.mrf.mxu0
      %924 = vmatprep.mubr.bf16.mxu0 0
      %925 = vmatmul.mubr.bf16.gmra.mxu0 %v863
      %v926 = vpop.f32.mrf.mxu0
      %v927 = vadd.f32 0.0, %v926
      %v928 = vpop.f32.mrf.mxu0
      %v929 = vpop.f32.mrf.mxu0
      %v930 = vadd.f32 0.0, %v929
      %v931 = vpop.f32.mrf.mxu0
      %932 = vdwg.mxu0
      %v933 = vadd.f32 %v790, %v903
      %v934 = vadd.f32 %v791, %v906
      %v935 = vadd.f32 %v792, %v911
      %v936 = vadd.f32 %v793, %v914
      %v937 = vadd.f32 %v794, %v919
      %v938 = vadd.f32 %v795, %v922
      %v939 = vadd.f32 %v796, %v927
      %v940 = vadd.f32 %v797, %v930
      %v941 = vld [vmem:[%s655 + $0x1] sm:$0xf]
      %v942 = vld [vmem:[%s655 + $0x9] sm:$0xf]
      %v943 = vld [vmem:[%s655 + $0x11] sm:$0xf]
      %v944 = vld [vmem:[%s655 + $0x19] sm:$0xf]
      %v945 = vld [vmem:[%s655 + $0x29] sm:$0xf]
      %v946 = vld [vmem:[%s655 + $0x31] sm:$0xf]
      %v947 = vld [vmem:[%s655 + $0x39] sm:$0xf]
      %v948 = vld [vmem:[%s655 + $0x41] sm:$0xf]
      %v949 = vld [vmem:[%s655 + $0x51] sm:$0xf]
      %v950 = vld [vmem:[%s655 + $0x59] sm:$0xf]
      %v951 = vld [vmem:[%s655 + $0x61] sm:$0xf]
      %v952 = vld [vmem:[%s655 + $0x69] sm:$0xf]
      %v953 = vld [vmem:[%s655 + $0x79] sm:$0xf]
      %v954 = vld [vmem:[%s655 + $0x81] sm:$0xf]
      %v955 = vld [vmem:[%s655 + $0x89] sm:$0xf]
      %v956 = vld [vmem:[%s655 + $0x91] sm:$0xf]
      %v973 = vcombine.low %v941, %v942
      %v974 = vcombine.low %v943, %v944
      %v975 = vcombine.low %v945, %v946
      %v976 = vcombine.low %v947, %v948
      %v977 = vcombine.low %v949, %v950
      %v978 = vcombine.low %v951, %v952
      %v979 = vcombine.low %v953, %v954
      %v980 = vcombine.low %v955, %v956
      %v989 = vpack.c.bf16 %v974, %v973
      %v990 = vpack.c.bf16 %v976, %v975
      %v991 = vpack.c.bf16 %v978, %v977
      %v992 = vpack.c.bf16 %v980, %v979
      %s993 = scalar_lea.vmem %s1, 10
      %v994 = vld [vmem:[%s993] sm:$0x3]
      %v996 = vsel %vm351, %v989, 0
      %v999 = vsel %vm351, %v990, 0
      %v1002 = vsel %vm351, %v991, 0
      %v1005 = vsel %vm351, %v992, 0
      %v1008 = vsel %vm364, %v994, 0
      %1010 = vmatprep.subr.bf16.mxu0 0
      %1011 = vmatpush1.bf16.msra.mxu0 0
      %1012 = vmatprep.subr.bf16.mxu0 0
      %1013 = vmatpush1.bf16.msra.mxu0 0
      %1014 = vmatprep.subr.bf16.mxu0 0
      %1015 = vmatpush1.bf16.msra.mxu0 0
      %1016 = vmatprep.subr.bf16.mxu0 0
      %1017 = vmatpush1.bf16.msra.mxu0 0
      %1018 = vmatprep.subr.bf16.mxu0 0
      %1019 = vmatpush1.bf16.msra.mxu0 0
      %1020 = vmatprep.subr.bf16.mxu0 0
      %1021 = vmatpush1.bf16.msra.mxu0 0
      %1022 = vmatprep.subr.bf16.mxu0 0
      %1023 = vmatpush1.bf16.msra.mxu0 0
      %1024 = vmatprep.subr.bf16.mxu0 0
      %1025 = vmatpush1.bf16.msra.mxu0 %v1008
      %1026 = vmatprep.subr.bf16.mxu0 0
      %1027 = vmatpush2.bf16.msra.mxu0 0
      %1028 = vmatprep.subr.bf16.mxu0 0
      %1029 = vmatpush2.bf16.msra.mxu0 0
      %1030 = vmatprep.subr.bf16.mxu0 0
      %1031 = vmatpush2.bf16.msra.mxu0 0
      %1032 = vmatprep.subr.bf16.mxu0 0
      %1033 = vmatpush2.bf16.msra.mxu0 0
      %1034 = vmatprep.subr.bf16.mxu0 0
      %1035 = vmatpush2.bf16.msra.mxu0 0
      %1036 = vmatprep.subr.bf16.mxu0 0
      %1037 = vmatpush2.bf16.msra.mxu0 0
      %1038 = vmatprep.subr.bf16.mxu0 0
      %1039 = vmatpush2.bf16.msra.mxu0 0
      %1040 = vmatprep.subr.bf16.mxu0 0
      %1041 = vmatpush2.bf16.msra.mxu0 0
      %1042 = vmatprep.mubr.bf16.mxu0 0
      %1043 = vmatmul.mubr.bf16.gmra.mxu0 %v996
      %v1044 = vpop.f32.mrf.mxu0
      %v1045 = vadd.f32 0.0, %v1044
      %v1046 = vpop.f32.mrf.mxu0
      %v1047 = vpop.f32.mrf.mxu0
      %v1048 = vadd.f32 0.0, %v1047
      %v1049 = vpop.f32.mrf.mxu0
      %1050 = vmatprep.mubr.bf16.mxu0 0
      %1051 = vmatmul.mubr.bf16.gmra.mxu0 %v999
      %v1052 = vpop.f32.mrf.mxu0
      %v1053 = vadd.f32 0.0, %v1052
      %v1054 = vpop.f32.mrf.mxu0
      %v1055 = vpop.f32.mrf.mxu0
      %v1056 = vadd.f32 0.0, %v1055
      %v1057 = vpop.f32.mrf.mxu0
      %1058 = vmatprep.mubr.bf16.mxu0 0
      %1059 = vmatmul.mubr.bf16.gmra.mxu0 %v1002
      %v1060 = vpop.f32.mrf.mxu0
      %v1061 = vadd.f32 0.0, %v1060
      %v1062 = vpop.f32.mrf.mxu0
      %v1063 = vpop.f32.mrf.mxu0
      %v1064 = vadd.f32 0.0, %v1063
      %v1065 = vpop.f32.mrf.mxu0
      %1066 = vmatprep.mubr.bf16.mxu0 0
      %1067 = vmatmul.mubr.bf16.gmra.mxu0 %v1005
      %v1068 = vpop.f32.mrf.mxu0
      %v1069 = vadd.f32 0.0, %v1068
      %v1070 = vpop.f32.mrf.mxu0
      %v1071 = vpop.f32.mrf.mxu0
      %v1072 = vadd.f32 0.0, %v1071
      %v1073 = vpop.f32.mrf.mxu0
      %1074 = vdwg.mxu0
      %v1075 = vadd.f32 %v933, %v1045
      %v1076 = vadd.f32 %v934, %v1048
      %v1077 = vadd.f32 %v935, %v1053
      %v1078 = vadd.f32 %v936, %v1056
      %v1079 = vadd.f32 %v937, %v1061
      %v1080 = vadd.f32 %v938, %v1064
      %v1081 = vadd.f32 %v939, %v1069
      %v1082 = vadd.f32 %v940, %v1072
      %s1083 = scalar_lea.vmem %s230, 8
      %v1084 = vld [vmem:[%s1083] sm:$0xf]
      %v1085 = vld [vmem:[%s1083 + $0x8] sm:$0xf]
      %v1086 = vld [vmem:[%s1083 + $0x10] sm:$0xf]
      %v1087 = vld [vmem:[%s1083 + $0x18] sm:$0xf]
      %v1088 = vld [vmem:[%s1083 + $0x28] sm:$0xf]
      %v1089 = vld [vmem:[%s1083 + $0x30] sm:$0xf]
      %v1090 = vld [vmem:[%s1083 + $0x38] sm:$0xf]
      %v1091 = vld [vmem:[%s1083 + $0x40] sm:$0xf]
      %v1092 = vld [vmem:[%s1083 + $0x50] sm:$0xf]
      %v1093 = vld [vmem:[%s1083 + $0x58] sm:$0xf]
      %v1094 = vld [vmem:[%s1083 + $0x60] sm:$0xf]
      %v1095 = vld [vmem:[%s1083 + $0x68] sm:$0xf]
      %v1096 = vld [vmem:[%s1083 + $0x78] sm:$0xf]
      %v1097 = vld [vmem:[%s1083 + $0x80] sm:$0xf]
      %v1098 = vld [vmem:[%s1083 + $0x88] sm:$0xf]
      %v1099 = vld [vmem:[%s1083 + $0x90] sm:$0xf]
      %v1116 = vcombine.low %v1084, %v1085
      %v1117 = vcombine.low %v1086, %v1087
      %v1118 = vcombine.low %v1088, %v1089
      %v1119 = vcombine.low %v1090, %v1091
      %v1120 = vcombine.low %v1092, %v1093
      %v1121 = vcombine.low %v1094, %v1095
      %v1122 = vcombine.low %v1096, %v1097
      %v1123 = vcombine.low %v1098, %v1099
      %v1132 = vpack.c.bf16 %v1117, %v1116
      %v1133 = vpack.c.bf16 %v1119, %v1118
      %v1134 = vpack.c.bf16 %v1121, %v1120
      %v1135 = vpack.c.bf16 %v1123, %v1122
      %s1136 = scalar_lea.vmem %s1, 12
      %v1137 = vld [vmem:[%s1136] sm:$0x3]
      %v1139 = vsel %vm351, %v1132, 0
      %v1142 = vsel %vm351, %v1133, 0
      %v1145 = vsel %vm351, %v1134, 0
      %v1148 = vsel %vm351, %v1135, 0
      %v1151 = vsel %vm364, %v1137, 0
      %1153 = vmatprep.subr.bf16.mxu0 0
      %1154 = vmatpush1.bf16.msra.mxu0 0
      %1155 = vmatprep.subr.bf16.mxu0 0
      %1156 = vmatpush1.bf16.msra.mxu0 0
      %1157 = vmatprep.subr.bf16.mxu0 0
      %1158 = vmatpush1.bf16.msra.mxu0 0
      %1159 = vmatprep.subr.bf16.mxu0 0
      %1160 = vmatpush1.bf16.msra.mxu0 0
      %1161 = vmatprep.subr.bf16.mxu0 0
      %1162 = vmatpush1.bf16.msra.mxu0 0
      %1163 = vmatprep.subr.bf16.mxu0 0
      %1164 = vmatpush1.bf16.msra.mxu0 0
      %1165 = vmatprep.subr.bf16.mxu0 0
      %1166 = vmatpush1.bf16.msra.mxu0 0
      %1167 = vmatprep.subr.bf16.mxu0 0
      %1168 = vmatpush1.bf16.msra.mxu0 %v1151
      %1169 = vmatprep.subr.bf16.mxu0 0
      %1170 = vmatpush2.bf16.msra.mxu0 0
      %1171 = vmatprep.subr.bf16.mxu0 0
      %1172 = vmatpush2.bf16.msra.mxu0 0
      %1173 = vmatprep.subr.bf16.mxu0 0
      %1174 = vmatpush2.bf16.msra.mxu0 0
      %1175 = vmatprep.subr.bf16.mxu0 0
      %1176 = vmatpush2.bf16.msra.mxu0 0
      %1177 = vmatprep.subr.bf16.mxu0 0
      %1178 = vmatpush2.bf16.msra.mxu0 0
      %1179 = vmatprep.subr.bf16.mxu0 0
      %1180 = vmatpush2.bf16.msra.mxu0 0
      %1181 = vmatprep.subr.bf16.mxu0 0
      %1182 = vmatpush2.bf16.msra.mxu0 0
      %1183 = vmatprep.subr.bf16.mxu0 0
      %1184 = vmatpush2.bf16.msra.mxu0 0
      %1185 = vmatprep.mubr.bf16.mxu0 0
      %1186 = vmatmul.mubr.bf16.gmra.mxu0 %v1139
      %v1187 = vpop.f32.mrf.mxu0
      %v1188 = vadd.f32 0.0, %v1187
      %v1189 = vpop.f32.mrf.mxu0
      %v1190 = vpop.f32.mrf.mxu0
      %v1191 = vadd.f32 0.0, %v1190
      %v1192 = vpop.f32.mrf.mxu0
      %1193 = vmatprep.mubr.bf16.mxu0 0
      %1194 = vmatmul.mubr.bf16.gmra.mxu0 %v1142
      %v1195 = vpop.f32.mrf.mxu0
      %v1196 = vadd.f32 0.0, %v1195
      %v1197 = vpop.f32.mrf.mxu0
      %v1198 = vpop.f32.mrf.mxu0
      %v1199 = vadd.f32 0.0, %v1198
      %v1200 = vpop.f32.mrf.mxu0
      %1201 = vmatprep.mubr.bf16.mxu0 0
      %1202 = vmatmul.mubr.bf16.gmra.mxu0 %v1145
      %v1203 = vpop.f32.mrf.mxu0
      %v1204 = vadd.f32 0.0, %v1203
      %v1205 = vpop.f32.mrf.mxu0
      %v1206 = vpop.f32.mrf.mxu0
      %v1207 = vadd.f32 0.0, %v1206
      %v1208 = vpop.f32.mrf.mxu0
      %1209 = vmatprep.mubr.bf16.mxu0 0
      %1210 = vmatmul.mubr.bf16.gmra.mxu0 %v1148
      %v1211 = vpop.f32.mrf.mxu0
      %v1212 = vadd.f32 0.0, %v1211
      %v1213 = vpop.f32.mrf.mxu0
      %v1214 = vpop.f32.mrf.mxu0
      %v1215 = vadd.f32 0.0, %v1214
      %v1216 = vpop.f32.mrf.mxu0
      %1217 = vdwg.mxu0
      %v1218 = vadd.f32 %v1075, %v1188
      %v1219 = vadd.f32 %v1076, %v1191
      %v1220 = vadd.f32 %v1077, %v1196
      %v1221 = vadd.f32 %v1078, %v1199
      %v1222 = vadd.f32 %v1079, %v1204
      %v1223 = vadd.f32 %v1080, %v1207
      %v1224 = vadd.f32 %v1081, %v1212
      %v1225 = vadd.f32 %v1082, %v1215
      %s1226 = scalar_lea.vmem %s230, 208
      %v1227 = vld [vmem:[%s1226] sm:$0xf]
      %v1228 = vld [vmem:[%s1226 + $0x8] sm:$0xf]
      %v1229 = vld [vmem:[%s1226 + $0x10] sm:$0xf]
      %v1230 = vld [vmem:[%s1226 + $0x18] sm:$0xf]
      %v1231 = vld [vmem:[%s1226 + $0x28] sm:$0xf]
      %v1232 = vld [vmem:[%s1226 + $0x30] sm:$0xf]
      %v1233 = vld [vmem:[%s1226 + $0x38] sm:$0xf]
      %v1234 = vld [vmem:[%s1226 + $0x40] sm:$0xf]
      %v1235 = vld [vmem:[%s1226 + $0x50] sm:$0xf]
      %v1236 = vld [vmem:[%s1226 + $0x58] sm:$0xf]
      %v1237 = vld [vmem:[%s1226 + $0x60] sm:$0xf]
      %v1238 = vld [vmem:[%s1226 + $0x68] sm:$0xf]
      %v1239 = vld [vmem:[%s1226 + $0x78] sm:$0xf]
      %v1240 = vld [vmem:[%s1226 + $0x80] sm:$0xf]
      %v1241 = vld [vmem:[%s1226 + $0x88] sm:$0xf]
      %v1242 = vld [vmem:[%s1226 + $0x90] sm:$0xf]
      %v1259 = vcombine.low %v1227, %v1228
      %v1260 = vcombine.low %v1229, %v1230
      %v1261 = vcombine.low %v1231, %v1232
      %v1262 = vcombine.low %v1233, %v1234
      %v1263 = vcombine.low %v1235, %v1236
      %v1264 = vcombine.low %v1237, %v1238
      %v1265 = vcombine.low %v1239, %v1240
      %v1266 = vcombine.low %v1241, %v1242
      %v1275 = vpack.c.bf16 %v1260, %v1259
      %v1276 = vpack.c.bf16 %v1262, %v1261
      %v1277 = vpack.c.bf16 %v1264, %v1263
      %v1278 = vpack.c.bf16 %v1266, %v1265
      %s1279 = scalar_lea.vmem %s1, 14
      %v1280 = vld [vmem:[%s1279] sm:$0x3]
      %v1282 = vsel %vm351, %v1275, 0
      %v1285 = vsel %vm351, %v1276, 0
      %v1288 = vsel %vm351, %v1277, 0
      %v1291 = vsel %vm351, %v1278, 0
      %v1294 = vsel %vm364, %v1280, 0
      %1296 = vmatprep.subr.bf16.mxu0 0
      %1297 = vmatpush1.bf16.msra.mxu0 0
      %1298 = vmatprep.subr.bf16.mxu0 0
      %1299 = vmatpush1.bf16.msra.mxu0 0
      %1300 = vmatprep.subr.bf16.mxu0 0
      %1301 = vmatpush1.bf16.msra.mxu0 0
      %1302 = vmatprep.subr.bf16.mxu0 0
      %1303 = vmatpush1.bf16.msra.mxu0 0
      %1304 = vmatprep.subr.bf16.mxu0 0
      %1305 = vmatpush1.bf16.msra.mxu0 0
      %1306 = vmatprep.subr.bf16.mxu0 0
      %1307 = vmatpush1.bf16.msra.mxu0 0
      %1308 = vmatprep.subr.bf16.mxu0 0
      %1309 = vmatpush1.bf16.msra.mxu0 0
      %1310 = vmatprep.subr.bf16.mxu0 0
      %1311 = vmatpush1.bf16.msra.mxu0 %v1294
      %1312 = vmatprep.subr.bf16.mxu0 0
      %1313 = vmatpush2.bf16.msra.mxu0 0
      %1314 = vmatprep.subr.bf16.mxu0 0
      %1315 = vmatpush2.bf16.msra.mxu0 0
      %1316 = vmatprep.subr.bf16.mxu0 0
      %1317 = vmatpush2.bf16.msra.mxu0 0
      %1318 = vmatprep.subr.bf16.mxu0 0
      %1319 = vmatpush2.bf16.msra.mxu0 0
      %1320 = vmatprep.subr.bf16.mxu0 0
      %1321 = vmatpush2.bf16.msra.mxu0 0
      %1322 = vmatprep.subr.bf16.mxu0 0
      %1323 = vmatpush2.bf16.msra.mxu0 0
      %1324 = vmatprep.subr.bf16.mxu0 0
      %1325 = vmatpush2.bf16.msra.mxu0 0
      %1326 = vmatprep.subr.bf16.mxu0 0
      %1327 = vmatpush2.bf16.msra.mxu0 0
      %1328 = vmatprep.mubr.bf16.mxu0 0
      %1329 = vmatmul.mubr.bf16.gmra.mxu0 %v1282
      %v1330 = vpop.f32.mrf.mxu0
      %v1331 = vadd.f32 0.0, %v1330
      %v1332 = vpop.f32.mrf.mxu0
      %v1333 = vpop.f32.mrf.mxu0
      %v1334 = vadd.f32 0.0, %v1333
      %v1335 = vpop.f32.mrf.mxu0
      %1336 = vmatprep.mubr.bf16.mxu0 0
      %1337 = vmatmul.mubr.bf16.gmra.mxu0 %v1285
      %v1338 = vpop.f32.mrf.mxu0
      %v1339 = vadd.f32 0.0, %v1338
      %v1340 = vpop.f32.mrf.mxu0
      %v1341 = vpop.f32.mrf.mxu0
      %v1342 = vadd.f32 0.0, %v1341
      %v1343 = vpop.f32.mrf.mxu0
      %1344 = vmatprep.mubr.bf16.mxu0 0
      %1345 = vmatmul.mubr.bf16.gmra.mxu0 %v1288
      %v1346 = vpop.f32.mrf.mxu0
      %v1347 = vadd.f32 0.0, %v1346
      %v1348 = vpop.f32.mrf.mxu0
      %v1349 = vpop.f32.mrf.mxu0
      %v1350 = vadd.f32 0.0, %v1349
      %v1351 = vpop.f32.mrf.mxu0
      %1352 = vmatprep.mubr.bf16.mxu0 0
      %1353 = vmatmul.mubr.bf16.gmra.mxu0 %v1291
      %v1354 = vpop.f32.mrf.mxu0
      %v1355 = vadd.f32 0.0, %v1354
      %v1356 = vpop.f32.mrf.mxu0
      %v1357 = vpop.f32.mrf.mxu0
      %v1358 = vadd.f32 0.0, %v1357
      %v1359 = vpop.f32.mrf.mxu0
      %1360 = vdwg.mxu0
      %v1361 = vadd.f32 %v1218, %v1331
      %v1362 = vadd.f32 %v1219, %v1334
      %v1363 = vadd.f32 %v1220, %v1339
      %v1364 = vadd.f32 %v1221, %v1342
      %v1365 = vadd.f32 %v1222, %v1347
      %v1366 = vadd.f32 %v1223, %v1350
      %v1367 = vadd.f32 %v1224, %v1355
      %v1368 = vadd.f32 %v1225, %v1358
      %v1369 = vld [vmem:[%s1083 + $0x1] sm:$0xf]
      %v1370 = vld [vmem:[%s1083 + $0x9] sm:$0xf]
      %v1371 = vld [vmem:[%s1083 + $0x11] sm:$0xf]
      %v1372 = vld [vmem:[%s1083 + $0x19] sm:$0xf]
      %v1373 = vld [vmem:[%s1083 + $0x29] sm:$0xf]
      %v1374 = vld [vmem:[%s1083 + $0x31] sm:$0xf]
      %v1375 = vld [vmem:[%s1083 + $0x39] sm:$0xf]
      %v1376 = vld [vmem:[%s1083 + $0x41] sm:$0xf]
      %v1377 = vld [vmem:[%s1083 + $0x51] sm:$0xf]
      %v1378 = vld [vmem:[%s1083 + $0x59] sm:$0xf]
      %v1379 = vld [vmem:[%s1083 + $0x61] sm:$0xf]
      %v1380 = vld [vmem:[%s1083 + $0x69] sm:$0xf]
      %v1381 = vld [vmem:[%s1083 + $0x79] sm:$0xf]
      %v1382 = vld [vmem:[%s1083 + $0x81] sm:$0xf]
      %v1383 = vld [vmem:[%s1083 + $0x89] sm:$0xf]
      %v1384 = vld [vmem:[%s1083 + $0x91] sm:$0xf]
      %v1401 = vcombine.low %v1369, %v1370
      %v1402 = vcombine.low %v1371, %v1372
      %v1403 = vcombine.low %v1373, %v1374
      %v1404 = vcombine.low %v1375, %v1376
      %v1405 = vcombine.low %v1377, %v1378
      %v1406 = vcombine.low %v1379, %v1380
      %v1407 = vcombine.low %v1381, %v1382
      %v1408 = vcombine.low %v1383, %v1384
      %v1417 = vpack.c.bf16 %v1402, %v1401
      %v1418 = vpack.c.bf16 %v1404, %v1403
      %v1419 = vpack.c.bf16 %v1406, %v1405
      %v1420 = vpack.c.bf16 %v1408, %v1407
      %s1421 = scalar_lea.vmem %s1, 16
      %v1422 = vld [vmem:[%s1421] sm:$0x3]
      %v1424 = vsel %vm351, %v1417, 0
      %v1427 = vsel %vm351, %v1418, 0
      %v1430 = vsel %vm351, %v1419, 0
      %v1433 = vsel %vm351, %v1420, 0
      %v1436 = vsel %vm364, %v1422, 0
      %1438 = vmatprep.subr.bf16.mxu0 0
      %1439 = vmatpush1.bf16.msra.mxu0 0
      %1440 = vmatprep.subr.bf16.mxu0 0
      %1441 = vmatpush1.bf16.msra.mxu0 0
      %1442 = vmatprep.subr.bf16.mxu0 0
      %1443 = vmatpush1.bf16.msra.mxu0 0
      %1444 = vmatprep.subr.bf16.mxu0 0
      %1445 = vmatpush1.bf16.msra.mxu0 0
      %1446 = vmatprep.subr.bf16.mxu0 0
      %1447 = vmatpush1.bf16.msra.mxu0 0
      %1448 = vmatprep.subr.bf16.mxu0 0
      %1449 = vmatpush1.bf16.msra.mxu0 0
      %1450 = vmatprep.subr.bf16.mxu0 0
      %1451 = vmatpush1.bf16.msra.mxu0 0
      %1452 = vmatprep.subr.bf16.mxu0 0
      %1453 = vmatpush1.bf16.msra.mxu0 %v1436
      %1454 = vmatprep.subr.bf16.mxu0 0
      %1455 = vmatpush2.bf16.msra.mxu0 0
      %1456 = vmatprep.subr.bf16.mxu0 0
      %1457 = vmatpush2.bf16.msra.mxu0 0
      %1458 = vmatprep.subr.bf16.mxu0 0
      %1459 = vmatpush2.bf16.msra.mxu0 0
      %1460 = vmatprep.subr.bf16.mxu0 0
      %1461 = vmatpush2.bf16.msra.mxu0 0
      %1462 = vmatprep.subr.bf16.mxu0 0
      %1463 = vmatpush2.bf16.msra.mxu0 0
      %1464 = vmatprep.subr.bf16.mxu0 0
      %1465 = vmatpush2.bf16.msra.mxu0 0
      %1466 = vmatprep.subr.bf16.mxu0 0
      %1467 = vmatpush2.bf16.msra.mxu0 0
      %1468 = vmatprep.subr.bf16.mxu0 0
      %1469 = vmatpush2.bf16.msra.mxu0 0
      %1470 = vmatprep.mubr.bf16.mxu0 0
      %1471 = vmatmul.mubr.bf16.gmra.mxu0 %v1424
      %v1472 = vpop.f32.mrf.mxu0
      %v1473 = vadd.f32 0.0, %v1472
      %v1474 = vpop.f32.mrf.mxu0
      %v1475 = vpop.f32.mrf.mxu0
      %v1476 = vadd.f32 0.0, %v1475
      %v1477 = vpop.f32.mrf.mxu0
      %1478 = vmatprep.mubr.bf16.mxu0 0
      %1479 = vmatmul.mubr.bf16.gmra.mxu0 %v1427
      %v1480 = vpop.f32.mrf.mxu0
      %v1481 = vadd.f32 0.0, %v1480
      %v1482 = vpop.f32.mrf.mxu0
      %v1483 = vpop.f32.mrf.mxu0
      %v1484 = vadd.f32 0.0, %v1483
      %v1485 = vpop.f32.mrf.mxu0
      %1486 = vmatprep.mubr.bf16.mxu0 0
      %1487 = vmatmul.mubr.bf16.gmra.mxu0 %v1430
      %v1488 = vpop.f32.mrf.mxu0
      %v1489 = vadd.f32 0.0, %v1488
      %v1490 = vpop.f32.mrf.mxu0
      %v1491 = vpop.f32.mrf.mxu0
      %v1492 = vadd.f32 0.0, %v1491
      %v1493 = vpop.f32.mrf.mxu0
      %1494 = vmatprep.mubr.bf16.mxu0 0
      %1495 = vmatmul.mubr.bf16.gmra.mxu0 %v1433
      %v1496 = vpop.f32.mrf.mxu0
      %v1497 = vadd.f32 0.0, %v1496
      %v1498 = vpop.f32.mrf.mxu0
      %v1499 = vpop.f32.mrf.mxu0
      %v1500 = vadd.f32 0.0, %v1499
      %v1501 = vpop.f32.mrf.mxu0
      %1502 = vdwg.mxu0
      %v1503 = vadd.f32 %v1361, %v1473
      %v1504 = vadd.f32 %v1362, %v1476
      %v1505 = vadd.f32 %v1363, %v1481
      %v1506 = vadd.f32 %v1364, %v1484
      %v1507 = vadd.f32 %v1365, %v1489
      %v1508 = vadd.f32 %v1366, %v1492
      %v1509 = vadd.f32 %v1367, %v1497
      %v1510 = vadd.f32 %v1368, %v1500
      %s1511 = scalar_lea.vmem %s230, 800
      %v1512 = vld [vmem:[%s1511] sm:$0xf]
      %v1513 = vld [vmem:[%s1511 + $0x8] sm:$0xf]
      %v1514 = vld [vmem:[%s1511 + $0x10] sm:$0xf]
      %v1515 = vld [vmem:[%s1511 + $0x18] sm:$0xf]
      %v1516 = vld [vmem:[%s1511 + $0x28] sm:$0xf]
      %v1517 = vld [vmem:[%s1511 + $0x30] sm:$0xf]
      %v1518 = vld [vmem:[%s1511 + $0x38] sm:$0xf]
      %v1519 = vld [vmem:[%s1511 + $0x40] sm:$0xf]
      %v1520 = vld [vmem:[%s1511 + $0x50] sm:$0xf]
      %v1521 = vld [vmem:[%s1511 + $0x58] sm:$0xf]
      %v1522 = vld [vmem:[%s1511 + $0x60] sm:$0xf]
      %v1523 = vld [vmem:[%s1511 + $0x68] sm:$0xf]
      %v1524 = vld [vmem:[%s1511 + $0x78] sm:$0xf]
      %v1525 = vld [vmem:[%s1511 + $0x80] sm:$0xf]
      %v1526 = vld [vmem:[%s1511 + $0x88] sm:$0xf]
      %v1527 = vld [vmem:[%s1511 + $0x90] sm:$0xf]
      %v1544 = vcombine.low %v1512, %v1513
      %v1545 = vcombine.low %v1514, %v1515
      %v1546 = vcombine.low %v1516, %v1517
      %v1547 = vcombine.low %v1518, %v1519
      %v1548 = vcombine.low %v1520, %v1521
      %v1549 = vcombine.low %v1522, %v1523
      %v1550 = vcombine.low %v1524, %v1525
      %v1551 = vcombine.low %v1526, %v1527
      %v1560 = vpack.c.bf16 %v1545, %v1544
      %v1561 = vpack.c.bf16 %v1547, %v1546
      %v1562 = vpack.c.bf16 %v1549, %v1548
      %v1563 = vpack.c.bf16 %v1551, %v1550
      %s1564 = scalar_lea.vmem %s1, 18
      %v1565 = vld [vmem:[%s1564] sm:$0x3]
      %v1567 = vsel %vm351, %v1560, 0
      %v1570 = vsel %vm351, %v1561, 0
      %v1573 = vsel %vm351, %v1562, 0
      %v1576 = vsel %vm351, %v1563, 0
      %v1579 = vsel %vm364, %v1565, 0
      %1581 = vmatprep.subr.bf16.mxu0 0
      %1582 = vmatpush1.bf16.msra.mxu0 0
      %1583 = vmatprep.subr.bf16.mxu0 0
      %1584 = vmatpush1.bf16.msra.mxu0 0
      %1585 = vmatprep.subr.bf16.mxu0 0
      %1586 = vmatpush1.bf16.msra.mxu0 0
      %1587 = vmatprep.subr.bf16.mxu0 0
      %1588 = vmatpush1.bf16.msra.mxu0 0
      %1589 = vmatprep.subr.bf16.mxu0 0
      %1590 = vmatpush1.bf16.msra.mxu0 0
      %1591 = vmatprep.subr.bf16.mxu0 0
      %1592 = vmatpush1.bf16.msra.mxu0 0
      %1593 = vmatprep.subr.bf16.mxu0 0
      %1594 = vmatpush1.bf16.msra.mxu0 0
      %1595 = vmatprep.subr.bf16.mxu0 0
      %1596 = vmatpush1.bf16.msra.mxu0 %v1579
      %1597 = vmatprep.subr.bf16.mxu0 0
      %1598 = vmatpush2.bf16.msra.mxu0 0
      %1599 = vmatprep.subr.bf16.mxu0 0
      %1600 = vmatpush2.bf16.msra.mxu0 0
      %1601 = vmatprep.subr.bf16.mxu0 0
      %1602 = vmatpush2.bf16.msra.mxu0 0
      %1603 = vmatprep.subr.bf16.mxu0 0
      %1604 = vmatpush2.bf16.msra.mxu0 0
      %1605 = vmatprep.subr.bf16.mxu0 0
      %1606 = vmatpush2.bf16.msra.mxu0 0
      %1607 = vmatprep.subr.bf16.mxu0 0
      %1608 = vmatpush2.bf16.msra.mxu0 0
      %1609 = vmatprep.subr.bf16.mxu0 0
      %1610 = vmatpush2.bf16.msra.mxu0 0
      %1611 = vmatprep.subr.bf16.mxu0 0
      %1612 = vmatpush2.bf16.msra.mxu0 0
      %1613 = vmatprep.mubr.bf16.mxu0 0
      %1614 = vmatmul.mubr.bf16.gmra.mxu0 %v1567
      %v1615 = vpop.f32.mrf.mxu0
      %v1616 = vadd.f32 0.0, %v1615
      %v1617 = vpop.f32.mrf.mxu0
      %v1618 = vpop.f32.mrf.mxu0
      %v1619 = vadd.f32 0.0, %v1618
      %v1620 = vpop.f32.mrf.mxu0
      %1621 = vmatprep.mubr.bf16.mxu0 0
      %1622 = vmatmul.mubr.bf16.gmra.mxu0 %v1570
      %v1623 = vpop.f32.mrf.mxu0
      %v1624 = vadd.f32 0.0, %v1623
      %v1625 = vpop.f32.mrf.mxu0
      %v1626 = vpop.f32.mrf.mxu0
      %v1627 = vadd.f32 0.0, %v1626
      %v1628 = vpop.f32.mrf.mxu0
      %1629 = vmatprep.mubr.bf16.mxu0 0
      %1630 = vmatmul.mubr.bf16.gmra.mxu0 %v1573
      %v1631 = vpop.f32.mrf.mxu0
      %v1632 = vadd.f32 0.0, %v1631
      %v1633 = vpop.f32.mrf.mxu0
      %v1634 = vpop.f32.mrf.mxu0
      %v1635 = vadd.f32 0.0, %v1634
      %v1636 = vpop.f32.mrf.mxu0
      %1637 = vmatprep.mubr.bf16.mxu0 0
      %1638 = vmatmul.mubr.bf16.gmra.mxu0 %v1576
      %v1639 = vpop.f32.mrf.mxu0
      %v1640 = vadd.f32 0.0, %v1639
      %v1641 = vpop.f32.mrf.mxu0
      %v1642 = vpop.f32.mrf.mxu0
      %v1643 = vadd.f32 0.0, %v1642
      %v1644 = vpop.f32.mrf.mxu0
      %1645 = vdwg.mxu0
      %v1646 = vadd.f32 %v1503, %v1616
      %v1647 = vadd.f32 %v1504, %v1619
      %v1648 = vadd.f32 %v1505, %v1624
      %v1649 = vadd.f32 %v1506, %v1627
      %v1650 = vadd.f32 %v1507, %v1632
      %v1651 = vadd.f32 %v1508, %v1635
      %v1652 = vadd.f32 %v1509, %v1640
      %v1653 = vadd.f32 %v1510, %v1643
      %s1654 = scalar_lea.vmem %s230, 1000
      %v1655 = vld [vmem:[%s1654] sm:$0xf]
      %v1656 = vld [vmem:[%s1654 + $0x8] sm:$0xf]
      %v1657 = vld [vmem:[%s1654 + $0x10] sm:$0xf]
      %v1658 = vld [vmem:[%s1654 + $0x18] sm:$0xf]
      %v1659 = vld [vmem:[%s1654 + $0x28] sm:$0xf]
      %v1660 = vld [vmem:[%s1654 + $0x30] sm:$0xf]
      %v1661 = vld [vmem:[%s1654 + $0x38] sm:$0xf]
      %v1662 = vld [vmem:[%s1654 + $0x40] sm:$0xf]
      %v1663 = vld [vmem:[%s1654 + $0x50] sm:$0xf]
      %v1664 = vld [vmem:[%s1654 + $0x58] sm:$0xf]
      %v1665 = vld [vmem:[%s1654 + $0x60] sm:$0xf]
      %v1666 = vld [vmem:[%s1654 + $0x68] sm:$0xf]
      %v1667 = vld [vmem:[%s1654 + $0x78] sm:$0xf]
      %v1668 = vld [vmem:[%s1654 + $0x80] sm:$0xf]
      %v1669 = vld [vmem:[%s1654 + $0x88] sm:$0xf]
      %v1670 = vld [vmem:[%s1654 + $0x90] sm:$0xf]
      %v1687 = vcombine.low %v1655, %v1656
      %v1688 = vcombine.low %v1657, %v1658
      %v1689 = vcombine.low %v1659, %v1660
      %v1690 = vcombine.low %v1661, %v1662
      %v1691 = vcombine.low %v1663, %v1664
      %v1692 = vcombine.low %v1665, %v1666
      %v1693 = vcombine.low %v1667, %v1668
      %v1694 = vcombine.low %v1669, %v1670
      %v1703 = vpack.c.bf16 %v1688, %v1687
      %v1704 = vpack.c.bf16 %v1690, %v1689
      %v1705 = vpack.c.bf16 %v1692, %v1691
      %v1706 = vpack.c.bf16 %v1694, %v1693
      %s1707 = scalar_lea.vmem %s1, 20
      %v1708 = vld [vmem:[%s1707] sm:$0x3]
      %v1710 = vsel %vm351, %v1703, 0
      %v1713 = vsel %vm351, %v1704, 0
      %v1716 = vsel %vm351, %v1705, 0
      %v1719 = vsel %vm351, %v1706, 0
      %v1722 = vsel %vm364, %v1708, 0
      %1724 = vmatprep.subr.bf16.mxu0 0
      %1725 = vmatpush1.bf16.msra.mxu0 0
      %1726 = vmatprep.subr.bf16.mxu0 0
      %1727 = vmatpush1.bf16.msra.mxu0 0
      %1728 = vmatprep.subr.bf16.mxu0 0
      %1729 = vmatpush1.bf16.msra.mxu0 0
      %1730 = vmatprep.subr.bf16.mxu0 0
      %1731 = vmatpush1.bf16.msra.mxu0 0
      %1732 = vmatprep.subr.bf16.mxu0 0
      %1733 = vmatpush1.bf16.msra.mxu0 0
      %1734 = vmatprep.subr.bf16.mxu0 0
      %1735 = vmatpush1.bf16.msra.mxu0 0
      %1736 = vmatprep.subr.bf16.mxu0 0
      %1737 = vmatpush1.bf16.msra.mxu0 0
      %1738 = vmatprep.subr.bf16.mxu0 0
      %1739 = vmatpush1.bf16.msra.mxu0 %v1722
      %1740 = vmatprep.subr.bf16.mxu0 0
      %1741 = vmatpush2.bf16.msra.mxu0 0
      %1742 = vmatprep.subr.bf16.mxu0 0
      %1743 = vmatpush2.bf16.msra.mxu0 0
      %1744 = vmatprep.subr.bf16.mxu0 0
      %1745 = vmatpush2.bf16.msra.mxu0 0
      %1746 = vmatprep.subr.bf16.mxu0 0
      %1747 = vmatpush2.bf16.msra.mxu0 0
      %1748 = vmatprep.subr.bf16.mxu0 0
      %1749 = vmatpush2.bf16.msra.mxu0 0
      %1750 = vmatprep.subr.bf16.mxu0 0
      %1751 = vmatpush2.bf16.msra.mxu0 0
      %1752 = vmatprep.subr.bf16.mxu0 0
      %1753 = vmatpush2.bf16.msra.mxu0 0
      %1754 = vmatprep.subr.bf16.mxu0 0
      %1755 = vmatpush2.bf16.msra.mxu0 0
      %1756 = vmatprep.mubr.bf16.mxu0 0
      %1757 = vmatmul.mubr.bf16.gmra.mxu0 %v1710
      %v1758 = vpop.f32.mrf.mxu0
      %v1759 = vadd.f32 0.0, %v1758
      %v1760 = vpop.f32.mrf.mxu0
      %v1761 = vpop.f32.mrf.mxu0
      %v1762 = vadd.f32 0.0, %v1761
      %v1763 = vpop.f32.mrf.mxu0
      %1764 = vmatprep.mubr.bf16.mxu0 0
      %1765 = vmatmul.mubr.bf16.gmra.mxu0 %v1713
      %v1766 = vpop.f32.mrf.mxu0
      %v1767 = vadd.f32 0.0, %v1766
      %v1768 = vpop.f32.mrf.mxu0
      %v1769 = vpop.f32.mrf.mxu0
      %v1770 = vadd.f32 0.0, %v1769
      %v1771 = vpop.f32.mrf.mxu0
      %1772 = vmatprep.mubr.bf16.mxu0 0
      %1773 = vmatmul.mubr.bf16.gmra.mxu0 %v1716
      %v1774 = vpop.f32.mrf.mxu0
      %v1775 = vadd.f32 0.0, %v1774
      %v1776 = vpop.f32.mrf.mxu0
      %v1777 = vpop.f32.mrf.mxu0
      %v1778 = vadd.f32 0.0, %v1777
      %v1779 = vpop.f32.mrf.mxu0
      %1780 = vmatprep.mubr.bf16.mxu0 0
      %1781 = vmatmul.mubr.bf16.gmra.mxu0 %v1719
      %v1782 = vpop.f32.mrf.mxu0
      %v1783 = vadd.f32 0.0, %v1782
      %v1784 = vpop.f32.mrf.mxu0
      %v1785 = vpop.f32.mrf.mxu0
      %v1786 = vadd.f32 0.0, %v1785
      %v1787 = vpop.f32.mrf.mxu0
      %1788 = vdwg.mxu0
      %v1789 = vadd.f32 %v1646, %v1759
      %v1790 = vadd.f32 %v1647, %v1762
      %v1791 = vadd.f32 %v1648, %v1767
      %v1792 = vadd.f32 %v1649, %v1770
      %v1793 = vadd.f32 %v1650, %v1775
      %v1794 = vadd.f32 %v1651, %v1778
      %v1795 = vadd.f32 %v1652, %v1783
      %v1796 = vadd.f32 %v1653, %v1786
      %v1797 = vld [vmem:[%s1511 + $0x1] sm:$0xf]
      %v1798 = vld [vmem:[%s1511 + $0x9] sm:$0xf]
      %v1799 = vld [vmem:[%s1511 + $0x11] sm:$0xf]
      %v1800 = vld [vmem:[%s1511 + $0x19] sm:$0xf]
      %v1801 = vld [vmem:[%s1511 + $0x29] sm:$0xf]
      %v1802 = vld [vmem:[%s1511 + $0x31] sm:$0xf]
      %v1803 = vld [vmem:[%s1511 + $0x39] sm:$0xf]
      %v1804 = vld [vmem:[%s1511 + $0x41] sm:$0xf]
      %v1805 = vld [vmem:[%s1511 + $0x51] sm:$0xf]
      %v1806 = vld [vmem:[%s1511 + $0x59] sm:$0xf]
      %v1807 = vld [vmem:[%s1511 + $0x61] sm:$0xf]
      %v1808 = vld [vmem:[%s1511 + $0x69] sm:$0xf]
      %v1809 = vld [vmem:[%s1511 + $0x79] sm:$0xf]
      %v1810 = vld [vmem:[%s1511 + $0x81] sm:$0xf]
      %v1811 = vld [vmem:[%s1511 + $0x89] sm:$0xf]
      %v1812 = vld [vmem:[%s1511 + $0x91] sm:$0xf]
      %v1829 = vcombine.low %v1797, %v1798
      %v1830 = vcombine.low %v1799, %v1800
      %v1831 = vcombine.low %v1801, %v1802
      %v1832 = vcombine.low %v1803, %v1804
      %v1833 = vcombine.low %v1805, %v1806
      %v1834 = vcombine.low %v1807, %v1808
      %v1835 = vcombine.low %v1809, %v1810
      %v1836 = vcombine.low %v1811, %v1812
      %v1845 = vpack.c.bf16 %v1830, %v1829
      %v1846 = vpack.c.bf16 %v1832, %v1831
      %v1847 = vpack.c.bf16 %v1834, %v1833
      %v1848 = vpack.c.bf16 %v1836, %v1835
      %s1849 = scalar_lea.vmem %s1, 22
      %v1850 = vld [vmem:[%s1849] sm:$0x3]
      %v1852 = vsel %vm351, %v1845, 0
      %v1855 = vsel %vm351, %v1846, 0
      %v1858 = vsel %vm351, %v1847, 0
      %v1861 = vsel %vm351, %v1848, 0
      %v1864 = vsel %vm364, %v1850, 0
      %1866 = vmatprep.subr.bf16.mxu0 0
      %1867 = vmatpush1.bf16.msra.mxu0 0
      %1868 = vmatprep.subr.bf16.mxu0 0
      %1869 = vmatpush1.bf16.msra.mxu0 0
      %1870 = vmatprep.subr.bf16.mxu0 0
      %1871 = vmatpush1.bf16.msra.mxu0 0
      %1872 = vmatprep.subr.bf16.mxu0 0
      %1873 = vmatpush1.bf16.msra.mxu0 0
      %1874 = vmatprep.subr.bf16.mxu0 0
      %1875 = vmatpush1.bf16.msra.mxu0 0
      %1876 = vmatprep.subr.bf16.mxu0 0
      %1877 = vmatpush1.bf16.msra.mxu0 0
      %1878 = vmatprep.subr.bf16.mxu0 0
      %1879 = vmatpush1.bf16.msra.mxu0 0
      %1880 = vmatprep.subr.bf16.mxu0 0
      %1881 = vmatpush1.bf16.msra.mxu0 %v1864
      %1882 = vmatprep.subr.bf16.mxu0 0
      %1883 = vmatpush2.bf16.msra.mxu0 0
      %1884 = vmatprep.subr.bf16.mxu0 0
      %1885 = vmatpush2.bf16.msra.mxu0 0
      %1886 = vmatprep.subr.bf16.mxu0 0
      %1887 = vmatpush2.bf16.msra.mxu0 0
      %1888 = vmatprep.subr.bf16.mxu0 0
      %1889 = vmatpush2.bf16.msra.mxu0 0
      %1890 = vmatprep.subr.bf16.mxu0 0
      %1891 = vmatpush2.bf16.msra.mxu0 0
      %1892 = vmatprep.subr.bf16.mxu0 0
      %1893 = vmatpush2.bf16.msra.mxu0 0
      %1894 = vmatprep.subr.bf16.mxu0 0
      %1895 = vmatpush2.bf16.msra.mxu0 0
      %1896 = vmatprep.subr.bf16.mxu0 0
      %1897 = vmatpush2.bf16.msra.mxu0 0
      %1898 = vmatprep.mubr.bf16.mxu0 0
      %1899 = vmatmul.mubr.bf16.gmra.mxu0 %v1852
      %v1900 = vpop.f32.mrf.mxu0
      %v1901 = vadd.f32 0.0, %v1900
      %v1902 = vpop.f32.mrf.mxu0
      %v1903 = vpop.f32.mrf.mxu0
      %v1904 = vadd.f32 0.0, %v1903
      %v1905 = vpop.f32.mrf.mxu0
      %1906 = vmatprep.mubr.bf16.mxu0 0
      %1907 = vmatmul.mubr.bf16.gmra.mxu0 %v1855
      %v1908 = vpop.f32.mrf.mxu0
      %v1909 = vadd.f32 0.0, %v1908
      %v1910 = vpop.f32.mrf.mxu0
      %v1911 = vpop.f32.mrf.mxu0
      %v1912 = vadd.f32 0.0, %v1911
      %v1913 = vpop.f32.mrf.mxu0
      %1914 = vmatprep.mubr.bf16.mxu0 0
      %1915 = vmatmul.mubr.bf16.gmra.mxu0 %v1858
      %v1916 = vpop.f32.mrf.mxu0
      %v1917 = vadd.f32 0.0, %v1916
      %v1918 = vpop.f32.mrf.mxu0
      %v1919 = vpop.f32.mrf.mxu0
      %v1920 = vadd.f32 0.0, %v1919
      %v1921 = vpop.f32.mrf.mxu0
      %1922 = vmatprep.mubr.bf16.mxu0 0
      %1923 = vmatmul.mubr.bf16.gmra.mxu0 %v1861
      %v1924 = vpop.f32.mrf.mxu0
      %v1925 = vadd.f32 0.0, %v1924
      %v1926 = vpop.f32.mrf.mxu0
      %v1927 = vpop.f32.mrf.mxu0
      %v1928 = vadd.f32 0.0, %v1927
      %v1929 = vpop.f32.mrf.mxu0
      %1930 = vdwg.mxu0
      %v1931 = vadd.f32 %v1789, %v1901
      %v1932 = vadd.f32 %v1790, %v1904
      %v1933 = vadd.f32 %v1791, %v1909
      %v1934 = vadd.f32 %v1792, %v1912
      %v1935 = vadd.f32 %v1793, %v1917
      %v1936 = vadd.f32 %v1794, %v1920
      %v1937 = vadd.f32 %v1795, %v1925
      %v1938 = vadd.f32 %v1796, %v1928
      %s1939 = scalar_lea.vmem %s230, 1200
      %v1940 = vld [vmem:[%s1939] sm:$0xf]
      %v1941 = vld [vmem:[%s1939 + $0x8] sm:$0xf]
      %v1942 = vld [vmem:[%s1939 + $0x10] sm:$0xf]
      %v1943 = vld [vmem:[%s1939 + $0x18] sm:$0xf]
      %v1944 = vld [vmem:[%s1939 + $0x28] sm:$0xf]
      %v1945 = vld [vmem:[%s1939 + $0x30] sm:$0xf]
      %v1946 = vld [vmem:[%s1939 + $0x38] sm:$0xf]
      %v1947 = vld [vmem:[%s1939 + $0x40] sm:$0xf]
      %v1948 = vld [vmem:[%s1939 + $0x50] sm:$0xf]
      %v1949 = vld [vmem:[%s1939 + $0x58] sm:$0xf]
      %v1950 = vld [vmem:[%s1939 + $0x60] sm:$0xf]
      %v1951 = vld [vmem:[%s1939 + $0x68] sm:$0xf]
      %v1952 = vld [vmem:[%s1939 + $0x78] sm:$0xf]
      %v1953 = vld [vmem:[%s1939 + $0x80] sm:$0xf]
      %v1954 = vld [vmem:[%s1939 + $0x88] sm:$0xf]
      %v1955 = vld [vmem:[%s1939 + $0x90] sm:$0xf]
      %v1972 = vcombine.low %v1940, %v1941
      %v1973 = vcombine.low %v1942, %v1943
      %v1974 = vcombine.low %v1944, %v1945
      %v1975 = vcombine.low %v1946, %v1947
      %v1976 = vcombine.low %v1948, %v1949
      %v1977 = vcombine.low %v1950, %v1951
      %v1978 = vcombine.low %v1952, %v1953
      %v1979 = vcombine.low %v1954, %v1955
      %v1988 = vpack.c.bf16 %v1973, %v1972
      %v1989 = vpack.c.bf16 %v1975, %v1974
      %v1990 = vpack.c.bf16 %v1977, %v1976
      %v1991 = vpack.c.bf16 %v1979, %v1978
      %s1992 = scalar_lea.vmem %s1, 24
      %v1993 = vld [vmem:[%s1992] sm:$0x3]
      %v1995 = vsel %vm351, %v1988, 0
      %v1998 = vsel %vm351, %v1989, 0
      %v2001 = vsel %vm351, %v1990, 0
      %v2004 = vsel %vm351, %v1991, 0
      %v2007 = vsel %vm364, %v1993, 0
      %2009 = vmatprep.subr.bf16.mxu0 0
      %2010 = vmatpush1.bf16.msra.mxu0 0
      %2011 = vmatprep.subr.bf16.mxu0 0
      %2012 = vmatpush1.bf16.msra.mxu0 0
      %2013 = vmatprep.subr.bf16.mxu0 0
      %2014 = vmatpush1.bf16.msra.mxu0 0
      %2015 = vmatprep.subr.bf16.mxu0 0
      %2016 = vmatpush1.bf16.msra.mxu0 0
      %2017 = vmatprep.subr.bf16.mxu0 0
      %2018 = vmatpush1.bf16.msra.mxu0 0
      %2019 = vmatprep.subr.bf16.mxu0 0
      %2020 = vmatpush1.bf16.msra.mxu0 0
      %2021 = vmatprep.subr.bf16.mxu0 0
      %2022 = vmatpush1.bf16.msra.mxu0 0
      %2023 = vmatprep.subr.bf16.mxu0 0
      %2024 = vmatpush1.bf16.msra.mxu0 %v2007
      %2025 = vmatprep.subr.bf16.mxu0 0
      %2026 = vmatpush2.bf16.msra.mxu0 0
      %2027 = vmatprep.subr.bf16.mxu0 0
      %2028 = vmatpush2.bf16.msra.mxu0 0
      %2029 = vmatprep.subr.bf16.mxu0 0
      %2030 = vmatpush2.bf16.msra.mxu0 0
      %2031 = vmatprep.subr.bf16.mxu0 0
      %2032 = vmatpush2.bf16.msra.mxu0 0
      %2033 = vmatprep.subr.bf16.mxu0 0
      %2034 = vmatpush2.bf16.msra.mxu0 0
      %2035 = vmatprep.subr.bf16.mxu0 0
      %2036 = vmatpush2.bf16.msra.mxu0 0
      %2037 = vmatprep.subr.bf16.mxu0 0
      %2038 = vmatpush2.bf16.msra.mxu0 0
      %2039 = vmatprep.subr.bf16.mxu0 0
      %2040 = vmatpush2.bf16.msra.mxu0 0
      %2041 = vmatprep.mubr.bf16.mxu0 0
      %2042 = vmatmul.mubr.bf16.gmra.mxu0 %v1995
      %v2043 = vpop.f32.mrf.mxu0
      %v2044 = vadd.f32 0.0, %v2043
      %v2045 = vpop.f32.mrf.mxu0
      %v2046 = vpop.f32.mrf.mxu0
      %v2047 = vadd.f32 0.0, %v2046
      %v2048 = vpop.f32.mrf.mxu0
      %2049 = vmatprep.mubr.bf16.mxu0 0
      %2050 = vmatmul.mubr.bf16.gmra.mxu0 %v1998
      %v2051 = vpop.f32.mrf.mxu0
      %v2052 = vadd.f32 0.0, %v2051
      %v2053 = vpop.f32.mrf.mxu0
      %v2054 = vpop.f32.mrf.mxu0
      %v2055 = vadd.f32 0.0, %v2054
      %v2056 = vpop.f32.mrf.mxu0
      %2057 = vmatprep.mubr.bf16.mxu0 0
      %2058 = vmatmul.mubr.bf16.gmra.mxu0 %v2001
      %v2059 = vpop.f32.mrf.mxu0
      %v2060 = vadd.f32 0.0, %v2059
      %v2061 = vpop.f32.mrf.mxu0
      %v2062 = vpop.f32.mrf.mxu0
      %v2063 = vadd.f32 0.0, %v2062
      %v2064 = vpop.f32.mrf.mxu0
      %2065 = vmatprep.mubr.bf16.mxu0 0
      %2066 = vmatmul.mubr.bf16.gmra.mxu0 %v2004
      %v2067 = vpop.f32.mrf.mxu0
      %v2068 = vadd.f32 0.0, %v2067
      %v2069 = vpop.f32.mrf.mxu0
      %v2070 = vpop.f32.mrf.mxu0
      %v2071 = vadd.f32 0.0, %v2070
      %v2072 = vpop.f32.mrf.mxu0
      %2073 = vdwg.mxu0
      %v2074 = vadd.f32 %v1931, %v2044
      %v2075 = vadd.f32 %v1932, %v2047
      %v2076 = vadd.f32 %v1933, %v2052
      %v2077 = vadd.f32 %v1934, %v2055
      %v2078 = vadd.f32 %v1935, %v2060
      %v2079 = vadd.f32 %v1936, %v2063
      %v2080 = vadd.f32 %v1937, %v2068
      %v2081 = vadd.f32 %v1938, %v2071
      %s2082 = scalar_lea.vmem %s230, 1400
      %v2083 = vld [vmem:[%s2082] sm:$0xf]
      %v2084 = vld [vmem:[%s2082 + $0x8] sm:$0xf]
      %v2085 = vld [vmem:[%s2082 + $0x10] sm:$0xf]
      %v2086 = vld [vmem:[%s2082 + $0x18] sm:$0xf]
      %v2087 = vld [vmem:[%s2082 + $0x28] sm:$0xf]
      %v2088 = vld [vmem:[%s2082 + $0x30] sm:$0xf]
      %v2089 = vld [vmem:[%s2082 + $0x38] sm:$0xf]
      %v2090 = vld [vmem:[%s2082 + $0x40] sm:$0xf]
      %v2091 = vld [vmem:[%s2082 + $0x50] sm:$0xf]
      %v2092 = vld [vmem:[%s2082 + $0x58] sm:$0xf]
      %v2093 = vld [vmem:[%s2082 + $0x60] sm:$0xf]
      %v2094 = vld [vmem:[%s2082 + $0x68] sm:$0xf]
      %v2095 = vld [vmem:[%s2082 + $0x78] sm:$0xf]
      %v2096 = vld [vmem:[%s2082 + $0x80] sm:$0xf]
      %v2097 = vld [vmem:[%s2082 + $0x88] sm:$0xf]
      %v2098 = vld [vmem:[%s2082 + $0x90] sm:$0xf]
      %v2115 = vcombine.low %v2083, %v2084
      %v2116 = vcombine.low %v2085, %v2086
      %v2117 = vcombine.low %v2087, %v2088
      %v2118 = vcombine.low %v2089, %v2090
      %v2119 = vcombine.low %v2091, %v2092
      %v2120 = vcombine.low %v2093, %v2094
      %v2121 = vcombine.low %v2095, %v2096
      %v2122 = vcombine.low %v2097, %v2098
      %v2131 = vpack.c.bf16 %v2116, %v2115
      %v2132 = vpack.c.bf16 %v2118, %v2117
      %v2133 = vpack.c.bf16 %v2120, %v2119
      %v2134 = vpack.c.bf16 %v2122, %v2121
      %s2135 = scalar_lea.vmem %s1, 26
      %v2136 = vld [vmem:[%s2135] sm:$0x3]
      %v2138 = vsel %vm351, %v2131, 0
      %v2141 = vsel %vm351, %v2132, 0
      %v2144 = vsel %vm351, %v2133, 0
      %v2147 = vsel %vm351, %v2134, 0
      %v2150 = vsel %vm364, %v2136, 0
      %2152 = vmatprep.subr.bf16.mxu0 0
      %2153 = vmatpush1.bf16.msra.mxu0 0
      %2154 = vmatprep.subr.bf16.mxu0 0
      %2155 = vmatpush1.bf16.msra.mxu0 0
      %2156 = vmatprep.subr.bf16.mxu0 0
      %2157 = vmatpush1.bf16.msra.mxu0 0
      %2158 = vmatprep.subr.bf16.mxu0 0
      %2159 = vmatpush1.bf16.msra.mxu0 0
      %2160 = vmatprep.subr.bf16.mxu0 0
      %2161 = vmatpush1.bf16.msra.mxu0 0
      %2162 = vmatprep.subr.bf16.mxu0 0
      %2163 = vmatpush1.bf16.msra.mxu0 0
      %2164 = vmatprep.subr.bf16.mxu0 0
      %2165 = vmatpush1.bf16.msra.mxu0 0
      %2166 = vmatprep.subr.bf16.mxu0 0
      %2167 = vmatpush1.bf16.msra.mxu0 %v2150
      %2168 = vmatprep.subr.bf16.mxu0 0
      %2169 = vmatpush2.bf16.msra.mxu0 0
      %2170 = vmatprep.subr.bf16.mxu0 0
      %2171 = vmatpush2.bf16.msra.mxu0 0
      %2172 = vmatprep.subr.bf16.mxu0 0
      %2173 = vmatpush2.bf16.msra.mxu0 0
      %2174 = vmatprep.subr.bf16.mxu0 0
      %2175 = vmatpush2.bf16.msra.mxu0 0
      %2176 = vmatprep.subr.bf16.mxu0 0
      %2177 = vmatpush2.bf16.msra.mxu0 0
      %2178 = vmatprep.subr.bf16.mxu0 0
      %2179 = vmatpush2.bf16.msra.mxu0 0
      %2180 = vmatprep.subr.bf16.mxu0 0
      %2181 = vmatpush2.bf16.msra.mxu0 0
      %2182 = vmatprep.subr.bf16.mxu0 0
      %2183 = vmatpush2.bf16.msra.mxu0 0
      %2184 = vmatprep.mubr.bf16.mxu0 0
      %2185 = vmatmul.mubr.bf16.gmra.mxu0 %v2138
      %v2186 = vpop.f32.mrf.mxu0
      %v2187 = vadd.f32 0.0, %v2186
      %v2188 = vpop.f32.mrf.mxu0
      %v2189 = vpop.f32.mrf.mxu0
      %v2190 = vadd.f32 0.0, %v2189
      %v2191 = vpop.f32.mrf.mxu0
      %2192 = vmatprep.mubr.bf16.mxu0 0
      %2193 = vmatmul.mubr.bf16.gmra.mxu0 %v2141
      %v2194 = vpop.f32.mrf.mxu0
      %v2195 = vadd.f32 0.0, %v2194
      %v2196 = vpop.f32.mrf.mxu0
      %v2197 = vpop.f32.mrf.mxu0
      %v2198 = vadd.f32 0.0, %v2197
      %v2199 = vpop.f32.mrf.mxu0
      %2200 = vmatprep.mubr.bf16.mxu0 0
      %2201 = vmatmul.mubr.bf16.gmra.mxu0 %v2144
      %v2202 = vpop.f32.mrf.mxu0
      %v2203 = vadd.f32 0.0, %v2202
      %v2204 = vpop.f32.mrf.mxu0
      %v2205 = vpop.f32.mrf.mxu0
      %v2206 = vadd.f32 0.0, %v2205
      %v2207 = vpop.f32.mrf.mxu0
      %2208 = vmatprep.mubr.bf16.mxu0 0
      %2209 = vmatmul.mubr.bf16.gmra.mxu0 %v2147
      %v2210 = vpop.f32.mrf.mxu0
      %v2211 = vadd.f32 0.0, %v2210
      %v2212 = vpop.f32.mrf.mxu0
      %v2213 = vpop.f32.mrf.mxu0
      %v2214 = vadd.f32 0.0, %v2213
      %v2215 = vpop.f32.mrf.mxu0
      %2216 = vdwg.mxu0
      %v2217 = vadd.f32 %v2074, %v2187
      %v2218 = vadd.f32 %v2075, %v2190
      %v2219 = vadd.f32 %v2076, %v2195
      %v2220 = vadd.f32 %v2077, %v2198
      %v2221 = vadd.f32 %v2078, %v2203
      %v2222 = vadd.f32 %v2079, %v2206
      %v2223 = vadd.f32 %v2080, %v2211
      %v2224 = vadd.f32 %v2081, %v2214
      %v2225 = vld [vmem:[%s1939 + $0x1] sm:$0xf]
      %v2226 = vld [vmem:[%s1939 + $0x9] sm:$0xf]
      %v2227 = vld [vmem:[%s1939 + $0x11] sm:$0xf]
      %v2228 = vld [vmem:[%s1939 + $0x19] sm:$0xf]
      %v2229 = vld [vmem:[%s1939 + $0x29] sm:$0xf]
      %v2230 = vld [vmem:[%s1939 + $0x31] sm:$0xf]
      %v2231 = vld [vmem:[%s1939 + $0x39] sm:$0xf]
      %v2232 = vld [vmem:[%s1939 + $0x41] sm:$0xf]
      %v2233 = vld [vmem:[%s1939 + $0x51] sm:$0xf]
      %v2234 = vld [vmem:[%s1939 + $0x59] sm:$0xf]
      %v2235 = vld [vmem:[%s1939 + $0x61] sm:$0xf]
      %v2236 = vld [vmem:[%s1939 + $0x69] sm:$0xf]
      %v2237 = vld [vmem:[%s1939 + $0x79] sm:$0xf]
      %v2238 = vld [vmem:[%s1939 + $0x81] sm:$0xf]
      %v2239 = vld [vmem:[%s1939 + $0x89] sm:$0xf]
      %v2240 = vld [vmem:[%s1939 + $0x91] sm:$0xf]
      %v2257 = vcombine.low %v2225, %v2226
      %v2258 = vcombine.low %v2227, %v2228
      %v2259 = vcombine.low %v2229, %v2230
      %v2260 = vcombine.low %v2231, %v2232
      %v2261 = vcombine.low %v2233, %v2234
      %v2262 = vcombine.low %v2235, %v2236
      %v2263 = vcombine.low %v2237, %v2238
      %v2264 = vcombine.low %v2239, %v2240
      %v2273 = vpack.c.bf16 %v2258, %v2257
      %v2274 = vpack.c.bf16 %v2260, %v2259
      %v2275 = vpack.c.bf16 %v2262, %v2261
      %v2276 = vpack.c.bf16 %v2264, %v2263
      %s2277 = scalar_lea.vmem %s1, 28
      %v2278 = vld [vmem:[%s2277] sm:$0x3]
      %v2280 = vsel %vm351, %v2273, 0
      %v2283 = vsel %vm351, %v2274, 0
      %v2286 = vsel %vm351, %v2275, 0
      %v2289 = vsel %vm351, %v2276, 0
      %v2292 = vsel %vm364, %v2278, 0
      %2294 = vmatprep.subr.bf16.mxu0 0
      %2295 = vmatpush1.bf16.msra.mxu0 0
      %2296 = vmatprep.subr.bf16.mxu0 0
      %2297 = vmatpush1.bf16.msra.mxu0 0
      %2298 = vmatprep.subr.bf16.mxu0 0
      %2299 = vmatpush1.bf16.msra.mxu0 0
      %2300 = vmatprep.subr.bf16.mxu0 0
      %2301 = vmatpush1.bf16.msra.mxu0 0
      %2302 = vmatprep.subr.bf16.mxu0 0
      %2303 = vmatpush1.bf16.msra.mxu0 0
      %2304 = vmatprep.subr.bf16.mxu0 0
      %2305 = vmatpush1.bf16.msra.mxu0 0
      %2306 = vmatprep.subr.bf16.mxu0 0
      %2307 = vmatpush1.bf16.msra.mxu0 0
      %2308 = vmatprep.subr.bf16.mxu0 0
      %2309 = vmatpush1.bf16.msra.mxu0 %v2292
      %2310 = vmatprep.subr.bf16.mxu0 0
      %2311 = vmatpush2.bf16.msra.mxu0 0
      %2312 = vmatprep.subr.bf16.mxu0 0
      %2313 = vmatpush2.bf16.msra.mxu0 0
      %2314 = vmatprep.subr.bf16.mxu0 0
      %2315 = vmatpush2.bf16.msra.mxu0 0
      %2316 = vmatprep.subr.bf16.mxu0 0
      %2317 = vmatpush2.bf16.msra.mxu0 0
      %2318 = vmatprep.subr.bf16.mxu0 0
      %2319 = vmatpush2.bf16.msra.mxu0 0
      %2320 = vmatprep.subr.bf16.mxu0 0
      %2321 = vmatpush2.bf16.msra.mxu0 0
      %2322 = vmatprep.subr.bf16.mxu0 0
      %2323 = vmatpush2.bf16.msra.mxu0 0
      %2324 = vmatprep.subr.bf16.mxu0 0
      %2325 = vmatpush2.bf16.msra.mxu0 0
      %2326 = vmatprep.mubr.bf16.mxu0 0
      %2327 = vmatmul.mubr.bf16.gmra.mxu0 %v2280
      %v2328 = vpop.f32.mrf.mxu0
      %v2329 = vadd.f32 0.0, %v2328
      %v2330 = vpop.f32.mrf.mxu0
      %v2331 = vpop.f32.mrf.mxu0
      %v2332 = vadd.f32 0.0, %v2331
      %v2333 = vpop.f32.mrf.mxu0
      %2334 = vmatprep.mubr.bf16.mxu0 0
      %2335 = vmatmul.mubr.bf16.gmra.mxu0 %v2283
      %v2336 = vpop.f32.mrf.mxu0
      %v2337 = vadd.f32 0.0, %v2336
      %v2338 = vpop.f32.mrf.mxu0
      %v2339 = vpop.f32.mrf.mxu0
      %v2340 = vadd.f32 0.0, %v2339
      %v2341 = vpop.f32.mrf.mxu0
      %2342 = vmatprep.mubr.bf16.mxu0 0
      %2343 = vmatmul.mubr.bf16.gmra.mxu0 %v2286
      %v2344 = vpop.f32.mrf.mxu0
      %v2345 = vadd.f32 0.0, %v2344
      %v2346 = vpop.f32.mrf.mxu0
      %v2347 = vpop.f32.mrf.mxu0
      %v2348 = vadd.f32 0.0, %v2347
      %v2349 = vpop.f32.mrf.mxu0
      %2350 = vmatprep.mubr.bf16.mxu0 0
      %2351 = vmatmul.mubr.bf16.gmra.mxu0 %v2289
      %v2352 = vpop.f32.mrf.mxu0
      %v2353 = vadd.f32 0.0, %v2352
      %v2354 = vpop.f32.mrf.mxu0
      %v2355 = vpop.f32.mrf.mxu0
      %v2356 = vadd.f32 0.0, %v2355
      %v2357 = vpop.f32.mrf.mxu0
      %2358 = vdwg.mxu0
      %v2359 = vadd.f32 %v2217, %v2329
      %v2360 = vadd.f32 %v2218, %v2332
      %v2361 = vadd.f32 %v2219, %v2337
      %v2362 = vadd.f32 %v2220, %v2340
      %v2363 = vadd.f32 %v2221, %v2345
      %v2364 = vadd.f32 %v2222, %v2348
      %v2365 = vadd.f32 %v2223, %v2353
      %v2366 = vadd.f32 %v2224, %v2356
      %s2367 = scalar_lea.vmem %s230, 808
      %v2368 = vld [vmem:[%s2367] sm:$0xf]
      %v2369 = vld [vmem:[%s2367 + $0x8] sm:$0xf]
      %v2370 = vld [vmem:[%s2367 + $0x10] sm:$0xf]
      %v2371 = vld [vmem:[%s2367 + $0x18] sm:$0xf]
      %v2372 = vld [vmem:[%s2367 + $0x28] sm:$0xf]
      %v2373 = vld [vmem:[%s2367 + $0x30] sm:$0xf]
      %v2374 = vld [vmem:[%s2367 + $0x38] sm:$0xf]
      %v2375 = vld [vmem:[%s2367 + $0x40] sm:$0xf]
      %v2376 = vld [vmem:[%s2367 + $0x50] sm:$0xf]
      %v2377 = vld [vmem:[%s2367 + $0x58] sm:$0xf]
      %v2378 = vld [vmem:[%s2367 + $0x60] sm:$0xf]
      %v2379 = vld [vmem:[%s2367 + $0x68] sm:$0xf]
      %v2380 = vld [vmem:[%s2367 + $0x78] sm:$0xf]
      %v2381 = vld [vmem:[%s2367 + $0x80] sm:$0xf]
      %v2382 = vld [vmem:[%s2367 + $0x88] sm:$0xf]
      %v2383 = vld [vmem:[%s2367 + $0x90] sm:$0xf]
      %v2400 = vcombine.low %v2368, %v2369
      %v2401 = vcombine.low %v2370, %v2371
      %v2402 = vcombine.low %v2372, %v2373
      %v2403 = vcombine.low %v2374, %v2375
      %v2404 = vcombine.low %v2376, %v2377
      %v2405 = vcombine.low %v2378, %v2379
      %v2406 = vcombine.low %v2380, %v2381
      %v2407 = vcombine.low %v2382, %v2383
      %v2416 = vpack.c.bf16 %v2401, %v2400
      %v2417 = vpack.c.bf16 %v2403, %v2402
      %v2418 = vpack.c.bf16 %v2405, %v2404
      %v2419 = vpack.c.bf16 %v2407, %v2406
      %s2420 = scalar_lea.vmem %s1, 30
      %v2421 = vld [vmem:[%s2420] sm:$0x3]
      %v2423 = vsel %vm351, %v2416, 0
      %v2426 = vsel %vm351, %v2417, 0
      %v2429 = vsel %vm351, %v2418, 0
      %v2432 = vsel %vm351, %v2419, 0
      %v2435 = vsel %vm364, %v2421, 0
      %2437 = vmatprep.subr.bf16.mxu0 0
      %2438 = vmatpush1.bf16.msra.mxu0 0
      %2439 = vmatprep.subr.bf16.mxu0 0
      %2440 = vmatpush1.bf16.msra.mxu0 0
      %2441 = vmatprep.subr.bf16.mxu0 0
      %2442 = vmatpush1.bf16.msra.mxu0 0
      %2443 = vmatprep.subr.bf16.mxu0 0
      %2444 = vmatpush1.bf16.msra.mxu0 0
      %2445 = vmatprep.subr.bf16.mxu0 0
      %2446 = vmatpush1.bf16.msra.mxu0 0
      %2447 = vmatprep.subr.bf16.mxu0 0
      %2448 = vmatpush1.bf16.msra.mxu0 0
      %2449 = vmatprep.subr.bf16.mxu0 0
      %2450 = vmatpush1.bf16.msra.mxu0 0
      %2451 = vmatprep.subr.bf16.mxu0 0
      %2452 = vmatpush1.bf16.msra.mxu0 %v2435
      %2453 = vmatprep.subr.bf16.mxu0 0
      %2454 = vmatpush2.bf16.msra.mxu0 0
      %2455 = vmatprep.subr.bf16.mxu0 0
      %2456 = vmatpush2.bf16.msra.mxu0 0
      %2457 = vmatprep.subr.bf16.mxu0 0
      %2458 = vmatpush2.bf16.msra.mxu0 0
      %2459 = vmatprep.subr.bf16.mxu0 0
      %2460 = vmatpush2.bf16.msra.mxu0 0
      %2461 = vmatprep.subr.bf16.mxu0 0
      %2462 = vmatpush2.bf16.msra.mxu0 0
      %2463 = vmatprep.subr.bf16.mxu0 0
      %2464 = vmatpush2.bf16.msra.mxu0 0
      %2465 = vmatprep.subr.bf16.mxu0 0
      %2466 = vmatpush2.bf16.msra.mxu0 0
      %2467 = vmatprep.subr.bf16.mxu0 0
      %2468 = vmatpush2.bf16.msra.mxu0 0
      %2469 = vmatprep.mubr.bf16.mxu0 0
      %2470 = vmatmul.mubr.bf16.gmra.mxu0 %v2423
      %v2471 = vpop.f32.mrf.mxu0
      %v2472 = vadd.f32 0.0, %v2471
      %v2473 = vpop.f32.mrf.mxu0
      %v2474 = vpop.f32.mrf.mxu0
      %v2475 = vadd.f32 0.0, %v2474
      %v2476 = vpop.f32.mrf.mxu0
      %2477 = vmatprep.mubr.bf16.mxu0 0
      %2478 = vmatmul.mubr.bf16.gmra.mxu0 %v2426
      %v2479 = vpop.f32.mrf.mxu0
      %v2480 = vadd.f32 0.0, %v2479
      %v2481 = vpop.f32.mrf.mxu0
      %v2482 = vpop.f32.mrf.mxu0
      %v2483 = vadd.f32 0.0, %v2482
      %v2484 = vpop.f32.mrf.mxu0
      %2485 = vmatprep.mubr.bf16.mxu0 0
      %2486 = vmatmul.mubr.bf16.gmra.mxu0 %v2429
      %v2487 = vpop.f32.mrf.mxu0
      %v2488 = vadd.f32 0.0, %v2487
      %v2489 = vpop.f32.mrf.mxu0
      %v2490 = vpop.f32.mrf.mxu0
      %v2491 = vadd.f32 0.0, %v2490
      %v2492 = vpop.f32.mrf.mxu0
      %2493 = vmatprep.mubr.bf16.mxu0 0
      %2494 = vmatmul.mubr.bf16.gmra.mxu0 %v2432
      %v2495 = vpop.f32.mrf.mxu0
      %v2496 = vadd.f32 0.0, %v2495
      %v2497 = vpop.f32.mrf.mxu0
      %v2498 = vpop.f32.mrf.mxu0
      %v2499 = vadd.f32 0.0, %v2498
      %v2500 = vpop.f32.mrf.mxu0
      %2501 = vdwg.mxu0
      %v2502 = vadd.f32 %v2359, %v2472
      %v2503 = vadd.f32 %v2360, %v2475
      %v2504 = vadd.f32 %v2361, %v2480
      %v2505 = vadd.f32 %v2362, %v2483
      %v2506 = vadd.f32 %v2363, %v2488
      %v2507 = vadd.f32 %v2364, %v2491
      %v2508 = vadd.f32 %v2365, %v2496
      %v2509 = vadd.f32 %v2366, %v2499
      %s2510 = scalar_lea.vmem %s230, 1008
      %v2511 = vld [vmem:[%s2510] sm:$0xf]
      %v2512 = vld [vmem:[%s2510 + $0x8] sm:$0xf]
      %v2513 = vld [vmem:[%s2510 + $0x10] sm:$0xf]
      %v2514 = vld [vmem:[%s2510 + $0x18] sm:$0xf]
      %v2515 = vld [vmem:[%s2510 + $0x28] sm:$0xf]
      %v2516 = vld [vmem:[%s2510 + $0x30] sm:$0xf]
      %v2517 = vld [vmem:[%s2510 + $0x38] sm:$0xf]
      %v2518 = vld [vmem:[%s2510 + $0x40] sm:$0xf]
      %v2519 = vld [vmem:[%s2510 + $0x50] sm:$0xf]
      %v2520 = vld [vmem:[%s2510 + $0x58] sm:$0xf]
      %v2521 = vld [vmem:[%s2510 + $0x60] sm:$0xf]
      %v2522 = vld [vmem:[%s2510 + $0x68] sm:$0xf]
      %v2523 = vld [vmem:[%s2510 + $0x78] sm:$0xf]
      %v2524 = vld [vmem:[%s2510 + $0x80] sm:$0xf]
      %v2525 = vld [vmem:[%s2510 + $0x88] sm:$0xf]
      %v2526 = vld [vmem:[%s2510 + $0x90] sm:$0xf]
      %v2543 = vcombine.low %v2511, %v2512
      %v2544 = vcombine.low %v2513, %v2514
      %v2545 = vcombine.low %v2515, %v2516
      %v2546 = vcombine.low %v2517, %v2518
      %v2547 = vcombine.low %v2519, %v2520
      %v2548 = vcombine.low %v2521, %v2522
      %v2549 = vcombine.low %v2523, %v2524
      %v2550 = vcombine.low %v2525, %v2526
      %v2559 = vpack.c.bf16 %v2544, %v2543
      %v2560 = vpack.c.bf16 %v2546, %v2545
      %v2561 = vpack.c.bf16 %v2548, %v2547
      %v2562 = vpack.c.bf16 %v2550, %v2549
      %s2563 = scalar_lea.vmem %s1, 32
      %v2564 = vld [vmem:[%s2563] sm:$0x3]
      %v2566 = vsel %vm351, %v2559, 0
      %v2569 = vsel %vm351, %v2560, 0
      %v2572 = vsel %vm351, %v2561, 0
      %v2575 = vsel %vm351, %v2562, 0
      %v2578 = vsel %vm364, %v2564, 0
      %2580 = vmatprep.subr.bf16.mxu0 0
      %2581 = vmatpush1.bf16.msra.mxu0 0
      %2582 = vmatprep.subr.bf16.mxu0 0
      %2583 = vmatpush1.bf16.msra.mxu0 0
      %2584 = vmatprep.subr.bf16.mxu0 0
      %2585 = vmatpush1.bf16.msra.mxu0 0
      %2586 = vmatprep.subr.bf16.mxu0 0
      %2587 = vmatpush1.bf16.msra.mxu0 0
      %2588 = vmatprep.subr.bf16.mxu0 0
      %2589 = vmatpush1.bf16.msra.mxu0 0
      %2590 = vmatprep.subr.bf16.mxu0 0
      %2591 = vmatpush1.bf16.msra.mxu0 0
      %2592 = vmatprep.subr.bf16.mxu0 0
      %2593 = vmatpush1.bf16.msra.mxu0 0
      %2594 = vmatprep.subr.bf16.mxu0 0
      %2595 = vmatpush1.bf16.msra.mxu0 %v2578
      %2596 = vmatprep.subr.bf16.mxu0 0
      %2597 = vmatpush2.bf16.msra.mxu0 0
      %2598 = vmatprep.subr.bf16.mxu0 0
      %2599 = vmatpush2.bf16.msra.mxu0 0
      %2600 = vmatprep.subr.bf16.mxu0 0
      %2601 = vmatpush2.bf16.msra.mxu0 0
      %2602 = vmatprep.subr.bf16.mxu0 0
      %2603 = vmatpush2.bf16.msra.mxu0 0
      %2604 = vmatprep.subr.bf16.mxu0 0
      %2605 = vmatpush2.bf16.msra.mxu0 0
      %2606 = vmatprep.subr.bf16.mxu0 0
      %2607 = vmatpush2.bf16.msra.mxu0 0
      %2608 = vmatprep.subr.bf16.mxu0 0
      %2609 = vmatpush2.bf16.msra.mxu0 0
      %2610 = vmatprep.subr.bf16.mxu0 0
      %2611 = vmatpush2.bf16.msra.mxu0 0
      %2612 = vmatprep.mubr.bf16.mxu0 0
      %2613 = vmatmul.mubr.bf16.gmra.mxu0 %v2566
      %v2614 = vpop.f32.mrf.mxu0
      %v2615 = vadd.f32 0.0, %v2614
      %v2616 = vpop.f32.mrf.mxu0
      %v2617 = vpop.f32.mrf.mxu0
      %v2618 = vadd.f32 0.0, %v2617
      %v2619 = vpop.f32.mrf.mxu0
      %2620 = vmatprep.mubr.bf16.mxu0 0
      %2621 = vmatmul.mubr.bf16.gmra.mxu0 %v2569
      %v2622 = vpop.f32.mrf.mxu0
      %v2623 = vadd.f32 0.0, %v2622
      %v2624 = vpop.f32.mrf.mxu0
      %v2625 = vpop.f32.mrf.mxu0
      %v2626 = vadd.f32 0.0, %v2625
      %v2627 = vpop.f32.mrf.mxu0
      %2628 = vmatprep.mubr.bf16.mxu0 0
      %2629 = vmatmul.mubr.bf16.gmra.mxu0 %v2572
      %v2630 = vpop.f32.mrf.mxu0
      %v2631 = vadd.f32 0.0, %v2630
      %v2632 = vpop.f32.mrf.mxu0
      %v2633 = vpop.f32.mrf.mxu0
      %v2634 = vadd.f32 0.0, %v2633
      %v2635 = vpop.f32.mrf.mxu0
      %2636 = vmatprep.mubr.bf16.mxu0 0
      %2637 = vmatmul.mubr.bf16.gmra.mxu0 %v2575
      %v2638 = vpop.f32.mrf.mxu0
      %v2639 = vadd.f32 0.0, %v2638
      %v2640 = vpop.f32.mrf.mxu0
      %v2641 = vpop.f32.mrf.mxu0
      %v2642 = vadd.f32 0.0, %v2641
      %v2643 = vpop.f32.mrf.mxu0
      %2644 = vdwg.mxu0
      %v2645 = vadd.f32 %v2502, %v2615
      %v2646 = vadd.f32 %v2503, %v2618
      %v2647 = vadd.f32 %v2504, %v2623
      %v2648 = vadd.f32 %v2505, %v2626
      %v2649 = vadd.f32 %v2506, %v2631
      %v2650 = vadd.f32 %v2507, %v2634
      %v2651 = vadd.f32 %v2508, %v2639
      %v2652 = vadd.f32 %v2509, %v2642
      %v2653 = vld [vmem:[%s2367 + $0x1] sm:$0xf]
      %v2654 = vld [vmem:[%s2367 + $0x9] sm:$0xf]
      %v2655 = vld [vmem:[%s2367 + $0x11] sm:$0xf]
      %v2656 = vld [vmem:[%s2367 + $0x19] sm:$0xf]
      %v2657 = vld [vmem:[%s2367 + $0x29] sm:$0xf]
      %v2658 = vld [vmem:[%s2367 + $0x31] sm:$0xf]
      %v2659 = vld [vmem:[%s2367 + $0x39] sm:$0xf]
      %v2660 = vld [vmem:[%s2367 + $0x41] sm:$0xf]
      %v2661 = vld [vmem:[%s2367 + $0x51] sm:$0xf]
      %v2662 = vld [vmem:[%s2367 + $0x59] sm:$0xf]
      %v2663 = vld [vmem:[%s2367 + $0x61] sm:$0xf]
      %v2664 = vld [vmem:[%s2367 + $0x69] sm:$0xf]
      %v2665 = vld [vmem:[%s2367 + $0x79] sm:$0xf]
      %v2666 = vld [vmem:[%s2367 + $0x81] sm:$0xf]
      %v2667 = vld [vmem:[%s2367 + $0x89] sm:$0xf]
      %v2668 = vld [vmem:[%s2367 + $0x91] sm:$0xf]
      %v2685 = vcombine.low %v2653, %v2654
      %v2686 = vcombine.low %v2655, %v2656
      %v2687 = vcombine.low %v2657, %v2658
      %v2688 = vcombine.low %v2659, %v2660
      %v2689 = vcombine.low %v2661, %v2662
      %v2690 = vcombine.low %v2663, %v2664
      %v2691 = vcombine.low %v2665, %v2666
      %v2692 = vcombine.low %v2667, %v2668
      %v2701 = vpack.c.bf16 %v2686, %v2685
      %v2702 = vpack.c.bf16 %v2688, %v2687
      %v2703 = vpack.c.bf16 %v2690, %v2689
      %v2704 = vpack.c.bf16 %v2692, %v2691
      %s2705 = scalar_lea.vmem %s1, 34
      %v2706 = vld [vmem:[%s2705] sm:$0x3]
      %v2708 = vsel %vm351, %v2701, 0
      %v2711 = vsel %vm351, %v2702, 0
      %v2714 = vsel %vm351, %v2703, 0
      %v2717 = vsel %vm351, %v2704, 0
      %v2720 = vsel %vm364, %v2706, 0
      %2722 = vmatprep.subr.bf16.mxu0 0
      %2723 = vmatpush1.bf16.msra.mxu0 0
      %2724 = vmatprep.subr.bf16.mxu0 0
      %2725 = vmatpush1.bf16.msra.mxu0 0
      %2726 = vmatprep.subr.bf16.mxu0 0
      %2727 = vmatpush1.bf16.msra.mxu0 0
      %2728 = vmatprep.subr.bf16.mxu0 0
      %2729 = vmatpush1.bf16.msra.mxu0 0
      %2730 = vmatprep.subr.bf16.mxu0 0
      %2731 = vmatpush1.bf16.msra.mxu0 0
      %2732 = vmatprep.subr.bf16.mxu0 0
      %2733 = vmatpush1.bf16.msra.mxu0 0
      %2734 = vmatprep.subr.bf16.mxu0 0
      %2735 = vmatpush1.bf16.msra.mxu0 0
      %2736 = vmatprep.subr.bf16.mxu0 0
      %2737 = vmatpush1.bf16.msra.mxu0 %v2720
      %2738 = vmatprep.subr.bf16.mxu0 0
      %2739 = vmatpush2.bf16.msra.mxu0 0
      %2740 = vmatprep.subr.bf16.mxu0 0
      %2741 = vmatpush2.bf16.msra.mxu0 0
      %2742 = vmatprep.subr.bf16.mxu0 0
      %2743 = vmatpush2.bf16.msra.mxu0 0
      %2744 = vmatprep.subr.bf16.mxu0 0
      %2745 = vmatpush2.bf16.msra.mxu0 0
      %2746 = vmatprep.subr.bf16.mxu0 0
      %2747 = vmatpush2.bf16.msra.mxu0 0
      %2748 = vmatprep.subr.bf16.mxu0 0
      %2749 = vmatpush2.bf16.msra.mxu0 0
      %2750 = vmatprep.subr.bf16.mxu0 0
      %2751 = vmatpush2.bf16.msra.mxu0 0
      %2752 = vmatprep.subr.bf16.mxu0 0
      %2753 = vmatpush2.bf16.msra.mxu0 0
      %2754 = vmatprep.mubr.bf16.mxu0 0
      %2755 = vmatmul.mubr.bf16.gmra.mxu0 %v2708
      %v2756 = vpop.f32.mrf.mxu0
      %v2757 = vadd.f32 0.0, %v2756
      %v2758 = vpop.f32.mrf.mxu0
      %v2759 = vpop.f32.mrf.mxu0
      %v2760 = vadd.f32 0.0, %v2759
      %v2761 = vpop.f32.mrf.mxu0
      %2762 = vmatprep.mubr.bf16.mxu0 0
      %2763 = vmatmul.mubr.bf16.gmra.mxu0 %v2711
      %v2764 = vpop.f32.mrf.mxu0
      %v2765 = vadd.f32 0.0, %v2764
      %v2766 = vpop.f32.mrf.mxu0
      %v2767 = vpop.f32.mrf.mxu0
      %v2768 = vadd.f32 0.0, %v2767
      %v2769 = vpop.f32.mrf.mxu0
      %2770 = vmatprep.mubr.bf16.mxu0 0
      %2771 = vmatmul.mubr.bf16.gmra.mxu0 %v2714
      %v2772 = vpop.f32.mrf.mxu0
      %v2773 = vadd.f32 0.0, %v2772
      %v2774 = vpop.f32.mrf.mxu0
      %v2775 = vpop.f32.mrf.mxu0
      %v2776 = vadd.f32 0.0, %v2775
      %v2777 = vpop.f32.mrf.mxu0
      %2778 = vmatprep.mubr.bf16.mxu0 0
      %2779 = vmatmul.mubr.bf16.gmra.mxu0 %v2717
      %v2780 = vpop.f32.mrf.mxu0
      %v2781 = vadd.f32 0.0, %v2780
      %v2782 = vpop.f32.mrf.mxu0
      %v2783 = vpop.f32.mrf.mxu0
      %v2784 = vadd.f32 0.0, %v2783
      %v2785 = vpop.f32.mrf.mxu0
      %2786 = vdwg.mxu0
      %v2787 = vadd.f32 %v2645, %v2757
      %v2788 = vadd.f32 %v2646, %v2760
      %v2789 = vadd.f32 %v2647, %v2765
      %v2790 = vadd.f32 %v2648, %v2768
      %v2791 = vadd.f32 %v2649, %v2773
      %v2792 = vadd.f32 %v2650, %v2776
      %v2793 = vadd.f32 %v2651, %v2781
      %v2794 = vadd.f32 %v2652, %v2784
      %s2795 = scalar_lea.vmem %s230, 40
      %v2796 = vld [vmem:[%s2795] sm:$0xf]
      %v2797 = vld [vmem:[%s2795 + $0x8] sm:$0xf]
      %v2798 = vld [vmem:[%s2795 + $0x10] sm:$0xf]
      %v2799 = vld [vmem:[%s2795 + $0x18] sm:$0xf]
      %v2800 = vld [vmem:[%s2795 + $0x28] sm:$0xf]
      %v2801 = vld [vmem:[%s2795 + $0x30] sm:$0xf]
      %v2802 = vld [vmem:[%s2795 + $0x38] sm:$0xf]
      %v2803 = vld [vmem:[%s2795 + $0x40] sm:$0xf]
      %v2804 = vld [vmem:[%s2795 + $0x50] sm:$0xf]
      %v2805 = vld [vmem:[%s2795 + $0x58] sm:$0xf]
      %v2806 = vld [vmem:[%s2795 + $0x60] sm:$0xf]
      %v2807 = vld [vmem:[%s2795 + $0x68] sm:$0xf]
      %v2808 = vld [vmem:[%s2795 + $0x78] sm:$0xf]
      %v2809 = vld [vmem:[%s2795 + $0x80] sm:$0xf]
      %v2810 = vld [vmem:[%s2795 + $0x88] sm:$0xf]
      %v2811 = vld [vmem:[%s2795 + $0x90] sm:$0xf]
      %v2828 = vcombine.low %v2796, %v2797
      %v2829 = vcombine.low %v2798, %v2799
      %v2830 = vcombine.low %v2800, %v2801
      %v2831 = vcombine.low %v2802, %v2803
      %v2832 = vcombine.low %v2804, %v2805
      %v2833 = vcombine.low %v2806, %v2807
      %v2834 = vcombine.low %v2808, %v2809
      %v2835 = vcombine.low %v2810, %v2811
      %v2844 = vpack.c.bf16 %v2829, %v2828
      %v2845 = vpack.c.bf16 %v2831, %v2830
      %v2846 = vpack.c.bf16 %v2833, %v2832
      %v2847 = vpack.c.bf16 %v2835, %v2834
      %s2848 = scalar_lea.vmem %s1, 36
      %v2849 = vld [vmem:[%s2848] sm:$0x3]
      %v2851 = vsel %vm351, %v2844, 0
      %v2854 = vsel %vm351, %v2845, 0
      %v2857 = vsel %vm351, %v2846, 0
      %v2860 = vsel %vm351, %v2847, 0
      %v2863 = vsel %vm364, %v2849, 0
      %2865 = vmatprep.subr.bf16.mxu0 0
      %2866 = vmatpush1.bf16.msra.mxu0 0
      %2867 = vmatprep.subr.bf16.mxu0 0
      %2868 = vmatpush1.bf16.msra.mxu0 0
      %2869 = vmatprep.subr.bf16.mxu0 0
      %2870 = vmatpush1.bf16.msra.mxu0 0
      %2871 = vmatprep.subr.bf16.mxu0 0
      %2872 = vmatpush1.bf16.msra.mxu0 0
      %2873 = vmatprep.subr.bf16.mxu0 0
      %2874 = vmatpush1.bf16.msra.mxu0 0
      %2875 = vmatprep.subr.bf16.mxu0 0
      %2876 = vmatpush1.bf16.msra.mxu0 0
      %2877 = vmatprep.subr.bf16.mxu0 0
      %2878 = vmatpush1.bf16.msra.mxu0 0
      %2879 = vmatprep.subr.bf16.mxu0 0
      %2880 = vmatpush1.bf16.msra.mxu0 %v2863
      %2881 = vmatprep.subr.bf16.mxu0 0
      %2882 = vmatpush2.bf16.msra.mxu0 0
      %2883 = vmatprep.subr.bf16.mxu0 0
      %2884 = vmatpush2.bf16.msra.mxu0 0
      %2885 = vmatprep.subr.bf16.mxu0 0
      %2886 = vmatpush2.bf16.msra.mxu0 0
      %2887 = vmatprep.subr.bf16.mxu0 0
      %2888 = vmatpush2.bf16.msra.mxu0 0
      %2889 = vmatprep.subr.bf16.mxu0 0
      %2890 = vmatpush2.bf16.msra.mxu0 0
      %2891 = vmatprep.subr.bf16.mxu0 0
      %2892 = vmatpush2.bf16.msra.mxu0 0
      %2893 = vmatprep.subr.bf16.mxu0 0
      %2894 = vmatpush2.bf16.msra.mxu0 0
      %2895 = vmatprep.subr.bf16.mxu0 0
      %2896 = vmatpush2.bf16.msra.mxu0 0
      %2897 = vmatprep.mubr.bf16.mxu0 0
      %2898 = vmatmul.mubr.bf16.gmra.mxu0 %v2851
      %v2899 = vpop.f32.mrf.mxu0
      %v2900 = vadd.f32 0.0, %v2899
      %v2901 = vpop.f32.mrf.mxu0
      %v2902 = vpop.f32.mrf.mxu0
      %v2903 = vadd.f32 0.0, %v2902
      %v2904 = vpop.f32.mrf.mxu0
      %2905 = vmatprep.mubr.bf16.mxu0 0
      %2906 = vmatmul.mubr.bf16.gmra.mxu0 %v2854
      %v2907 = vpop.f32.mrf.mxu0
      %v2908 = vadd.f32 0.0, %v2907
      %v2909 = vpop.f32.mrf.mxu0
      %v2910 = vpop.f32.mrf.mxu0
      %v2911 = vadd.f32 0.0, %v2910
      %v2912 = vpop.f32.mrf.mxu0
      %2913 = vmatprep.mubr.bf16.mxu0 0
      %2914 = vmatmul.mubr.bf16.gmra.mxu0 %v2857
      %v2915 = vpop.f32.mrf.mxu0
      %v2916 = vadd.f32 0.0, %v2915
      %v2917 = vpop.f32.mrf.mxu0
      %v2918 = vpop.f32.mrf.mxu0
      %v2919 = vadd.f32 0.0, %v2918
      %v2920 = vpop.f32.mrf.mxu0
      %2921 = vmatprep.mubr.bf16.mxu0 0
      %2922 = vmatmul.mubr.bf16.gmra.mxu0 %v2860
      %v2923 = vpop.f32.mrf.mxu0
      %v2924 = vadd.f32 0.0, %v2923
      %v2925 = vpop.f32.mrf.mxu0
      %v2926 = vpop.f32.mrf.mxu0
      %v2927 = vadd.f32 0.0, %v2926
      %v2928 = vpop.f32.mrf.mxu0
      %2929 = vdwg.mxu0
      %v2930 = vadd.f32 %v2787, %v2900
      %v2931 = vadd.f32 %v2788, %v2903
      %v2932 = vadd.f32 %v2789, %v2908
      %v2933 = vadd.f32 %v2790, %v2911
      %v2934 = vadd.f32 %v2791, %v2916
      %v2935 = vadd.f32 %v2792, %v2919
      %v2936 = vadd.f32 %v2793, %v2924
      %v2937 = vadd.f32 %v2794, %v2927
      %s2938 = scalar_lea.vmem %s230, 240
      %v2939 = vld [vmem:[%s2938] sm:$0xf]
      %v2940 = vld [vmem:[%s2938 + $0x8] sm:$0xf]
      %v2941 = vld [vmem:[%s2938 + $0x10] sm:$0xf]
      %v2942 = vld [vmem:[%s2938 + $0x18] sm:$0xf]
      %v2943 = vld [vmem:[%s2938 + $0x28] sm:$0xf]
      %v2944 = vld [vmem:[%s2938 + $0x30] sm:$0xf]
      %v2945 = vld [vmem:[%s2938 + $0x38] sm:$0xf]
      %v2946 = vld [vmem:[%s2938 + $0x40] sm:$0xf]
      %v2947 = vld [vmem:[%s2938 + $0x50] sm:$0xf]
      %v2948 = vld [vmem:[%s2938 + $0x58] sm:$0xf]
      %v2949 = vld [vmem:[%s2938 + $0x60] sm:$0xf]
      %v2950 = vld [vmem:[%s2938 + $0x68] sm:$0xf]
      %v2951 = vld [vmem:[%s2938 + $0x78] sm:$0xf]
      %v2952 = vld [vmem:[%s2938 + $0x80] sm:$0xf]
      %v2953 = vld [vmem:[%s2938 + $0x88] sm:$0xf]
      %v2954 = vld [vmem:[%s2938 + $0x90] sm:$0xf]
      %v2971 = vcombine.low %v2939, %v2940
      %v2972 = vcombine.low %v2941, %v2942
      %v2973 = vcombine.low %v2943, %v2944
      %v2974 = vcombine.low %v2945, %v2946
      %v2975 = vcombine.low %v2947, %v2948
      %v2976 = vcombine.low %v2949, %v2950
      %v2977 = vcombine.low %v2951, %v2952
      %v2978 = vcombine.low %v2953, %v2954
      %v2987 = vpack.c.bf16 %v2972, %v2971
      %v2988 = vpack.c.bf16 %v2974, %v2973
      %v2989 = vpack.c.bf16 %v2976, %v2975
      %v2990 = vpack.c.bf16 %v2978, %v2977
      %s2991 = scalar_lea.vmem %s1, 38
      %v2992 = vld [vmem:[%s2991] sm:$0x3]
      %v2994 = vsel %vm351, %v2987, 0
      %v2997 = vsel %vm351, %v2988, 0
      %v3000 = vsel %vm351, %v2989, 0
      %v3003 = vsel %vm351, %v2990, 0
      %v3006 = vsel %vm364, %v2992, 0
      %3008 = vmatprep.subr.bf16.mxu0 0
      %3009 = vmatpush1.bf16.msra.mxu0 0
      %3010 = vmatprep.subr.bf16.mxu0 0
      %3011 = vmatpush1.bf16.msra.mxu0 0
      %3012 = vmatprep.subr.bf16.mxu0 0
      %3013 = vmatpush1.bf16.msra.mxu0 0
      %3014 = vmatprep.subr.bf16.mxu0 0
      %3015 = vmatpush1.bf16.msra.mxu0 0
      %3016 = vmatprep.subr.bf16.mxu0 0
      %3017 = vmatpush1.bf16.msra.mxu0 0
      %3018 = vmatprep.subr.bf16.mxu0 0
      %3019 = vmatpush1.bf16.msra.mxu0 0
      %3020 = vmatprep.subr.bf16.mxu0 0
      %3021 = vmatpush1.bf16.msra.mxu0 0
      %3022 = vmatprep.subr.bf16.mxu0 0
      %3023 = vmatpush1.bf16.msra.mxu0 %v3006
      %3024 = vmatprep.subr.bf16.mxu0 0
      %3025 = vmatpush2.bf16.msra.mxu0 0
      %3026 = vmatprep.subr.bf16.mxu0 0
      %3027 = vmatpush2.bf16.msra.mxu0 0
      %3028 = vmatprep.subr.bf16.mxu0 0
      %3029 = vmatpush2.bf16.msra.mxu0 0
      %3030 = vmatprep.subr.bf16.mxu0 0
      %3031 = vmatpush2.bf16.msra.mxu0 0
      %3032 = vmatprep.subr.bf16.mxu0 0
      %3033 = vmatpush2.bf16.msra.mxu0 0
      %3034 = vmatprep.subr.bf16.mxu0 0
      %3035 = vmatpush2.bf16.msra.mxu0 0
      %3036 = vmatprep.subr.bf16.mxu0 0
      %3037 = vmatpush2.bf16.msra.mxu0 0
      %3038 = vmatprep.subr.bf16.mxu0 0
      %3039 = vmatpush2.bf16.msra.mxu0 0
      %3040 = vmatprep.mubr.bf16.mxu0 0
      %3041 = vmatmul.mubr.bf16.gmra.mxu0 %v2994
      %v3042 = vpop.f32.mrf.mxu0
      %v3043 = vadd.f32 0.0, %v3042
      %v3044 = vpop.f32.mrf.mxu0
      %v3045 = vpop.f32.mrf.mxu0
      %v3046 = vadd.f32 0.0, %v3045
      %v3047 = vpop.f32.mrf.mxu0
      %3048 = vmatprep.mubr.bf16.mxu0 0
      %3049 = vmatmul.mubr.bf16.gmra.mxu0 %v2997
      %v3050 = vpop.f32.mrf.mxu0
      %v3051 = vadd.f32 0.0, %v3050
      %v3052 = vpop.f32.mrf.mxu0
      %v3053 = vpop.f32.mrf.mxu0
      %v3054 = vadd.f32 0.0, %v3053
      %v3055 = vpop.f32.mrf.mxu0
      %3056 = vmatprep.mubr.bf16.mxu0 0
      %3057 = vmatmul.mubr.bf16.gmra.mxu0 %v3000
      %v3058 = vpop.f32.mrf.mxu0
      %v3059 = vadd.f32 0.0, %v3058
      %v3060 = vpop.f32.mrf.mxu0
      %v3061 = vpop.f32.mrf.mxu0
      %v3062 = vadd.f32 0.0, %v3061
      %v3063 = vpop.f32.mrf.mxu0
      %3064 = vmatprep.mubr.bf16.mxu0 0
      %3065 = vmatmul.mubr.bf16.gmra.mxu0 %v3003
      %v3066 = vpop.f32.mrf.mxu0
      %v3067 = vadd.f32 0.0, %v3066
      %v3068 = vpop.f32.mrf.mxu0
      %v3069 = vpop.f32.mrf.mxu0
      %v3070 = vadd.f32 0.0, %v3069
      %v3071 = vpop.f32.mrf.mxu0
      %3072 = vdwg.mxu0
      %v3073 = vadd.f32 %v2930, %v3043
      %v3074 = vadd.f32 %v2931, %v3046
      %v3075 = vadd.f32 %v2932, %v3051
      %v3076 = vadd.f32 %v2933, %v3054
      %v3077 = vadd.f32 %v2934, %v3059
      %v3078 = vadd.f32 %v2935, %v3062
      %v3079 = vadd.f32 %v2936, %v3067
      %v3080 = vadd.f32 %v2937, %v3070
      %v3081 = vld [vmem:[%s2795 + $0x1] sm:$0xf]
      %v3082 = vld [vmem:[%s2795 + $0x9] sm:$0xf]
      %v3083 = vld [vmem:[%s2795 + $0x11] sm:$0xf]
      %v3084 = vld [vmem:[%s2795 + $0x19] sm:$0xf]
      %v3085 = vld [vmem:[%s2795 + $0x29] sm:$0xf]
      %v3086 = vld [vmem:[%s2795 + $0x31] sm:$0xf]
      %v3087 = vld [vmem:[%s2795 + $0x39] sm:$0xf]
      %v3088 = vld [vmem:[%s2795 + $0x41] sm:$0xf]
      %v3089 = vld [vmem:[%s2795 + $0x51] sm:$0xf]
      %v3090 = vld [vmem:[%s2795 + $0x59] sm:$0xf]
      %v3091 = vld [vmem:[%s2795 + $0x61] sm:$0xf]
      %v3092 = vld [vmem:[%s2795 + $0x69] sm:$0xf]
      %v3093 = vld [vmem:[%s2795 + $0x79] sm:$0xf]
      %v3094 = vld [vmem:[%s2795 + $0x81] sm:$0xf]
      %v3095 = vld [vmem:[%s2795 + $0x89] sm:$0xf]
      %v3096 = vld [vmem:[%s2795 + $0x91] sm:$0xf]
      %v3113 = vcombine.low %v3081, %v3082
      %v3114 = vcombine.low %v3083, %v3084
      %v3115 = vcombine.low %v3085, %v3086
      %v3116 = vcombine.low %v3087, %v3088
      %v3117 = vcombine.low %v3089, %v3090
      %v3118 = vcombine.low %v3091, %v3092
      %v3119 = vcombine.low %v3093, %v3094
      %v3120 = vcombine.low %v3095, %v3096
      %v3129 = vpack.c.bf16 %v3114, %v3113
      %v3130 = vpack.c.bf16 %v3116, %v3115
      %v3131 = vpack.c.bf16 %v3118, %v3117
      %v3132 = vpack.c.bf16 %v3120, %v3119
      %s3133 = scalar_lea.vmem %s1, 40
      %v3134 = vld [vmem:[%s3133] sm:$0x3]
      %v3136 = vsel %vm351, %v3129, 0
      %v3139 = vsel %vm351, %v3130, 0
      %v3142 = vsel %vm351, %v3131, 0
      %v3145 = vsel %vm351, %v3132, 0
      %v3148 = vsel %vm364, %v3134, 0
      %3150 = vmatprep.subr.bf16.mxu0 0
      %3151 = vmatpush1.bf16.msra.mxu0 0
      %3152 = vmatprep.subr.bf16.mxu0 0
      %3153 = vmatpush1.bf16.msra.mxu0 0
      %3154 = vmatprep.subr.bf16.mxu0 0
      %3155 = vmatpush1.bf16.msra.mxu0 0
      %3156 = vmatprep.subr.bf16.mxu0 0
      %3157 = vmatpush1.bf16.msra.mxu0 0
      %3158 = vmatprep.subr.bf16.mxu0 0
      %3159 = vmatpush1.bf16.msra.mxu0 0
      %3160 = vmatprep.subr.bf16.mxu0 0
      %3161 = vmatpush1.bf16.msra.mxu0 0
      %3162 = vmatprep.subr.bf16.mxu0 0
      %3163 = vmatpush1.bf16.msra.mxu0 0
      %3164 = vmatprep.subr.bf16.mxu0 0
      %3165 = vmatpush1.bf16.msra.mxu0 %v3148
      %3166 = vmatprep.subr.bf16.mxu0 0
      %3167 = vmatpush2.bf16.msra.mxu0 0
      %3168 = vmatprep.subr.bf16.mxu0 0
      %3169 = vmatpush2.bf16.msra.mxu0 0
      %3170 = vmatprep.subr.bf16.mxu0 0
      %3171 = vmatpush2.bf16.msra.mxu0 0
      %3172 = vmatprep.subr.bf16.mxu0 0
      %3173 = vmatpush2.bf16.msra.mxu0 0
      %3174 = vmatprep.subr.bf16.mxu0 0
      %3175 = vmatpush2.bf16.msra.mxu0 0
      %3176 = vmatprep.subr.bf16.mxu0 0
      %3177 = vmatpush2.bf16.msra.mxu0 0
      %3178 = vmatprep.subr.bf16.mxu0 0
      %3179 = vmatpush2.bf16.msra.mxu0 0
      %3180 = vmatprep.subr.bf16.mxu0 0
      %3181 = vmatpush2.bf16.msra.mxu0 0
      %3182 = vmatprep.mubr.bf16.mxu0 0
      %3183 = vmatmul.mubr.bf16.gmra.mxu0 %v3136
      %v3184 = vpop.f32.mrf.mxu0
      %v3185 = vadd.f32 0.0, %v3184
      %v3186 = vpop.f32.mrf.mxu0
      %v3187 = vpop.f32.mrf.mxu0
      %v3188 = vadd.f32 0.0, %v3187
      %v3189 = vpop.f32.mrf.mxu0
      %3190 = vmatprep.mubr.bf16.mxu0 0
      %3191 = vmatmul.mubr.bf16.gmra.mxu0 %v3139
      %v3192 = vpop.f32.mrf.mxu0
      %v3193 = vadd.f32 0.0, %v3192
      %v3194 = vpop.f32.mrf.mxu0
      %v3195 = vpop.f32.mrf.mxu0
      %v3196 = vadd.f32 0.0, %v3195
      %v3197 = vpop.f32.mrf.mxu0
      %3198 = vmatprep.mubr.bf16.mxu0 0
      %3199 = vmatmul.mubr.bf16.gmra.mxu0 %v3142
      %v3200 = vpop.f32.mrf.mxu0
      %v3201 = vadd.f32 0.0, %v3200
      %v3202 = vpop.f32.mrf.mxu0
      %v3203 = vpop.f32.mrf.mxu0
      %v3204 = vadd.f32 0.0, %v3203
      %v3205 = vpop.f32.mrf.mxu0
      %3206 = vmatprep.mubr.bf16.mxu0 0
      %3207 = vmatmul.mubr.bf16.gmra.mxu0 %v3145
      %v3208 = vpop.f32.mrf.mxu0
      %v3209 = vadd.f32 0.0, %v3208
      %v3210 = vpop.f32.mrf.mxu0
      %v3211 = vpop.f32.mrf.mxu0
      %v3212 = vadd.f32 0.0, %v3211
      %v3213 = vpop.f32.mrf.mxu0
      %3214 = vdwg.mxu0
      %v3215 = vadd.f32 %v3073, %v3185
      %v3216 = vadd.f32 %v3074, %v3188
      %v3217 = vadd.f32 %v3075, %v3193
      %v3218 = vadd.f32 %v3076, %v3196
      %v3219 = vadd.f32 %v3077, %v3201
      %v3220 = vadd.f32 %v3078, %v3204
      %v3221 = vadd.f32 %v3079, %v3209
      %v3222 = vadd.f32 %v3080, %v3212
      %s3223 = scalar_lea.vmem %s230, 440
      %v3224 = vld [vmem:[%s3223] sm:$0xf]
      %v3225 = vld [vmem:[%s3223 + $0x8] sm:$0xf]
      %v3226 = vld [vmem:[%s3223 + $0x10] sm:$0xf]
      %v3227 = vld [vmem:[%s3223 + $0x18] sm:$0xf]
      %v3228 = vld [vmem:[%s3223 + $0x28] sm:$0xf]
      %v3229 = vld [vmem:[%s3223 + $0x30] sm:$0xf]
      %v3230 = vld [vmem:[%s3223 + $0x38] sm:$0xf]
      %v3231 = vld [vmem:[%s3223 + $0x40] sm:$0xf]
      %v3232 = vld [vmem:[%s3223 + $0x50] sm:$0xf]
      %v3233 = vld [vmem:[%s3223 + $0x58] sm:$0xf]
      %v3234 = vld [vmem:[%s3223 + $0x60] sm:$0xf]
      %v3235 = vld [vmem:[%s3223 + $0x68] sm:$0xf]
      %v3236 = vld [vmem:[%s3223 + $0x78] sm:$0xf]
      %v3237 = vld [vmem:[%s3223 + $0x80] sm:$0xf]
      %v3238 = vld [vmem:[%s3223 + $0x88] sm:$0xf]
      %v3239 = vld [vmem:[%s3223 + $0x90] sm:$0xf]
      %v3256 = vcombine.low %v3224, %v3225
      %v3257 = vcombine.low %v3226, %v3227
      %v3258 = vcombine.low %v3228, %v3229
      %v3259 = vcombine.low %v3230, %v3231
      %v3260 = vcombine.low %v3232, %v3233
      %v3261 = vcombine.low %v3234, %v3235
      %v3262 = vcombine.low %v3236, %v3237
      %v3263 = vcombine.low %v3238, %v3239
      %v3272 = vpack.c.bf16 %v3257, %v3256
      %v3273 = vpack.c.bf16 %v3259, %v3258
      %v3274 = vpack.c.bf16 %v3261, %v3260
      %v3275 = vpack.c.bf16 %v3263, %v3262
      %s3276 = scalar_lea.vmem %s1, 42
      %v3277 = vld [vmem:[%s3276] sm:$0x3]
      %v3279 = vsel %vm351, %v3272, 0
      %v3282 = vsel %vm351, %v3273, 0
      %v3285 = vsel %vm351, %v3274, 0
      %v3288 = vsel %vm351, %v3275, 0
      %v3291 = vsel %vm364, %v3277, 0
      %3293 = vmatprep.subr.bf16.mxu0 0
      %3294 = vmatpush1.bf16.msra.mxu0 0
      %3295 = vmatprep.subr.bf16.mxu0 0
      %3296 = vmatpush1.bf16.msra.mxu0 0
      %3297 = vmatprep.subr.bf16.mxu0 0
      %3298 = vmatpush1.bf16.msra.mxu0 0
      %3299 = vmatprep.subr.bf16.mxu0 0
      %3300 = vmatpush1.bf16.msra.mxu0 0
      %3301 = vmatprep.subr.bf16.mxu0 0
      %3302 = vmatpush1.bf16.msra.mxu0 0
      %3303 = vmatprep.subr.bf16.mxu0 0
      %3304 = vmatpush1.bf16.msra.mxu0 0
      %3305 = vmatprep.subr.bf16.mxu0 0
      %3306 = vmatpush1.bf16.msra.mxu0 0
      %3307 = vmatprep.subr.bf16.mxu0 0
      %3308 = vmatpush1.bf16.msra.mxu0 %v3291
      %3309 = vmatprep.subr.bf16.mxu0 0
      %3310 = vmatpush2.bf16.msra.mxu0 0
      %3311 = vmatprep.subr.bf16.mxu0 0
      %3312 = vmatpush2.bf16.msra.mxu0 0
      %3313 = vmatprep.subr.bf16.mxu0 0
      %3314 = vmatpush2.bf16.msra.mxu0 0
      %3315 = vmatprep.subr.bf16.mxu0 0
      %3316 = vmatpush2.bf16.msra.mxu0 0
      %3317 = vmatprep.subr.bf16.mxu0 0
      %3318 = vmatpush2.bf16.msra.mxu0 0
      %3319 = vmatprep.subr.bf16.mxu0 0
      %3320 = vmatpush2.bf16.msra.mxu0 0
      %3321 = vmatprep.subr.bf16.mxu0 0
      %3322 = vmatpush2.bf16.msra.mxu0 0
      %3323 = vmatprep.subr.bf16.mxu0 0
      %3324 = vmatpush2.bf16.msra.mxu0 0
      %3325 = vmatprep.mubr.bf16.mxu0 0
      %3326 = vmatmul.mubr.bf16.gmra.mxu0 %v3279
      %v3327 = vpop.f32.mrf.mxu0
      %v3328 = vadd.f32 0.0, %v3327
      %v3329 = vpop.f32.mrf.mxu0
      %v3330 = vpop.f32.mrf.mxu0
      %v3331 = vadd.f32 0.0, %v3330
      %v3332 = vpop.f32.mrf.mxu0
      %3333 = vmatprep.mubr.bf16.mxu0 0
      %3334 = vmatmul.mubr.bf16.gmra.mxu0 %v3282
      %v3335 = vpop.f32.mrf.mxu0
      %v3336 = vadd.f32 0.0, %v3335
      %v3337 = vpop.f32.mrf.mxu0
      %v3338 = vpop.f32.mrf.mxu0
      %v3339 = vadd.f32 0.0, %v3338
      %v3340 = vpop.f32.mrf.mxu0
      %3341 = vmatprep.mubr.bf16.mxu0 0
      %3342 = vmatmul.mubr.bf16.gmra.mxu0 %v3285
      %v3343 = vpop.f32.mrf.mxu0
      %v3344 = vadd.f32 0.0, %v3343
      %v3345 = vpop.f32.mrf.mxu0
      %v3346 = vpop.f32.mrf.mxu0
      %v3347 = vadd.f32 0.0, %v3346
      %v3348 = vpop.f32.mrf.mxu0
      %3349 = vmatprep.mubr.bf16.mxu0 0
      %3350 = vmatmul.mubr.bf16.gmra.mxu0 %v3288
      %v3351 = vpop.f32.mrf.mxu0
      %v3352 = vadd.f32 0.0, %v3351
      %v3353 = vpop.f32.mrf.mxu0
      %v3354 = vpop.f32.mrf.mxu0
      %v3355 = vadd.f32 0.0, %v3354
      %v3356 = vpop.f32.mrf.mxu0
      %3357 = vdwg.mxu0
      %v3358 = vadd.f32 %v3215, %v3328
      %v3359 = vadd.f32 %v3216, %v3331
      %v3360 = vadd.f32 %v3217, %v3336
      %v3361 = vadd.f32 %v3218, %v3339
      %v3362 = vadd.f32 %v3219, %v3344
      %v3363 = vadd.f32 %v3220, %v3347
      %v3364 = vadd.f32 %v3221, %v3352
      %v3365 = vadd.f32 %v3222, %v3355
      %s3366 = scalar_lea.vmem %s230, 640
      %v3367 = vld [vmem:[%s3366] sm:$0xf]
      %v3368 = vld [vmem:[%s3366 + $0x8] sm:$0xf]
      %v3369 = vld [vmem:[%s3366 + $0x10] sm:$0xf]
      %v3370 = vld [vmem:[%s3366 + $0x18] sm:$0xf]
      %v3371 = vld [vmem:[%s3366 + $0x28] sm:$0xf]
      %v3372 = vld [vmem:[%s3366 + $0x30] sm:$0xf]
      %v3373 = vld [vmem:[%s3366 + $0x38] sm:$0xf]
      %v3374 = vld [vmem:[%s3366 + $0x40] sm:$0xf]
      %v3375 = vld [vmem:[%s3366 + $0x50] sm:$0xf]
      %v3376 = vld [vmem:[%s3366 + $0x58] sm:$0xf]
      %v3377 = vld [vmem:[%s3366 + $0x60] sm:$0xf]
      %v3378 = vld [vmem:[%s3366 + $0x68] sm:$0xf]
      %v3379 = vld [vmem:[%s3366 + $0x78] sm:$0xf]
      %v3380 = vld [vmem:[%s3366 + $0x80] sm:$0xf]
      %v3381 = vld [vmem:[%s3366 + $0x88] sm:$0xf]
      %v3382 = vld [vmem:[%s3366 + $0x90] sm:$0xf]
      %v3399 = vcombine.low %v3367, %v3368
      %v3400 = vcombine.low %v3369, %v3370
      %v3401 = vcombine.low %v3371, %v3372
      %v3402 = vcombine.low %v3373, %v3374
      %v3403 = vcombine.low %v3375, %v3376
      %v3404 = vcombine.low %v3377, %v3378
      %v3405 = vcombine.low %v3379, %v3380
      %v3406 = vcombine.low %v3381, %v3382
      %v3415 = vpack.c.bf16 %v3400, %v3399
      %v3416 = vpack.c.bf16 %v3402, %v3401
      %v3417 = vpack.c.bf16 %v3404, %v3403
      %v3418 = vpack.c.bf16 %v3406, %v3405
      %s3419 = scalar_lea.vmem %s1, 44
      %v3420 = vld [vmem:[%s3419] sm:$0x3]
      %v3422 = vsel %vm351, %v3415, 0
      %v3425 = vsel %vm351, %v3416, 0
      %v3428 = vsel %vm351, %v3417, 0
      %v3431 = vsel %vm351, %v3418, 0
      %v3434 = vsel %vm364, %v3420, 0
      %3436 = vmatprep.subr.bf16.mxu0 0
      %3437 = vmatpush1.bf16.msra.mxu0 0
      %3438 = vmatprep.subr.bf16.mxu0 0
      %3439 = vmatpush1.bf16.msra.mxu0 0
      %3440 = vmatprep.subr.bf16.mxu0 0
      %3441 = vmatpush1.bf16.msra.mxu0 0
      %3442 = vmatprep.subr.bf16.mxu0 0
      %3443 = vmatpush1.bf16.msra.mxu0 0
      %3444 = vmatprep.subr.bf16.mxu0 0
      %3445 = vmatpush1.bf16.msra.mxu0 0
      %3446 = vmatprep.subr.bf16.mxu0 0
      %3447 = vmatpush1.bf16.msra.mxu0 0
      %3448 = vmatprep.subr.bf16.mxu0 0
      %3449 = vmatpush1.bf16.msra.mxu0 0
      %3450 = vmatprep.subr.bf16.mxu0 0
      %3451 = vmatpush1.bf16.msra.mxu0 %v3434
      %3452 = vmatprep.subr.bf16.mxu0 0
      %3453 = vmatpush2.bf16.msra.mxu0 0
      %3454 = vmatprep.subr.bf16.mxu0 0
      %3455 = vmatpush2.bf16.msra.mxu0 0
      %3456 = vmatprep.subr.bf16.mxu0 0
      %3457 = vmatpush2.bf16.msra.mxu0 0
      %3458 = vmatprep.subr.bf16.mxu0 0
      %3459 = vmatpush2.bf16.msra.mxu0 0
      %3460 = vmatprep.subr.bf16.mxu0 0
      %3461 = vmatpush2.bf16.msra.mxu0 0
      %3462 = vmatprep.subr.bf16.mxu0 0
      %3463 = vmatpush2.bf16.msra.mxu0 0
      %3464 = vmatprep.subr.bf16.mxu0 0
      %3465 = vmatpush2.bf16.msra.mxu0 0
      %3466 = vmatprep.subr.bf16.mxu0 0
      %3467 = vmatpush2.bf16.msra.mxu0 0
      %3468 = vmatprep.mubr.bf16.mxu0 0
      %3469 = vmatmul.mubr.bf16.gmra.mxu0 %v3422
      %v3470 = vpop.f32.mrf.mxu0
      %v3471 = vadd.f32 0.0, %v3470
      %v3472 = vpop.f32.mrf.mxu0
      %v3473 = vpop.f32.mrf.mxu0
      %v3474 = vadd.f32 0.0, %v3473
      %v3475 = vpop.f32.mrf.mxu0
      %3476 = vmatprep.mubr.bf16.mxu0 0
      %3477 = vmatmul.mubr.bf16.gmra.mxu0 %v3425
      %v3478 = vpop.f32.mrf.mxu0
      %v3479 = vadd.f32 0.0, %v3478
      %v3480 = vpop.f32.mrf.mxu0
      %v3481 = vpop.f32.mrf.mxu0
      %v3482 = vadd.f32 0.0, %v3481
      %v3483 = vpop.f32.mrf.mxu0
      %3484 = vmatprep.mubr.bf16.mxu0 0
      %3485 = vmatmul.mubr.bf16.gmra.mxu0 %v3428
      %v3486 = vpop.f32.mrf.mxu0
      %v3487 = vadd.f32 0.0, %v3486
      %v3488 = vpop.f32.mrf.mxu0
      %v3489 = vpop.f32.mrf.mxu0
      %v3490 = vadd.f32 0.0, %v3489
      %v3491 = vpop.f32.mrf.mxu0
      %3492 = vmatprep.mubr.bf16.mxu0 0
      %3493 = vmatmul.mubr.bf16.gmra.mxu0 %v3431
      %v3494 = vpop.f32.mrf.mxu0
      %v3495 = vadd.f32 0.0, %v3494
      %v3496 = vpop.f32.mrf.mxu0
      %v3497 = vpop.f32.mrf.mxu0
      %v3498 = vadd.f32 0.0, %v3497
      %v3499 = vpop.f32.mrf.mxu0
      %3500 = vdwg.mxu0
      %v3501 = vadd.f32 %v3358, %v3471
      %v3502 = vadd.f32 %v3359, %v3474
      %v3503 = vadd.f32 %v3360, %v3479
      %v3504 = vadd.f32 %v3361, %v3482
      %v3505 = vadd.f32 %v3362, %v3487
      %v3506 = vadd.f32 %v3363, %v3490
      %v3507 = vadd.f32 %v3364, %v3495
      %v3508 = vadd.f32 %v3365, %v3498
      %v3509 = vld [vmem:[%s3223 + $0x1] sm:$0xf]
      %v3510 = vld [vmem:[%s3223 + $0x9] sm:$0xf]
      %v3511 = vld [vmem:[%s3223 + $0x11] sm:$0xf]
      %v3512 = vld [vmem:[%s3223 + $0x19] sm:$0xf]
      %v3513 = vld [vmem:[%s3223 + $0x29] sm:$0xf]
      %v3514 = vld [vmem:[%s3223 + $0x31] sm:$0xf]
      %v3515 = vld [vmem:[%s3223 + $0x39] sm:$0xf]
      %v3516 = vld [vmem:[%s3223 + $0x41] sm:$0xf]
      %v3517 = vld [vmem:[%s3223 + $0x51] sm:$0xf]
      %v3518 = vld [vmem:[%s3223 + $0x59] sm:$0xf]
      %v3519 = vld [vmem:[%s3223 + $0x61] sm:$0xf]
      %v3520 = vld [vmem:[%s3223 + $0x69] sm:$0xf]
      %v3521 = vld [vmem:[%s3223 + $0x79] sm:$0xf]
      %v3522 = vld [vmem:[%s3223 + $0x81] sm:$0xf]
      %v3523 = vld [vmem:[%s3223 + $0x89] sm:$0xf]
      %v3524 = vld [vmem:[%s3223 + $0x91] sm:$0xf]
      %v3541 = vcombine.low %v3509, %v3510
      %v3542 = vcombine.low %v3511, %v3512
      %v3543 = vcombine.low %v3513, %v3514
      %v3544 = vcombine.low %v3515, %v3516
      %v3545 = vcombine.low %v3517, %v3518
      %v3546 = vcombine.low %v3519, %v3520
      %v3547 = vcombine.low %v3521, %v3522
      %v3548 = vcombine.low %v3523, %v3524
      %v3557 = vpack.c.bf16 %v3542, %v3541
      %v3558 = vpack.c.bf16 %v3544, %v3543
      %v3559 = vpack.c.bf16 %v3546, %v3545
      %v3560 = vpack.c.bf16 %v3548, %v3547
      %s3561 = scalar_lea.vmem %s1, 46
      %v3562 = vld [vmem:[%s3561] sm:$0x3]
      %v3564 = vsel %vm351, %v3557, 0
      %v3567 = vsel %vm351, %v3558, 0
      %v3570 = vsel %vm351, %v3559, 0
      %v3573 = vsel %vm351, %v3560, 0
      %v3576 = vsel %vm364, %v3562, 0
      %3578 = vmatprep.subr.bf16.mxu0 0
      %3579 = vmatpush1.bf16.msra.mxu0 0
      %3580 = vmatprep.subr.bf16.mxu0 0
      %3581 = vmatpush1.bf16.msra.mxu0 0
      %3582 = vmatprep.subr.bf16.mxu0 0
      %3583 = vmatpush1.bf16.msra.mxu0 0
      %3584 = vmatprep.subr.bf16.mxu0 0
      %3585 = vmatpush1.bf16.msra.mxu0 0
      %3586 = vmatprep.subr.bf16.mxu0 0
      %3587 = vmatpush1.bf16.msra.mxu0 0
      %3588 = vmatprep.subr.bf16.mxu0 0
      %3589 = vmatpush1.bf16.msra.mxu0 0
      %3590 = vmatprep.subr.bf16.mxu0 0
      %3591 = vmatpush1.bf16.msra.mxu0 0
      %3592 = vmatprep.subr.bf16.mxu0 0
      %3593 = vmatpush1.bf16.msra.mxu0 %v3576
      %3594 = vmatprep.subr.bf16.mxu0 0
      %3595 = vmatpush2.bf16.msra.mxu0 0
      %3596 = vmatprep.subr.bf16.mxu0 0
      %3597 = vmatpush2.bf16.msra.mxu0 0
      %3598 = vmatprep.subr.bf16.mxu0 0
      %3599 = vmatpush2.bf16.msra.mxu0 0
      %3600 = vmatprep.subr.bf16.mxu0 0
      %3601 = vmatpush2.bf16.msra.mxu0 0
      %3602 = vmatprep.subr.bf16.mxu0 0
      %3603 = vmatpush2.bf16.msra.mxu0 0
      %3604 = vmatprep.subr.bf16.mxu0 0
      %3605 = vmatpush2.bf16.msra.mxu0 0
      %3606 = vmatprep.subr.bf16.mxu0 0
      %3607 = vmatpush2.bf16.msra.mxu0 0
      %3608 = vmatprep.subr.bf16.mxu0 0
      %3609 = vmatpush2.bf16.msra.mxu0 0
      %3610 = vmatprep.mubr.bf16.mxu0 0
      %3611 = vmatmul.mubr.bf16.gmra.mxu0 %v3564
      %v3612 = vpop.f32.mrf.mxu0
      %v3613 = vadd.f32 0.0, %v3612
      %v3614 = vpop.f32.mrf.mxu0
      %v3615 = vpop.f32.mrf.mxu0
      %v3616 = vadd.f32 0.0, %v3615
      %v3617 = vpop.f32.mrf.mxu0
      %3618 = vmatprep.mubr.bf16.mxu0 0
      %3619 = vmatmul.mubr.bf16.gmra.mxu0 %v3567
      %v3620 = vpop.f32.mrf.mxu0
      %v3621 = vadd.f32 0.0, %v3620
      %v3622 = vpop.f32.mrf.mxu0
      %v3623 = vpop.f32.mrf.mxu0
      %v3624 = vadd.f32 0.0, %v3623
      %v3625 = vpop.f32.mrf.mxu0
      %3626 = vmatprep.mubr.bf16.mxu0 0
      %3627 = vmatmul.mubr.bf16.gmra.mxu0 %v3570
      %v3628 = vpop.f32.mrf.mxu0
      %v3629 = vadd.f32 0.0, %v3628
      %v3630 = vpop.f32.mrf.mxu0
      %v3631 = vpop.f32.mrf.mxu0
      %v3632 = vadd.f32 0.0, %v3631
      %v3633 = vpop.f32.mrf.mxu0
      %3634 = vmatprep.mubr.bf16.mxu0 0
      %3635 = vmatmul.mubr.bf16.gmra.mxu0 %v3573
      %v3636 = vpop.f32.mrf.mxu0
      %v3637 = vadd.f32 0.0, %v3636
      %v3638 = vpop.f32.mrf.mxu0
      %v3639 = vpop.f32.mrf.mxu0
      %v3640 = vadd.f32 0.0, %v3639
      %v3641 = vpop.f32.mrf.mxu0
      %3642 = vdwg.mxu0
      %v3643 = vadd.f32 %v3501, %v3613
      %v3644 = vadd.f32 %v3502, %v3616
      %v3645 = vadd.f32 %v3503, %v3621
      %v3646 = vadd.f32 %v3504, %v3624
      %v3647 = vadd.f32 %v3505, %v3629
      %v3648 = vadd.f32 %v3506, %v3632
      %v3649 = vadd.f32 %v3507, %v3637
      %v3650 = vadd.f32 %v3508, %v3640
      %s3651 = scalar_lea.vmem %s230, 48
      %v3652 = vld [vmem:[%s3651] sm:$0xf]
      %v3653 = vld [vmem:[%s3651 + $0x8] sm:$0xf]
      %v3654 = vld [vmem:[%s3651 + $0x10] sm:$0xf]
      %v3655 = vld [vmem:[%s3651 + $0x18] sm:$0xf]
      %v3656 = vld [vmem:[%s3651 + $0x28] sm:$0xf]
      %v3657 = vld [vmem:[%s3651 + $0x30] sm:$0xf]
      %v3658 = vld [vmem:[%s3651 + $0x38] sm:$0xf]
      %v3659 = vld [vmem:[%s3651 + $0x40] sm:$0xf]
      %v3660 = vld [vmem:[%s3651 + $0x50] sm:$0xf]
      %v3661 = vld [vmem:[%s3651 + $0x58] sm:$0xf]
      %v3662 = vld [vmem:[%s3651 + $0x60] sm:$0xf]
      %v3663 = vld [vmem:[%s3651 + $0x68] sm:$0xf]
      %v3664 = vld [vmem:[%s3651 + $0x78] sm:$0xf]
      %v3665 = vld [vmem:[%s3651 + $0x80] sm:$0xf]
      %v3666 = vld [vmem:[%s3651 + $0x88] sm:$0xf]
      %v3667 = vld [vmem:[%s3651 + $0x90] sm:$0xf]
      %v3684 = vcombine.low %v3652, %v3653
      %v3685 = vcombine.low %v3654, %v3655
      %v3686 = vcombine.low %v3656, %v3657
      %v3687 = vcombine.low %v3658, %v3659
      %v3688 = vcombine.low %v3660, %v3661
      %v3689 = vcombine.low %v3662, %v3663
      %v3690 = vcombine.low %v3664, %v3665
      %v3691 = vcombine.low %v3666, %v3667
      %v3700 = vpack.c.bf16 %v3685, %v3684
      %v3701 = vpack.c.bf16 %v3687, %v3686
      %v3702 = vpack.c.bf16 %v3689, %v3688
      %v3703 = vpack.c.bf16 %v3691, %v3690
      %s3704 = scalar_lea.vmem %s1, 48
      %v3705 = vld [vmem:[%s3704] sm:$0x3]
      %v3707 = vsel %vm351, %v3700, 0
      %v3710 = vsel %vm351, %v3701, 0
      %v3713 = vsel %vm351, %v3702, 0
      %v3716 = vsel %vm351, %v3703, 0
      %v3719 = vsel %vm364, %v3705, 0
      %3721 = vmatprep.subr.bf16.mxu0 0
      %3722 = vmatpush1.bf16.msra.mxu0 0
      %3723 = vmatprep.subr.bf16.mxu0 0
      %3724 = vmatpush1.bf16.msra.mxu0 0
      %3725 = vmatprep.subr.bf16.mxu0 0
      %3726 = vmatpush1.bf16.msra.mxu0 0
      %3727 = vmatprep.subr.bf16.mxu0 0
      %3728 = vmatpush1.bf16.msra.mxu0 0
      %3729 = vmatprep.subr.bf16.mxu0 0
      %3730 = vmatpush1.bf16.msra.mxu0 0
      %3731 = vmatprep.subr.bf16.mxu0 0
      %3732 = vmatpush1.bf16.msra.mxu0 0
      %3733 = vmatprep.subr.bf16.mxu0 0
      %3734 = vmatpush1.bf16.msra.mxu0 0
      %3735 = vmatprep.subr.bf16.mxu0 0
      %3736 = vmatpush1.bf16.msra.mxu0 %v3719
      %3737 = vmatprep.subr.bf16.mxu0 0
      %3738 = vmatpush2.bf16.msra.mxu0 0
      %3739 = vmatprep.subr.bf16.mxu0 0
      %3740 = vmatpush2.bf16.msra.mxu0 0
      %3741 = vmatprep.subr.bf16.mxu0 0
      %3742 = vmatpush2.bf16.msra.mxu0 0
      %3743 = vmatprep.subr.bf16.mxu0 0
      %3744 = vmatpush2.bf16.msra.mxu0 0
      %3745 = vmatprep.subr.bf16.mxu0 0
      %3746 = vmatpush2.bf16.msra.mxu0 0
      %3747 = vmatprep.subr.bf16.mxu0 0
      %3748 = vmatpush2.bf16.msra.mxu0 0
      %3749 = vmatprep.subr.bf16.mxu0 0
      %3750 = vmatpush2.bf16.msra.mxu0 0
      %3751 = vmatprep.subr.bf16.mxu0 0
      %3752 = vmatpush2.bf16.msra.mxu0 0
      %3753 = vmatprep.mubr.bf16.mxu0 0
      %3754 = vmatmul.mubr.bf16.gmra.mxu0 %v3707
      %v3755 = vpop.f32.mrf.mxu0
      %v3756 = vadd.f32 0.0, %v3755
      %v3757 = vpop.f32.mrf.mxu0
      %v3758 = vpop.f32.mrf.mxu0
      %v3759 = vadd.f32 0.0, %v3758
      %v3760 = vpop.f32.mrf.mxu0
      %3761 = vmatprep.mubr.bf16.mxu0 0
      %3762 = vmatmul.mubr.bf16.gmra.mxu0 %v3710
      %v3763 = vpop.f32.mrf.mxu0
      %v3764 = vadd.f32 0.0, %v3763
      %v3765 = vpop.f32.mrf.mxu0
      %v3766 = vpop.f32.mrf.mxu0
      %v3767 = vadd.f32 0.0, %v3766
      %v3768 = vpop.f32.mrf.mxu0
      %3769 = vmatprep.mubr.bf16.mxu0 0
      %3770 = vmatmul.mubr.bf16.gmra.mxu0 %v3713
      %v3771 = vpop.f32.mrf.mxu0
      %v3772 = vadd.f32 0.0, %v3771
      %v3773 = vpop.f32.mrf.mxu0
      %v3774 = vpop.f32.mrf.mxu0
      %v3775 = vadd.f32 0.0, %v3774
      %v3776 = vpop.f32.mrf.mxu0
      %3777 = vmatprep.mubr.bf16.mxu0 0
      %3778 = vmatmul.mubr.bf16.gmra.mxu0 %v3716
      %v3779 = vpop.f32.mrf.mxu0
      %v3780 = vadd.f32 0.0, %v3779
      %v3781 = vpop.f32.mrf.mxu0
      %v3782 = vpop.f32.mrf.mxu0
      %v3783 = vadd.f32 0.0, %v3782
      %v3784 = vpop.f32.mrf.mxu0
      %3785 = vdwg.mxu0
      %v3786 = vadd.f32 %v3643, %v3756
      %v3787 = vadd.f32 %v3644, %v3759
      %v3788 = vadd.f32 %v3645, %v3764
      %v3789 = vadd.f32 %v3646, %v3767
      %v3790 = vadd.f32 %v3647, %v3772
      %v3791 = vadd.f32 %v3648, %v3775
      %v3792 = vadd.f32 %v3649, %v3780
      %v3793 = vadd.f32 %v3650, %v3783
      %s3794 = scalar_lea.vmem %s230, 248
      %v3795 = vld [vmem:[%s3794] sm:$0xf]
      %v3796 = vld [vmem:[%s3794 + $0x8] sm:$0xf]
      %v3797 = vld [vmem:[%s3794 + $0x10] sm:$0xf]
      %v3798 = vld [vmem:[%s3794 + $0x18] sm:$0xf]
      %v3799 = vld [vmem:[%s3794 + $0x28] sm:$0xf]
      %v3800 = vld [vmem:[%s3794 + $0x30] sm:$0xf]
      %v3801 = vld [vmem:[%s3794 + $0x38] sm:$0xf]
      %v3802 = vld [vmem:[%s3794 + $0x40] sm:$0xf]
      %v3803 = vld [vmem:[%s3794 + $0x50] sm:$0xf]
      %v3804 = vld [vmem:[%s3794 + $0x58] sm:$0xf]
      %v3805 = vld [vmem:[%s3794 + $0x60] sm:$0xf]
      %v3806 = vld [vmem:[%s3794 + $0x68] sm:$0xf]
      %v3807 = vld [vmem:[%s3794 + $0x78] sm:$0xf]
      %v3808 = vld [vmem:[%s3794 + $0x80] sm:$0xf]
      %v3809 = vld [vmem:[%s3794 + $0x88] sm:$0xf]
      %v3810 = vld [vmem:[%s3794 + $0x90] sm:$0xf]
      %v3827 = vcombine.low %v3795, %v3796
      %v3828 = vcombine.low %v3797, %v3798
      %v3829 = vcombine.low %v3799, %v3800
      %v3830 = vcombine.low %v3801, %v3802
      %v3831 = vcombine.low %v3803, %v3804
      %v3832 = vcombine.low %v3805, %v3806
      %v3833 = vcombine.low %v3807, %v3808
      %v3834 = vcombine.low %v3809, %v3810
      %v3843 = vpack.c.bf16 %v3828, %v3827
      %v3844 = vpack.c.bf16 %v3830, %v3829
      %v3845 = vpack.c.bf16 %v3832, %v3831
      %v3846 = vpack.c.bf16 %v3834, %v3833
      %s3847 = scalar_lea.vmem %s1, 50
      %v3848 = vld [vmem:[%s3847] sm:$0x3]
      %v3850 = vsel %vm351, %v3843, 0
      %v3853 = vsel %vm351, %v3844, 0
      %v3856 = vsel %vm351, %v3845, 0
      %v3859 = vsel %vm351, %v3846, 0
      %v3862 = vsel %vm364, %v3848, 0
      %3864 = vmatprep.subr.bf16.mxu0 0
      %3865 = vmatpush1.bf16.msra.mxu0 0
      %3866 = vmatprep.subr.bf16.mxu0 0
      %3867 = vmatpush1.bf16.msra.mxu0 0
      %3868 = vmatprep.subr.bf16.mxu0 0
      %3869 = vmatpush1.bf16.msra.mxu0 0
      %3870 = vmatprep.subr.bf16.mxu0 0
      %3871 = vmatpush1.bf16.msra.mxu0 0
      %3872 = vmatprep.subr.bf16.mxu0 0
      %3873 = vmatpush1.bf16.msra.mxu0 0
      %3874 = vmatprep.subr.bf16.mxu0 0
      %3875 = vmatpush1.bf16.msra.mxu0 0
      %3876 = vmatprep.subr.bf16.mxu0 0
      %3877 = vmatpush1.bf16.msra.mxu0 0
      %3878 = vmatprep.subr.bf16.mxu0 0
      %3879 = vmatpush1.bf16.msra.mxu0 %v3862
      %3880 = vmatprep.subr.bf16.mxu0 0
      %3881 = vmatpush2.bf16.msra.mxu0 0
      %3882 = vmatprep.subr.bf16.mxu0 0
      %3883 = vmatpush2.bf16.msra.mxu0 0
      %3884 = vmatprep.subr.bf16.mxu0 0
      %3885 = vmatpush2.bf16.msra.mxu0 0
      %3886 = vmatprep.subr.bf16.mxu0 0
      %3887 = vmatpush2.bf16.msra.mxu0 0
      %3888 = vmatprep.subr.bf16.mxu0 0
      %3889 = vmatpush2.bf16.msra.mxu0 0
      %3890 = vmatprep.subr.bf16.mxu0 0
      %3891 = vmatpush2.bf16.msra.mxu0 0
      %3892 = vmatprep.subr.bf16.mxu0 0
      %3893 = vmatpush2.bf16.msra.mxu0 0
      %3894 = vmatprep.subr.bf16.mxu0 0
      %3895 = vmatpush2.bf16.msra.mxu0 0
      %3896 = vmatprep.mubr.bf16.mxu0 0
      %3897 = vmatmul.mubr.bf16.gmra.mxu0 %v3850
      %v3898 = vpop.f32.mrf.mxu0
      %v3899 = vadd.f32 0.0, %v3898
      %v3900 = vpop.f32.mrf.mxu0
      %v3901 = vpop.f32.mrf.mxu0
      %v3902 = vadd.f32 0.0, %v3901
      %v3903 = vpop.f32.mrf.mxu0
      %3904 = vmatprep.mubr.bf16.mxu0 0
      %3905 = vmatmul.mubr.bf16.gmra.mxu0 %v3853
      %v3906 = vpop.f32.mrf.mxu0
      %v3907 = vadd.f32 0.0, %v3906
      %v3908 = vpop.f32.mrf.mxu0
      %v3909 = vpop.f32.mrf.mxu0
      %v3910 = vadd.f32 0.0, %v3909
      %v3911 = vpop.f32.mrf.mxu0
      %3912 = vmatprep.mubr.bf16.mxu0 0
      %3913 = vmatmul.mubr.bf16.gmra.mxu0 %v3856
      %v3914 = vpop.f32.mrf.mxu0
      %v3915 = vadd.f32 0.0, %v3914
      %v3916 = vpop.f32.mrf.mxu0
      %v3917 = vpop.f32.mrf.mxu0
      %v3918 = vadd.f32 0.0, %v3917
      %v3919 = vpop.f32.mrf.mxu0
      %3920 = vmatprep.mubr.bf16.mxu0 0
      %3921 = vmatmul.mubr.bf16.gmra.mxu0 %v3859
      %v3922 = vpop.f32.mrf.mxu0
      %v3923 = vadd.f32 0.0, %v3922
      %v3924 = vpop.f32.mrf.mxu0
      %v3925 = vpop.f32.mrf.mxu0
      %v3926 = vadd.f32 0.0, %v3925
      %v3927 = vpop.f32.mrf.mxu0
      %3928 = vdwg.mxu0
      %v3929 = vadd.f32 %v3786, %v3899
      %v3930 = vadd.f32 %v3787, %v3902
      %v3931 = vadd.f32 %v3788, %v3907
      %v3932 = vadd.f32 %v3789, %v3910
      %v3933 = vadd.f32 %v3790, %v3915
      %v3934 = vadd.f32 %v3791, %v3918
      %v3935 = vadd.f32 %v3792, %v3923
      %v3936 = vadd.f32 %v3793, %v3926
      %v3937 = vld [vmem:[%s3651 + $0x1] sm:$0xf]
      %v3938 = vld [vmem:[%s3651 + $0x9] sm:$0xf]
      %v3939 = vld [vmem:[%s3651 + $0x11] sm:$0xf]
      %v3940 = vld [vmem:[%s3651 + $0x19] sm:$0xf]
      %v3941 = vld [vmem:[%s3651 + $0x29] sm:$0xf]
      %v3942 = vld [vmem:[%s3651 + $0x31] sm:$0xf]
      %v3943 = vld [vmem:[%s3651 + $0x39] sm:$0xf]
      %v3944 = vld [vmem:[%s3651 + $0x41] sm:$0xf]
      %v3945 = vld [vmem:[%s3651 + $0x51] sm:$0xf]
      %v3946 = vld [vmem:[%s3651 + $0x59] sm:$0xf]
      %v3947 = vld [vmem:[%s3651 + $0x61] sm:$0xf]
      %v3948 = vld [vmem:[%s3651 + $0x69] sm:$0xf]
      %v3949 = vld [vmem:[%s3651 + $0x79] sm:$0xf]
      %v3950 = vld [vmem:[%s3651 + $0x81] sm:$0xf]
      %v3951 = vld [vmem:[%s3651 + $0x89] sm:$0xf]
      %v3952 = vld [vmem:[%s3651 + $0x91] sm:$0xf]
      %v3969 = vcombine.low %v3937, %v3938
      %v3970 = vcombine.low %v3939, %v3940
      %v3971 = vcombine.low %v3941, %v3942
      %v3972 = vcombine.low %v3943, %v3944
      %v3973 = vcombine.low %v3945, %v3946
      %v3974 = vcombine.low %v3947, %v3948
      %v3975 = vcombine.low %v3949, %v3950
      %v3976 = vcombine.low %v3951, %v3952
      %v3985 = vpack.c.bf16 %v3970, %v3969
      %v3986 = vpack.c.bf16 %v3972, %v3971
      %v3987 = vpack.c.bf16 %v3974, %v3973
      %v3988 = vpack.c.bf16 %v3976, %v3975
      %s3989 = scalar_lea.vmem %s1, 52
      %v3990 = vld [vmem:[%s3989] sm:$0x3]
      %v3992 = vsel %vm351, %v3985, 0
      %v3995 = vsel %vm351, %v3986, 0
      %v3998 = vsel %vm351, %v3987, 0
      %v4001 = vsel %vm351, %v3988, 0
      %v4004 = vsel %vm364, %v3990, 0
      %4006 = vmatprep.subr.bf16.mxu0 0
      %4007 = vmatpush1.bf16.msra.mxu0 0
      %4008 = vmatprep.subr.bf16.mxu0 0
      %4009 = vmatpush1.bf16.msra.mxu0 0
      %4010 = vmatprep.subr.bf16.mxu0 0
      %4011 = vmatpush1.bf16.msra.mxu0 0
      %4012 = vmatprep.subr.bf16.mxu0 0
      %4013 = vmatpush1.bf16.msra.mxu0 0
      %4014 = vmatprep.subr.bf16.mxu0 0
      %4015 = vmatpush1.bf16.msra.mxu0 0
      %4016 = vmatprep.subr.bf16.mxu0 0
      %4017 = vmatpush1.bf16.msra.mxu0 0
      %4018 = vmatprep.subr.bf16.mxu0 0
      %4019 = vmatpush1.bf16.msra.mxu0 0
      %4020 = vmatprep.subr.bf16.mxu0 0
      %4021 = vmatpush1.bf16.msra.mxu0 %v4004
      %4022 = vmatprep.subr.bf16.mxu0 0
      %4023 = vmatpush2.bf16.msra.mxu0 0
      %4024 = vmatprep.subr.bf16.mxu0 0
      %4025 = vmatpush2.bf16.msra.mxu0 0
      %4026 = vmatprep.subr.bf16.mxu0 0
      %4027 = vmatpush2.bf16.msra.mxu0 0
      %4028 = vmatprep.subr.bf16.mxu0 0
      %4029 = vmatpush2.bf16.msra.mxu0 0
      %4030 = vmatprep.subr.bf16.mxu0 0
      %4031 = vmatpush2.bf16.msra.mxu0 0
      %4032 = vmatprep.subr.bf16.mxu0 0
      %4033 = vmatpush2.bf16.msra.mxu0 0
      %4034 = vmatprep.subr.bf16.mxu0 0
      %4035 = vmatpush2.bf16.msra.mxu0 0
      %4036 = vmatprep.subr.bf16.mxu0 0
      %4037 = vmatpush2.bf16.msra.mxu0 0
      %4038 = vmatprep.mubr.bf16.mxu0 0
      %4039 = vmatmul.mubr.bf16.gmra.mxu0 %v3992
      %v4040 = vpop.f32.mrf.mxu0
      %v4041 = vadd.f32 0.0, %v4040
      %v4042 = vpop.f32.mrf.mxu0
      %v4043 = vpop.f32.mrf.mxu0
      %v4044 = vadd.f32 0.0, %v4043
      %v4045 = vpop.f32.mrf.mxu0
      %4046 = vmatprep.mubr.bf16.mxu0 0
      %4047 = vmatmul.mubr.bf16.gmra.mxu0 %v3995
      %v4048 = vpop.f32.mrf.mxu0
      %v4049 = vadd.f32 0.0, %v4048
      %v4050 = vpop.f32.mrf.mxu0
      %v4051 = vpop.f32.mrf.mxu0
      %v4052 = vadd.f32 0.0, %v4051
      %v4053 = vpop.f32.mrf.mxu0
      %4054 = vmatprep.mubr.bf16.mxu0 0
      %4055 = vmatmul.mubr.bf16.gmra.mxu0 %v3998
      %v4056 = vpop.f32.mrf.mxu0
      %v4057 = vadd.f32 0.0, %v4056
      %v4058 = vpop.f32.mrf.mxu0
      %v4059 = vpop.f32.mrf.mxu0
      %v4060 = vadd.f32 0.0, %v4059
      %v4061 = vpop.f32.mrf.mxu0
      %4062 = vmatprep.mubr.bf16.mxu0 0
      %4063 = vmatmul.mubr.bf16.gmra.mxu0 %v4001
      %v4064 = vpop.f32.mrf.mxu0
      %v4065 = vadd.f32 0.0, %v4064
      %v4066 = vpop.f32.mrf.mxu0
      %v4067 = vpop.f32.mrf.mxu0
      %v4068 = vadd.f32 0.0, %v4067
      %v4069 = vpop.f32.mrf.mxu0
      %4070 = vdwg.mxu0
      %v4071 = vadd.f32 %v3929, %v4041
      %v4072 = vadd.f32 %v3930, %v4044
      %v4073 = vadd.f32 %v3931, %v4049
      %v4074 = vadd.f32 %v3932, %v4052
      %v4075 = vadd.f32 %v3933, %v4057
      %v4076 = vadd.f32 %v3934, %v4060
      %v4077 = vadd.f32 %v3935, %v4065
      %v4078 = vadd.f32 %v3936, %v4068
      %v4079 = vld [vmem:[%s2] sm:$0x1]
      %v4081 = vlaneseq
      %v4082 = vshrl.u32 %v4081, 7
      %v4083 = vsub.s32 0, %v4082
      %v4084 = vrot.slane %v4079, %v4083
      %v4086 = vadd.f32 %v4071, %v4084
      %v4087 = vadd.f32 %v4072, %v4084
      %v4088 = vadd.f32 %v4073, %v4084
      %v4089 = vadd.f32 %v4074, %v4084
      %v4090 = vadd.f32 %v4075, %v4084
      %v4091 = vadd.f32 %v4076, %v4084
      %v4092 = vadd.f32 %v4077, %v4084
      %v4093 = vadd.f32 %v4078, %v4084
      %4094 = vst [vmem:[%s235] sm:$0xff] %v4086
      %4095 = vst [vmem:[%s235 + $0x8] sm:$0xff] %v4087
      %4096 = vst [vmem:[%s235 + $0x10] sm:$0xff] %v4088
      %4097 = vst [vmem:[%s235 + $0x18] sm:$0xff] %v4089
      %4098 = vst [vmem:[%s235 + $0x20] sm:$0xff] %v4090
      %4099 = vst [vmem:[%s235 + $0x28] sm:$0xff] %v4091
      %4100 = vst [vmem:[%s235 + $0x30] sm:$0xff] %v4092
      %4101 = vst [vmem:[%s235 + $0x38] sm:$0xff] %v4093
      %v4102 = vadd.f32 %v4086, %v4087
      %v4103 = vadd.f32 %v4102, %v4088
      %v4104 = vadd.f32 %v4103, %v4089
      %v4105 = vadd.f32 %v4104, %v4090
      %v4106 = vadd.f32 %v4105, %v4091
      %v4107 = vadd.f32 %v4106, %v4092
      %v4108 = vadd.f32 %v4107, %v4093
      %v4109 = vrot.slane %v4108, 4
      %v4110 = vadd.f32 %v4108, %v4109
      %v4111 = vrot.slane %v4110, 2
      %v4112 = vadd.f32 %v4110, %v4111
      %v4113 = vrot.slane %v4112, 1
      %v4114 = vadd.f32 %v4112, %v4113
      %4115 = vst [vmem:[%s238] sm:$0x1] %v4114
      %v4116 = vmul.f32 %v4086, %v4086
      %v4117 = vmul.f32 %v4087, %v4087
      %v4118 = vmul.f32 %v4088, %v4088
      %v4119 = vmul.f32 %v4089, %v4089
      %v4120 = vmul.f32 %v4090, %v4090
      %v4121 = vmul.f32 %v4091, %v4091
      %v4122 = vmul.f32 %v4092, %v4092
      %v4123 = vmul.f32 %v4093, %v4093
      %v4124 = vadd.f32 %v4116, %v4117
      %v4125 = vadd.f32 %v4124, %v4118
      %v4126 = vadd.f32 %v4125, %v4119
      %v4127 = vadd.f32 %v4126, %v4120
      %v4128 = vadd.f32 %v4127, %v4121
      %v4129 = vadd.f32 %v4128, %v4122
      %v4130 = vadd.f32 %v4129, %v4123
      %v4131 = vrot.slane %v4130, 4
      %v4132 = vadd.f32 %v4130, %v4131
      %v4133 = vrot.slane %v4132, 2
      %v4134 = vadd.f32 %v4132, %v4133
      %v4135 = vrot.slane %v4134, 1
      %v4136 = vadd.f32 %v4134, %v4135
      %4137 = vst [vmem:[%s241] sm:$0x1] %v4136
      %p4138 = scmp.lt.s32.totalorder %s17, 1
      %s4139 = scalar_select %p4138, %s17, 1
      %s4140 = smul.addr %s4139, 8
      %s4141 = smul.addr %s4140, 8
      %s4142 = scalar_lea.vmem %s3, %s4141
      %p4143 = scmp.lt.s32.totalorder %s17, 1
      %s4144 = scalar_select %p4143, %s17, 1
      %s4145 = scalar_lea.vmem %s4, %s4144
      %p4146 = scmp.lt.s32.totalorder %s17, 1
      %s4147 = scalar_select %p4146, %s17, 1
      %s4148 = scalar_lea.vmem %s5, %s4147
      // Predicated region
      $region33: #{down_block_forward.6} parent=31 // pred_check
        %p4149 = pneg %p103
      $region34: #{down_block_forward.6} parent=31 // pred_check_branch
        %4151 = sbr.rel (%p4149) target = $region36
      $region35: #{down_block_forward.6} parent=31 // pred_region
        _
      $region36: #{down_block_forward.6} parent=31 // pred_fallthru
        _
      // Predicated region
      $region37: #{down_block_forward.6} parent=31 // pred_check
        %p4152 = pneg %p129
      $region38: #{down_block_forward.6} parent=31 // pred_check_branch
        %4154 = sbr.rel (%p4152) target = $region40
      $region39: #{down_block_forward.6} parent=31 // pred_region
        _
      $region40: #{down_block_forward.6} parent=31 // pred_fallthru
        _
      // Predicated region
      $region41: #{down_block_forward.6} parent=31 // pred_check
        %p4155 = pneg %p155
      $region42: #{down_block_forward.6} parent=31 // pred_check_branch
        %4157 = sbr.rel (%p4155) target = $region44
      $region43: #{down_block_forward.6} parent=31 // pred_region
        _
      $region44: #{down_block_forward.6} parent=31 // pred_fallthru
        _
    $region32: #{down_block_forward.6} parent=5 // pred_fallthru
      _
    %p4158 = scmp.le.s32.totalorder 2, %s12
    // Predicated region
    $region45: #{down_block_forward.6} parent=5 // pred_check
      %p4159 = pneg %p4158
    $region46: #{down_block_forward.6} parent=5 // pred_check_branch
      %4161 = sbr.rel (%p4159) target = $region48
    $region47: #{down_block_forward.6} parent=5 // pred_region
      %s4162 = ssub.s32 %s12, 2
      // Predicated region
      $region49: #{down_block_forward.6} parent=47 // pred_check
        %p4163 = pneg %p109
      $region50: #{down_block_forward.6} parent=47 // pred_check_branch
        %4165 = sbr.rel (%p4163) target = $region52
      $region51: #{down_block_forward.6} parent=47 // pred_region
        %p4166 = scmp.lt.s32.totalorder %s18, 1
        %s4167 = scalar_select %p4166, %s18, 1
        %s4168 = smul.addr %s4167, 8
        %s4169 = smul.addr %s4168, 8
        %s4170 = scalar_lea.vmem %s3, %s4169
      $region52: #{down_block_forward.6} parent=47 // pred_fallthru
        _
      // Predicated region
      $region53: #{down_block_forward.6} parent=47 // pred_check
        %p4171 = pneg %p135
      $region54: #{down_block_forward.6} parent=47 // pred_check_branch
        %4173 = sbr.rel (%p4171) target = $region56
      $region55: #{down_block_forward.6} parent=47 // pred_region
        %p4174 = scmp.lt.s32.totalorder %s18, 1
        %s4175 = scalar_select %p4174, %s18, 1
        %s4176 = scalar_lea.vmem %s4, %s4175
      $region56: #{down_block_forward.6} parent=47 // pred_fallthru
        _
      // Predicated region
      $region57: #{down_block_forward.6} parent=47 // pred_check
        %p4177 = pneg %p161
      $region58: #{down_block_forward.6} parent=47 // pred_check_branch
        %4179 = sbr.rel (%p4177) target = $region60
      $region59: #{down_block_forward.6} parent=47 // pred_region
        %p4180 = scmp.lt.s32.totalorder %s18, 1
        %s4181 = scalar_select %p4180, %s18, 1
        %s4182 = scalar_lea.vmem %s5, %s4181
      $region60: #{down_block_forward.6} parent=47 // pred_fallthru
        _
    $region48: #{down_block_forward.6} parent=5 // pred_fallthru
      _
  $region6: #{down_block_forward.6} parent=0 // loop_footer
    %s16 = sadd.s32 1, %s12
  $region7: #{down_block_forward.6} parent=0 // loop_footer_branch
    %11 = sbr.rel target = $region3
  $region8: #{down_block_forward.6} parent=0 // loop_exit
    _

// kernel: down_block_forward.11
$region0: #{down_block_forward.11}
  #allocation0 [shape = 'u32[]', space=smem, size = 0x4, offset = 0x4, fixed_abs, tag = 'smem constant byte address 0x4 - core index']
  #allocation1 [shape = 'u32[144,128]{1,0:T(1,128)}', space=vmem, size = 0x12000, scoped, tag = 'internal scratch']
  %s0 = inlined_call_operand.vmem [shape: f32[2,64,128], index: 0, kind: input, shape index: {}]
  %s1 = inlined_call_operand.vmem [shape: f32[2,1,128], index: 1, kind: input, shape index: {}]
  %s2 = inlined_call_operand.vmem [shape: f32[2,1,128], index: 2, kind: input, shape index: {}]
  %s3 = inlined_call_operand.vmem [shape: f32[2,64,128], index: 3, kind: input, shape index: {}]
  %s4 = inlined_call_operand.hbm [shape: f32[2,64,128], index: 4, kind: output, shape index: {}]
  %s5 = sld [smem:[#allocation0]]
  $region49: #{down_block_forward.11} parent=0
    _
  %s7 = ssub.s32 1, %s5
  %s8 = scalar_select 0, %s7, %s5
  $region1: #{down_block_forward.11} parent=0
    #allocation2 [shape = 'u8[65536]{0}', space=vmem, size = 0x10000, scoped, tag = 'output window, operand 0']
    #allocation3 [shape = 's32[2]{0}', space=sflag, size = 0x8, scoped, tag = 'scoped memory for down_block_forward.11']
    %9 = vsyncpa [#allocation3], 0
    %s10 = scalar_lea.sflag [#allocation3], 1
    %11 = vsyncpa %s10, 0
    loop: start=0, step=1, limit=4
    $region2: #{down_block_forward.11} parent=1 // loop_pre_header
      _
    $region3: #{down_block_forward.11} parent=1 // loop_header
      %s13 = sphi 0, %s17
      %p14 = scmp.ge.s32.totalorder %s13, 4
      %s20 = sphi 0, %s32
      %s21 = sphi 0, %s28
      %s22 = sphi 0, %s20
      %s23 = sphi 0, %s21
      %s24 = sphi 0, %s22
      %s25 = sphi 0, %s23
      %s37 = sphi 0, %s39
      %s40 = sphi 0, %s37
      %s41 = sphi 0, %s40
      %s57 = sphi 0, %s41
      %s63 = sphi 0, %s65
      %s66 = sphi 0, %s63
      %s67 = sphi 0, %s66
      %s83 = sphi 0, %s67
      %s89 = sphi 0, %s91
      %s92 = sphi 0, %s89
      %s93 = sphi 0, %s92
      %s109 = sphi 0, %s93
      %s117 = sphi 0, %s119
      %s120 = sphi 0, %s117
      %s121 = sphi 0, %s120
      %s137 = sphi 0, %s121
      %s145 = sphi 0, %s147
      %s148 = sphi 0, %s145
      %s149 = sphi 0, %s148
      %s165 = sphi 0, %s149
    $region4: #{down_block_forward.11} parent=1 // loop_header_branch
      %16 = sbr.rel (%p14) target = $region8
    $region5: #{down_block_forward.11} parent=1 // loop_body
      %s18 = ssub.s32 %s13, 1
      %s19 = ssub.s32 %s13, 2
      %s26 = sadd.s32 1, %s21
      %p27 = scmp.ge.s32.totalorder %s26, 1
      %s28 = scalar_select %p27, 0, %s26
      %s29 = sadd.s32 1, %s20
      %s30 = scalar_select %p27, %s29, %s20
      %p31 = scmp.ge.s32.totalorder %s30, 2
      %s32 = scalar_select %p31, 0, %s30
      %s33 = ssub.s32 %s20, %s32
      %s34 = ssub.s32 %s21, %s28
      %s35 = sor.u32 %s33, %s34
      %p36 = scmp.eq.s32.totalorder %s35, 0
      %s38 = sadd.s32 %s37, 1
      %s39 = scalar_select %p36, %s37, %s38
      %p42 = pneg %p36
      %p43 = scmp.eq.s32.totalorder %s13, 1
      %p44 = por %p42, %p43
      %p45 = scmp.ne.s32.totalorder %s37, %s40
      %p46 = scmp.eq.s32.totalorder %s13, 0
      %p47 = por %p45, %p46
      %p48 = scmp.ne.s32.totalorder %s37, %s40
      %p49 = scmp.eq.s32.totalorder %s18, 1
      %p50 = por %p48, %p49
      %p51 = scmp.ne.s32.totalorder %s40, %s41
      %p52 = scmp.eq.s32.totalorder %s18, 0
      %p53 = por %p51, %p52
      %p54 = scmp.ne.s32.totalorder %s40, %s41
      %p55 = scmp.eq.s32.totalorder %s19, 1
      %p56 = por %p54, %p55
      %p58 = scmp.ne.s32.totalorder %s41, %s57
      %p59 = scmp.eq.s32.totalorder %s19, 0
      %p60 = por %p58, %p59
      %s61 = ssub.s32 %s20, %s32
      %p62 = scmp.eq.s32.totalorder %s61, 0
      %s64 = sadd.s32 %s63, 1
      %s65 = scalar_select %p62, %s63, %s64
      %p68 = pneg %p62
      %p69 = scmp.eq.s32.totalorder %s13, 1
      %p70 = por %p68, %p69
      %p71 = scmp.ne.s32.totalorder %s63, %s66
      %p72 = scmp.eq.s32.totalorder %s13, 0
      %p73 = por %p71, %p72
      %p74 = scmp.ne.s32.totalorder %s63, %s66
      %p75 = scmp.eq.s32.totalorder %s18, 1
      %p76 = por %p74, %p75
      %p77 = scmp.ne.s32.totalorder %s66, %s67
      %p78 = scmp.eq.s32.totalorder %s18, 0
      %p79 = por %p77, %p78
      %p80 = scmp.ne.s32.totalorder %s66, %s67
      %p81 = scmp.eq.s32.totalorder %s19, 1
      %p82 = por %p80, %p81
      %p84 = scmp.ne.s32.totalorder %s67, %s83
      %p85 = scmp.eq.s32.totalorder %s19, 0
      %p86 = por %p84, %p85
      %s87 = ssub.s32 %s20, %s32
      %p88 = scmp.eq.s32.totalorder %s87, 0
      %s90 = sadd.s32 %s89, 1
      %s91 = scalar_select %p88, %s89, %s90
      %p94 = pneg %p88
      %p95 = scmp.eq.s32.totalorder %s13, 1
      %p96 = por %p94, %p95
      %p97 = scmp.ne.s32.totalorder %s89, %s92
      %p98 = scmp.eq.s32.totalorder %s13, 0
      %p99 = por %p97, %p98
      %p100 = scmp.ne.s32.totalorder %s89, %s92
      %p101 = scmp.eq.s32.totalorder %s18, 1
      %p102 = por %p100, %p101
      %p103 = scmp.ne.s32.totalorder %s92, %s93
      %p104 = scmp.eq.s32.totalorder %s18, 0
      %p105 = por %p103, %p104
      %p106 = scmp.ne.s32.totalorder %s92, %s93
      %p107 = scmp.eq.s32.totalorder %s19, 1
      %p108 = por %p106, %p107
      %p110 = scmp.ne.s32.totalorder %s93, %s109
      %p111 = scmp.eq.s32.totalorder %s19, 0
      %p112 = por %p110, %p111
      %s113 = ssub.s32 %s20, %s32
      %s114 = ssub.s32 %s21, %s28
      %s115 = sor.u32 %s113, %s114
      %p116 = scmp.eq.s32.totalorder %s115, 0
      %s118 = sadd.s32 %s117, 1
      %s119 = scalar_select %p116, %s117, %s118
      %p122 = pneg %p116
      %p123 = scmp.eq.s32.totalorder %s13, 1
      %p124 = por %p122, %p123
      %p125 = scmp.ne.s32.totalorder %s117, %s120
      %p126 = scmp.eq.s32.totalorder %s13, 0
      %p127 = por %p125, %p126
      %p128 = scmp.ne.s32.totalorder %s117, %s120
      %p129 = scmp.eq.s32.totalorder %s18, 1
      %p130 = por %p128, %p129
      %p131 = scmp.ne.s32.totalorder %s120, %s121
      %p132 = scmp.eq.s32.totalorder %s18, 0
      %p133 = por %p131, %p132
      %p134 = scmp.ne.s32.totalorder %s120, %s121
      %p135 = scmp.eq.s32.totalorder %s19, 1
      %p136 = por %p134, %p135
      %p138 = scmp.ne.s32.totalorder %s121, %s137
      %p139 = scmp.eq.s32.totalorder %s19, 0
      %p140 = por %p138, %p139
      %s141 = ssub.s32 %s20, %s32
      %s142 = ssub.s32 %s21, %s28
      %s143 = sor.u32 %s141, %s142
      %p144 = scmp.eq.s32.totalorder %s143, 0
      %s146 = sadd.s32 %s145, 1
      %s147 = scalar_select %p144, %s145, %s146
      %p150 = pneg %p144
      %p151 = scmp.eq.s32.totalorder %s13, 1
      %p152 = por %p150, %p151
      %p153 = scmp.ne.s32.totalorder %s145, %s148
      %p154 = scmp.eq.s32.totalorder %s13, 0
      %p155 = por %p153, %p154
      %p156 = scmp.ne.s32.totalorder %s145, %s148
      %p157 = scmp.eq.s32.totalorder %s18, 1
      %p158 = por %p156, %p157
      %p159 = scmp.ne.s32.totalorder %s148, %s149
      %p160 = scmp.eq.s32.totalorder %s18, 0
      %p161 = por %p159, %p160
      %p162 = scmp.ne.s32.totalorder %s148, %s149
      %p163 = scmp.eq.s32.totalorder %s19, 1
      %p164 = por %p162, %p163
      %p166 = scmp.ne.s32.totalorder %s149, %s165
      %p167 = scmp.eq.s32.totalorder %s19, 0
      %p168 = por %p166, %p167
      %p169 = scmp.le.s32.totalorder 1, %s13
      %p170 = scmp.lt.s32.totalorder %s13, 3
      %p171 = pnand %p169, %p170
      %p172 = pneg %p171
      // Predicated region
      $region9: #{down_block_forward.11} parent=5 // pred_check
        _
      $region10: #{down_block_forward.11} parent=5 // pred_check_branch
        %174 = sbr.rel (%p171) target = $region12
      $region11: #{down_block_forward.11} parent=5 // pred_region
        %s175 = ssub.s32 %s13, 1
      $region12: #{down_block_forward.11} parent=5 // pred_fallthru
        _
      %p176 = scmp.lt.s32.totalorder %s13, 2
      // Predicated region
      $region13: #{down_block_forward.11} parent=5 // pred_check
        %p177 = pneg %p176
      $region14: #{down_block_forward.11} parent=5 // pred_check_branch
        %179 = sbr.rel (%p177) target = $region16
      $region15: #{down_block_forward.11} parent=5 // pred_region
        // Predicated region
        $region17: #{down_block_forward.11} parent=15 // pred_check
          %p180 = pneg %p47
        $region18: #{down_block_forward.11} parent=15 // pred_check_branch
          %182 = sbr.rel (%p180) target = $region20
        $region19: #{down_block_forward.11} parent=15 // pred_region
          %s183 = smul.u32 8, %s21
          %p184 = scmp.lt.s32.totalorder %s20, 1
          %s185 = scalar_select %p184, %s20, 1
          %p186 = scmp.lt.s32.totalorder %s183, 7
          %s187 = scalar_select %p186, %s183, 7
          %s188 = smul.addr %s185, 8
          %s189 = sadd.s32 %s187, %s188
          %s190 = smul.addr %s189, 8
          %s191 = scalar_lea.vmem %s0, %s190
          %s192 = smul.u32 8, %s21
        $region20: #{down_block_forward.11} parent=15 // pred_fallthru
          _
        // Predicated region
        $region21: #{down_block_forward.11} parent=15 // pred_check
          %p193 = pneg %p73
        $region22: #{down_block_forward.11} parent=15 // pred_check_branch
          %195 = sbr.rel (%p193) target = $region24
        $region23: #{down_block_forward.11} parent=15 // pred_region
          %p196 = scmp.lt.s32.totalorder %s20, 1
          %s197 = scalar_select %p196, %s20, 1
          %s198 = scalar_lea.vmem %s1, %s197
        $region24: #{down_block_forward.11} parent=15 // pred_fallthru
          _
        // Predicated region
        $region25: #{down_block_forward.11} parent=15 // pred_check
          %p199 = pneg %p99
        $region26: #{down_block_forward.11} parent=15 // pred_check_branch
          %201 = sbr.rel (%p199) target = $region28
        $region27: #{down_block_forward.11} parent=15 // pred_region
          %p202 = scmp.lt.s32.totalorder %s20, 1
          %s203 = scalar_select %p202, %s20, 1
          %s204 = scalar_lea.vmem %s2, %s203
        $region28: #{down_block_forward.11} parent=15 // pred_fallthru
          _
        // Predicated region
        $region29: #{down_block_forward.11} parent=15 // pred_check
          %p205 = pneg %p127
        $region30: #{down_block_forward.11} parent=15 // pred_check_branch
          %207 = sbr.rel (%p205) target = $region32
        $region31: #{down_block_forward.11} parent=15 // pred_region
          %s208 = smul.u32 8, %s21
          %p209 = scmp.lt.s32.totalorder %s20, 1
          %s210 = scalar_select %p209, %s20, 1
          %p211 = scmp.lt.s32.totalorder %s208, 7
          %s212 = scalar_select %p211, %s208, 7
          %s213 = smul.addr %s210, 8
          %s214 = sadd.s32 %s212, %s213
          %s215 = smul.addr %s214, 8
          %s216 = scalar_lea.vmem %s3, %s215
          %s217 = smul.u32 8, %s21
        $region32: #{down_block_forward.11} parent=15 // pred_fallthru
          _
      $region16: #{down_block_forward.11} parent=5 // pred_fallthru
        _
      %p218 = scmp.le.s32.totalorder 1, %s13
      %p219 = scmp.lt.s32.totalorder %s13, 3
      %p220 = pnand %p218, %p219
      %p221 = pneg %p220
      // Predicated region
      $region33: #{down_block_forward.11} parent=5 // pred_check
        _
      $region34: #{down_block_forward.11} parent=5 // pred_check_branch
        %223 = sbr.rel (%p220) target = $region36
      $region35: #{down_block_forward.11} parent=5 // pred_region
        %s224 = ssub.s32 %s13, 1
        %s225 = smul.u32 8, %s23
        %p226 = scmp.lt.s32.totalorder %s22, 1
        %s227 = scalar_select %p226, %s22, 1
        %p228 = scmp.lt.s32.totalorder %s225, 7
        %s229 = scalar_select %p228, %s225, 7
        %s230 = smul.addr %s227, 8
        %s231 = sadd.s32 %s229, %s230
        %s232 = smul.addr %s231, 8
        %s233 = scalar_lea.vmem %s0, %s232
        %p234 = pneg %p53
        %p235 = pneg %p50
        %p236 = scmp.lt.s32.totalorder %s22, 1
        %s237 = scalar_select %p236, %s22, 1
        %s238 = scalar_lea.vmem %s1, %s237
        %p239 = pneg %p79
        %p240 = pneg %p76
        %p241 = scmp.lt.s32.totalorder %s22, 1
        %s242 = scalar_select %p241, %s22, 1
        %s243 = scalar_lea.vmem %s2, %s242
        %p244 = pneg %p105
        %p245 = pneg %p102
        %s246 = smul.u32 8, %s23
        %p247 = scmp.lt.s32.totalorder %s22, 1
        %s248 = scalar_select %p247, %s22, 1
        %p249 = scmp.lt.s32.totalorder %s246, 7
        %s250 = scalar_select %p249, %s246, 7
        %s251 = smul.addr %s248, 8
        %s252 = sadd.s32 %s250, %s251
        %s253 = smul.addr %s252, 8
        %s254 = scalar_lea.vmem %s3, %s253
        %p255 = pneg %p133
        %p256 = pneg %p130
        %p257 = pneg %p161
        %p258 = pneg %p158
        %s259 = sand.u32 %s148, 1
        %s260 = scalar_lea.sflag [#allocation3], %s259
        %s261 = sand.u32 %s148, 1
        %s262 = smul.addr %s261, 64
        %s263 = scalar_lea.vmem [#allocation2], %s262
        %s264 = smul.u32 8, %s23
        %p265 = scmp.lt.s32.totalorder %s22, 1
        %s266 = scalar_select %p265, %s22, 1
        %p267 = scmp.lt.s32.totalorder %s264, 7
        %s268 = scalar_select %p267, %s264, 7
        %s269 = smul.addr %s266, 8
        %s270 = sadd.s32 %s268, %s269
        %s271 = smul.addr %s270, 8
        %s272 = scalar_lea.vmem %s0, %s271
        %s273 = smul.u32 8, %s23
        %p274 = scmp.lt.s32.totalorder %s22, 1
        %s275 = scalar_select %p274, %s22, 1
        %s276 = scalar_lea.vmem %s1, %s275
        %p277 = scmp.lt.s32.totalorder %s22, 1
        %s278 = scalar_select %p277, %s22, 1
        %s279 = scalar_lea.vmem %s2, %s278
        %s280 = smul.u32 8, %s23
        %p281 = scmp.lt.s32.totalorder %s22, 1
        %s282 = scalar_select %p281, %s22, 1
        %p283 = scmp.lt.s32.totalorder %s280, 7
        %s284 = scalar_select %p283, %s280, 7
        %s285 = smul.addr %s282, 8
        %s286 = sadd.s32 %s284, %s285
        %s287 = smul.addr %s286, 8
        %s288 = scalar_lea.vmem %s3, %s287
        %s289 = smul.u32 8, %s23
        %s290 = smul.u32 8, %s23
        %v291 = vld [vmem:[%s272] sm:$0xff]
        %v292 = vld [vmem:[%s272 + $0x8] sm:$0xff]
        %v293 = vld [vmem:[%s272 + $0x10] sm:$0xff]
        %v294 = vld [vmem:[%s272 + $0x18] sm:$0xff]
        %v295 = vld [vmem:[%s272 + $0x20] sm:$0xff]
        %v296 = vld [vmem:[%s272 + $0x28] sm:$0xff]
        %v297 = vld [vmem:[%s272 + $0x30] sm:$0xff]
        %v298 = vld [vmem:[%s272 + $0x38] sm:$0xff]
        %v299 = vld [vmem:[%s276] sm:$0x1]
        %v301 = vlaneseq
        %v302 = vshrl.u32 %v301, 7
        %v303 = vsub.s32 0, %v302
        %v304 = vrot.slane %v299, %v303
        %v306 = vmul.f32 %v291, %v304
        %v307 = vmul.f32 %v292, %v304
        %v308 = vmul.f32 %v293, %v304
        %v309 = vmul.f32 %v294, %v304
        %v310 = vmul.f32 %v295, %v304
        %v311 = vmul.f32 %v296, %v304
        %v312 = vmul.f32 %v297, %v304
        %v313 = vmul.f32 %v298, %v304
        %v314 = vld [vmem:[%s279] sm:$0x1]
        %v316 = vlaneseq
        %v317 = vshrl.u32 %v316, 7
        %v318 = vsub.s32 0, %v317
        %v319 = vrot.slane %v314, %v318
        %v321 = vadd.f32 %v306, %v319
        %v322 = vadd.f32 %v307, %v319
        %v323 = vadd.f32 %v308, %v319
        %v324 = vadd.f32 %v309, %v319
        %v325 = vadd.f32 %v310, %v319
        %v326 = vadd.f32 %v311, %v319
        %v327 = vadd.f32 %v312, %v319
        %v328 = vadd.f32 %v313, %v319
        %v329 = vld [vmem:[%s288] sm:$0xff]
        %v330 = vld [vmem:[%s288 + $0x8] sm:$0xff]
        %v331 = vld [vmem:[%s288 + $0x10] sm:$0xff]
        %v332 = vld [vmem:[%s288 + $0x18] sm:$0xff]
        %v333 = vld [vmem:[%s288 + $0x20] sm:$0xff]
        %v334 = vld [vmem:[%s288 + $0x28] sm:$0xff]
        %v335 = vld [vmem:[%s288 + $0x30] sm:$0xff]
        %v336 = vld [vmem:[%s288 + $0x38] sm:$0xff]
        %v337 = vadd.f32 %v321, %v329
        %v338 = vadd.f32 %v322, %v330
        %v339 = vadd.f32 %v323, %v331
        %v340 = vadd.f32 %v324, %v332
        %v341 = vadd.f32 %v325, %v333
        %v342 = vadd.f32 %v326, %v334
        %v343 = vadd.f32 %v327, %v335
        %v344 = vadd.f32 %v328, %v336
        %v345 = vmax.f32 %v337, 0.0
        %v346 = vmax.f32 %v338, 0.0
        %v347 = vmax.f32 %v339, 0.0
        %v348 = vmax.f32 %v340, 0.0
        %v349 = vmax.f32 %v341, 0.0
        %v350 = vmax.f32 %v342, 0.0
        %v351 = vmax.f32 %v343, 0.0
        %v352 = vmax.f32 %v344, 0.0
        %353 = vst [vmem:[%s263] sm:$0xff] %v345
        %354 = vst [vmem:[%s263 + $0x8] sm:$0xff] %v346
        %355 = vst [vmem:[%s263 + $0x10] sm:$0xff] %v347
        %356 = vst [vmem:[%s263 + $0x18] sm:$0xff] %v348
        %357 = vst [vmem:[%s263 + $0x20] sm:$0xff] %v349
        %358 = vst [vmem:[%s263 + $0x28] sm:$0xff] %v350
        %359 = vst [vmem:[%s263 + $0x30] sm:$0xff] %v351
        %360 = vst [vmem:[%s263 + $0x38] sm:$0xff] %v352
        %s361 = sand.u32 %s148, 1
        %s362 = scalar_lea.sflag [#allocation3], %s361
        %s363 = sand.u32 %s148, 1
        %s364 = smul.addr %s363, 64
        %s365 = scalar_lea.vmem [#allocation2], %s364
        // Predicated region
        $region37: #{down_block_forward.11} parent=35 // pred_check
          %p366 = pneg %p158
        $region38: #{down_block_forward.11} parent=35 // pred_check_branch
          %368 = sbr.rel (%p366) target = $region40
        $region39: #{down_block_forward.11} parent=35 // pred_region
          %s369 = smul.u32 8, %s23
          %s371 = ssub.s32 1024, 1024
          %372 = vsyncadd %s362, %s371
          %s373 = smul.addr %s22, 8
          %s374 = sadd.s32 %s369, %s373
          %s375 = smul.addr %s374, 128
          %s376 = scalar_lea.hbm %s4, %s375
          %s377 = sshll.u32 %s365, 4
          %s378 = int_to_ptr.vmem [resolvable:$true] %s377
          %383 = dma.vmem_to_hbm [thread:$0]  %s378, 1024, %s376, %s362, 128, 128, 8
        $region40: #{down_block_forward.11} parent=35 // pred_fallthru
          _
      $region36: #{down_block_forward.11} parent=5 // pred_fallthru
        _
      %p384 = scmp.le.s32.totalorder 2, %s13
      // Predicated region
      $region41: #{down_block_forward.11} parent=5 // pred_check
        %p385 = pneg %p384
      $region42: #{down_block_forward.11} parent=5 // pred_check_branch
        %387 = sbr.rel (%p385) target = $region44
      $region43: #{down_block_forward.11} parent=5 // pred_region
        %s388 = ssub.s32 %s13, 2
        // Predicated region
        $region45: #{down_block_forward.11} parent=43 // pred_check
          %p389 = pneg %p164
        $region46: #{down_block_forward.11} parent=43 // pred_check_branch
          %391 = sbr.rel (%p389) target = $region48
        $region47: #{down_block_forward.11} parent=43 // pred_region
          %s392 = sand.u32 %s149, 1
          %s393 = scalar_lea.sflag [#allocation3], %s392
          %s394 = sand.u32 %s149, 1
          %s395 = smul.addr %s394, 64
          %s396 = scalar_lea.vmem [#allocation2], %s395
          %397 = dma.done %s393, 1024
        $region48: #{down_block_forward.11} parent=43 // pred_fallthru
          _
      $region44: #{down_block_forward.11} parent=5 // pred_fallthru
        _
    $region6: #{down_block_forward.11} parent=1 // loop_footer
      %s17 = sadd.s32 1, %s13
    $region7: #{down_block_forward.11} parent=1 // loop_footer_branch
      %12 = sbr.rel target = $region3
    $region8: #{down_block_forward.11} parent=1 // loop_exit
      _
    %398 = vsyncpa [#allocation3], 1
    %s399 = scalar_lea.sflag [#allocation3], 1
    %400 = vsyncpa %s399, 1

// kernel: down_block_forward.8
$region0: #{down_block_forward.8}
  #allocation0 [shape = 'u32[]', space=smem, size = 0x4, offset = 0x4, fixed_abs, tag = 'smem constant byte address 0x4 - core index']
  #allocation1 [shape = 'u32[144,128]{1,0:T(1,128)}', space=vmem, size = 0x12000, scoped, tag = 'internal scratch']
  %s0 = inlined_call_operand.vmem [shape: f32[2,6,6,6,128], index: 0, kind: input, shape index: {}]
  %s1 = inlined_call_operand.vmem [shape: bf16[27,128,128], index: 1, kind: input, shape index: {}]
  %s2 = inlined_call_operand.vmem [shape: f32[1,128], index: 2, kind: input, shape index: {}]
  %s3 = inlined_call_operand.vmem [shape: f32[2,64,128], index: 3, kind: output, shape index: {0}]
  %s4 = inlined_call_operand.vmem [shape: f32[2,1,128], index: 4, kind: output, shape index: {1}]
  %s5 = inlined_call_operand.vmem [shape: f32[2,1,128], index: 5, kind: output, shape index: {2}]
  %6 = xla_tuple %s3, %s4, %s5
  %s7 = sld [smem:[#allocation0]]
  $region61: #{down_block_forward.8} parent=0
    _
  %s9 = ssub.s32 1, %s7
  %s10 = scalar_select 0, %s9, %s7
  loop: start=0, step=1, limit=4
  $region2: #{down_block_forward.8} parent=0 // loop_pre_header
    _
  $region3: #{down_block_forward.8} parent=0 // loop_header
    %s12 = sphi 0, %s16
    %p13 = scmp.ge.s32.totalorder %s12, 4
    %s22 = sphi 0, %s24
    %s25 = sphi 0, %s22
    %s26 = sphi 0, %s25
    %s42 = sphi 0, %s26
    %s46 = sphi 0, %s46
    %s48 = sphi 0, %s46
    %s49 = sphi 0, %s48
    %s63 = sphi 0, %s49
    %s67 = sphi 0, %s67
    %s69 = sphi 0, %s67
    %s70 = sphi 0, %s69
    %s84 = sphi 0, %s70
    %s90 = sphi 0, %s92
    %s93 = sphi 0, %s90
    %s94 = sphi 0, %s93
    %s110 = sphi 0, %s94
    %s116 = sphi 0, %s118
    %s119 = sphi 0, %s116
    %s120 = sphi 0, %s119
    %s136 = sphi 0, %s120
    %s142 = sphi 0, %s144
    %s145 = sphi 0, %s142
    %s146 = sphi 0, %s145
    %s162 = sphi 0, %s146
  $region4: #{down_block_forward.8} parent=0 // loop_header_branch
    %15 = sbr.rel (%p13) target = $region8
  $region5: #{down_block_forward.8} parent=0 // loop_body
    %s17 = ssub.s32 %s12, 1
    %s18 = ssub.s32 %s12, 2
    %s19 = sadd.s32 %s12, 1
    %s20 = ssub.s32 %s12, %s19
    %p21 = scmp.eq.s32.totalorder %s20, 0
    %s23 = sadd.s32 %s22, 1
    %s24 = scalar_select %p21, %s22, %s23
    %p27 = pneg %p21
    %p28 = scmp.eq.s32.totalorder %s12, 1
    %p29 = por %p27, %p28
    %p30 = scmp.ne.s32.totalorder %s22, %s25
    %p31 = scmp.eq.s32.totalorder %s12, 0
    %p32 = por %p30, %p31
    %p33 = scmp.ne.s32.totalorder %s22, %s25
    %p34 = scmp.eq.s32.totalorder %s17, 1
    %p35 = por %p33, %p34
    %p36 = scmp.ne.s32.totalorder %s25, %s26
    %p37 = scmp.eq.s32.totalorder %s17, 0
    %p38 = por %p36, %p37
    %p39 = scmp.ne.s32.totalorder %s25, %s26
    %p40 = scmp.eq.s32.totalorder %s18, 1
    %p41 = por %p39, %p40
    %p43 = scmp.ne.s32.totalorder %s26, %s42
    %p44 = scmp.eq.s32.totalorder %s18, 0
    %p45 = por %p43, %p44
    %s47 = sadd.s32 %s46, 1
    %p50 = scmp.eq.s32.totalorder %s12, 1
    %p51 = scmp.ne.s32.totalorder %s46, %s48
    %p52 = scmp.eq.s32.totalorder %s12, 0
    %p53 = por %p51, %p52
    %p54 = scmp.ne.s32.totalorder %s46, %s48
    %p55 = scmp.eq.s32.totalorder %s17, 1
    %p56 = por %p54, %p55
    %p57 = scmp.ne.s32.totalorder %s48, %s49
    %p58 = scmp.eq.s32.totalorder %s17, 0
    %p59 = por %p57, %p58
    %p60 = scmp.ne.s32.totalorder %s48, %s49
    %p61 = scmp.eq.s32.totalorder %s18, 1
    %p62 = por %p60, %p61
    %p64 = scmp.ne.s32.totalorder %s49, %s63
    %p65 = scmp.eq.s32.totalorder %s18, 0
    %p66 = por %p64, %p65
    %s68 = sadd.s32 %s67, 1
    %p71 = scmp.eq.s32.totalorder %s12, 1
    %p72 = scmp.ne.s32.totalorder %s67, %s69
    %p73 = scmp.eq.s32.totalorder %s12, 0
    %p74 = por %p72, %p73
    %p75 = scmp.ne.s32.totalorder %s67, %s69
    %p76 = scmp.eq.s32.totalorder %s17, 1
    %p77 = por %p75, %p76
    %p78 = scmp.ne.s32.totalorder %s69, %s70
    %p79 = scmp.eq.s32.totalorder %s17, 0
    %p80 = por %p78, %p79
    %p81 = scmp.ne.s32.totalorder %s69, %s70
    %p82 = scmp.eq.s32.totalorder %s18, 1
    %p83 = por %p81, %p82
    %p85 = scmp.ne.s32.totalorder %s70, %s84
    %p86 = scmp.eq.s32.totalorder %s18, 0
    %p87 = por %p85, %p86
    %s88 = ssub.s32 %s12, %s19
    %p89 = scmp.eq.s32.totalorder %s88, 0
    %s91 = sadd.s32 %s90, 1
    %s92 = scalar_select %p89, %s90, %s91
    %p95 = pneg %p89
    %p96 = scmp.eq.s32.totalorder %s12, 1
    %p97 = por %p95, %p96
    %p98 = scmp.ne.s32.totalorder %s90, %s93
    %p99 = scmp.eq.s32.totalorder %s12, 0
    %p100 = por %p98, %p99
    %p101 = scmp.ne.s32.totalorder %s90, %s93
    %p102 = scmp.eq.s32.totalorder %s17, 1
    %p103 = por %p101, %p102
    %p104 = scmp.ne.s32.totalorder %s93, %s94
    %p105 = scmp.eq.s32.totalorder %s17, 0
    %p106 = por %p104, %p105
    %p107 = scmp.ne.s32.totalorder %s93, %s94
    %p108 = scmp.eq.s32.totalorder %s18, 1
    %p109 = por %p107, %p108
    %p111 = scmp.ne.s32.totalorder %s94, %s110
    %p112 = scmp.eq.s32.totalorder %s18, 0
    %p113 = por %p111, %p112
    %s114 = ssub.s32 %s12, %s19
    %p115 = scmp.eq.s32.totalorder %s114, 0
    %s117 = sadd.s32 %s116, 1
    %s118 = scalar_select %p115, %s116, %s117
    %p121 = pneg %p115
    %p122 = scmp.eq.s32.totalorder %s12, 1
    %p123 = por %p121, %p122
    %p124 = scmp.ne.s32.totalorder %s116, %s119
    %p125 = scmp.eq.s32.totalorder %s12, 0
    %p126 = por %p124, %p125
    %p127 = scmp.ne.s32.totalorder %s116, %s119
    %p128 = scmp.eq.s32.totalorder %s17, 1
    %p129 = por %p127, %p128
    %p130 = scmp.ne.s32.totalorder %s119, %s120
    %p131 = scmp.eq.s32.totalorder %s17, 0
    %p132 = por %p130, %p131
    %p133 = scmp.ne.s32.totalorder %s119, %s120
    %p134 = scmp.eq.s32.totalorder %s18, 1
    %p135 = por %p133, %p134
    %p137 = scmp.ne.s32.totalorder %s120, %s136
    %p138 = scmp.eq.s32.totalorder %s18, 0
    %p139 = por %p137, %p138
    %s140 = ssub.s32 %s12, %s19
    %p141 = scmp.eq.s32.totalorder %s140, 0
    %s143 = sadd.s32 %s142, 1
    %s144 = scalar_select %p141, %s142, %s143
    %p147 = pneg %p141
    %p148 = scmp.eq.s32.totalorder %s12, 1
    %p149 = por %p147, %p148
    %p150 = scmp.ne.s32.totalorder %s142, %s145
    %p151 = scmp.eq.s32.totalorder %s12, 0
    %p152 = por %p150, %p151
    %p153 = scmp.ne.s32.totalorder %s142, %s145
    %p154 = scmp.eq.s32.totalorder %s17, 1
    %p155 = por %p153, %p154
    %p156 = scmp.ne.s32.totalorder %s145, %s146
    %p157 = scmp.eq.s32.totalorder %s17, 0
    %p158 = por %p156, %p157
    %p159 = scmp.ne.s32.totalorder %s145, %s146
    %p160 = scmp.eq.s32.totalorder %s18, 1
    %p161 = por %p159, %p160
    %p163 = scmp.ne.s32.totalorder %s146, %s162
    %p164 = scmp.eq.s32.totalorder %s18, 0
    %p165 = por %p163, %p164
    %p166 = scmp.le.s32.totalorder 1, %s12
    %p167 = scmp.lt.s32.totalorder %s12, 3
    %p168 = pnand %p166, %p167
    %p169 = pneg %p168
    // Predicated region
    $region9: #{down_block_forward.8} parent=5 // pred_check
      _
    $region10: #{down_block_forward.8} parent=5 // pred_check_branch
      %171 = sbr.rel (%p168) target = $region12
    $region11: #{down_block_forward.8} parent=5 // pred_region
      %s172 = ssub.s32 %s12, 1
      // Predicated region
      $region13: #{down_block_forward.8} parent=11 // pred_check
        %p173 = pneg %p59
      $region14: #{down_block_forward.8} parent=11 // pred_check_branch
        %175 = sbr.rel (%p173) target = $region16
      $region15: #{down_block_forward.8} parent=11 // pred_region
        _
      $region16: #{down_block_forward.8} parent=11 // pred_fallthru
        _
      // Predicated region
      $region17: #{down_block_forward.8} parent=11 // pred_check
        %p176 = pneg %p80
      $region18: #{down_block_forward.8} parent=11 // pred_check_branch
        %178 = sbr.rel (%p176) target = $region20
      $region19: #{down_block_forward.8} parent=11 // pred_region
        _
      $region20: #{down_block_forward.8} parent=11 // pred_fallthru
        _
    $region12: #{down_block_forward.8} parent=5 // pred_fallthru
      _
    %p179 = scmp.lt.s32.totalorder %s12, 2
    // Predicated region
    $region21: #{down_block_forward.8} parent=5 // pred_check
      %p180 = pneg %p179
    $region22: #{down_block_forward.8} parent=5 // pred_check_branch
      %182 = sbr.rel (%p180) target = $region24
    $region23: #{down_block_forward.8} parent=5 // pred_region
      // Predicated region
      $region25: #{down_block_forward.8} parent=23 // pred_check
        %p183 = pneg %p32
      $region26: #{down_block_forward.8} parent=23 // pred_check_branch
        %185 = sbr.rel (%p183) target = $region28
      $region27: #{down_block_forward.8} parent=23 // pred_region
        %p186 = scmp.lt.s32.totalorder %s12, 1
        %s187 = scalar_select %p186, %s12, 1
        %s188 = smul.addr %s187, 36
        %s189 = smul.addr %s188, 8
        %s190 = scalar_lea.vmem %s0, %s189
      $region28: #{down_block_forward.8} parent=23 // pred_fallthru
        _
    $region24: #{down_block_forward.8} parent=5 // pred_fallthru
      _
    %p191 = scmp.le.s32.totalorder 1, %s12
    %p192 = scmp.lt.s32.totalorder %s12, 3
    %p193 = pnand %p191, %p192
    %p194 = pneg %p193
    // Predicated region
    $region29: #{down_block_forward.8} parent=5 // pred_check
      _
    $region30: #{down_block_forward.8} parent=5 // pred_check_branch
      %196 = sbr.rel (%p193) target = $region32
    $region31: #{down_block_forward.8} parent=5 // pred_region
      %s197 = ssub.s32 %s12, 1
      %p198 = scmp.lt.s32.totalorder %s17, 1
      %s199 = scalar_select %p198, %s17, 1
      %s200 = smul.addr %s199, 36
      %s201 = smul.addr %s200, 8
      %s202 = scalar_lea.vmem %s0, %s201
      %p203 = pneg %p38
      %p204 = pneg %p35
      %p205 = pneg %p59
      %p206 = pneg %p56
      %p207 = pneg %p80
      %p208 = pneg %p77
      %p209 = pneg %p106
      %p210 = pneg %p103
      %p211 = scmp.lt.s32.totalorder %s17, 1
      %s212 = scalar_select %p211, %s17, 1
      %s213 = smul.addr %s212, 8
      %s214 = smul.addr %s213, 8
      %s215 = scalar_lea.vmem %s3, %s214
      %p216 = pneg %p132
      %p217 = pneg %p129
      %p218 = scmp.lt.s32.totalorder %s17, 1
      %s219 = scalar_select %p218, %s17, 1
      %s220 = scalar_lea.vmem %s4, %s219
      %p221 = pneg %p158
      %p222 = pneg %p155
      %p223 = scmp.lt.s32.totalorder %s17, 1
      %s224 = scalar_select %p223, %s17, 1
      %s225 = scalar_lea.vmem %s5, %s224
      %p226 = scmp.lt.s32.totalorder %s17, 1
      %s227 = scalar_select %p226, %s17, 1
      %s228 = smul.addr %s227, 36
      %s229 = smul.addr %s228, 8
      %s230 = scalar_lea.vmem %s0, %s229
      %p231 = scmp.lt.s32.totalorder %s17, 1
      %s232 = scalar_select %p231, %s17, 1
      %s233 = smul.addr %s232, 8
      %s234 = smul.addr %s233, 8
      %s235 = scalar_lea.vmem %s3, %s234
      %p236 = scmp.lt.s32.totalorder %s17, 1
      %s237 = scalar_select %p236, %s17, 1
      %s238 = scalar_lea.vmem %s4, %s237
      %p239 = scmp.lt.s32.totalorder %s17, 1
      %s240 = scalar_select %p239, %s17, 1
      %s241 = scalar_lea.vmem %s5, %s240
      %v243 = vld [vmem:[%s230] sm:$0xf]
      %v244 = vld [vmem:[%s230 + $0x8] sm:$0xf]
      %v245 = vld [vmem:[%s230 + $0x10] sm:$0xf]
      %v246 = vld [vmem:[%s230 + $0x18] sm:$0xf]
      %v247 = vld [vmem:[%s230 + $0x30] sm:$0xf]
      %v248 = vld [vmem:[%s230 + $0x38] sm:$0xf]
      %v249 = vld [vmem:[%s230 + $0x40] sm:$0xf]
      %v250 = vld [vmem:[%s230 + $0x48] sm:$0xf]
      %v251 = vld [vmem:[%s230 + $0x60] sm:$0xf]
      %v252 = vld [vmem:[%s230 + $0x68] sm:$0xf]
      %v253 = vld [vmem:[%s230 + $0x70] sm:$0xf]
      %v254 = vld [vmem:[%s230 + $0x78] sm:$0xf]
      %v255 = vld [vmem:[%s230 + $0x90] sm:$0xf]
      %v256 = vld [vmem:[%s230 + $0x98] sm:$0xf]
      %v257 = vld [vmem:[%s230 + $0xa0] sm:$0xf]
      %v258 = vld [vmem:[%s230 + $0xa8] sm:$0xf]
      %v275 = vcombine.low %v243, %v244
      %v276 = vcombine.low %v245, %v246
      %v277 = vcombine.low %v247, %v248
      %v278 = vcombine.low %v249, %v250
      %v279 = vcombine.low %v251, %v252
      %v280 = vcombine.low %v253, %v254
      %v281 = vcombine.low %v255, %v256
      %v282 = vcombine.low %v257, %v258
      %v291 = vpack.c.bf16 %v276, %v275
      %v292 = vpack.c.bf16 %v278, %v277
      %v293 = vpack.c.bf16 %v280, %v279
      %v294 = vpack.c.bf16 %v282, %v281
      %v295 = vld [vmem:[%s1] sm:$0xf]
      %v296 = vld [vmem:[%s1 + $0x4] sm:$0xf]
      %v297 = vld [vmem:[%s1 + $0x8] sm:$0xf]
      %v298 = vld [vmem:[%s1 + $0xc] sm:$0xf]
      %v299 = vld [vmem:[%s1 + $0x10] sm:$0xf]
      %v300 = vld [vmem:[%s1 + $0x14] sm:$0xf]
      %v301 = vld [vmem:[%s1 + $0x18] sm:$0xf]
      %v302 = vld [vmem:[%s1 + $0x1c] sm:$0xf]
      %v303 = vld [vmem:[%s1 + $0x20] sm:$0xf]
      %v304 = vld [vmem:[%s1 + $0x24] sm:$0xf]
      %v305 = vld [vmem:[%s1 + $0x28] sm:$0xf]
      %v306 = vld [vmem:[%s1 + $0x2c] sm:$0xf]
      %v307 = vld [vmem:[%s1 + $0x30] sm:$0xf]
      %v308 = vld [vmem:[%s1 + $0x34] sm:$0xf]
      %v309 = vld [vmem:[%s1 + $0x38] sm:$0xf]
      %v310 = vld [vmem:[%s1 + $0x3c] sm:$0xf]
      %v311 = vld [vmem:[%s230 + $0x1] sm:$0xf]
      %v312 = vld [vmem:[%s230 + $0x9] sm:$0xf]
      %v313 = vld [vmem:[%s230 + $0x11] sm:$0xf]
      %v314 = vld [vmem:[%s230 + $0x19] sm:$0xf]
      %v315 = vld [vmem:[%s230 + $0x31] sm:$0xf]
      %v316 = vld [vmem:[%s230 + $0x39] sm:$0xf]
      %v317 = vld [vmem:[%s230 + $0x41] sm:$0xf]
      %v318 = vld [vmem:[%s230 + $0x49] sm:$0xf]
      %v319 = vld [vmem:[%s230 + $0x61] sm:$0xf]
      %v320 = vld [vmem:[%s230 + $0x69] sm:$0xf]
      %v321 = vld [vmem:[%s230 + $0x71] sm:$0xf]
      %v322 = vld [vmem:[%s230 + $0x79] sm:$0xf]
      %v323 = vld [vmem:[%s230 + $0x91] sm:$0xf]
      %v324 = vld [vmem:[%s230 + $0x99] sm:$0xf]
      %v325 = vld [vmem:[%s230 + $0xa1] sm:$0xf]
      %v326 = vld [vmem:[%s230 + $0xa9] sm:$0xf]
      %v343 = vcombine.low %v311, %v312
      %v344 = vcombine.low %v313, %v314
      %v345 = vcombine.low %v315, %v316
      %v346 = vcombine.low %v317, %v318
      %v347 = vcombine.low %v319, %v320
      %v348 = vcombine.low %v321, %v322
      %v349 = vcombine.low %v323, %v324
      %v350 = vcombine.low %v325, %v326
      %v359 = vpack.c.bf16 %v344, %v343
      %v360 = vpack.c.bf16 %v346, %v345
      %v361 = vpack.c.bf16 %v348, %v347
      %v362 = vpack.c.bf16 %v350, %v349
      %s363 = scalar_lea.vmem %s1, 64
      %v364 = vld [vmem:[%s363] sm:$0xf]
      %v365 = vld [vmem:[%s363 + $0x4] sm:$0xf]
      %v366 = vld [vmem:[%s363 + $0x8] sm:$0xf]
      %v367 = vld [vmem:[%s363 + $0xc] sm:$0xf]
      %v368 = vld [vmem:[%s363 + $0x10] sm:$0xf]
      %v369 = vld [vmem:[%s363 + $0x14] sm:$0xf]
      %v370 = vld [vmem:[%s363 + $0x18] sm:$0xf]
      %v371 = vld [vmem:[%s363 + $0x1c] sm:$0xf]
      %v372 = vld [vmem:[%s363 + $0x20] sm:$0xf]
      %v373 = vld [vmem:[%s363 + $0x24] sm:$0xf]
      %v374 = vld [vmem:[%s363 + $0x28] sm:$0xf]
      %v375 = vld [vmem:[%s363 + $0x2c] sm:$0xf]
      %v376 = vld [vmem:[%s363 + $0x30] sm:$0xf]
      %v377 = vld [vmem:[%s363 + $0x34] sm:$0xf]
      %v378 = vld [vmem:[%s363 + $0x38] sm:$0xf]
      %v379 = vld [vmem:[%s363 + $0x3c] sm:$0xf]
      %v396 = vunpack.c.l.b16 %v364
      %v397 = vunpack.c.l.b16 %v365
      %v398 = vunpack.c.l.b16 %v366
      %v399 = vunpack.c.l.b16 %v367
      %v400 = vunpack.c.l.b16 %v368
      %v401 = vunpack.c.l.b16 %v369
      %v402 = vunpack.c.l.b16 %v370
      %v403 = vunpack.c.l.b16 %v371
      %v404 = vunpack.c.l.b16 %v372
      %v405 = vunpack.c.l.b16 %v373
      %v406 = vunpack.c.l.b16 %v374
      %v407 = vunpack.c.l.b16 %v375
      %v408 = vunpack.c.l.b16 %v376
      %v409 = vunpack.c.l.b16 %v377
      %v410 = vunpack.c.l.b16 %v378
      %v411 = vunpack.c.l.b16 %v379
      %v412 = vpack.c.b16 %v397, %v396
      %v413 = vpack.c.b16 %v399, %v398
      %v414 = vpack.c.b16 %v401, %v400
      %v415 = vpack.c.b16 %v403, %v402
      %v416 = vpack.c.b16 %v405, %v404
      %v417 = vpack.c.b16 %v407, %v406
      %v418 = vpack.c.b16 %v409, %v408
      %v419 = vpack.c.b16 %v411, %v410
      %428 = vmatprep.subr.bf16.mxu0 0
      %429 = vmatpush1.bf16.msra.mxu0 %v419
      %430 = vmatprep.subr.bf16.mxu0 0
      %431 = vmatpush1.bf16.msra.mxu0 %v418
      %432 = vmatprep.subr.bf16.mxu0 0
      %433 = vmatpush1.bf16.msra.mxu0 %v417
      %434 = vmatprep.subr.bf16.mxu0 0
      %435 = vmatpush1.bf16.msra.mxu0 %v416
      %436 = vmatprep.subr.bf16.mxu0 0
      %437 = vmatpush1.bf16.msra.mxu0 %v415
      %438 = vmatprep.subr.bf16.mxu0 0
      %439 = vmatpush1.bf16.msra.mxu0 %v414
      %440 = vmatprep.subr.bf16.mxu0 0
      %441 = vmatpush1.bf16.msra.mxu0 %v413
      %442 = vmatprep.subr.bf16.mxu0 0
      %443 = vmatpush1.bf16.msra.mxu0 %v412
      %444 = vmatprep.subr.bf16.mxu0 0
      %445 = vmatpush2.bf16.msra.mxu0 0
      %446 = vmatprep.subr.bf16.mxu0 0
      %447 = vmatpush2.bf16.msra.mxu0 0
      %448 = vmatprep.subr.bf16.mxu0 0
      %449 = vmatpush2.bf16.msra.mxu0 0
      %450 = vmatprep.subr.bf16.mxu0 0
      %451 = vmatpush2.bf16.msra.mxu0 0
      %452 = vmatprep.subr.bf16.mxu0 0
      %453 = vmatpush2.bf16.msra.mxu0 0
      %454 = vmatprep.subr.bf16.mxu0 0
      %455 = vmatpush2.bf16.msra.mxu0 0
      %456 = vmatprep.subr.bf16.mxu0 0
      %457 = vmatpush2.bf16.msra.mxu0 0
      %458 = vmatprep.subr.bf16.mxu0 0
      %459 = vmatpush2.bf16.msra.mxu0 0
      %460 = vmatprep.mubr.bf16.mxu0 0
      %461 = vmatmul.mubr.bf16.gmra.mxu0 %v359
      %v462 = vpop.f32.mrf.mxu0
      %v463 = vadd.f32 0.0, %v462
      %v464 = vpop.f32.mrf.mxu0
      %v465 = vpop.f32.mrf.mxu0
      %v466 = vadd.f32 0.0, %v465
      %v467 = vpop.f32.mrf.mxu0
      %468 = vmatprep.mubr.bf16.mxu0 0
      %469 = vmatmul.mubr.bf16.gmra.mxu0 %v360
      %v470 = vpop.f32.mrf.mxu0
      %v471 = vadd.f32 0.0, %v470
      %v472 = vpop.f32.mrf.mxu0
      %v473 = vpop.f32.mrf.mxu0
      %v474 = vadd.f32 0.0, %v473
      %v475 = vpop.f32.mrf.mxu0
      %476 = vmatprep.mubr.bf16.mxu0 0
      %477 = vmatmul.mubr.bf16.gmra.mxu0 %v361
      %v478 = vpop.f32.mrf.mxu0
      %v479 = vadd.f32 0.0, %v478
      %v480 = vpop.f32.mrf.mxu0
      %v481 = vpop.f32.mrf.mxu0
      %v482 = vadd.f32 0.0, %v481
      %v483 = vpop.f32.mrf.mxu0
      %484 = vmatprep.mubr.bf16.mxu0 0
      %485 = vmatmul.mubr.bf16.gmra.mxu0 %v362
      %v486 = vpop.f32.mrf.mxu0
      %v487 = vadd.f32 0.0, %v486
      %v488 = vpop.f32.mrf.mxu0
      %v489 = vpop.f32.mrf.mxu0
      %v490 = vadd.f32 0.0, %v489
      %v491 = vpop.f32.mrf.mxu0
      %492 = vdwg.mxu0
      %v509 = vunpack.c.l.b16 %v295
      %v510 = vunpack.c.l.b16 %v296
      %v511 = vunpack.c.l.b16 %v297
      %v512 = vunpack.c.l.b16 %v298
      %v513 = vunpack.c.l.b16 %v299
      %v514 = vunpack.c.l.b16 %v300
      %v515 = vunpack.c.l.b16 %v301
      %v516 = vunpack.c.l.b16 %v302
      %v517 = vunpack.c.l.b16 %v303
      %v518 = vunpack.c.l.b16 %v304
      %v519 = vunpack.c.l.b16 %v305
      %v520 = vunpack.c.l.b16 %v306
      %v521 = vunpack.c.l.b16 %v307
      %v522 = vunpack.c.l.b16 %v308
      %v523 = vunpack.c.l.b16 %v309
      %v524 = vunpack.c.l.b16 %v310
      %v525 = vpack.c.b16 %v510, %v509
      %v526 = vpack.c.b16 %v512, %v511
      %v527 = vpack.c.b16 %v514, %v513
      %v528 = vpack.c.b16 %v516, %v515
      %v529 = vpack.c.b16 %v518, %v517
      %v530 = vpack.c.b16 %v520, %v519
      %v531 = vpack.c.b16 %v522, %v521
      %v532 = vpack.c.b16 %v524, %v523
      %541 = vmatprep.subr.bf16.mxu0 0
      %542 = vmatpush1.bf16.msra.mxu0 %v532
      %543 = vmatprep.subr.bf16.mxu0 0
      %544 = vmatpush1.bf16.msra.mxu0 %v531
      %545 = vmatprep.subr.bf16.mxu0 0
      %546 = vmatpush1.bf16.msra.mxu0 %v530
      %547 = vmatprep.subr.bf16.mxu0 0
      %548 = vmatpush1.bf16.msra.mxu0 %v529
      %549 = vmatprep.subr.bf16.mxu0 0
      %550 = vmatpush1.bf16.msra.mxu0 %v528
      %551 = vmatprep.subr.bf16.mxu0 0
      %552 = vmatpush1.bf16.msra.mxu0 %v527
      %553 = vmatprep.subr.bf16.mxu0 0
      %554 = vmatpush1.bf16.msra.mxu0 %v526
      %555 = vmatprep.subr.bf16.mxu0 0
      %556 = vmatpush1.bf16.msra.mxu0 %v525
      %557 = vmatprep.subr.bf16.mxu0 0
      %558 = vmatpush2.bf16.msra.mxu0 0
      %559 = vmatprep.subr.bf16.mxu0 0
      %560 = vmatpush2.bf16.msra.mxu0 0
      %561 = vmatprep.subr.bf16.mxu0 0
      %562 = vmatpush2.bf16.msra.mxu0 0
      %563 = vmatprep.subr.bf16.mxu0 0
      %564 = vmatpush2.bf16.msra.mxu0 0
      %565 = vmatprep.subr.bf16.mxu0 0
      %566 = vmatpush2.bf16.msra.mxu0 0
      %567 = vmatprep.subr.bf16.mxu0 0
      %568 = vmatpush2.bf16.msra.mxu0 0
      %569 = vmatprep.subr.bf16.mxu0 0
      %570 = vmatpush2.bf16.msra.mxu0 0
      %571 = vmatprep.subr.bf16.mxu0 0
      %572 = vmatpush2.bf16.msra.mxu0 0
      %573 = vmatprep.mubr.bf16.mxu0 0
      %574 = vmatmul.mubr.bf16.gmra.mxu0 %v291
      %v575 = vpop.f32.mrf.mxu0
      %v576 = vadd.f32 %v463, %v575
      %v577 = vpop.f32.mrf.mxu0
      %v578 = vpop.f32.mrf.mxu0
      %v579 = vadd.f32 %v466, %v578
      %v580 = vpop.f32.mrf.mxu0
      %581 = vmatprep.mubr.bf16.mxu0 0
      %582 = vmatmul.mubr.bf16.gmra.mxu0 %v292
      %v583 = vpop.f32.mrf.mxu0
      %v584 = vadd.f32 %v471, %v583
      %v585 = vpop.f32.mrf.mxu0
      %v586 = vpop.f32.mrf.mxu0
      %v587 = vadd.f32 %v474, %v586
      %v588 = vpop.f32.mrf.mxu0
      %589 = vmatprep.mubr.bf16.mxu0 0
      %590 = vmatmul.mubr.bf16.gmra.mxu0 %v293
      %v591 = vpop.f32.mrf.mxu0
      %v592 = vadd.f32 %v479, %v591
      %v593 = vpop.f32.mrf.mxu0
      %v594 = vpop.f32.mrf.mxu0
      %v595 = vadd.f32 %v482, %v594
      %v596 = vpop.f32.mrf.mxu0
      %597 = vmatprep.mubr.bf16.mxu0 0
      %598 = vmatmul.mubr.bf16.gmra.mxu0 %v294
      %v599 = vpop.f32.mrf.mxu0
      %v600 = vadd.f32 %v487, %v599
      %v601 = vpop.f32.mrf.mxu0
      %v602 = vpop.f32.mrf.mxu0
      %v603 = vadd.f32 %v490, %v602
      %v604 = vpop.f32.mrf.mxu0
      %605 = vdwg.mxu0
      %v606 = vld [vmem:[%s230 + $0x2] sm:$0xf]
      %v607 = vld [vmem:[%s230 + $0xa] sm:$0xf]
      %v608 = vld [vmem:[%s230 + $0x12] sm:$0xf]
      %v609 = vld [vmem:[%s230 + $0x1a] sm:$0xf]
      %v610 = vld [vmem:[%s230 + $0x32] sm:$0xf]
      %v611 = vld [vmem:[%s230 + $0x3a] sm:$0xf]
      %v612 = vld [vmem:[%s230 + $0x42] sm:$0xf]
      %v613 = vld [vmem:[%s230 + $0x4a] sm:$0xf]
      %v614 = vld [vmem:[%s230 + $0x62] sm:$0xf]
      %v615 = vld [vmem:[%s230 + $0x6a] sm:$0xf]
      %v616 = vld [vmem:[%s230 + $0x72] sm:$0xf]
      %v617 = vld [vmem:[%s230 + $0x7a] sm:$0xf]
      %v618 = vld [vmem:[%s230 + $0x92] sm:$0xf]
      %v619 = vld [vmem:[%s230 + $0x9a] sm:$0xf]
      %v620 = vld [vmem:[%s230 + $0xa2] sm:$0xf]
      %v621 = vld [vmem:[%s230 + $0xaa] sm:$0xf]
      %v638 = vcombine.low %v606, %v607
      %v639 = vcombine.low %v608, %v609
      %v640 = vcombine.low %v610, %v611
      %v641 = vcombine.low %v612, %v613
      %v642 = vcombine.low %v614, %v615
      %v643 = vcombine.low %v616, %v617
      %v644 = vcombine.low %v618, %v619
      %v645 = vcombine.low %v620, %v621
      %v654 = vpack.c.bf16 %v639, %v638
      %v655 = vpack.c.bf16 %v641, %v640
      %v656 = vpack.c.bf16 %v643, %v642
      %v657 = vpack.c.bf16 %v645, %v644
      %s658 = scalar_lea.vmem %s1, 128
      %v659 = vld [vmem:[%s658] sm:$0xf]
      %v660 = vld [vmem:[%s658 + $0x4] sm:$0xf]
      %v661 = vld [vmem:[%s658 + $0x8] sm:$0xf]
      %v662 = vld [vmem:[%s658 + $0xc] sm:$0xf]
      %v663 = vld [vmem:[%s658 + $0x10] sm:$0xf]
      %v664 = vld [vmem:[%s658 + $0x14] sm:$0xf]
      %v665 = vld [vmem:[%s658 + $0x18] sm:$0xf]
      %v666 = vld [vmem:[%s658 + $0x1c] sm:$0xf]
      %v667 = vld [vmem:[%s658 + $0x20] sm:$0xf]
      %v668 = vld [vmem:[%s658 + $0x24] sm:$0xf]
      %v669 = vld [vmem:[%s658 + $0x28] sm:$0xf]
      %v670 = vld [vmem:[%s658 + $0x2c] sm:$0xf]
      %v671 = vld [vmem:[%s658 + $0x30] sm:$0xf]
      %v672 = vld [vmem:[%s658 + $0x34] sm:$0xf]
      %v673 = vld [vmem:[%s658 + $0x38] sm:$0xf]
      %v674 = vld [vmem:[%s658 + $0x3c] sm:$0xf]
      %v691 = vunpack.c.l.b16 %v659
      %v692 = vunpack.c.l.b16 %v660
      %v693 = vunpack.c.l.b16 %v661
      %v694 = vunpack.c.l.b16 %v662
      %v695 = vunpack.c.l.b16 %v663
      %v696 = vunpack.c.l.b16 %v664
      %v697 = vunpack.c.l.b16 %v665
      %v698 = vunpack.c.l.b16 %v666
      %v699 = vunpack.c.l.b16 %v667
      %v700 = vunpack.c.l.b16 %v668
      %v701 = vunpack.c.l.b16 %v669
      %v702 = vunpack.c.l.b16 %v670
      %v703 = vunpack.c.l.b16 %v671
      %v704 = vunpack.c.l.b16 %v672
      %v705 = vunpack.c.l.b16 %v673
      %v706 = vunpack.c.l.b16 %v674
      %v707 = vpack.c.b16 %v692, %v691
      %v708 = vpack.c.b16 %v694, %v693
      %v709 = vpack.c.b16 %v696, %v695
      %v710 = vpack.c.b16 %v698, %v697
      %v711 = vpack.c.b16 %v700, %v699
      %v712 = vpack.c.b16 %v702, %v701
      %v713 = vpack.c.b16 %v704, %v703
      %v714 = vpack.c.b16 %v706, %v705
      %723 = vmatprep.subr.bf16.mxu0 0
      %724 = vmatpush1.bf16.msra.mxu0 %v714
      %725 = vmatprep.subr.bf16.mxu0 0
      %726 = vmatpush1.bf16.msra.mxu0 %v713
      %727 = vmatprep.subr.bf16.mxu0 0
      %728 = vmatpush1.bf16.msra.mxu0 %v712
      %729 = vmatprep.subr.bf16.mxu0 0
      %730 = vmatpush1.bf16.msra.mxu0 %v711
      %731 = vmatprep.subr.bf16.mxu0 0
      %732 = vmatpush1.bf16.msra.mxu0 %v710
      %733 = vmatprep.subr.bf16.mxu0 0
      %734 = vmatpush1.bf16.msra.mxu0 %v709
      %735 = vmatprep.subr.bf16.mxu0 0
      %736 = vmatpush1.bf16.msra.mxu0 %v708
      %737 = vmatprep.subr.bf16.mxu0 0
      %738 = vmatpush1.bf16.msra.mxu0 %v707
      %739 = vmatprep.subr.bf16.mxu0 0
      %740 = vmatpush2.bf16.msra.mxu0 0
      %741 = vmatprep.subr.bf16.mxu0 0
      %742 = vmatpush2.bf16.msra.mxu0 0
      %743 = vmatprep.subr.bf16.mxu0 0
      %744 = vmatpush2.bf16.msra.mxu0 0
      %745 = vmatprep.subr.bf16.mxu0 0
      %746 = vmatpush2.bf16.msra.mxu0 0
      %747 = vmatprep.subr.bf16.mxu0 0
      %748 = vmatpush2.bf16.msra.mxu0 0
      %749 = vmatprep.subr.bf16.mxu0 0
      %750 = vmatpush2.bf16.msra.mxu0 0
      %751 = vmatprep.subr.bf16.mxu0 0
      %752 = vmatpush2.bf16.msra.mxu0 0
      %753 = vmatprep.subr.bf16.mxu0 0
      %754 = vmatpush2.bf16.msra.mxu0 0
      %755 = vmatprep.mubr.bf16.mxu0 0
      %756 = vmatmul.mubr.bf16.gmra.mxu0 %v654
      %v757 = vpop.f32.mrf.mxu0
      %v758 = vadd.f32 0.0, %v757
      %v759 = vpop.f32.mrf.mxu0
      %v760 = vpop.f32.mrf.mxu0
      %v761 = vadd.f32 0.0, %v760
      %v762 = vpop.f32.mrf.mxu0
      %763 = vmatprep.mubr.bf16.mxu0 0
      %764 = vmatmul.mubr.bf16.gmra.mxu0 %v655
      %v765 = vpop.f32.mrf.mxu0
      %v766 = vadd.f32 0.0, %v765
      %v767 = vpop.f32.mrf.mxu0
      %v768 = vpop.f32.mrf.mxu0
      %v769 = vadd.f32 0.0, %v768
      %v770 = vpop.f32.mrf.mxu0
      %771 = vmatprep.mubr.bf16.mxu0 0
      %772 = vmatmul.mubr.bf16.gmra.mxu0 %v656
      %v773 = vpop.f32.mrf.mxu0
      %v774 = vadd.f32 0.0, %v773
      %v775 = vpop.f32.mrf.mxu0
      %v776 = vpop.f32.mrf.mxu0
      %v777 = vadd.f32 0.0, %v776
      %v778 = vpop.f32.mrf.mxu0
      %779 = vmatprep.mubr.bf16.mxu0 0
      %780 = vmatmul.mubr.bf16.gmra.mxu0 %v657
      %v781 = vpop.f32.mrf.mxu0
      %v782 = vadd.f32 0.0, %v781
      %v783 = vpop.f32.mrf.mxu0
      %v784 = vpop.f32.mrf.mxu0
      %v785 = vadd.f32 0.0, %v784
      %v786 = vpop.f32.mrf.mxu0
      %787 = vdwg.mxu0
      %v788 = vadd.f32 %v576, %v758
      %v789 = vadd.f32 %v579, %v761
      %v790 = vadd.f32 %v584, %v766
      %v791 = vadd.f32 %v587, %v769
      %v792 = vadd.f32 %v592, %v774
      %v793 = vadd.f32 %v595, %v777
      %v794 = vadd.f32 %v600, %v782
      %v795 = vadd.f32 %v603, %v785
      %s796 = scalar_lea.vmem %s230, 8
      %v797 = vld [vmem:[%s796] sm:$0xf]
      %v798 = vld [vmem:[%s796 + $0x8] sm:$0xf]
      %v799 = vld [vmem:[%s796 + $0x10] sm:$0xf]
      %v800 = vld [vmem:[%s796 + $0x18] sm:$0xf]
      %v801 = vld [vmem:[%s796 + $0x30] sm:$0xf]
      %v802 = vld [vmem:[%s796 + $0x38] sm:$0xf]
      %v803 = vld [vmem:[%s796 + $0x40] sm:$0xf]
      %v804 = vld [vmem:[%s796 + $0x48] sm:$0xf]
      %v805 = vld [vmem:[%s796 + $0x60] sm:$0xf]
      %v806 = vld [vmem:[%s796 + $0x68] sm:$0xf]
      %v807 = vld [vmem:[%s796 + $0x70] sm:$0xf]
      %v808 = vld [vmem:[%s796 + $0x78] sm:$0xf]
      %v809 = vld [vmem:[%s796 + $0x90] sm:$0xf]
      %v810 = vld [vmem:[%s796 + $0x98] sm:$0xf]
      %v811 = vld [vmem:[%s796 + $0xa0] sm:$0xf]
      %v812 = vld [vmem:[%s796 + $0xa8] sm:$0xf]
      %v829 = vcombine.low %v797, %v798
      %v830 = vcombine.low %v799, %v800
      %v831 = vcombine.low %v801, %v802
      %v832 = vcombine.low %v803, %v804
      %v833 = vcombine.low %v805, %v806
      %v834 = vcombine.low %v807, %v808
      %v835 = vcombine.low %v809, %v810
      %v836 = vcombine.low %v811, %v812
      %v845 = vpack.c.bf16 %v830, %v829
      %v846 = vpack.c.bf16 %v832, %v831
      %v847 = vpack.c.bf16 %v834, %v833
      %v848 = vpack.c.bf16 %v836, %v835
      %s849 = scalar_lea.vmem %s1, 192
      %v850 = vld [vmem:[%s849] sm:$0xf]
      %v851 = vld [vmem:[%s849 + $0x4] sm:$0xf]
      %v852 = vld [vmem:[%s849 + $0x8] sm:$0xf]
      %v853 = vld [vmem:[%s849 + $0xc] sm:$0xf]
      %v854 = vld [vmem:[%s849 + $0x10] sm:$0xf]
      %v855 = vld [vmem:[%s849 + $0x14] sm:$0xf]
      %v856 = vld [vmem:[%s849 + $0x18] sm:$0xf]
      %v857 = vld [vmem:[%s849 + $0x1c] sm:$0xf]
      %v858 = vld [vmem:[%s849 + $0x20] sm:$0xf]
      %v859 = vld [vmem:[%s849 + $0x24] sm:$0xf]
      %v860 = vld [vmem:[%s849 + $0x28] sm:$0xf]
      %v861 = vld [vmem:[%s849 + $0x2c] sm:$0xf]
      %v862 = vld [vmem:[%s849 + $0x30] sm:$0xf]
      %v863 = vld [vmem:[%s849 + $0x34] sm:$0xf]
      %v864 = vld [vmem:[%s849 + $0x38] sm:$0xf]
      %v865 = vld [vmem:[%s849 + $0x3c] sm:$0xf]
      %v882 = vunpack.c.l.b16 %v850
      %v883 = vunpack.c.l.b16 %v851
      %v884 = vunpack.c.l.b16 %v852
      %v885 = vunpack.c.l.b16 %v853
      %v886 = vunpack.c.l.b16 %v854
      %v887 = vunpack.c.l.b16 %v855
      %v888 = vunpack.c.l.b16 %v856
      %v889 = vunpack.c.l.b16 %v857
      %v890 = vunpack.c.l.b16 %v858
      %v891 = vunpack.c.l.b16 %v859
      %v892 = vunpack.c.l.b16 %v860
      %v893 = vunpack.c.l.b16 %v861
      %v894 = vunpack.c.l.b16 %v862
      %v895 = vunpack.c.l.b16 %v863
      %v896 = vunpack.c.l.b16 %v864
      %v897 = vunpack.c.l.b16 %v865
      %v898 = vpack.c.b16 %v883, %v882
      %v899 = vpack.c.b16 %v885, %v884
      %v900 = vpack.c.b16 %v887, %v886
      %v901 = vpack.c.b16 %v889, %v888
      %v902 = vpack.c.b16 %v891, %v890
      %v903 = vpack.c.b16 %v893, %v892
      %v904 = vpack.c.b16 %v895, %v894
      %v905 = vpack.c.b16 %v897, %v896
      %914 = vmatprep.subr.bf16.mxu0 0
      %915 = vmatpush1.bf16.msra.mxu0 %v905
      %916 = vmatprep.subr.bf16.mxu0 0
      %917 = vmatpush1.bf16.msra.mxu0 %v904
      %918 = vmatprep.subr.bf16.mxu0 0
      %919 = vmatpush1.bf16.msra.mxu0 %v903
      %920 = vmatprep.subr.bf16.mxu0 0
      %921 = vmatpush1.bf16.msra.mxu0 %v902
      %922 = vmatprep.subr.bf16.mxu0 0
      %923 = vmatpush1.bf16.msra.mxu0 %v901
      %924 = vmatprep.subr.bf16.mxu0 0
      %925 = vmatpush1.bf16.msra.mxu0 %v900
      %926 = vmatprep.subr.bf16.mxu0 0
      %927 = vmatpush1.bf16.msra.mxu0 %v899
      %928 = vmatprep.subr.bf16.mxu0 0
      %929 = vmatpush1.bf16.msra.mxu0 %v898
      %930 = vmatprep.subr.bf16.mxu0 0
      %931 = vmatpush2.bf16.msra.mxu0 0
      %932 = vmatprep.subr.bf16.mxu0 0
      %933 = vmatpush2.bf16.msra.mxu0 0
      %934 = vmatprep.subr.bf16.mxu0 0
      %935 = vmatpush2.bf16.msra.mxu0 0
      %936 = vmatprep.subr.bf16.mxu0 0
      %937 = vmatpush2.bf16.msra.mxu0 0
      %938 = vmatprep.subr.bf16.mxu0 0
      %939 = vmatpush2.bf16.msra.mxu0 0
      %940 = vmatprep.subr.bf16.mxu0 0
      %941 = vmatpush2.bf16.msra.mxu0 0
      %942 = vmatprep.subr.bf16.mxu0 0
      %943 = vmatpush2.bf16.msra.mxu0 0
      %944 = vmatprep.subr.bf16.mxu0 0
      %945 = vmatpush2.bf16.msra.mxu0 0
      %946 = vmatprep.mubr.bf16.mxu0 0
      %947 = vmatmul.mubr.bf16.gmra.mxu0 %v845
      %v948 = vpop.f32.mrf.mxu0
      %v949 = vadd.f32 0.0, %v948
      %v950 = vpop.f32.mrf.mxu0
      %v951 = vpop.f32.mrf.mxu0
      %v952 = vadd.f32 0.0, %v951
      %v953 = vpop.f32.mrf.mxu0
      %954 = vmatprep.mubr.bf16.mxu0 0
      %955 = vmatmul.mubr.bf16.gmra.mxu0 %v846
      %v956 = vpop.f32.mrf.mxu0
      %v957 = vadd.f32 0.0, %v956
      %v958 = vpop.f32.mrf.mxu0
      %v959 = vpop.f32.mrf.mxu0
      %v960 = vadd.f32 0.0, %v959
      %v961 = vpop.f32.mrf.mxu0
      %962 = vmatprep.mubr.bf16.mxu0 0
      %963 = vmatmul.mubr.bf16.gmra.mxu0 %v847
      %v964 = vpop.f32.mrf.mxu0
      %v965 = vadd.f32 0.0, %v964
      %v966 = vpop.f32.mrf.mxu0
      %v967 = vpop.f32.mrf.mxu0
      %v968 = vadd.f32 0.0, %v967
      %v969 = vpop.f32.mrf.mxu0
      %970 = vmatprep.mubr.bf16.mxu0 0
      %971 = vmatmul.mubr.bf16.gmra.mxu0 %v848
      %v972 = vpop.f32.mrf.mxu0
      %v973 = vadd.f32 0.0, %v972
      %v974 = vpop.f32.mrf.mxu0
      %v975 = vpop.f32.mrf.mxu0
      %v976 = vadd.f32 0.0, %v975
      %v977 = vpop.f32.mrf.mxu0
      %978 = vdwg.mxu0
      %v979 = vadd.f32 %v788, %v949
      %v980 = vadd.f32 %v789, %v952
      %v981 = vadd.f32 %v790, %v957
      %v982 = vadd.f32 %v791, %v960
      %v983 = vadd.f32 %v792, %v965
      %v984 = vadd.f32 %v793, %v968
      %v985 = vadd.f32 %v794, %v973
      %v986 = vadd.f32 %v795, %v976
      %v987 = vld [vmem:[%s796 + $0x1] sm:$0xf]
      %v988 = vld [vmem:[%s796 + $0x9] sm:$0xf]
      %v989 = vld [vmem:[%s796 + $0x11] sm:$0xf]
      %v990 = vld [vmem:[%s796 + $0x19] sm:$0xf]
      %v991 = vld [vmem:[%s796 + $0x31] sm:$0xf]
      %v992 = vld [vmem:[%s796 + $0x39] sm:$0xf]
      %v993 = vld [vmem:[%s796 + $0x41] sm:$0xf]
      %v994 = vld [vmem:[%s796 + $0x49] sm:$0xf]
      %v995 = vld [vmem:[%s796 + $0x61] sm:$0xf]
      %v996 = vld [vmem:[%s796 + $0x69] sm:$0xf]
      %v997 = vld [vmem:[%s796 + $0x71] sm:$0xf]
      %v998 = vld [vmem:[%s796 + $0x79] sm:$0xf]
      %v999 = vld [vmem:[%s796 + $0x91] sm:$0xf]
      %v1000 = vld [vmem:[%s796 + $0x99] sm:$0xf]
      %v1001 = vld [vmem:[%s796 + $0xa1] sm:$0xf]
      %v1002 = vld [vmem:[%s796 + $0xa9] sm:$0xf]
      %v1019 = vcombine.low %v987, %v988
      %v1020 = vcombine.low %v989, %v990
      %v1021 = vcombine.low %v991, %v992
      %v1022 = vcombine.low %v993, %v994
      %v1023 = vcombine.low %v995, %v996
      %v1024 = vcombine.low %v997, %v998
      %v1025 = vcombine.low %v999, %v1000
      %v1026 = vcombine.low %v1001, %v1002
      %v1035 = vpack.c.bf16 %v1020, %v1019
      %v1036 = vpack.c.bf16 %v1022, %v1021
      %v1037 = vpack.c.bf16 %v1024, %v1023
      %v1038 = vpack.c.bf16 %v1026, %v1025
      %s1039 = scalar_lea.vmem %s1, 256
      %v1040 = vld [vmem:[%s1039] sm:$0xf]
      %v1041 = vld [vmem:[%s1039 + $0x4] sm:$0xf]
      %v1042 = vld [vmem:[%s1039 + $0x8] sm:$0xf]
      %v1043 = vld [vmem:[%s1039 + $0xc] sm:$0xf]
      %v1044 = vld [vmem:[%s1039 + $0x10] sm:$0xf]
      %v1045 = vld [vmem:[%s1039 + $0x14] sm:$0xf]
      %v1046 = vld [vmem:[%s1039 + $0x18] sm:$0xf]
      %v1047 = vld [vmem:[%s1039 + $0x1c] sm:$0xf]
      %v1048 = vld [vmem:[%s1039 + $0x20] sm:$0xf]
      %v1049 = vld [vmem:[%s1039 + $0x24] sm:$0xf]
      %v1050 = vld [vmem:[%s1039 + $0x28] sm:$0xf]
      %v1051 = vld [vmem:[%s1039 + $0x2c] sm:$0xf]
      %v1052 = vld [vmem:[%s1039 + $0x30] sm:$0xf]
      %v1053 = vld [vmem:[%s1039 + $0x34] sm:$0xf]
      %v1054 = vld [vmem:[%s1039 + $0x38] sm:$0xf]
      %v1055 = vld [vmem:[%s1039 + $0x3c] sm:$0xf]
      %v1072 = vunpack.c.l.b16 %v1040
      %v1073 = vunpack.c.l.b16 %v1041
      %v1074 = vunpack.c.l.b16 %v1042
      %v1075 = vunpack.c.l.b16 %v1043
      %v1076 = vunpack.c.l.b16 %v1044
      %v1077 = vunpack.c.l.b16 %v1045
      %v1078 = vunpack.c.l.b16 %v1046
      %v1079 = vunpack.c.l.b16 %v1047
      %v1080 = vunpack.c.l.b16 %v1048
      %v1081 = vunpack.c.l.b16 %v1049
      %v1082 = vunpack.c.l.b16 %v1050
      %v1083 = vunpack.c.l.b16 %v1051
      %v1084 = vunpack.c.l.b16 %v1052
      %v1085 = vunpack.c.l.b16 %v1053
      %v1086 = vunpack.c.l.b16 %v1054
      %v1087 = vunpack.c.l.b16 %v1055
      %v1088 = vpack.c.b16 %v1073, %v1072
      %v1089 = vpack.c.b16 %v1075, %v1074
      %v1090 = vpack.c.b16 %v1077, %v1076
      %v1091 = vpack.c.b16 %v1079, %v1078
      %v1092 = vpack.c.b16 %v1081, %v1080
      %v1093 = vpack.c.b16 %v1083, %v1082
      %v1094 = vpack.c.b16 %v1085, %v1084
      %v1095 = vpack.c.b16 %v1087, %v1086
      %1104 = vmatprep.subr.bf16.mxu0 0
      %1105 = vmatpush1.bf16.msra.mxu0 %v1095
      %1106 = vmatprep.subr.bf16.mxu0 0
      %1107 = vmatpush1.bf16.msra.mxu0 %v1094
      %1108 = vmatprep.subr.bf16.mxu0 0
      %1109 = vmatpush1.bf16.msra.mxu0 %v1093
      %1110 = vmatprep.subr.bf16.mxu0 0
      %1111 = vmatpush1.bf16.msra.mxu0 %v1092
      %1112 = vmatprep.subr.bf16.mxu0 0
      %1113 = vmatpush1.bf16.msra.mxu0 %v1091
      %1114 = vmatprep.subr.bf16.mxu0 0
      %1115 = vmatpush1.bf16.msra.mxu0 %v1090
      %1116 = vmatprep.subr.bf16.mxu0 0
      %1117 = vmatpush1.bf16.msra.mxu0 %v1089
      %1118 = vmatprep.subr.bf16.mxu0 0
      %1119 = vmatpush1.bf16.msra.mxu0 %v1088
      %1120 = vmatprep.subr.bf16.mxu0 0
      %1121 = vmatpush2.bf16.msra.mxu0 0
      %1122 = vmatprep.subr.bf16.mxu0 0
      %1123 = vmatpush2.bf16.msra.mxu0 0
      %1124 = vmatprep.subr.bf16.mxu0 0
      %1125 = vmatpush2.bf16.msra.mxu0 0
      %1126 = vmatprep.subr.bf16.mxu0 0
      %1127 = vmatpush2.bf16.msra.mxu0 0
      %1128 = vmatprep.subr.bf16.mxu0 0
      %1129 = vmatpush2.bf16.msra.mxu0 0
      %1130 = vmatprep.subr.bf16.mxu0 0
      %1131 = vmatpush2.bf16.msra.mxu0 0
      %1132 = vmatprep.subr.bf16.mxu0 0
      %1133 = vmatpush2.bf16.msra.mxu0 0
      %1134 = vmatprep.subr.bf16.mxu0 0
      %1135 = vmatpush2.bf16.msra.mxu0 0
      %1136 = vmatprep.mubr.bf16.mxu0 0
      %1137 = vmatmul.mubr.bf16.gmra.mxu0 %v1035
      %v1138 = vpop.f32.mrf.mxu0
      %v1139 = vadd.f32 0.0, %v1138
      %v1140 = vpop.f32.mrf.mxu0
      %v1141 = vpop.f32.mrf.mxu0
      %v1142 = vadd.f32 0.0, %v1141
      %v1143 = vpop.f32.mrf.mxu0
      %1144 = vmatprep.mubr.bf16.mxu0 0
      %1145 = vmatmul.mubr.bf16.gmra.mxu0 %v1036
      %v1146 = vpop.f32.mrf.mxu0
      %v1147 = vadd.f32 0.0, %v1146
      %v1148 = vpop.f32.mrf.mxu0
      %v1149 = vpop.f32.mrf.mxu0
      %v1150 = vadd.f32 0.0, %v1149
      %v1151 = vpop.f32.mrf.mxu0
      %1152 = vmatprep.mubr.bf16.mxu0 0
      %1153 = vmatmul.mubr.bf16.gmra.mxu0 %v1037
      %v1154 = vpop.f32.mrf.mxu0
      %v1155 = vadd.f32 0.0, %v1154
      %v1156 = vpop.f32.mrf.mxu0
      %v1157 = vpop.f32.mrf.mxu0
      %v1158 = vadd.f32 0.0, %v1157
      %v1159 = vpop.f32.mrf.mxu0
      %1160 = vmatprep.mubr.bf16.mxu0 0
      %1161 = vmatmul.mubr.bf16.gmra.mxu0 %v1038
      %v1162 = vpop.f32.mrf.mxu0
      %v1163 = vadd.f32 0.0, %v1162
      %v1164 = vpop.f32.mrf.mxu0
      %v1165 = vpop.f32.mrf.mxu0
      %v1166 = vadd.f32 0.0, %v1165
      %v1167 = vpop.f32.mrf.mxu0
      %1168 = vdwg.mxu0
      %v1169 = vadd.f32 %v979, %v1139
      %v1170 = vadd.f32 %v980, %v1142
      %v1171 = vadd.f32 %v981, %v1147
      %v1172 = vadd.f32 %v982, %v1150
      %v1173 = vadd.f32 %v983, %v1155
      %v1174 = vadd.f32 %v984, %v1158
      %v1175 = vadd.f32 %v985, %v1163
      %v1176 = vadd.f32 %v986, %v1166
      %v1177 = vld [vmem:[%s796 + $0x2] sm:$0xf]
      %v1178 = vld [vmem:[%s796 + $0xa] sm:$0xf]
      %v1179 = vld [vmem:[%s796 + $0x12] sm:$0xf]
      %v1180 = vld [vmem:[%s796 + $0x1a] sm:$0xf]
      %v1181 = vld [vmem:[%s796 + $0x32] sm:$0xf]
      %v1182 = vld [vmem:[%s796 + $0x3a] sm:$0xf]
      %v1183 = vld [vmem:[%s796 + $0x42] sm:$0xf]
      %v1184 = vld [vmem:[%s796 + $0x4a] sm:$0xf]
      %v1185 = vld [vmem:[%s796 + $0x62] sm:$0xf]
      %v1186 = vld [vmem:[%s796 + $0x6a] sm:$0xf]
      %v1187 = vld [vmem:[%s796 + $0x72] sm:$0xf]
      %v1188 = vld [vmem:[%s796 + $0x7a] sm:$0xf]
      %v1189 = vld [vmem:[%s796 + $0x92] sm:$0xf]
      %v1190 = vld [vmem:[%s796 + $0x9a] sm:$0xf]
      %v1191 = vld [vmem:[%s796 + $0xa2] sm:$0xf]
      %v1192 = vld [vmem:[%s796 + $0xaa] sm:$0xf]
      %v1209 = vcombine.low %v1177, %v1178
      %v1210 = vcombine.low %v1179, %v1180
      %v1211 = vcombine.low %v1181, %v1182
      %v1212 = vcombine.low %v1183, %v1184
      %v1213 = vcombine.low %v1185, %v1186
      %v1214 = vcombine.low %v1187, %v1188
      %v1215 = vcombine.low %v1189, %v1190
      %v1216 = vcombine.low %v1191, %v1192
      %v1225 = vpack.c.bf16 %v1210, %v1209
      %v1226 = vpack.c.bf16 %v1212, %v1211
      %v1227 = vpack.c.bf16 %v1214, %v1213
      %v1228 = vpack.c.bf16 %v1216, %v1215
      %s1229 = scalar_lea.vmem %s1, 320
      %v1230 = vld [vmem:[%s1229] sm:$0xf]
      %v1231 = vld [vmem:[%s1229 + $0x4] sm:$0xf]
      %v1232 = vld [vmem:[%s1229 + $0x8] sm:$0xf]
      %v1233 = vld [vmem:[%s1229 + $0xc] sm:$0xf]
      %v1234 = vld [vmem:[%s1229 + $0x10] sm:$0xf]
      %v1235 = vld [vmem:[%s1229 + $0x14] sm:$0xf]
      %v1236 = vld [vmem:[%s1229 + $0x18] sm:$0xf]
      %v1237 = vld [vmem:[%s1229 + $0x1c] sm:$0xf]
      %v1238 = vld [vmem:[%s1229 + $0x20] sm:$0xf]
      %v1239 = vld [vmem:[%s1229 + $0x24] sm:$0xf]
      %v1240 = vld [vmem:[%s1229 + $0x28] sm:$0xf]
      %v1241 = vld [vmem:[%s1229 + $0x2c] sm:$0xf]
      %v1242 = vld [vmem:[%s1229 + $0x30] sm:$0xf]
      %v1243 = vld [vmem:[%s1229 + $0x34] sm:$0xf]
      %v1244 = vld [vmem:[%s1229 + $0x38] sm:$0xf]
      %v1245 = vld [vmem:[%s1229 + $0x3c] sm:$0xf]
      %v1262 = vunpack.c.l.b16 %v1230
      %v1263 = vunpack.c.l.b16 %v1231
      %v1264 = vunpack.c.l.b16 %v1232
      %v1265 = vunpack.c.l.b16 %v1233
      %v1266 = vunpack.c.l.b16 %v1234
      %v1267 = vunpack.c.l.b16 %v1235
      %v1268 = vunpack.c.l.b16 %v1236
      %v1269 = vunpack.c.l.b16 %v1237
      %v1270 = vunpack.c.l.b16 %v1238
      %v1271 = vunpack.c.l.b16 %v1239
      %v1272 = vunpack.c.l.b16 %v1240
      %v1273 = vunpack.c.l.b16 %v1241
      %v1274 = vunpack.c.l.b16 %v1242
      %v1275 = vunpack.c.l.b16 %v1243
      %v1276 = vunpack.c.l.b16 %v1244
      %v1277 = vunpack.c.l.b16 %v1245
      %v1278 = vpack.c.b16 %v1263, %v1262
      %v1279 = vpack.c.b16 %v1265, %v1264
      %v1280 = vpack.c.b16 %v1267, %v1266
      %v1281 = vpack.c.b16 %v1269, %v1268
      %v1282 = vpack.c.b16 %v1271, %v1270
      %v1283 = vpack.c.b16 %v1273, %v1272
      %v1284 = vpack.c.b16 %v1275, %v1274
      %v1285 = vpack.c.b16 %v1277, %v1276
      %1294 = vmatprep.subr.bf16.mxu0 0
      %1295 = vmatpush1.bf16.msra.mxu0 %v1285
      %1296 = vmatprep.subr.bf16.mxu0 0
      %1297 = vmatpush1.bf16.msra.mxu0 %v1284
      %1298 = vmatprep.subr.bf16.mxu0 0
      %1299 = vmatpush1.bf16.msra.mxu0 %v1283
      %1300 = vmatprep.subr.bf16.mxu0 0
      %1301 = vmatpush1.bf16.msra.mxu0 %v1282
      %1302 = vmatprep.subr.bf16.mxu0 0
      %1303 = vmatpush1.bf16.msra.mxu0 %v1281
      %1304 = vmatprep.subr.bf16.mxu0 0
      %1305 = vmatpush1.bf16.msra.mxu0 %v1280
      %1306 = vmatprep.subr.bf16.mxu0 0
      %1307 = vmatpush1.bf16.msra.mxu0 %v1279
      %1308 = vmatprep.subr.bf16.mxu0 0
      %1309 = vmatpush1.bf16.msra.mxu0 %v1278
      %1310 = vmatprep.subr.bf16.mxu0 0
      %1311 = vmatpush2.bf16.msra.mxu0 0
      %1312 = vmatprep.subr.bf16.mxu0 0
      %1313 = vmatpush2.bf16.msra.mxu0 0
      %1314 = vmatprep.subr.bf16.mxu0 0
      %1315 = vmatpush2.bf16.msra.mxu0 0
      %1316 = vmatprep.subr.bf16.mxu0 0
      %1317 = vmatpush2.bf16.msra.mxu0 0
      %1318 = vmatprep.subr.bf16.mxu0 0
      %1319 = vmatpush2.bf16.msra.mxu0 0
      %1320 = vmatprep.subr.bf16.mxu0 0
      %1321 = vmatpush2.bf16.msra.mxu0 0
      %1322 = vmatprep.subr.bf16.mxu0 0
      %1323 = vmatpush2.bf16.msra.mxu0 0
      %1324 = vmatprep.subr.bf16.mxu0 0
      %1325 = vmatpush2.bf16.msra.mxu0 0
      %1326 = vmatprep.mubr.bf16.mxu0 0
      %1327 = vmatmul.mubr.bf16.gmra.mxu0 %v1225
      %v1328 = vpop.f32.mrf.mxu0
      %v1329 = vadd.f32 0.0, %v1328
      %v1330 = vpop.f32.mrf.mxu0
      %v1331 = vpop.f32.mrf.mxu0
      %v1332 = vadd.f32 0.0, %v1331
      %v1333 = vpop.f32.mrf.mxu0
      %1334 = vmatprep.mubr.bf16.mxu0 0
      %1335 = vmatmul.mubr.bf16.gmra.mxu0 %v1226
      %v1336 = vpop.f32.mrf.mxu0
      %v1337 = vadd.f32 0.0, %v1336
      %v1338 = vpop.f32.mrf.mxu0
      %v1339 = vpop.f32.mrf.mxu0
      %v1340 = vadd.f32 0.0, %v1339
      %v1341 = vpop.f32.mrf.mxu0
      %1342 = vmatprep.mubr.bf16.mxu0 0
      %1343 = vmatmul.mubr.bf16.gmra.mxu0 %v1227
      %v1344 = vpop.f32.mrf.mxu0
      %v1345 = vadd.f32 0.0, %v1344
      %v1346 = vpop.f32.mrf.mxu0
      %v1347 = vpop.f32.mrf.mxu0
      %v1348 = vadd.f32 0.0, %v1347
      %v1349 = vpop.f32.mrf.mxu0
      %1350 = vmatprep.mubr.bf16.mxu0 0
      %1351 = vmatmul.mubr.bf16.gmra.mxu0 %v1228
      %v1352 = vpop.f32.mrf.mxu0
      %v1353 = vadd.f32 0.0, %v1352
      %v1354 = vpop.f32.mrf.mxu0
      %v1355 = vpop.f32.mrf.mxu0
      %v1356 = vadd.f32 0.0, %v1355
      %v1357 = vpop.f32.mrf.mxu0
      %1358 = vdwg.mxu0
      %v1359 = vadd.f32 %v1169, %v1329
      %v1360 = vadd.f32 %v1170, %v1332
      %v1361 = vadd.f32 %v1171, %v1337
      %v1362 = vadd.f32 %v1172, %v1340
      %v1363 = vadd.f32 %v1173, %v1345
      %v1364 = vadd.f32 %v1174, %v1348
      %v1365 = vadd.f32 %v1175, %v1353
      %v1366 = vadd.f32 %v1176, %v1356
      %s1367 = scalar_lea.vmem %s230, 16
      %v1368 = vld [vmem:[%s1367] sm:$0xf]
      %v1369 = vld [vmem:[%s1367 + $0x8] sm:$0xf]
      %v1370 = vld [vmem:[%s1367 + $0x10] sm:$0xf]
      %v1371 = vld [vmem:[%s1367 + $0x18] sm:$0xf]
      %v1372 = vld [vmem:[%s1367 + $0x30] sm:$0xf]
      %v1373 = vld [vmem:[%s1367 + $0x38] sm:$0xf]
      %v1374 = vld [vmem:[%s1367 + $0x40] sm:$0xf]
      %v1375 = vld [vmem:[%s1367 + $0x48] sm:$0xf]
      %v1376 = vld [vmem:[%s1367 + $0x60] sm:$0xf]
      %v1377 = vld [vmem:[%s1367 + $0x68] sm:$0xf]
      %v1378 = vld [vmem:[%s1367 + $0x70] sm:$0xf]
      %v1379 = vld [vmem:[%s1367 + $0x78] sm:$0xf]
      %v1380 = vld [vmem:[%s1367 + $0x90] sm:$0xf]
      %v1381 = vld [vmem:[%s1367 + $0x98] sm:$0xf]
      %v1382 = vld [vmem:[%s1367 + $0xa0] sm:$0xf]
      %v1383 = vld [vmem:[%s1367 + $0xa8] sm:$0xf]
      %v1400 = vcombine.low %v1368, %v1369
      %v1401 = vcombine.low %v1370, %v1371
      %v1402 = vcombine.low %v1372, %v1373
      %v1403 = vcombine.low %v1374, %v1375
      %v1404 = vcombine.low %v1376, %v1377
      %v1405 = vcombine.low %v1378, %v1379
      %v1406 = vcombine.low %v1380, %v1381
      %v1407 = vcombine.low %v1382, %v1383
      %v1416 = vpack.c.bf16 %v1401, %v1400
      %v1417 = vpack.c.bf16 %v1403, %v1402
      %v1418 = vpack.c.bf16 %v1405, %v1404
      %v1419 = vpack.c.bf16 %v1407, %v1406
      %s1420 = scalar_lea.vmem %s1, 384
      %v1421 = vld [vmem:[%s1420] sm:$0xf]
      %v1422 = vld [vmem:[%s1420 + $0x4] sm:$0xf]
      %v1423 = vld [vmem:[%s1420 + $0x8] sm:$0xf]
      %v1424 = vld [vmem:[%s1420 + $0xc] sm:$0xf]
      %v1425 = vld [vmem:[%s1420 + $0x10] sm:$0xf]
      %v1426 = vld [vmem:[%s1420 + $0x14] sm:$0xf]
      %v1427 = vld [vmem:[%s1420 + $0x18] sm:$0xf]
      %v1428 = vld [vmem:[%s1420 + $0x1c] sm:$0xf]
      %v1429 = vld [vmem:[%s1420 + $0x20] sm:$0xf]
      %v1430 = vld [vmem:[%s1420 + $0x24] sm:$0xf]
      %v1431 = vld [vmem:[%s1420 + $0x28] sm:$0xf]
      %v1432 = vld [vmem:[%s1420 + $0x2c] sm:$0xf]
      %v1433 = vld [vmem:[%s1420 + $0x30] sm:$0xf]
      %v1434 = vld [vmem:[%s1420 + $0x34] sm:$0xf]
      %v1435 = vld [vmem:[%s1420 + $0x38] sm:$0xf]
      %v1436 = vld [vmem:[%s1420 + $0x3c] sm:$0xf]
      %v1453 = vunpack.c.l.b16 %v1421
      %v1454 = vunpack.c.l.b16 %v1422
      %v1455 = vunpack.c.l.b16 %v1423
      %v1456 = vunpack.c.l.b16 %v1424
      %v1457 = vunpack.c.l.b16 %v1425
      %v1458 = vunpack.c.l.b16 %v1426
      %v1459 = vunpack.c.l.b16 %v1427
      %v1460 = vunpack.c.l.b16 %v1428
      %v1461 = vunpack.c.l.b16 %v1429
      %v1462 = vunpack.c.l.b16 %v1430
      %v1463 = vunpack.c.l.b16 %v1431
      %v1464 = vunpack.c.l.b16 %v1432
      %v1465 = vunpack.c.l.b16 %v1433
      %v1466 = vunpack.c.l.b16 %v1434
      %v1467 = vunpack.c.l.b16 %v1435
      %v1468 = vunpack.c.l.b16 %v1436
      %v1469 = vpack.c.b16 %v1454, %v1453
      %v1470 = vpack.c.b16 %v1456, %v1455
      %v1471 = vpack.c.b16 %v1458, %v1457
      %v1472 = vpack.c.b16 %v1460, %v1459
      %v1473 = vpack.c.b16 %v1462, %v1461
      %v1474 = vpack.c.b16 %v1464, %v1463
      %v1475 = vpack.c.b16 %v1466, %v1465
      %v1476 = vpack.c.b16 %v1468, %v1467
      %1485 = vmatprep.subr.bf16.mxu0 0
      %1486 = vmatpush1.bf16.msra.mxu0 %v1476
      %1487 = vmatprep.subr.bf16.mxu0 0
      %1488 = vmatpush1.bf16.msra.mxu0 %v1475
      %1489 = vmatprep.subr.bf16.mxu0 0
      %1490 = vmatpush1.bf16.msra.mxu0 %v1474
      %1491 = vmatprep.subr.bf16.mxu0 0
      %1492 = vmatpush1.bf16.msra.mxu0 %v1473
      %1493 = vmatprep.subr.bf16.mxu0 0
      %1494 = vmatpush1.bf16.msra.mxu0 %v1472
      %1495 = vmatprep.subr.bf16.mxu0 0
      %1496 = vmatpush1.bf16.msra.mxu0 %v1471
      %1497 = vmatprep.subr.bf16.mxu0 0
      %1498 = vmatpush1.bf16.msra.mxu0 %v1470
      %1499 = vmatprep.subr.bf16.mxu0 0
      %1500 = vmatpush1.bf16.msra.mxu0 %v1469
      %1501 = vmatprep.subr.bf16.mxu0 0
      %1502 = vmatpush2.bf16.msra.mxu0 0
      %1503 = vmatprep.subr.bf16.mxu0 0
      %1504 = vmatpush2.bf16.msra.mxu0 0
      %1505 = vmatprep.subr.bf16.mxu0 0
      %1506 = vmatpush2.bf16.msra.mxu0 0
      %1507 = vmatprep.subr.bf16.mxu0 0
      %1508 = vmatpush2.bf16.msra.mxu0 0
      %1509 = vmatprep.subr.bf16.mxu0 0
      %1510 = vmatpush2.bf16.msra.mxu0 0
      %1511 = vmatprep.subr.bf16.mxu0 0
      %1512 = vmatpush2.bf16.msra.mxu0 0
      %1513 = vmatprep.subr.bf16.mxu0 0
      %1514 = vmatpush2.bf16.msra.mxu0 0
      %1515 = vmatprep.subr.bf16.mxu0 0
      %1516 = vmatpush2.bf16.msra.mxu0 0
      %1517 = vmatprep.mubr.bf16.mxu0 0
      %1518 = vmatmul.mubr.bf16.gmra.mxu0 %v1416
      %v1519 = vpop.f32.mrf.mxu0
      %v1520 = vadd.f32 0.0, %v1519
      %v1521 = vpop.f32.mrf.mxu0
      %v1522 = vpop.f32.mrf.mxu0
      %v1523 = vadd.f32 0.0, %v1522
      %v1524 = vpop.f32.mrf.mxu0
      %1525 = vmatprep.mubr.bf16.mxu0 0
      %1526 = vmatmul.mubr.bf16.gmra.mxu0 %v1417
      %v1527 = vpop.f32.mrf.mxu0
      %v1528 = vadd.f32 0.0, %v1527
      %v1529 = vpop.f32.mrf.mxu0
      %v1530 = vpop.f32.mrf.mxu0
      %v1531 = vadd.f32 0.0, %v1530
      %v1532 = vpop.f32.mrf.mxu0
      %1533 = vmatprep.mubr.bf16.mxu0 0
      %1534 = vmatmul.mubr.bf16.gmra.mxu0 %v1418
      %v1535 = vpop.f32.mrf.mxu0
      %v1536 = vadd.f32 0.0, %v1535
      %v1537 = vpop.f32.mrf.mxu0
      %v1538 = vpop.f32.mrf.mxu0
      %v1539 = vadd.f32 0.0, %v1538
      %v1540 = vpop.f32.mrf.mxu0
      %1541 = vmatprep.mubr.bf16.mxu0 0
      %1542 = vmatmul.mubr.bf16.gmra.mxu0 %v1419
      %v1543 = vpop.f32.mrf.mxu0
      %v1544 = vadd.f32 0.0, %v1543
      %v1545 = vpop.f32.mrf.mxu0
      %v1546 = vpop.f32.mrf.mxu0
      %v1547 = vadd.f32 0.0, %v1546
      %v1548 = vpop.f32.mrf.mxu0
      %1549 = vdwg.mxu0
      %v1550 = vadd.f32 %v1359, %v1520
      %v1551 = vadd.f32 %v1360, %v1523
      %v1552 = vadd.f32 %v1361, %v1528
      %v1553 = vadd.f32 %v1362, %v1531
      %v1554 = vadd.f32 %v1363, %v1536
      %v1555 = vadd.f32 %v1364, %v1539
      %v1556 = vadd.f32 %v1365, %v1544
      %v1557 = vadd.f32 %v1366, %v1547
      %v1558 = vld [vmem:[%s1367 + $0x1] sm:$0xf]
      %v1559 = vld [vmem:[%s1367 + $0x9] sm:$0xf]
      %v1560 = vld [vmem:[%s1367 + $0x11] sm:$0xf]
      %v1561 = vld [vmem:[%s1367 + $0x19] sm:$0xf]
      %v1562 = vld [vmem:[%s1367 + $0x31] sm:$0xf]
      %v1563 = vld [vmem:[%s1367 + $0x39] sm:$0xf]
      %v1564 = vld [vmem:[%s1367 + $0x41] sm:$0xf]
      %v1565 = vld [vmem:[%s1367 + $0x49] sm:$0xf]
      %v1566 = vld [vmem:[%s1367 + $0x61] sm:$0xf]
      %v1567 = vld [vmem:[%s1367 + $0x69] sm:$0xf]
      %v1568 = vld [vmem:[%s1367 + $0x71] sm:$0xf]
      %v1569 = vld [vmem:[%s1367 + $0x79] sm:$0xf]
      %v1570 = vld [vmem:[%s1367 + $0x91] sm:$0xf]
      %v1571 = vld [vmem:[%s1367 + $0x99] sm:$0xf]
      %v1572 = vld [vmem:[%s1367 + $0xa1] sm:$0xf]
      %v1573 = vld [vmem:[%s1367 + $0xa9] sm:$0xf]
      %v1590 = vcombine.low %v1558, %v1559
      %v1591 = vcombine.low %v1560, %v1561
      %v1592 = vcombine.low %v1562, %v1563
      %v1593 = vcombine.low %v1564, %v1565
      %v1594 = vcombine.low %v1566, %v1567
      %v1595 = vcombine.low %v1568, %v1569
      %v1596 = vcombine.low %v1570, %v1571
      %v1597 = vcombine.low %v1572, %v1573
      %v1606 = vpack.c.bf16 %v1591, %v1590
      %v1607 = vpack.c.bf16 %v1593, %v1592
      %v1608 = vpack.c.bf16 %v1595, %v1594
      %v1609 = vpack.c.bf16 %v1597, %v1596
      %s1610 = scalar_lea.vmem %s1, 448
      %v1611 = vld [vmem:[%s1610] sm:$0xf]
      %v1612 = vld [vmem:[%s1610 + $0x4] sm:$0xf]
      %v1613 = vld [vmem:[%s1610 + $0x8] sm:$0xf]
      %v1614 = vld [vmem:[%s1610 + $0xc] sm:$0xf]
      %v1615 = vld [vmem:[%s1610 + $0x10] sm:$0xf]
      %v1616 = vld [vmem:[%s1610 + $0x14] sm:$0xf]
      %v1617 = vld [vmem:[%s1610 + $0x18] sm:$0xf]
      %v1618 = vld [vmem:[%s1610 + $0x1c] sm:$0xf]
      %v1619 = vld [vmem:[%s1610 + $0x20] sm:$0xf]
      %v1620 = vld [vmem:[%s1610 + $0x24] sm:$0xf]
      %v1621 = vld [vmem:[%s1610 + $0x28] sm:$0xf]
      %v1622 = vld [vmem:[%s1610 + $0x2c] sm:$0xf]
      %v1623 = vld [vmem:[%s1610 + $0x30] sm:$0xf]
      %v1624 = vld [vmem:[%s1610 + $0x34] sm:$0xf]
      %v1625 = vld [vmem:[%s1610 + $0x38] sm:$0xf]
      %v1626 = vld [vmem:[%s1610 + $0x3c] sm:$0xf]
      %v1643 = vunpack.c.l.b16 %v1611
      %v1644 = vunpack.c.l.b16 %v1612
      %v1645 = vunpack.c.l.b16 %v1613
      %v1646 = vunpack.c.l.b16 %v1614
      %v1647 = vunpack.c.l.b16 %v1615
      %v1648 = vunpack.c.l.b16 %v1616
      %v1649 = vunpack.c.l.b16 %v1617
      %v1650 = vunpack.c.l.b16 %v1618
      %v1651 = vunpack.c.l.b16 %v1619
      %v1652 = vunpack.c.l.b16 %v1620
      %v1653 = vunpack.c.l.b16 %v1621
      %v1654 = vunpack.c.l.b16 %v1622
      %v1655 = vunpack.c.l.b16 %v1623
      %v1656 = vunpack.c.l.b16 %v1624
      %v1657 = vunpack.c.l.b16 %v1625
      %v1658 = vunpack.c.l.b16 %v1626
      %v1659 = vpack.c.b16 %v1644, %v1643
      %v1660 = vpack.c.b16 %v1646, %v1645
      %v1661 = vpack.c.b16 %v1648, %v1647
      %v1662 = vpack.c.b16 %v1650, %v1649
      %v1663 = vpack.c.b16 %v1652, %v1651
      %v1664 = vpack.c.b16 %v1654, %v1653
      %v1665 = vpack.c.b16 %v1656, %v1655
      %v1666 = vpack.c.b16 %v1658, %v1657
      %1675 = vmatprep.subr.bf16.mxu0 0
      %1676 = vmatpush1.bf16.msra.mxu0 %v1666
      %1677 = vmatprep.subr.bf16.mxu0 0
      %1678 = vmatpush1.bf16.msra.mxu0 %v1665
      %1679 = vmatprep.subr.bf16.mxu0 0
      %1680 = vmatpush1.bf16.msra.mxu0 %v1664
      %1681 = vmatprep.subr.bf16.mxu0 0
      %1682 = vmatpush1.bf16.msra.mxu0 %v1663
      %1683 = vmatprep.subr.bf16.mxu0 0
      %1684 = vmatpush1.bf16.msra.mxu0 %v1662
      %1685 = vmatprep.subr.bf16.mxu0 0
      %1686 = vmatpush1.bf16.msra.mxu0 %v1661
      %1687 = vmatprep.subr.bf16.mxu0 0
      %1688 = vmatpush1.bf16.msra.mxu0 %v1660
      %1689 = vmatprep.subr.bf16.mxu0 0
      %1690 = vmatpush1.bf16.msra.mxu0 %v1659
      %1691 = vmatprep.subr.bf16.mxu0 0
      %1692 = vmatpush2.bf16.msra.mxu0 0
      %1693 = vmatprep.subr.bf16.mxu0 0
      %1694 = vmatpush2.bf16.msra.mxu0 0
      %1695 = vmatprep.subr.bf16.mxu0 0
      %1696 = vmatpush2.bf16.msra.mxu0 0
      %1697 = vmatprep.subr.bf16.mxu0 0
      %1698 = vmatpush2.bf16.msra.mxu0 0
      %1699 = vmatprep.subr.bf16.mxu0 0
      %1700 = vmatpush2.bf16.msra.mxu0 0
      %1701 = vmatprep.subr.bf16.mxu0 0
      %1702 = vmatpush2.bf16.msra.mxu0 0
      %1703 = vmatprep.subr.bf16.mxu0 0
      %1704 = vmatpush2.bf16.msra.mxu0 0
      %1705 = vmatprep.subr.bf16.mxu0 0
      %1706 = vmatpush2.bf16.msra.mxu0 0
      %1707 = vmatprep.mubr.bf16.mxu0 0
      %1708 = vmatmul.mubr.bf16.gmra.mxu0 %v1606
      %v1709 = vpop.f32.mrf.mxu0
      %v1710 = vadd.f32 0.0, %v1709
      %v1711 = vpop.f32.mrf.mxu0
      %v1712 = vpop.f32.mrf.mxu0
      %v1713 = vadd.f32 0.0, %v1712
      %v1714 = vpop.f32.mrf.mxu0
      %1715 = vmatprep.mubr.bf16.mxu0 0
      %1716 = vmatmul.mubr.bf16.gmra.mxu0 %v1607
      %v1717 = vpop.f32.mrf.mxu0
      %v1718 = vadd.f32 0.0, %v1717
      %v1719 = vpop.f32.mrf.mxu0
      %v1720 = vpop.f32.mrf.mxu0
      %v1721 = vadd.f32 0.0, %v1720
      %v1722 = vpop.f32.mrf.mxu0
      %1723 = vmatprep.mubr.bf16.mxu0 0
      %1724 = vmatmul.mubr.bf16.gmra.mxu0 %v1608
      %v1725 = vpop.f32.mrf.mxu0
      %v1726 = vadd.f32 0.0, %v1725
      %v1727 = vpop.f32.mrf.mxu0
      %v1728 = vpop.f32.mrf.mxu0
      %v1729 = vadd.f32 0.0, %v1728
      %v1730 = vpop.f32.mrf.mxu0
      %1731 = vmatprep.mubr.bf16.mxu0 0
      %1732 = vmatmul.mubr.bf16.gmra.mxu0 %v1609
      %v1733 = vpop.f32.mrf.mxu0
      %v1734 = vadd.f32 0.0, %v1733
      %v1735 = vpop.f32.mrf.mxu0
      %v1736 = vpop.f32.mrf.mxu0
      %v1737 = vadd.f32 0.0, %v1736
      %v1738 = vpop.f32.mrf.mxu0
      %1739 = vdwg.mxu0
      %v1740 = vadd.f32 %v1550, %v1710
      %v1741 = vadd.f32 %v1551, %v1713
      %v1742 = vadd.f32 %v1552, %v1718
      %v1743 = vadd.f32 %v1553, %v1721
      %v1744 = vadd.f32 %v1554, %v1726
      %v1745 = vadd.f32 %v1555, %v1729
      %v1746 = vadd.f32 %v1556, %v1734
      %v1747 = vadd.f32 %v1557, %v1737
      %v1748 = vld [vmem:[%s1367 + $0x2] sm:$0xf]
      %v1749 = vld [vmem:[%s1367 + $0xa] sm:$0xf]
      %v1750 = vld [vmem:[%s1367 + $0x12] sm:$0xf]
      %v1751 = vld [vmem:[%s1367 + $0x1a] sm:$0xf]
      %v1752 = vld [vmem:[%s1367 + $0x32] sm:$0xf]
      %v1753 = vld [vmem:[%s1367 + $0x3a] sm:$0xf]
      %v1754 = vld [vmem:[%s1367 + $0x42] sm:$0xf]
      %v1755 = vld [vmem:[%s1367 + $0x4a] sm:$0xf]
      %v1756 = vld [vmem:[%s1367 + $0x62] sm:$0xf]
      %v1757 = vld [vmem:[%s1367 + $0x6a] sm:$0xf]
      %v1758 = vld [vmem:[%s1367 + $0x72] sm:$0xf]
      %v1759 = vld [vmem:[%s1367 + $0x7a] sm:$0xf]
      %v1760 = vld [vmem:[%s1367 + $0x92] sm:$0xf]
      %v1761 = vld [vmem:[%s1367 + $0x9a] sm:$0xf]
      %v1762 = vld [vmem:[%s1367 + $0xa2] sm:$0xf]
      %v1763 = vld [vmem:[%s1367 + $0xaa] sm:$0xf]
      %v1780 = vcombine.low %v1748, %v1749
      %v1781 = vcombine.low %v1750, %v1751
      %v1782 = vcombine.low %v1752, %v1753
      %v1783 = vcombine.low %v1754, %v1755
      %v1784 = vcombine.low %v1756, %v1757
      %v1785 = vcombine.low %v1758, %v1759
      %v1786 = vcombine.low %v1760, %v1761
      %v1787 = vcombine.low %v1762, %v1763
      %v1796 = vpack.c.bf16 %v1781, %v1780
      %v1797 = vpack.c.bf16 %v1783, %v1782
      %v1798 = vpack.c.bf16 %v1785, %v1784
      %v1799 = vpack.c.bf16 %v1787, %v1786
      %s1800 = scalar_lea.vmem %s1, 512
      %v1801 = vld [vmem:[%s1800] sm:$0xf]
      %v1802 = vld [vmem:[%s1800 + $0x4] sm:$0xf]
      %v1803 = vld [vmem:[%s1800 + $0x8] sm:$0xf]
      %v1804 = vld [vmem:[%s1800 + $0xc] sm:$0xf]
      %v1805 = vld [vmem:[%s1800 + $0x10] sm:$0xf]
      %v1806 = vld [vmem:[%s1800 + $0x14] sm:$0xf]
      %v1807 = vld [vmem:[%s1800 + $0x18] sm:$0xf]
      %v1808 = vld [vmem:[%s1800 + $0x1c] sm:$0xf]
      %v1809 = vld [vmem:[%s1800 + $0x20] sm:$0xf]
      %v1810 = vld [vmem:[%s1800 + $0x24] sm:$0xf]
      %v1811 = vld [vmem:[%s1800 + $0x28] sm:$0xf]
      %v1812 = vld [vmem:[%s1800 + $0x2c] sm:$0xf]
      %v1813 = vld [vmem:[%s1800 + $0x30] sm:$0xf]
      %v1814 = vld [vmem:[%s1800 + $0x34] sm:$0xf]
      %v1815 = vld [vmem:[%s1800 + $0x38] sm:$0xf]
      %v1816 = vld [vmem:[%s1800 + $0x3c] sm:$0xf]
      %v1833 = vunpack.c.l.b16 %v1801
      %v1834 = vunpack.c.l.b16 %v1802
      %v1835 = vunpack.c.l.b16 %v1803
      %v1836 = vunpack.c.l.b16 %v1804
      %v1837 = vunpack.c.l.b16 %v1805
      %v1838 = vunpack.c.l.b16 %v1806
      %v1839 = vunpack.c.l.b16 %v1807
      %v1840 = vunpack.c.l.b16 %v1808
      %v1841 = vunpack.c.l.b16 %v1809
      %v1842 = vunpack.c.l.b16 %v1810
      %v1843 = vunpack.c.l.b16 %v1811
      %v1844 = vunpack.c.l.b16 %v1812
      %v1845 = vunpack.c.l.b16 %v1813
      %v1846 = vunpack.c.l.b16 %v1814
      %v1847 = vunpack.c.l.b16 %v1815
      %v1848 = vunpack.c.l.b16 %v1816
      %v1849 = vpack.c.b16 %v1834, %v1833
      %v1850 = vpack.c.b16 %v1836, %v1835
      %v1851 = vpack.c.b16 %v1838, %v1837
      %v1852 = vpack.c.b16 %v1840, %v1839
      %v1853 = vpack.c.b16 %v1842, %v1841
      %v1854 = vpack.c.b16 %v1844, %v1843
      %v1855 = vpack.c.b16 %v1846, %v1845
      %v1856 = vpack.c.b16 %v1848, %v1847
      %1865 = vmatprep.subr.bf16.mxu0 0
      %1866 = vmatpush1.bf16.msra.mxu0 %v1856
      %1867 = vmatprep.subr.bf16.mxu0 0
      %1868 = vmatpush1.bf16.msra.mxu0 %v1855
      %1869 = vmatprep.subr.bf16.mxu0 0
      %1870 = vmatpush1.bf16.msra.mxu0 %v1854
      %1871 = vmatprep.subr.bf16.mxu0 0
      %1872 = vmatpush1.bf16.msra.mxu0 %v1853
      %1873 = vmatprep.subr.bf16.mxu0 0
      %1874 = vmatpush1.bf16.msra.mxu0 %v1852
      %1875 = vmatprep.subr.bf16.mxu0 0
      %1876 = vmatpush1.bf16.msra.mxu0 %v1851
      %1877 = vmatprep.subr.bf16.mxu0 0
      %1878 = vmatpush1.bf16.msra.mxu0 %v1850
      %1879 = vmatprep.subr.bf16.mxu0 0
      %1880 = vmatpush1.bf16.msra.mxu0 %v1849
      %1881 = vmatprep.subr.bf16.mxu0 0
      %1882 = vmatpush2.bf16.msra.mxu0 0
      %1883 = vmatprep.subr.bf16.mxu0 0
      %1884 = vmatpush2.bf16.msra.mxu0 0
      %1885 = vmatprep.subr.bf16.mxu0 0
      %1886 = vmatpush2.bf16.msra.mxu0 0
      %1887 = vmatprep.subr.bf16.mxu0 0
      %1888 = vmatpush2.bf16.msra.mxu0 0
      %1889 = vmatprep.subr.bf16.mxu0 0
      %1890 = vmatpush2.bf16.msra.mxu0 0
      %1891 = vmatprep.subr.bf16.mxu0 0
      %1892 = vmatpush2.bf16.msra.mxu0 0
      %1893 = vmatprep.subr.bf16.mxu0 0
      %1894 = vmatpush2.bf16.msra.mxu0 0
      %1895 = vmatprep.subr.bf16.mxu0 0
      %1896 = vmatpush2.bf16.msra.mxu0 0
      %1897 = vmatprep.mubr.bf16.mxu0 0
      %1898 = vmatmul.mubr.bf16.gmra.mxu0 %v1796
      %v1899 = vpop.f32.mrf.mxu0
      %v1900 = vadd.f32 0.0, %v1899
      %v1901 = vpop.f32.mrf.mxu0
      %v1902 = vpop.f32.mrf.mxu0
      %v1903 = vadd.f32 0.0, %v1902
      %v1904 = vpop.f32.mrf.mxu0
      %1905 = vmatprep.mubr.bf16.mxu0 0
      %1906 = vmatmul.mubr.bf16.gmra.mxu0 %v1797
      %v1907 = vpop.f32.mrf.mxu0
      %v1908 = vadd.f32 0.0, %v1907
      %v1909 = vpop.f32.mrf.mxu0
      %v1910 = vpop.f32.mrf.mxu0
      %v1911 = vadd.f32 0.0, %v1910
      %v1912 = vpop.f32.mrf.mxu0
      %1913 = vmatprep.mubr.bf16.mxu0 0
      %1914 = vmatmul.mubr.bf16.gmra.mxu0 %v1798
      %v1915 = vpop.f32.mrf.mxu0
      %v1916 = vadd.f32 0.0, %v1915
      %v1917 = vpop.f32.mrf.mxu0
      %v1918 = vpop.f32.mrf.mxu0
      %v1919 = vadd.f32 0.0, %v1918
      %v1920 = vpop.f32.mrf.mxu0
      %1921 = vmatprep.mubr.bf16.mxu0 0
      %1922 = vmatmul.mubr.bf16.gmra.mxu0 %v1799
      %v1923 = vpop.f32.mrf.mxu0
      %v1924 = vadd.f32 0.0, %v1923
      %v1925 = vpop.f32.mrf.mxu0
      %v1926 = vpop.f32.mrf.mxu0
      %v1927 = vadd.f32 0.0, %v1926
      %v1928 = vpop.f32.mrf.mxu0
      %1929 = vdwg.mxu0
      %v1930 = vadd.f32 %v1740, %v1900
      %v1931 = vadd.f32 %v1741, %v1903
      %v1932 = vadd.f32 %v1742, %v1908
      %v1933 = vadd.f32 %v1743, %v1911
      %v1934 = vadd.f32 %v1744, %v1916
      %v1935 = vadd.f32 %v1745, %v1919
      %v1936 = vadd.f32 %v1746, %v1924
      %v1937 = vadd.f32 %v1747, %v1927
      %s1938 = scalar_lea.vmem %s230, 48
      %v1939 = vld [vmem:[%s1938] sm:$0xf]
      %v1940 = vld [vmem:[%s1938 + $0x8] sm:$0xf]
      %v1941 = vld [vmem:[%s1938 + $0x10] sm:$0xf]
      %v1942 = vld [vmem:[%s1938 + $0x18] sm:$0xf]
      %v1943 = vld [vmem:[%s1938 + $0x30] sm:$0xf]
      %v1944 = vld [vmem:[%s1938 + $0x38] sm:$0xf]
      %v1945 = vld [vmem:[%s1938 + $0x40] sm:$0xf]
      %v1946 = vld [vmem:[%s1938 + $0x48] sm:$0xf]
      %v1947 = vld [vmem:[%s1938 + $0x60] sm:$0xf]
      %v1948 = vld [vmem:[%s1938 + $0x68] sm:$0xf]
      %v1949 = vld [vmem:[%s1938 + $0x70] sm:$0xf]
      %v1950 = vld [vmem:[%s1938 + $0x78] sm:$0xf]
      %v1951 = vld [vmem:[%s1938 + $0x90] sm:$0xf]
      %v1952 = vld [vmem:[%s1938 + $0x98] sm:$0xf]
      %v1953 = vld [vmem:[%s1938 + $0xa0] sm:$0xf]
      %v1954 = vld [vmem:[%s1938 + $0xa8] sm:$0xf]
      %v1971 = vcombine.low %v1939, %v1940
      %v1972 = vcombine.low %v1941, %v1942
      %v1973 = vcombine.low %v1943, %v1944
      %v1974 = vcombine.low %v1945, %v1946
      %v1975 = vcombine.low %v1947, %v1948
      %v1976 = vcombine.low %v1949, %v1950
      %v1977 = vcombine.low %v1951, %v1952
      %v1978 = vcombine.low %v1953, %v1954
      %v1987 = vpack.c.bf16 %v1972, %v1971
      %v1988 = vpack.c.bf16 %v1974, %v1973
      %v1989 = vpack.c.bf16 %v1976, %v1975
      %v1990 = vpack.c.bf16 %v1978, %v1977
      %s1991 = scalar_lea.vmem %s1, 576
      %v1992 = vld [vmem:[%s1991] sm:$0xf]
      %v1993 = vld [vmem:[%s1991 + $0x4] sm:$0xf]
      %v1994 = vld [vmem:[%s1991 + $0x8] sm:$0xf]
      %v1995 = vld [vmem:[%s1991 + $0xc] sm:$0xf]
      %v1996 = vld [vmem:[%s1991 + $0x10] sm:$0xf]
      %v1997 = vld [vmem:[%s1991 + $0x14] sm:$0xf]
      %v1998 = vld [vmem:[%s1991 + $0x18] sm:$0xf]
      %v1999 = vld [vmem:[%s1991 + $0x1c] sm:$0xf]
      %v2000 = vld [vmem:[%s1991 + $0x20] sm:$0xf]
      %v2001 = vld [vmem:[%s1991 + $0x24] sm:$0xf]
      %v2002 = vld [vmem:[%s1991 + $0x28] sm:$0xf]
      %v2003 = vld [vmem:[%s1991 + $0x2c] sm:$0xf]
      %v2004 = vld [vmem:[%s1991 + $0x30] sm:$0xf]
      %v2005 = vld [vmem:[%s1991 + $0x34] sm:$0xf]
      %v2006 = vld [vmem:[%s1991 + $0x38] sm:$0xf]
      %v2007 = vld [vmem:[%s1991 + $0x3c] sm:$0xf]
      %v2024 = vunpack.c.l.b16 %v1992
      %v2025 = vunpack.c.l.b16 %v1993
      %v2026 = vunpack.c.l.b16 %v1994
      %v2027 = vunpack.c.l.b16 %v1995
      %v2028 = vunpack.c.l.b16 %v1996
      %v2029 = vunpack.c.l.b16 %v1997
      %v2030 = vunpack.c.l.b16 %v1998
      %v2031 = vunpack.c.l.b16 %v1999
      %v2032 = vunpack.c.l.b16 %v2000
      %v2033 = vunpack.c.l.b16 %v2001
      %v2034 = vunpack.c.l.b16 %v2002
      %v2035 = vunpack.c.l.b16 %v2003
      %v2036 = vunpack.c.l.b16 %v2004
      %v2037 = vunpack.c.l.b16 %v2005
      %v2038 = vunpack.c.l.b16 %v2006
      %v2039 = vunpack.c.l.b16 %v2007
      %v2040 = vpack.c.b16 %v2025, %v2024
      %v2041 = vpack.c.b16 %v2027, %v2026
      %v2042 = vpack.c.b16 %v2029, %v2028
      %v2043 = vpack.c.b16 %v2031, %v2030
      %v2044 = vpack.c.b16 %v2033, %v2032
      %v2045 = vpack.c.b16 %v2035, %v2034
      %v2046 = vpack.c.b16 %v2037, %v2036
      %v2047 = vpack.c.b16 %v2039, %v2038
      %2056 = vmatprep.subr.bf16.mxu0 0
      %2057 = vmatpush1.bf16.msra.mxu0 %v2047
      %2058 = vmatprep.subr.bf16.mxu0 0
      %2059 = vmatpush1.bf16.msra.mxu0 %v2046
      %2060 = vmatprep.subr.bf16.mxu0 0
      %2061 = vmatpush1.bf16.msra.mxu0 %v2045
      %2062 = vmatprep.subr.bf16.mxu0 0
      %2063 = vmatpush1.bf16.msra.mxu0 %v2044
      %2064 = vmatprep.subr.bf16.mxu0 0
      %2065 = vmatpush1.bf16.msra.mxu0 %v2043
      %2066 = vmatprep.subr.bf16.mxu0 0
      %2067 = vmatpush1.bf16.msra.mxu0 %v2042
      %2068 = vmatprep.subr.bf16.mxu0 0
      %2069 = vmatpush1.bf16.msra.mxu0 %v2041
      %2070 = vmatprep.subr.bf16.mxu0 0
      %2071 = vmatpush1.bf16.msra.mxu0 %v2040
      %2072 = vmatprep.subr.bf16.mxu0 0
      %2073 = vmatpush2.bf16.msra.mxu0 0
      %2074 = vmatprep.subr.bf16.mxu0 0
      %2075 = vmatpush2.bf16.msra.mxu0 0
      %2076 = vmatprep.subr.bf16.mxu0 0
      %2077 = vmatpush2.bf16.msra.mxu0 0
      %2078 = vmatprep.subr.bf16.mxu0 0
      %2079 = vmatpush2.bf16.msra.mxu0 0
      %2080 = vmatprep.subr.bf16.mxu0 0
      %2081 = vmatpush2.bf16.msra.mxu0 0
      %2082 = vmatprep.subr.bf16.mxu0 0
      %2083 = vmatpush2.bf16.msra.mxu0 0
      %2084 = vmatprep.subr.bf16.mxu0 0
      %2085 = vmatpush2.bf16.msra.mxu0 0
      %2086 = vmatprep.subr.bf16.mxu0 0
      %2087 = vmatpush2.bf16.msra.mxu0 0
      %2088 = vmatprep.mubr.bf16.mxu0 0
      %2089 = vmatmul.mubr.bf16.gmra.mxu0 %v1987
      %v2090 = vpop.f32.mrf.mxu0
      %v2091 = vadd.f32 0.0, %v2090
      %v2092 = vpop.f32.mrf.mxu0
      %v2093 = vpop.f32.mrf.mxu0
      %v2094 = vadd.f32 0.0, %v2093
      %v2095 = vpop.f32.mrf.mxu0
      %2096 = vmatprep.mubr.bf16.mxu0 0
      %2097 = vmatmul.mubr.bf16.gmra.mxu0 %v1988
      %v2098 = vpop.f32.mrf.mxu0
      %v2099 = vadd.f32 0.0, %v2098
      %v2100 = vpop.f32.mrf.mxu0
      %v2101 = vpop.f32.mrf.mxu0
      %v2102 = vadd.f32 0.0, %v2101
      %v2103 = vpop.f32.mrf.mxu0
      %2104 = vmatprep.mubr.bf16.mxu0 0
      %2105 = vmatmul.mubr.bf16.gmra.mxu0 %v1989
      %v2106 = vpop.f32.mrf.mxu0
      %v2107 = vadd.f32 0.0, %v2106
      %v2108 = vpop.f32.mrf.mxu0
      %v2109 = vpop.f32.mrf.mxu0
      %v2110 = vadd.f32 0.0, %v2109
      %v2111 = vpop.f32.mrf.mxu0
      %2112 = vmatprep.mubr.bf16.mxu0 0
      %2113 = vmatmul.mubr.bf16.gmra.mxu0 %v1990
      %v2114 = vpop.f32.mrf.mxu0
      %v2115 = vadd.f32 0.0, %v2114
      %v2116 = vpop.f32.mrf.mxu0
      %v2117 = vpop.f32.mrf.mxu0
      %v2118 = vadd.f32 0.0, %v2117
      %v2119 = vpop.f32.mrf.mxu0
      %2120 = vdwg.mxu0
      %v2121 = vadd.f32 %v1930, %v2091
      %v2122 = vadd.f32 %v1931, %v2094
      %v2123 = vadd.f32 %v1932, %v2099
      %v2124 = vadd.f32 %v1933, %v2102
      %v2125 = vadd.f32 %v1934, %v2107
      %v2126 = vadd.f32 %v1935, %v2110
      %v2127 = vadd.f32 %v1936, %v2115
      %v2128 = vadd.f32 %v1937, %v2118
      %v2129 = vld [vmem:[%s1938 + $0x1] sm:$0xf]
      %v2130 = vld [vmem:[%s1938 + $0x9] sm:$0xf]
      %v2131 = vld [vmem:[%s1938 + $0x11] sm:$0xf]
      %v2132 = vld [vmem:[%s1938 + $0x19] sm:$0xf]
      %v2133 = vld [vmem:[%s1938 + $0x31] sm:$0xf]
      %v2134 = vld [vmem:[%s1938 + $0x39] sm:$0xf]
      %v2135 = vld [vmem:[%s1938 + $0x41] sm:$0xf]
      %v2136 = vld [vmem:[%s1938 + $0x49] sm:$0xf]
      %v2137 = vld [vmem:[%s1938 + $0x61] sm:$0xf]
      %v2138 = vld [vmem:[%s1938 + $0x69] sm:$0xf]
      %v2139 = vld [vmem:[%s1938 + $0x71] sm:$0xf]
      %v2140 = vld [vmem:[%s1938 + $0x79] sm:$0xf]
      %v2141 = vld [vmem:[%s1938 + $0x91] sm:$0xf]
      %v2142 = vld [vmem:[%s1938 + $0x99] sm:$0xf]
      %v2143 = vld [vmem:[%s1938 + $0xa1] sm:$0xf]
      %v2144 = vld [vmem:[%s1938 + $0xa9] sm:$0xf]
      %v2161 = vcombine.low %v2129, %v2130
      %v2162 = vcombine.low %v2131, %v2132
      %v2163 = vcombine.low %v2133, %v2134
      %v2164 = vcombine.low %v2135, %v2136
      %v2165 = vcombine.low %v2137, %v2138
      %v2166 = vcombine.low %v2139, %v2140
      %v2167 = vcombine.low %v2141, %v2142
      %v2168 = vcombine.low %v2143, %v2144
      %v2177 = vpack.c.bf16 %v2162, %v2161
      %v2178 = vpack.c.bf16 %v2164, %v2163
      %v2179 = vpack.c.bf16 %v2166, %v2165
      %v2180 = vpack.c.bf16 %v2168, %v2167
      %s2181 = scalar_lea.vmem %s1, 640
      %v2182 = vld [vmem:[%s2181] sm:$0xf]
      %v2183 = vld [vmem:[%s2181 + $0x4] sm:$0xf]
      %v2184 = vld [vmem:[%s2181 + $0x8] sm:$0xf]
      %v2185 = vld [vmem:[%s2181 + $0xc] sm:$0xf]
      %v2186 = vld [vmem:[%s2181 + $0x10] sm:$0xf]
      %v2187 = vld [vmem:[%s2181 + $0x14] sm:$0xf]
      %v2188 = vld [vmem:[%s2181 + $0x18] sm:$0xf]
      %v2189 = vld [vmem:[%s2181 + $0x1c] sm:$0xf]
      %v2190 = vld [vmem:[%s2181 + $0x20] sm:$0xf]
      %v2191 = vld [vmem:[%s2181 + $0x24] sm:$0xf]
      %v2192 = vld [vmem:[%s2181 + $0x28] sm:$0xf]
      %v2193 = vld [vmem:[%s2181 + $0x2c] sm:$0xf]
      %v2194 = vld [vmem:[%s2181 + $0x30] sm:$0xf]
      %v2195 = vld [vmem:[%s2181 + $0x34] sm:$0xf]
      %v2196 = vld [vmem:[%s2181 + $0x38] sm:$0xf]
      %v2197 = vld [vmem:[%s2181 + $0x3c] sm:$0xf]
      %v2214 = vunpack.c.l.b16 %v2182
      %v2215 = vunpack.c.l.b16 %v2183
      %v2216 = vunpack.c.l.b16 %v2184
      %v2217 = vunpack.c.l.b16 %v2185
      %v2218 = vunpack.c.l.b16 %v2186
      %v2219 = vunpack.c.l.b16 %v2187
      %v2220 = vunpack.c.l.b16 %v2188
      %v2221 = vunpack.c.l.b16 %v2189
      %v2222 = vunpack.c.l.b16 %v2190
      %v2223 = vunpack.c.l.b16 %v2191
      %v2224 = vunpack.c.l.b16 %v2192
      %v2225 = vunpack.c.l.b16 %v2193
      %v2226 = vunpack.c.l.b16 %v2194
      %v2227 = vunpack.c.l.b16 %v2195
      %v2228 = vunpack.c.l.b16 %v2196
      %v2229 = vunpack.c.l.b16 %v2197
      %v2230 = vpack.c.b16 %v2215, %v2214
      %v2231 = vpack.c.b16 %v2217, %v2216
      %v2232 = vpack.c.b16 %v2219, %v2218
      %v2233 = vpack.c.b16 %v2221, %v2220
      %v2234 = vpack.c.b16 %v2223, %v2222
      %v2235 = vpack.c.b16 %v2225, %v2224
      %v2236 = vpack.c.b16 %v2227, %v2226
      %v2237 = vpack.c.b16 %v2229, %v2228
      %2246 = vmatprep.subr.bf16.mxu0 0
      %2247 = vmatpush1.bf16.msra.mxu0 %v2237
      %2248 = vmatprep.subr.bf16.mxu0 0
      %2249 = vmatpush1.bf16.msra.mxu0 %v2236
      %2250 = vmatprep.subr.bf16.mxu0 0
      %2251 = vmatpush1.bf16.msra.mxu0 %v2235
      %2252 = vmatprep.subr.bf16.mxu0 0
      %2253 = vmatpush1.bf16.msra.mxu0 %v2234
      %2254 = vmatprep.subr.bf16.mxu0 0
      %2255 = vmatpush1.bf16.msra.mxu0 %v2233
      %2256 = vmatprep.subr.bf16.mxu0 0
      %2257 = vmatpush1.bf16.msra.mxu0 %v2232
      %2258 = vmatprep.subr.bf16.mxu0 0
      %2259 = vmatpush1.bf16.msra.mxu0 %v2231
      %2260 = vmatprep.subr.bf16.mxu0 0
      %2261 = vmatpush1.bf16.msra.mxu0 %v2230
      %2262 = vmatprep.subr.bf16.mxu0 0
      %2263 = vmatpush2.bf16.msra.mxu0 0
      %2264 = vmatprep.subr.bf16.mxu0 0
      %2265 = vmatpush2.bf16.msra.mxu0 0
      %2266 = vmatprep.subr.bf16.mxu0 0
      %2267 = vmatpush2.bf16.msra.mxu0 0
      %2268 = vmatprep.subr.bf16.mxu0 0
      %2269 = vmatpush2.bf16.msra.mxu0 0
      %2270 = vmatprep.subr.bf16.mxu0 0
      %2271 = vmatpush2.bf16.msra.mxu0 0
      %2272 = vmatprep.subr.bf16.mxu0 0
      %2273 = vmatpush2.bf16.msra.mxu0 0
      %2274 = vmatprep.subr.bf16.mxu0 0
      %2275 = vmatpush2.bf16.msra.mxu0 0
      %2276 = vmatprep.subr.bf16.mxu0 0
      %2277 = vmatpush2.bf16.msra.mxu0 0
      %2278 = vmatprep.mubr.bf16.mxu0 0
      %2279 = vmatmul.mubr.bf16.gmra.mxu0 %v2177
      %v2280 = vpop.f32.mrf.mxu0
      %v2281 = vadd.f32 0.0, %v2280
      %v2282 = vpop.f32.mrf.mxu0
      %v2283 = vpop.f32.mrf.mxu0
      %v2284 = vadd.f32 0.0, %v2283
      %v2285 = vpop.f32.mrf.mxu0
      %2286 = vmatprep.mubr.bf16.mxu0 0
      %2287 = vmatmul.mubr.bf16.gmra.mxu0 %v2178
      %v2288 = vpop.f32.mrf.mxu0
      %v2289 = vadd.f32 0.0, %v2288
      %v2290 = vpop.f32.mrf.mxu0
      %v2291 = vpop.f32.mrf.mxu0
      %v2292 = vadd.f32 0.0, %v2291
      %v2293 = vpop.f32.mrf.mxu0
      %2294 = vmatprep.mubr.bf16.mxu0 0
      %2295 = vmatmul.mubr.bf16.gmra.mxu0 %v2179
      %v2296 = vpop.f32.mrf.mxu0
      %v2297 = vadd.f32 0.0, %v2296
      %v2298 = vpop.f32.mrf.mxu0
      %v2299 = vpop.f32.mrf.mxu0
      %v2300 = vadd.f32 0.0, %v2299
      %v2301 = vpop.f32.mrf.mxu0
      %2302 = vmatprep.mubr.bf16.mxu0 0
      %2303 = vmatmul.mubr.bf16.gmra.mxu0 %v2180
      %v2304 = vpop.f32.mrf.mxu0
      %v2305 = vadd.f32 0.0, %v2304
      %v2306 = vpop.f32.mrf.mxu0
      %v2307 = vpop.f32.mrf.mxu0
      %v2308 = vadd.f32 0.0, %v2307
      %v2309 = vpop.f32.mrf.mxu0
      %2310 = vdwg.mxu0
      %v2311 = vadd.f32 %v2121, %v2281
      %v2312 = vadd.f32 %v2122, %v2284
      %v2313 = vadd.f32 %v2123, %v2289
      %v2314 = vadd.f32 %v2124, %v2292
      %v2315 = vadd.f32 %v2125, %v2297
      %v2316 = vadd.f32 %v2126, %v2300
      %v2317 = vadd.f32 %v2127, %v2305
      %v2318 = vadd.f32 %v2128, %v2308
      %v2319 = vld [vmem:[%s1938 + $0x2] sm:$0xf]
      %v2320 = vld [vmem:[%s1938 + $0xa] sm:$0xf]
      %v2321 = vld [vmem:[%s1938 + $0x12] sm:$0xf]
      %v2322 = vld [vmem:[%s1938 + $0x1a] sm:$0xf]
      %v2323 = vld [vmem:[%s1938 + $0x32] sm:$0xf]
      %v2324 = vld [vmem:[%s1938 + $0x3a] sm:$0xf]
      %v2325 = vld [vmem:[%s1938 + $0x42] sm:$0xf]
      %v2326 = vld [vmem:[%s1938 + $0x4a] sm:$0xf]
      %v2327 = vld [vmem:[%s1938 + $0x62] sm:$0xf]
      %v2328 = vld [vmem:[%s1938 + $0x6a] sm:$0xf]
      %v2329 = vld [vmem:[%s1938 + $0x72] sm:$0xf]
      %v2330 = vld [vmem:[%s1938 + $0x7a] sm:$0xf]
      %v2331 = vld [vmem:[%s1938 + $0x92] sm:$0xf]
      %v2332 = vld [vmem:[%s1938 + $0x9a] sm:$0xf]
      %v2333 = vld [vmem:[%s1938 + $0xa2] sm:$0xf]
      %v2334 = vld [vmem:[%s1938 + $0xaa] sm:$0xf]
      %v2351 = vcombine.low %v2319, %v2320
      %v2352 = vcombine.low %v2321, %v2322
      %v2353 = vcombine.low %v2323, %v2324
      %v2354 = vcombine.low %v2325, %v2326
      %v2355 = vcombine.low %v2327, %v2328
      %v2356 = vcombine.low %v2329, %v2330
      %v2357 = vcombine.low %v2331, %v2332
      %v2358 = vcombine.low %v2333, %v2334
      %v2367 = vpack.c.bf16 %v2352, %v2351
      %v2368 = vpack.c.bf16 %v2354, %v2353
      %v2369 = vpack.c.bf16 %v2356, %v2355
      %v2370 = vpack.c.bf16 %v2358, %v2357
      %s2371 = scalar_lea.vmem %s1, 704
      %v2372 = vld [vmem:[%s2371] sm:$0xf]
      %v2373 = vld [vmem:[%s2371 + $0x4] sm:$0xf]
      %v2374 = vld [vmem:[%s2371 + $0x8] sm:$0xf]
      %v2375 = vld [vmem:[%s2371 + $0xc] sm:$0xf]
      %v2376 = vld [vmem:[%s2371 + $0x10] sm:$0xf]
      %v2377 = vld [vmem:[%s2371 + $0x14] sm:$0xf]
      %v2378 = vld [vmem:[%s2371 + $0x18] sm:$0xf]
      %v2379 = vld [vmem:[%s2371 + $0x1c] sm:$0xf]
      %v2380 = vld [vmem:[%s2371 + $0x20] sm:$0xf]
      %v2381 = vld [vmem:[%s2371 + $0x24] sm:$0xf]
      %v2382 = vld [vmem:[%s2371 + $0x28] sm:$0xf]
      %v2383 = vld [vmem:[%s2371 + $0x2c] sm:$0xf]
      %v2384 = vld [vmem:[%s2371 + $0x30] sm:$0xf]
      %v2385 = vld [vmem:[%s2371 + $0x34] sm:$0xf]
      %v2386 = vld [vmem:[%s2371 + $0x38] sm:$0xf]
      %v2387 = vld [vmem:[%s2371 + $0x3c] sm:$0xf]
      %v2404 = vunpack.c.l.b16 %v2372
      %v2405 = vunpack.c.l.b16 %v2373
      %v2406 = vunpack.c.l.b16 %v2374
      %v2407 = vunpack.c.l.b16 %v2375
      %v2408 = vunpack.c.l.b16 %v2376
      %v2409 = vunpack.c.l.b16 %v2377
      %v2410 = vunpack.c.l.b16 %v2378
      %v2411 = vunpack.c.l.b16 %v2379
      %v2412 = vunpack.c.l.b16 %v2380
      %v2413 = vunpack.c.l.b16 %v2381
      %v2414 = vunpack.c.l.b16 %v2382
      %v2415 = vunpack.c.l.b16 %v2383
      %v2416 = vunpack.c.l.b16 %v2384
      %v2417 = vunpack.c.l.b16 %v2385
      %v2418 = vunpack.c.l.b16 %v2386
      %v2419 = vunpack.c.l.b16 %v2387
      %v2420 = vpack.c.b16 %v2405, %v2404
      %v2421 = vpack.c.b16 %v2407, %v2406
      %v2422 = vpack.c.b16 %v2409, %v2408
      %v2423 = vpack.c.b16 %v2411, %v2410
      %v2424 = vpack.c.b16 %v2413, %v2412
      %v2425 = vpack.c.b16 %v2415, %v2414
      %v2426 = vpack.c.b16 %v2417, %v2416
      %v2427 = vpack.c.b16 %v2419, %v2418
      %2436 = vmatprep.subr.bf16.mxu0 0
      %2437 = vmatpush1.bf16.msra.mxu0 %v2427
      %2438 = vmatprep.subr.bf16.mxu0 0
      %2439 = vmatpush1.bf16.msra.mxu0 %v2426
      %2440 = vmatprep.subr.bf16.mxu0 0
      %2441 = vmatpush1.bf16.msra.mxu0 %v2425
      %2442 = vmatprep.subr.bf16.mxu0 0
      %2443 = vmatpush1.bf16.msra.mxu0 %v2424
      %2444 = vmatprep.subr.bf16.mxu0 0
      %2445 = vmatpush1.bf16.msra.mxu0 %v2423
      %2446 = vmatprep.subr.bf16.mxu0 0
      %2447 = vmatpush1.bf16.msra.mxu0 %v2422
      %2448 = vmatprep.subr.bf16.mxu0 0
      %2449 = vmatpush1.bf16.msra.mxu0 %v2421
      %2450 = vmatprep.subr.bf16.mxu0 0
      %2451 = vmatpush1.bf16.msra.mxu0 %v2420
      %2452 = vmatprep.subr.bf16.mxu0 0
      %2453 = vmatpush2.bf16.msra.mxu0 0
      %2454 = vmatprep.subr.bf16.mxu0 0
      %2455 = vmatpush2.bf16.msra.mxu0 0
      %2456 = vmatprep.subr.bf16.mxu0 0
      %2457 = vmatpush2.bf16.msra.mxu0 0
      %2458 = vmatprep.subr.bf16.mxu0 0
      %2459 = vmatpush2.bf16.msra.mxu0 0
      %2460 = vmatprep.subr.bf16.mxu0 0
      %2461 = vmatpush2.bf16.msra.mxu0 0
      %2462 = vmatprep.subr.bf16.mxu0 0
      %2463 = vmatpush2.bf16.msra.mxu0 0
      %2464 = vmatprep.subr.bf16.mxu0 0
      %2465 = vmatpush2.bf16.msra.mxu0 0
      %2466 = vmatprep.subr.bf16.mxu0 0
      %2467 = vmatpush2.bf16.msra.mxu0 0
      %2468 = vmatprep.mubr.bf16.mxu0 0
      %2469 = vmatmul.mubr.bf16.gmra.mxu0 %v2367
      %v2470 = vpop.f32.mrf.mxu0
      %v2471 = vadd.f32 0.0, %v2470
      %v2472 = vpop.f32.mrf.mxu0
      %v2473 = vpop.f32.mrf.mxu0
      %v2474 = vadd.f32 0.0, %v2473
      %v2475 = vpop.f32.mrf.mxu0
      %2476 = vmatprep.mubr.bf16.mxu0 0
      %2477 = vmatmul.mubr.bf16.gmra.mxu0 %v2368
      %v2478 = vpop.f32.mrf.mxu0
      %v2479 = vadd.f32 0.0, %v2478
      %v2480 = vpop.f32.mrf.mxu0
      %v2481 = vpop.f32.mrf.mxu0
      %v2482 = vadd.f32 0.0, %v2481
      %v2483 = vpop.f32.mrf.mxu0
      %2484 = vmatprep.mubr.bf16.mxu0 0
      %2485 = vmatmul.mubr.bf16.gmra.mxu0 %v2369
      %v2486 = vpop.f32.mrf.mxu0
      %v2487 = vadd.f32 0.0, %v2486
      %v2488 = vpop.f32.mrf.mxu0
      %v2489 = vpop.f32.mrf.mxu0
      %v2490 = vadd.f32 0.0, %v2489
      %v2491 = vpop.f32.mrf.mxu0
      %2492 = vmatprep.mubr.bf16.mxu0 0
      %2493 = vmatmul.mubr.bf16.gmra.mxu0 %v2370
      %v2494 = vpop.f32.mrf.mxu0
      %v2495 = vadd.f32 0.0, %v2494
      %v2496 = vpop.f32.mrf.mxu0
      %v2497 = vpop.f32.mrf.mxu0
      %v2498 = vadd.f32 0.0, %v2497
      %v2499 = vpop.f32.mrf.mxu0
      %2500 = vdwg.mxu0
      %v2501 = vadd.f32 %v2311, %v2471
      %v2502 = vadd.f32 %v2312, %v2474
      %v2503 = vadd.f32 %v2313, %v2479
      %v2504 = vadd.f32 %v2314, %v2482
      %v2505 = vadd.f32 %v2315, %v2487
      %v2506 = vadd.f32 %v2316, %v2490
      %v2507 = vadd.f32 %v2317, %v2495
      %v2508 = vadd.f32 %v2318, %v2498
      %s2509 = scalar_lea.vmem %s230, 56
      %v2510 = vld [vmem:[%s2509] sm:$0xf]
      %v2511 = vld [vmem:[%s2509 + $0x8] sm:$0xf]
      %v2512 = vld [vmem:[%s2509 + $0x10] sm:$0xf]
      %v2513 = vld [vmem:[%s2509 + $0x18] sm:$0xf]
      %v2514 = vld [vmem:[%s2509 + $0x30] sm:$0xf]
      %v2515 = vld [vmem:[%s2509 + $0x38] sm:$0xf]
      %v2516 = vld [vmem:[%s2509 + $0x40] sm:$0xf]
      %v2517 = vld [vmem:[%s2509 + $0x48] sm:$0xf]
      %v2518 = vld [vmem:[%s2509 + $0x60] sm:$0xf]
      %v2519 = vld [vmem:[%s2509 + $0x68] sm:$0xf]
      %v2520 = vld [vmem:[%s2509 + $0x70] sm:$0xf]
      %v2521 = vld [vmem:[%s2509 + $0x78] sm:$0xf]
      %v2522 = vld [vmem:[%s2509 + $0x90] sm:$0xf]
      %v2523 = vld [vmem:[%s2509 + $0x98] sm:$0xf]
      %v2524 = vld [vmem:[%s2509 + $0xa0] sm:$0xf]
      %v2525 = vld [vmem:[%s2509 + $0xa8] sm:$0xf]
      %v2542 = vcombine.low %v2510, %v2511
      %v2543 = vcombine.low %v2512, %v2513
      %v2544 = vcombine.low %v2514, %v2515
      %v2545 = vcombine.low %v2516, %v2517
      %v2546 = vcombine.low %v2518, %v2519
      %v2547 = vcombine.low %v2520, %v2521
      %v2548 = vcombine.low %v2522, %v2523
      %v2549 = vcombine.low %v2524, %v2525
      %v2558 = vpack.c.bf16 %v2543, %v2542
      %v2559 = vpack.c.bf16 %v2545, %v2544
      %v2560 = vpack.c.bf16 %v2547, %v2546
      %v2561 = vpack.c.bf16 %v2549, %v2548
      %s2562 = scalar_lea.vmem %s1, 768
      %v2563 = vld [vmem:[%s2562] sm:$0xf]
      %v2564 = vld [vmem:[%s2562 + $0x4] sm:$0xf]
      %v2565 = vld [vmem:[%s2562 + $0x8] sm:$0xf]
      %v2566 = vld [vmem:[%s2562 + $0xc] sm:$0xf]
      %v2567 = vld [vmem:[%s2562 + $0x10] sm:$0xf]
      %v2568 = vld [vmem:[%s2562 + $0x14] sm:$0xf]
      %v2569 = vld [vmem:[%s2562 + $0x18] sm:$0xf]
      %v2570 = vld [vmem:[%s2562 + $0x1c] sm:$0xf]
      %v2571 = vld [vmem:[%s2562 + $0x20] sm:$0xf]
      %v2572 = vld [vmem:[%s2562 + $0x24] sm:$0xf]
      %v2573 = vld [vmem:[%s2562 + $0x28] sm:$0xf]
      %v2574 = vld [vmem:[%s2562 + $0x2c] sm:$0xf]
      %v2575 = vld [vmem:[%s2562 + $0x30] sm:$0xf]
      %v2576 = vld [vmem:[%s2562 + $0x34] sm:$0xf]
      %v2577 = vld [vmem:[%s2562 + $0x38] sm:$0xf]
      %v2578 = vld [vmem:[%s2562 + $0x3c] sm:$0xf]
      %v2595 = vunpack.c.l.b16 %v2563
      %v2596 = vunpack.c.l.b16 %v2564
      %v2597 = vunpack.c.l.b16 %v2565
      %v2598 = vunpack.c.l.b16 %v2566
      %v2599 = vunpack.c.l.b16 %v2567
      %v2600 = vunpack.c.l.b16 %v2568
      %v2601 = vunpack.c.l.b16 %v2569
      %v2602 = vunpack.c.l.b16 %v2570
      %v2603 = vunpack.c.l.b16 %v2571
      %v2604 = vunpack.c.l.b16 %v2572
      %v2605 = vunpack.c.l.b16 %v2573
      %v2606 = vunpack.c.l.b16 %v2574
      %v2607 = vunpack.c.l.b16 %v2575
      %v2608 = vunpack.c.l.b16 %v2576
      %v2609 = vunpack.c.l.b16 %v2577
      %v2610 = vunpack.c.l.b16 %v2578
      %v2611 = vpack.c.b16 %v2596, %v2595
      %v2612 = vpack.c.b16 %v2598, %v2597
      %v2613 = vpack.c.b16 %v2600, %v2599
      %v2614 = vpack.c.b16 %v2602, %v2601
      %v2615 = vpack.c.b16 %v2604, %v2603
      %v2616 = vpack.c.b16 %v2606, %v2605
      %v2617 = vpack.c.b16 %v2608, %v2607
      %v2618 = vpack.c.b16 %v2610, %v2609
      %2627 = vmatprep.subr.bf16.mxu0 0
      %2628 = vmatpush1.bf16.msra.mxu0 %v2618
      %2629 = vmatprep.subr.bf16.mxu0 0
      %2630 = vmatpush1.bf16.msra.mxu0 %v2617
      %2631 = vmatprep.subr.bf16.mxu0 0
      %2632 = vmatpush1.bf16.msra.mxu0 %v2616
      %2633 = vmatprep.subr.bf16.mxu0 0
      %2634 = vmatpush1.bf16.msra.mxu0 %v2615
      %2635 = vmatprep.subr.bf16.mxu0 0
      %2636 = vmatpush1.bf16.msra.mxu0 %v2614
      %2637 = vmatprep.subr.bf16.mxu0 0
      %2638 = vmatpush1.bf16.msra.mxu0 %v2613
      %2639 = vmatprep.subr.bf16.mxu0 0
      %2640 = vmatpush1.bf16.msra.mxu0 %v2612
      %2641 = vmatprep.subr.bf16.mxu0 0
      %2642 = vmatpush1.bf16.msra.mxu0 %v2611
      %2643 = vmatprep.subr.bf16.mxu0 0
      %2644 = vmatpush2.bf16.msra.mxu0 0
      %2645 = vmatprep.subr.bf16.mxu0 0
      %2646 = vmatpush2.bf16.msra.mxu0 0
      %2647 = vmatprep.subr.bf16.mxu0 0
      %2648 = vmatpush2.bf16.msra.mxu0 0
      %2649 = vmatprep.subr.bf16.mxu0 0
      %2650 = vmatpush2.bf16.msra.mxu0 0
      %2651 = vmatprep.subr.bf16.mxu0 0
      %2652 = vmatpush2.bf16.msra.mxu0 0
      %2653 = vmatprep.subr.bf16.mxu0 0
      %2654 = vmatpush2.bf16.msra.mxu0 0
      %2655 = vmatprep.subr.bf16.mxu0 0
      %2656 = vmatpush2.bf16.msra.mxu0 0
      %2657 = vmatprep.subr.bf16.mxu0 0
      %2658 = vmatpush2.bf16.msra.mxu0 0
      %2659 = vmatprep.mubr.bf16.mxu0 0
      %2660 = vmatmul.mubr.bf16.gmra.mxu0 %v2558
      %v2661 = vpop.f32.mrf.mxu0
      %v2662 = vadd.f32 0.0, %v2661
      %v2663 = vpop.f32.mrf.mxu0
      %v2664 = vpop.f32.mrf.mxu0
      %v2665 = vadd.f32 0.0, %v2664
      %v2666 = vpop.f32.mrf.mxu0
      %2667 = vmatprep.mubr.bf16.mxu0 0
      %2668 = vmatmul.mubr.bf16.gmra.mxu0 %v2559
      %v2669 = vpop.f32.mrf.mxu0
      %v2670 = vadd.f32 0.0, %v2669
      %v2671 = vpop.f32.mrf.mxu0
      %v2672 = vpop.f32.mrf.mxu0
      %v2673 = vadd.f32 0.0, %v2672
      %v2674 = vpop.f32.mrf.mxu0
      %2675 = vmatprep.mubr.bf16.mxu0 0
      %2676 = vmatmul.mubr.bf16.gmra.mxu0 %v2560
      %v2677 = vpop.f32.mrf.mxu0
      %v2678 = vadd.f32 0.0, %v2677
      %v2679 = vpop.f32.mrf.mxu0
      %v2680 = vpop.f32.mrf.mxu0
      %v2681 = vadd.f32 0.0, %v2680
      %v2682 = vpop.f32.mrf.mxu0
      %2683 = vmatprep.mubr.bf16.mxu0 0
      %2684 = vmatmul.mubr.bf16.gmra.mxu0 %v2561
      %v2685 = vpop.f32.mrf.mxu0
      %v2686 = vadd.f32 0.0, %v2685
      %v2687 = vpop.f32.mrf.mxu0
      %v2688 = vpop.f32.mrf.mxu0
      %v2689 = vadd.f32 0.0, %v2688
      %v2690 = vpop.f32.mrf.mxu0
      %2691 = vdwg.mxu0
      %v2692 = vadd.f32 %v2501, %v2662
      %v2693 = vadd.f32 %v2502, %v2665
      %v2694 = vadd.f32 %v2503, %v2670
      %v2695 = vadd.f32 %v2504, %v2673
      %v2696 = vadd.f32 %v2505, %v2678
      %v2697 = vadd.f32 %v2506, %v2681
      %v2698 = vadd.f32 %v2507, %v2686
      %v2699 = vadd.f32 %v2508, %v2689
      %v2700 = vld [vmem:[%s2509 + $0x1] sm:$0xf]
      %v2701 = vld [vmem:[%s2509 + $0x9] sm:$0xf]
      %v2702 = vld [vmem:[%s2509 + $0x11] sm:$0xf]
      %v2703 = vld [vmem:[%s2509 + $0x19] sm:$0xf]
      %v2704 = vld [vmem:[%s2509 + $0x31] sm:$0xf]
      %v2705 = vld [vmem:[%s2509 + $0x39] sm:$0xf]
      %v2706 = vld [vmem:[%s2509 + $0x41] sm:$0xf]
      %v2707 = vld [vmem:[%s2509 + $0x49] sm:$0xf]
      %v2708 = vld [vmem:[%s2509 + $0x61] sm:$0xf]
      %v2709 = vld [vmem:[%s2509 + $0x69] sm:$0xf]
      %v2710 = vld [vmem:[%s2509 + $0x71] sm:$0xf]
      %v2711 = vld [vmem:[%s2509 + $0x79] sm:$0xf]
      %v2712 = vld [vmem:[%s2509 + $0x91] sm:$0xf]
      %v2713 = vld [vmem:[%s2509 + $0x99] sm:$0xf]
      %v2714 = vld [vmem:[%s2509 + $0xa1] sm:$0xf]
      %v2715 = vld [vmem:[%s2509 + $0xa9] sm:$0xf]
      %v2732 = vcombine.low %v2700, %v2701
      %v2733 = vcombine.low %v2702, %v2703
      %v2734 = vcombine.low %v2704, %v2705
      %v2735 = vcombine.low %v2706, %v2707
      %v2736 = vcombine.low %v2708, %v2709
      %v2737 = vcombine.low %v2710, %v2711
      %v2738 = vcombine.low %v2712, %v2713
      %v2739 = vcombine.low %v2714, %v2715
      %v2748 = vpack.c.bf16 %v2733, %v2732
      %v2749 = vpack.c.bf16 %v2735, %v2734
      %v2750 = vpack.c.bf16 %v2737, %v2736
      %v2751 = vpack.c.bf16 %v2739, %v2738
      %s2752 = scalar_lea.vmem %s1, 832
      %v2753 = vld [vmem:[%s2752] sm:$0xf]
      %v2754 = vld [vmem:[%s2752 + $0x4] sm:$0xf]
      %v2755 = vld [vmem:[%s2752 + $0x8] sm:$0xf]
      %v2756 = vld [vmem:[%s2752 + $0xc] sm:$0xf]
      %v2757 = vld [vmem:[%s2752 + $0x10] sm:$0xf]
      %v2758 = vld [vmem:[%s2752 + $0x14] sm:$0xf]
      %v2759 = vld [vmem:[%s2752 + $0x18] sm:$0xf]
      %v2760 = vld [vmem:[%s2752 + $0x1c] sm:$0xf]
      %v2761 = vld [vmem:[%s2752 + $0x20] sm:$0xf]
      %v2762 = vld [vmem:[%s2752 + $0x24] sm:$0xf]
      %v2763 = vld [vmem:[%s2752 + $0x28] sm:$0xf]
      %v2764 = vld [vmem:[%s2752 + $0x2c] sm:$0xf]
      %v2765 = vld [vmem:[%s2752 + $0x30] sm:$0xf]
      %v2766 = vld [vmem:[%s2752 + $0x34] sm:$0xf]
      %v2767 = vld [vmem:[%s2752 + $0x38] sm:$0xf]
      %v2768 = vld [vmem:[%s2752 + $0x3c] sm:$0xf]
      %v2785 = vunpack.c.l.b16 %v2753
      %v2786 = vunpack.c.l.b16 %v2754
      %v2787 = vunpack.c.l.b16 %v2755
      %v2788 = vunpack.c.l.b16 %v2756
      %v2789 = vunpack.c.l.b16 %v2757
      %v2790 = vunpack.c.l.b16 %v2758
      %v2791 = vunpack.c.l.b16 %v2759
      %v2792 = vunpack.c.l.b16 %v2760
      %v2793 = vunpack.c.l.b16 %v2761
      %v2794 = vunpack.c.l.b16 %v2762
      %v2795 = vunpack.c.l.b16 %v2763
      %v2796 = vunpack.c.l.b16 %v2764
      %v2797 = vunpack.c.l.b16 %v2765
      %v2798 = vunpack.c.l.b16 %v2766
      %v2799 = vunpack.c.l.b16 %v2767
      %v2800 = vunpack.c.l.b16 %v2768
      %v2801 = vpack.c.b16 %v2786, %v2785
      %v2802 = vpack.c.b16 %v2788, %v2787
      %v2803 = vpack.c.b16 %v2790, %v2789
      %v2804 = vpack.c.b16 %v2792, %v2791
      %v2805 = vpack.c.b16 %v2794, %v2793
      %v2806 = vpack.c.b16 %v2796, %v2795
      %v2807 = vpack.c.b16 %v2798, %v2797
      %v2808 = vpack.c.b16 %v2800, %v2799
      %2817 = vmatprep.subr.bf16.mxu0 0
      %2818 = vmatpush1.bf16.msra.mxu0 %v2808
      %2819 = vmatprep.subr.bf16.mxu0 0
      %2820 = vmatpush1.bf16.msra.mxu0 %v2807
      %2821 = vmatprep.subr.bf16.mxu0 0
      %2822 = vmatpush1.bf16.msra.mxu0 %v2806
      %2823 = vmatprep.subr.bf16.mxu0 0
      %2824 = vmatpush1.bf16.msra.mxu0 %v2805
      %2825 = vmatprep.subr.bf16.mxu0 0
      %2826 = vmatpush1.bf16.msra.mxu0 %v2804
      %2827 = vmatprep.subr.bf16.mxu0 0
      %2828 = vmatpush1.bf16.msra.mxu0 %v2803
      %2829 = vmatprep.subr.bf16.mxu0 0
      %2830 = vmatpush1.bf16.msra.mxu0 %v2802
      %2831 = vmatprep.subr.bf16.mxu0 0
      %2832 = vmatpush1.bf16.msra.mxu0 %v2801
      %2833 = vmatprep.subr.bf16.mxu0 0
      %2834 = vmatpush2.bf16.msra.mxu0 0
      %2835 = vmatprep.subr.bf16.mxu0 0
      %2836 = vmatpush2.bf16.msra.mxu0 0
      %2837 = vmatprep.subr.bf16.mxu0 0
      %2838 = vmatpush2.bf16.msra.mxu0 0
      %2839 = vmatprep.subr.bf16.mxu0 0
      %2840 = vmatpush2.bf16.msra.mxu0 0
      %2841 = vmatprep.subr.bf16.mxu0 0
      %2842 = vmatpush2.bf16.msra.mxu0 0
      %2843 = vmatprep.subr.bf16.mxu0 0
      %2844 = vmatpush2.bf16.msra.mxu0 0
      %2845 = vmatprep.subr.bf16.mxu0 0
      %2846 = vmatpush2.bf16.msra.mxu0 0
      %2847 = vmatprep.subr.bf16.mxu0 0
      %2848 = vmatpush2.bf16.msra.mxu0 0
      %2849 = vmatprep.mubr.bf16.mxu0 0
      %2850 = vmatmul.mubr.bf16.gmra.mxu0 %v2748
      %v2851 = vpop.f32.mrf.mxu0
      %v2852 = vadd.f32 0.0, %v2851
      %v2853 = vpop.f32.mrf.mxu0
      %v2854 = vpop.f32.mrf.mxu0
      %v2855 = vadd.f32 0.0, %v2854
      %v2856 = vpop.f32.mrf.mxu0
      %2857 = vmatprep.mubr.bf16.mxu0 0
      %2858 = vmatmul.mubr.bf16.gmra.mxu0 %v2749
      %v2859 = vpop.f32.mrf.mxu0
      %v2860 = vadd.f32 0.0, %v2859
      %v2861 = vpop.f32.mrf.mxu0
      %v2862 = vpop.f32.mrf.mxu0
      %v2863 = vadd.f32 0.0, %v2862
      %v2864 = vpop.f32.mrf.mxu0
      %2865 = vmatprep.mubr.bf16.mxu0 0
      %2866 = vmatmul.mubr.bf16.gmra.mxu0 %v2750
      %v2867 = vpop.f32.mrf.mxu0
      %v2868 = vadd.f32 0.0, %v2867
      %v2869 = vpop.f32.mrf.mxu0
      %v2870 = vpop.f32.mrf.mxu0
      %v2871 = vadd.f32 0.0, %v2870
      %v2872 = vpop.f32.mrf.mxu0
      %2873 = vmatprep.mubr.bf16.mxu0 0
      %2874 = vmatmul.mubr.bf16.gmra.mxu0 %v2751
      %v2875 = vpop.f32.mrf.mxu0
      %v2876 = vadd.f32 0.0, %v2875
      %v2877 = vpop.f32.mrf.mxu0
      %v2878 = vpop.f32.mrf.mxu0
      %v2879 = vadd.f32 0.0, %v2878
      %v2880 = vpop.f32.mrf.mxu0
      %2881 = vdwg.mxu0
      %v2882 = vadd.f32 %v2692, %v2852
      %v2883 = vadd.f32 %v2693, %v2855
      %v2884 = vadd.f32 %v2694, %v2860
      %v2885 = vadd.f32 %v2695, %v2863
      %v2886 = vadd.f32 %v2696, %v2868
      %v2887 = vadd.f32 %v2697, %v2871
      %v2888 = vadd.f32 %v2698, %v2876
      %v2889 = vadd.f32 %v2699, %v2879
      %v2890 = vld [vmem:[%s2509 + $0x2] sm:$0xf]
      %v2891 = vld [vmem:[%s2509 + $0xa] sm:$0xf]
      %v2892 = vld [vmem:[%s2509 + $0x12] sm:$0xf]
      %v2893 = vld [vmem:[%s2509 + $0x1a] sm:$0xf]
      %v2894 = vld [vmem:[%s2509 + $0x32] sm:$0xf]
      %v2895 = vld [vmem:[%s2509 + $0x3a] sm:$0xf]
      %v2896 = vld [vmem:[%s2509 + $0x42] sm:$0xf]
      %v2897 = vld [vmem:[%s2509 + $0x4a] sm:$0xf]
      %v2898 = vld [vmem:[%s2509 + $0x62] sm:$0xf]
      %v2899 = vld [vmem:[%s2509 + $0x6a] sm:$0xf]
      %v2900 = vld [vmem:[%s2509 + $0x72] sm:$0xf]
      %v2901 = vld [vmem:[%s2509 + $0x7a] sm:$0xf]
      %v2902 = vld [vmem:[%s2509 + $0x92] sm:$0xf]
      %v2903 = vld [vmem:[%s2509 + $0x9a] sm:$0xf]
      %v2904 = vld [vmem:[%s2509 + $0xa2] sm:$0xf]
      %v2905 = vld [vmem:[%s2509 + $0xaa] sm:$0xf]
      %v2922 = vcombine.low %v2890, %v2891
      %v2923 = vcombine.low %v2892, %v2893
      %v2924 = vcombine.low %v2894, %v2895
      %v2925 = vcombine.low %v2896, %v2897
      %v2926 = vcombine.low %v2898, %v2899
      %v2927 = vcombine.low %v2900, %v2901
      %v2928 = vcombine.low %v2902, %v2903
      %v2929 = vcombine.low %v2904, %v2905
      %v2938 = vpack.c.bf16 %v2923, %v2922
      %v2939 = vpack.c.bf16 %v2925, %v2924
      %v2940 = vpack.c.bf16 %v2927, %v2926
      %v2941 = vpack.c.bf16 %v2929, %v2928
      %s2942 = scalar_lea.vmem %s1, 896
      %v2943 = vld [vmem:[%s2942] sm:$0xf]
      %v2944 = vld [vmem:[%s2942 + $0x4] sm:$0xf]
      %v2945 = vld [vmem:[%s2942 + $0x8] sm:$0xf]
      %v2946 = vld [vmem:[%s2942 + $0xc] sm:$0xf]
      %v2947 = vld [vmem:[%s2942 + $0x10] sm:$0xf]
      %v2948 = vld [vmem:[%s2942 + $0x14] sm:$0xf]
      %v2949 = vld [vmem:[%s2942 + $0x18] sm:$0xf]
      %v2950 = vld [vmem:[%s2942 + $0x1c] sm:$0xf]
      %v2951 = vld [vmem:[%s2942 + $0x20] sm:$0xf]
      %v2952 = vld [vmem:[%s2942 + $0x24] sm:$0xf]
      %v2953 = vld [vmem:[%s2942 + $0x28] sm:$0xf]
      %v2954 = vld [vmem:[%s2942 + $0x2c] sm:$0xf]
      %v2955 = vld [vmem:[%s2942 + $0x30] sm:$0xf]
      %v2956 = vld [vmem:[%s2942 + $0x34] sm:$0xf]
      %v2957 = vld [vmem:[%s2942 + $0x38] sm:$0xf]
      %v2958 = vld [vmem:[%s2942 + $0x3c] sm:$0xf]
      %v2975 = vunpack.c.l.b16 %v2943
      %v2976 = vunpack.c.l.b16 %v2944
      %v2977 = vunpack.c.l.b16 %v2945
      %v2978 = vunpack.c.l.b16 %v2946
      %v2979 = vunpack.c.l.b16 %v2947
      %v2980 = vunpack.c.l.b16 %v2948
      %v2981 = vunpack.c.l.b16 %v2949
      %v2982 = vunpack.c.l.b16 %v2950
      %v2983 = vunpack.c.l.b16 %v2951
      %v2984 = vunpack.c.l.b16 %v2952
      %v2985 = vunpack.c.l.b16 %v2953
      %v2986 = vunpack.c.l.b16 %v2954
      %v2987 = vunpack.c.l.b16 %v2955
      %v2988 = vunpack.c.l.b16 %v2956
      %v2989 = vunpack.c.l.b16 %v2957
      %v2990 = vunpack.c.l.b16 %v2958
      %v2991 = vpack.c.b16 %v2976, %v2975
      %v2992 = vpack.c.b16 %v2978, %v2977
      %v2993 = vpack.c.b16 %v2980, %v2979
      %v2994 = vpack.c.b16 %v2982, %v2981
      %v2995 = vpack.c.b16 %v2984, %v2983
      %v2996 = vpack.c.b16 %v2986, %v2985
      %v2997 = vpack.c.b16 %v2988, %v2987
      %v2998 = vpack.c.b16 %v2990, %v2989
      %3007 = vmatprep.subr.bf16.mxu0 0
      %3008 = vmatpush1.bf16.msra.mxu0 %v2998
      %3009 = vmatprep.subr.bf16.mxu0 0
      %3010 = vmatpush1.bf16.msra.mxu0 %v2997
      %3011 = vmatprep.subr.bf16.mxu0 0
      %3012 = vmatpush1.bf16.msra.mxu0 %v2996
      %3013 = vmatprep.subr.bf16.mxu0 0
      %3014 = vmatpush1.bf16.msra.mxu0 %v2995
      %3015 = vmatprep.subr.bf16.mxu0 0
      %3016 = vmatpush1.bf16.msra.mxu0 %v2994
      %3017 = vmatprep.subr.bf16.mxu0 0
      %3018 = vmatpush1.bf16.msra.mxu0 %v2993
      %3019 = vmatprep.subr.bf16.mxu0 0
      %3020 = vmatpush1.bf16.msra.mxu0 %v2992
      %3021 = vmatprep.subr.bf16.mxu0 0
      %3022 = vmatpush1.bf16.msra.mxu0 %v2991
      %3023 = vmatprep.subr.bf16.mxu0 0
      %3024 = vmatpush2.bf16.msra.mxu0 0
      %3025 = vmatprep.subr.bf16.mxu0 0
      %3026 = vmatpush2.bf16.msra.mxu0 0
      %3027 = vmatprep.subr.bf16.mxu0 0
      %3028 = vmatpush2.bf16.msra.mxu0 0
      %3029 = vmatprep.subr.bf16.mxu0 0
      %3030 = vmatpush2.bf16.msra.mxu0 0
      %3031 = vmatprep.subr.bf16.mxu0 0
      %3032 = vmatpush2.bf16.msra.mxu0 0
      %3033 = vmatprep.subr.bf16.mxu0 0
      %3034 = vmatpush2.bf16.msra.mxu0 0
      %3035 = vmatprep.subr.bf16.mxu0 0
      %3036 = vmatpush2.bf16.msra.mxu0 0
      %3037 = vmatprep.subr.bf16.mxu0 0
      %3038 = vmatpush2.bf16.msra.mxu0 0
      %3039 = vmatprep.mubr.bf16.mxu0 0
      %3040 = vmatmul.mubr.bf16.gmra.mxu0 %v2938
      %v3041 = vpop.f32.mrf.mxu0
      %v3042 = vadd.f32 0.0, %v3041
      %v3043 = vpop.f32.mrf.mxu0
      %v3044 = vpop.f32.mrf.mxu0
      %v3045 = vadd.f32 0.0, %v3044
      %v3046 = vpop.f32.mrf.mxu0
      %3047 = vmatprep.mubr.bf16.mxu0 0
      %3048 = vmatmul.mubr.bf16.gmra.mxu0 %v2939
      %v3049 = vpop.f32.mrf.mxu0
      %v3050 = vadd.f32 0.0, %v3049
      %v3051 = vpop.f32.mrf.mxu0
      %v3052 = vpop.f32.mrf.mxu0
      %v3053 = vadd.f32 0.0, %v3052
      %v3054 = vpop.f32.mrf.mxu0
      %3055 = vmatprep.mubr.bf16.mxu0 0
      %3056 = vmatmul.mubr.bf16.gmra.mxu0 %v2940
      %v3057 = vpop.f32.mrf.mxu0
      %v3058 = vadd.f32 0.0, %v3057
      %v3059 = vpop.f32.mrf.mxu0
      %v3060 = vpop.f32.mrf.mxu0
      %v3061 = vadd.f32 0.0, %v3060
      %v3062 = vpop.f32.mrf.mxu0
      %3063 = vmatprep.mubr.bf16.mxu0 0
      %3064 = vmatmul.mubr.bf16.gmra.mxu0 %v2941
      %v3065 = vpop.f32.mrf.mxu0
      %v3066 = vadd.f32 0.0, %v3065
      %v3067 = vpop.f32.mrf.mxu0
      %v3068 = vpop.f32.mrf.mxu0
      %v3069 = vadd.f32 0.0, %v3068
      %v3070 = vpop.f32.mrf.mxu0
      %3071 = vdwg.mxu0
      %v3072 = vadd.f32 %v2882, %v3042
      %v3073 = vadd.f32 %v2883, %v3045
      %v3074 = vadd.f32 %v2884, %v3050
      %v3075 = vadd.f32 %v2885, %v3053
      %v3076 = vadd.f32 %v2886, %v3058
      %v3077 = vadd.f32 %v2887, %v3061
      %v3078 = vadd.f32 %v2888, %v3066
      %v3079 = vadd.f32 %v2889, %v3069
      %s3080 = scalar_lea.vmem %s230, 64
      %v3081 = vld [vmem:[%s3080] sm:$0xf]
      %v3082 = vld [vmem:[%s3080 + $0x8] sm:$0xf]
      %v3083 = vld [vmem:[%s3080 + $0x10] sm:$0xf]
      %v3084 = vld [vmem:[%s3080 + $0x18] sm:$0xf]
      %v3085 = vld [vmem:[%s3080 + $0x30] sm:$0xf]
      %v3086 = vld [vmem:[%s3080 + $0x38] sm:$0xf]
      %v3087 = vld [vmem:[%s3080 + $0x40] sm:$0xf]
      %v3088 = vld [vmem:[%s3080 + $0x48] sm:$0xf]
      %v3089 = vld [vmem:[%s3080 + $0x60] sm:$0xf]
      %v3090 = vld [vmem:[%s3080 + $0x68] sm:$0xf]
      %v3091 = vld [vmem:[%s3080 + $0x70] sm:$0xf]
      %v3092 = vld [vmem:[%s3080 + $0x78] sm:$0xf]
      %v3093 = vld [vmem:[%s3080 + $0x90] sm:$0xf]
      %v3094 = vld [vmem:[%s3080 + $0x98] sm:$0xf]
      %v3095 = vld [vmem:[%s3080 + $0xa0] sm:$0xf]
      %v3096 = vld [vmem:[%s3080 + $0xa8] sm:$0xf]
      %v3113 = vcombine.low %v3081, %v3082
      %v3114 = vcombine.low %v3083, %v3084
      %v3115 = vcombine.low %v3085, %v3086
      %v3116 = vcombine.low %v3087, %v3088
      %v3117 = vcombine.low %v3089, %v3090
      %v3118 = vcombine.low %v3091, %v3092
      %v3119 = vcombine.low %v3093, %v3094
      %v3120 = vcombine.low %v3095, %v3096
      %v3129 = vpack.c.bf16 %v3114, %v3113
      %v3130 = vpack.c.bf16 %v3116, %v3115
      %v3131 = vpack.c.bf16 %v3118, %v3117
      %v3132 = vpack.c.bf16 %v3120, %v3119
      %s3133 = scalar_lea.vmem %s1, 960
      %v3134 = vld [vmem:[%s3133] sm:$0xf]
      %v3135 = vld [vmem:[%s3133 + $0x4] sm:$0xf]
      %v3136 = vld [vmem:[%s3133 + $0x8] sm:$0xf]
      %v3137 = vld [vmem:[%s3133 + $0xc] sm:$0xf]
      %v3138 = vld [vmem:[%s3133 + $0x10] sm:$0xf]
      %v3139 = vld [vmem:[%s3133 + $0x14] sm:$0xf]
      %v3140 = vld [vmem:[%s3133 + $0x18] sm:$0xf]
      %v3141 = vld [vmem:[%s3133 + $0x1c] sm:$0xf]
      %v3142 = vld [vmem:[%s3133 + $0x20] sm:$0xf]
      %v3143 = vld [vmem:[%s3133 + $0x24] sm:$0xf]
      %v3144 = vld [vmem:[%s3133 + $0x28] sm:$0xf]
      %v3145 = vld [vmem:[%s3133 + $0x2c] sm:$0xf]
      %v3146 = vld [vmem:[%s3133 + $0x30] sm:$0xf]
      %v3147 = vld [vmem:[%s3133 + $0x34] sm:$0xf]
      %v3148 = vld [vmem:[%s3133 + $0x38] sm:$0xf]
      %v3149 = vld [vmem:[%s3133 + $0x3c] sm:$0xf]
      %v3166 = vunpack.c.l.b16 %v3134
      %v3167 = vunpack.c.l.b16 %v3135
      %v3168 = vunpack.c.l.b16 %v3136
      %v3169 = vunpack.c.l.b16 %v3137
      %v3170 = vunpack.c.l.b16 %v3138
      %v3171 = vunpack.c.l.b16 %v3139
      %v3172 = vunpack.c.l.b16 %v3140
      %v3173 = vunpack.c.l.b16 %v3141
      %v3174 = vunpack.c.l.b16 %v3142
      %v3175 = vunpack.c.l.b16 %v3143
      %v3176 = vunpack.c.l.b16 %v3144
      %v3177 = vunpack.c.l.b16 %v3145
      %v3178 = vunpack.c.l.b16 %v3146
      %v3179 = vunpack.c.l.b16 %v3147
      %v3180 = vunpack.c.l.b16 %v3148
      %v3181 = vunpack.c.l.b16 %v3149
      %v3182 = vpack.c.b16 %v3167, %v3166
      %v3183 = vpack.c.b16 %v3169, %v3168
      %v3184 = vpack.c.b16 %v3171, %v3170
      %v3185 = vpack.c.b16 %v3173, %v3172
      %v3186 = vpack.c.b16 %v3175, %v3174
      %v3187 = vpack.c.b16 %v3177, %v3176
      %v3188 = vpack.c.b16 %v3179, %v3178
      %v3189 = vpack.c.b16 %v3181, %v3180
      %3198 = vmatprep.subr.bf16.mxu0 0
      %3199 = vmatpush1.bf16.msra.mxu0 %v3189
      %3200 = vmatprep.subr.bf16.mxu0 0
      %3201 = vmatpush1.bf16.msra.mxu0 %v3188
      %3202 = vmatprep.subr.bf16.mxu0 0
      %3203 = vmatpush1.bf16.msra.mxu0 %v3187
      %3204 = vmatprep.subr.bf16.mxu0 0
      %3205 = vmatpush1.bf16.msra.mxu0 %v3186
      %3206 = vmatprep.subr.bf16.mxu0 0
      %3207 = vmatpush1.bf16.msra.mxu0 %v3185
      %3208 = vmatprep.subr.bf16.mxu0 0
      %3209 = vmatpush1.bf16.msra.mxu0 %v3184
      %3210 = vmatprep.subr.bf16.mxu0 0
      %3211 = vmatpush1.bf16.msra.mxu0 %v3183
      %3212 = vmatprep.subr.bf16.mxu0 0
      %3213 = vmatpush1.bf16.msra.mxu0 %v3182
      %3214 = vmatprep.subr.bf16.mxu0 0
      %3215 = vmatpush2.bf16.msra.mxu0 0
      %3216 = vmatprep.subr.bf16.mxu0 0
      %3217 = vmatpush2.bf16.msra.mxu0 0
      %3218 = vmatprep.subr.bf16.mxu0 0
      %3219 = vmatpush2.bf16.msra.mxu0 0
      %3220 = vmatprep.subr.bf16.mxu0 0
      %3221 = vmatpush2.bf16.msra.mxu0 0
      %3222 = vmatprep.subr.bf16.mxu0 0
      %3223 = vmatpush2.bf16.msra.mxu0 0
      %3224 = vmatprep.subr.bf16.mxu0 0
      %3225 = vmatpush2.bf16.msra.mxu0 0
      %3226 = vmatprep.subr.bf16.mxu0 0
      %3227 = vmatpush2.bf16.msra.mxu0 0
      %3228 = vmatprep.subr.bf16.mxu0 0
      %3229 = vmatpush2.bf16.msra.mxu0 0
      %3230 = vmatprep.mubr.bf16.mxu0 0
      %3231 = vmatmul.mubr.bf16.gmra.mxu0 %v3129
      %v3232 = vpop.f32.mrf.mxu0
      %v3233 = vadd.f32 0.0, %v3232
      %v3234 = vpop.f32.mrf.mxu0
      %v3235 = vpop.f32.mrf.mxu0
      %v3236 = vadd.f32 0.0, %v3235
      %v3237 = vpop.f32.mrf.mxu0
      %3238 = vmatprep.mubr.bf16.mxu0 0
      %3239 = vmatmul.mubr.bf16.gmra.mxu0 %v3130
      %v3240 = vpop.f32.mrf.mxu0
      %v3241 = vadd.f32 0.0, %v3240
      %v3242 = vpop.f32.mrf.mxu0
      %v3243 = vpop.f32.mrf.mxu0
      %v3244 = vadd.f32 0.0, %v3243
      %v3245 = vpop.f32.mrf.mxu0
      %3246 = vmatprep.mubr.bf16.mxu0 0
      %3247 = vmatmul.mubr.bf16.gmra.mxu0 %v3131
      %v3248 = vpop.f32.mrf.mxu0
      %v3249 = vadd.f32 0.0, %v3248
      %v3250 = vpop.f32.mrf.mxu0
      %v3251 = vpop.f32.mrf.mxu0
      %v3252 = vadd.f32 0.0, %v3251
      %v3253 = vpop.f32.mrf.mxu0
      %3254 = vmatprep.mubr.bf16.mxu0 0
      %3255 = vmatmul.mubr.bf16.gmra.mxu0 %v3132
      %v3256 = vpop.f32.mrf.mxu0
      %v3257 = vadd.f32 0.0, %v3256
      %v3258 = vpop.f32.mrf.mxu0
      %v3259 = vpop.f32.mrf.mxu0
      %v3260 = vadd.f32 0.0, %v3259
      %v3261 = vpop.f32.mrf.mxu0
      %3262 = vdwg.mxu0
      %v3263 = vadd.f32 %v3072, %v3233
      %v3264 = vadd.f32 %v3073, %v3236
      %v3265 = vadd.f32 %v3074, %v3241
      %v3266 = vadd.f32 %v3075, %v3244
      %v3267 = vadd.f32 %v3076, %v3249
      %v3268 = vadd.f32 %v3077, %v3252
      %v3269 = vadd.f32 %v3078, %v3257
      %v3270 = vadd.f32 %v3079, %v3260
      %v3271 = vld [vmem:[%s3080 + $0x1] sm:$0xf]
      %v3272 = vld [vmem:[%s3080 + $0x9] sm:$0xf]
      %v3273 = vld [vmem:[%s3080 + $0x11] sm:$0xf]
      %v3274 = vld [vmem:[%s3080 + $0x19] sm:$0xf]
      %v3275 = vld [vmem:[%s3080 + $0x31] sm:$0xf]
      %v3276 = vld [vmem:[%s3080 + $0x39] sm:$0xf]
      %v3277 = vld [vmem:[%s3080 + $0x41] sm:$0xf]
      %v3278 = vld [vmem:[%s3080 + $0x49] sm:$0xf]
      %v3279 = vld [vmem:[%s3080 + $0x61] sm:$0xf]
      %v3280 = vld [vmem:[%s3080 + $0x69] sm:$0xf]
      %v3281 = vld [vmem:[%s3080 + $0x71] sm:$0xf]
      %v3282 = vld [vmem:[%s3080 + $0x79] sm:$0xf]
      %v3283 = vld [vmem:[%s3080 + $0x91] sm:$0xf]
      %v3284 = vld [vmem:[%s3080 + $0x99] sm:$0xf]
      %v3285 = vld [vmem:[%s3080 + $0xa1] sm:$0xf]
      %v3286 = vld [vmem:[%s3080 + $0xa9] sm:$0xf]
      %v3303 = vcombine.low %v3271, %v3272
      %v3304 = vcombine.low %v3273, %v3274
      %v3305 = vcombine.low %v3275, %v3276
      %v3306 = vcombine.low %v3277, %v3278
      %v3307 = vcombine.low %v3279, %v3280
      %v3308 = vcombine.low %v3281, %v3282
      %v3309 = vcombine.low %v3283, %v3284
      %v3310 = vcombine.low %v3285, %v3286
      %v3319 = vpack.c.bf16 %v3304, %v3303
      %v3320 = vpack.c.bf16 %v3306, %v3305
      %v3321 = vpack.c.bf16 %v3308, %v3307
      %v3322 = vpack.c.bf16 %v3310, %v3309
      %s3323 = scalar_lea.vmem %s1, 1024
      %v3324 = vld [vmem:[%s3323] sm:$0xf]
      %v3325 = vld [vmem:[%s3323 + $0x4] sm:$0xf]
      %v3326 = vld [vmem:[%s3323 + $0x8] sm:$0xf]
      %v3327 = vld [vmem:[%s3323 + $0xc] sm:$0xf]
      %v3328 = vld [vmem:[%s3323 + $0x10] sm:$0xf]
      %v3329 = vld [vmem:[%s3323 + $0x14] sm:$0xf]
      %v3330 = vld [vmem:[%s3323 + $0x18] sm:$0xf]
      %v3331 = vld [vmem:[%s3323 + $0x1c] sm:$0xf]
      %v3332 = vld [vmem:[%s3323 + $0x20] sm:$0xf]
      %v3333 = vld [vmem:[%s3323 + $0x24] sm:$0xf]
      %v3334 = vld [vmem:[%s3323 + $0x28] sm:$0xf]
      %v3335 = vld [vmem:[%s3323 + $0x2c] sm:$0xf]
      %v3336 = vld [vmem:[%s3323 + $0x30] sm:$0xf]
      %v3337 = vld [vmem:[%s3323 + $0x34] sm:$0xf]
      %v3338 = vld [vmem:[%s3323 + $0x38] sm:$0xf]
      %v3339 = vld [vmem:[%s3323 + $0x3c] sm:$0xf]
      %v3356 = vunpack.c.l.b16 %v3324
      %v3357 = vunpack.c.l.b16 %v3325
      %v3358 = vunpack.c.l.b16 %v3326
      %v3359 = vunpack.c.l.b16 %v3327
      %v3360 = vunpack.c.l.b16 %v3328
      %v3361 = vunpack.c.l.b16 %v3329
      %v3362 = vunpack.c.l.b16 %v3330
      %v3363 = vunpack.c.l.b16 %v3331
      %v3364 = vunpack.c.l.b16 %v3332
      %v3365 = vunpack.c.l.b16 %v3333
      %v3366 = vunpack.c.l.b16 %v3334
      %v3367 = vunpack.c.l.b16 %v3335
      %v3368 = vunpack.c.l.b16 %v3336
      %v3369 = vunpack.c.l.b16 %v3337
      %v3370 = vunpack.c.l.b16 %v3338
      %v3371 = vunpack.c.l.b16 %v3339
      %v3372 = vpack.c.b16 %v3357, %v3356
      %v3373 = vpack.c.b16 %v3359, %v3358
      %v3374 = vpack.c.b16 %v3361, %v3360
      %v3375 = vpack.c.b16 %v3363, %v3362
      %v3376 = vpack.c.b16 %v3365, %v3364
      %v3377 = vpack.c.b16 %v3367, %v3366
      %v3378 = vpack.c.b16 %v3369, %v3368
      %v3379 = vpack.c.b16 %v3371, %v3370
      %3388 = vmatprep.subr.bf16.mxu0 0
      %3389 = vmatpush1.bf16.msra.mxu0 %v3379
      %3390 = vmatprep.subr.bf16.mxu0 0
      %3391 = vmatpush1.bf16.msra.mxu0 %v3378
      %3392 = vmatprep.subr.bf16.mxu0 0
      %3393 = vmatpush1.bf16.msra.mxu0 %v3377
      %3394 = vmatprep.subr.bf16.mxu0 0
      %3395 = vmatpush1.bf16.msra.mxu0 %v3376
      %3396 = vmatprep.subr.bf16.mxu0 0
      %3397 = vmatpush1.bf16.msra.mxu0 %v3375
      %3398 = vmatprep.subr.bf16.mxu0 0
      %3399 = vmatpush1.bf16.msra.mxu0 %v3374
      %3400 = vmatprep.subr.bf16.mxu0 0
      %3401 = vmatpush1.bf16.msra.mxu0 %v3373
      %3402 = vmatprep.subr.bf16.mxu0 0
      %3403 = vmatpush1.bf16.msra.mxu0 %v3372
      %3404 = vmatprep.subr.bf16.mxu0 0
      %3405 = vmatpush2.bf16.msra.mxu0 0
      %3406 = vmatprep.subr.bf16.mxu0 0
      %3407 = vmatpush2.bf16.msra.mxu0 0
      %3408 = vmatprep.subr.bf16.mxu0 0
      %3409 = vmatpush2.bf16.msra.mxu0 0
      %3410 = vmatprep.subr.bf16.mxu0 0
      %3411 = vmatpush2.bf16.msra.mxu0 0
      %3412 = vmatprep.subr.bf16.mxu0 0
      %3413 = vmatpush2.bf16.msra.mxu0 0
      %3414 = vmatprep.subr.bf16.mxu0 0
      %3415 = vmatpush2.bf16.msra.mxu0 0
      %3416 = vmatprep.subr.bf16.mxu0 0
      %3417 = vmatpush2.bf16.msra.mxu0 0
      %3418 = vmatprep.subr.bf16.mxu0 0
      %3419 = vmatpush2.bf16.msra.mxu0 0
      %3420 = vmatprep.mubr.bf16.mxu0 0
      %3421 = vmatmul.mubr.bf16.gmra.mxu0 %v3319
      %v3422 = vpop.f32.mrf.mxu0
      %v3423 = vadd.f32 0.0, %v3422
      %v3424 = vpop.f32.mrf.mxu0
      %v3425 = vpop.f32.mrf.mxu0
      %v3426 = vadd.f32 0.0, %v3425
      %v3427 = vpop.f32.mrf.mxu0
      %3428 = vmatprep.mubr.bf16.mxu0 0
      %3429 = vmatmul.mubr.bf16.gmra.mxu0 %v3320
      %v3430 = vpop.f32.mrf.mxu0
      %v3431 = vadd.f32 0.0, %v3430
      %v3432 = vpop.f32.mrf.mxu0
      %v3433 = vpop.f32.mrf.mxu0
      %v3434 = vadd.f32 0.0, %v3433
      %v3435 = vpop.f32.mrf.mxu0
      %3436 = vmatprep.mubr.bf16.mxu0 0
      %3437 = vmatmul.mubr.bf16.gmra.mxu0 %v3321
      %v3438 = vpop.f32.mrf.mxu0
      %v3439 = vadd.f32 0.0, %v3438
      %v3440 = vpop.f32.mrf.mxu0
      %v3441 = vpop.f32.mrf.mxu0
      %v3442 = vadd.f32 0.0, %v3441
      %v3443 = vpop.f32.mrf.mxu0
      %3444 = vmatprep.mubr.bf16.mxu0 0
      %3445 = vmatmul.mubr.bf16.gmra.mxu0 %v3322
      %v3446 = vpop.f32.mrf.mxu0
      %v3447 = vadd.f32 0.0, %v3446
      %v3448 = vpop.f32.mrf.mxu0
      %v3449 = vpop.f32.mrf.mxu0
      %v3450 = vadd.f32 0.0, %v3449
      %v3451 = vpop.f32.mrf.mxu0
      %3452 = vdwg.mxu0
      %v3453 = vadd.f32 %v3263, %v3423
      %v3454 = vadd.f32 %v3264, %v3426
      %v3455 = vadd.f32 %v3265, %v3431
      %v3456 = vadd.f32 %v3266, %v3434
      %v3457 = vadd.f32 %v3267, %v3439
      %v3458 = vadd.f32 %v3268, %v3442
      %v3459 = vadd.f32 %v3269, %v3447
      %v3460 = vadd.f32 %v3270, %v3450
      %v3461 = vld [vmem:[%s3080 + $0x2] sm:$0xf]
      %v3462 = vld [vmem:[%s3080 + $0xa] sm:$0xf]
      %v3463 = vld [vmem:[%s3080 + $0x12] sm:$0xf]
      %v3464 = vld [vmem:[%s3080 + $0x1a] sm:$0xf]
      %v3465 = vld [vmem:[%s3080 + $0x32] sm:$0xf]
      %v3466 = vld [vmem:[%s3080 + $0x3a] sm:$0xf]
      %v3467 = vld [vmem:[%s3080 + $0x42] sm:$0xf]
      %v3468 = vld [vmem:[%s3080 + $0x4a] sm:$0xf]
      %v3469 = vld [vmem:[%s3080 + $0x62] sm:$0xf]
      %v3470 = vld [vmem:[%s3080 + $0x6a] sm:$0xf]
      %v3471 = vld [vmem:[%s3080 + $0x72] sm:$0xf]
      %v3472 = vld [vmem:[%s3080 + $0x7a] sm:$0xf]
      %v3473 = vld [vmem:[%s3080 + $0x92] sm:$0xf]
      %v3474 = vld [vmem:[%s3080 + $0x9a] sm:$0xf]
      %v3475 = vld [vmem:[%s3080 + $0xa2] sm:$0xf]
      %v3476 = vld [vmem:[%s3080 + $0xaa] sm:$0xf]
      %v3493 = vcombine.low %v3461, %v3462
      %v3494 = vcombine.low %v3463, %v3464
      %v3495 = vcombine.low %v3465, %v3466
      %v3496 = vcombine.low %v3467, %v3468
      %v3497 = vcombine.low %v3469, %v3470
      %v3498 = vcombine.low %v3471, %v3472
      %v3499 = vcombine.low %v3473, %v3474
      %v3500 = vcombine.low %v3475, %v3476
      %v3509 = vpack.c.bf16 %v3494, %v3493
      %v3510 = vpack.c.bf16 %v3496, %v3495
      %v3511 = vpack.c.bf16 %v3498, %v3497
      %v3512 = vpack.c.bf16 %v3500, %v3499
      %s3513 = scalar_lea.vmem %s1, 1088
      %v3514 = vld [vmem:[%s3513] sm:$0xf]
      %v3515 = vld [vmem:[%s3513 + $0x4] sm:$0xf]
      %v3516 = vld [vmem:[%s3513 + $0x8] sm:$0xf]
      %v3517 = vld [vmem:[%s3513 + $0xc] sm:$0xf]
      %v3518 = vld [vmem:[%s3513 + $0x10] sm:$0xf]
      %v3519 = vld [vmem:[%s3513 + $0x14] sm:$0xf]
      %v3520 = vld [vmem:[%s3513 + $0x18] sm:$0xf]
      %v3521 = vld [vmem:[%s3513 + $0x1c] sm:$0xf]
      %v3522 = vld [vmem:[%s3513 + $0x20] sm:$0xf]
      %v3523 = vld [vmem:[%s3513 + $0x24] sm:$0xf]
      %v3524 = vld [vmem:[%s3513 + $0x28] sm:$0xf]
      %v3525 = vld [vmem:[%s3513 + $0x2c] sm:$0xf]
      %v3526 = vld [vmem:[%s3513 + $0x30] sm:$0xf]
      %v3527 = vld [vmem:[%s3513 + $0x34] sm:$0xf]
      %v3528 = vld [vmem:[%s3513 + $0x38] sm:$0xf]
      %v3529 = vld [vmem:[%s3513 + $0x3c] sm:$0xf]
      %v3546 = vunpack.c.l.b16 %v3514
      %v3547 = vunpack.c.l.b16 %v3515
      %v3548 = vunpack.c.l.b16 %v3516
      %v3549 = vunpack.c.l.b16 %v3517
      %v3550 = vunpack.c.l.b16 %v3518
      %v3551 = vunpack.c.l.b16 %v3519
      %v3552 = vunpack.c.l.b16 %v3520
      %v3553 = vunpack.c.l.b16 %v3521
      %v3554 = vunpack.c.l.b16 %v3522
      %v3555 = vunpack.c.l.b16 %v3523
      %v3556 = vunpack.c.l.b16 %v3524
      %v3557 = vunpack.c.l.b16 %v3525
      %v3558 = vunpack.c.l.b16 %v3526
      %v3559 = vunpack.c.l.b16 %v3527
      %v3560 = vunpack.c.l.b16 %v3528
      %v3561 = vunpack.c.l.b16 %v3529
      %v3562 = vpack.c.b16 %v3547, %v3546
      %v3563 = vpack.c.b16 %v3549, %v3548
      %v3564 = vpack.c.b16 %v3551, %v3550
      %v3565 = vpack.c.b16 %v3553, %v3552
      %v3566 = vpack.c.b16 %v3555, %v3554
      %v3567 = vpack.c.b16 %v3557, %v3556
      %v3568 = vpack.c.b16 %v3559, %v3558
      %v3569 = vpack.c.b16 %v3561, %v3560
      %3578 = vmatprep.subr.bf16.mxu0 0
      %3579 = vmatpush1.bf16.msra.mxu0 %v3569
      %3580 = vmatprep.subr.bf16.mxu0 0
      %3581 = vmatpush1.bf16.msra.mxu0 %v3568
      %3582 = vmatprep.subr.bf16.mxu0 0
      %3583 = vmatpush1.bf16.msra.mxu0 %v3567
      %3584 = vmatprep.subr.bf16.mxu0 0
      %3585 = vmatpush1.bf16.msra.mxu0 %v3566
      %3586 = vmatprep.subr.bf16.mxu0 0
      %3587 = vmatpush1.bf16.msra.mxu0 %v3565
      %3588 = vmatprep.subr.bf16.mxu0 0
      %3589 = vmatpush1.bf16.msra.mxu0 %v3564
      %3590 = vmatprep.subr.bf16.mxu0 0
      %3591 = vmatpush1.bf16.msra.mxu0 %v3563
      %3592 = vmatprep.subr.bf16.mxu0 0
      %3593 = vmatpush1.bf16.msra.mxu0 %v3562
      %3594 = vmatprep.subr.bf16.mxu0 0
      %3595 = vmatpush2.bf16.msra.mxu0 0
      %3596 = vmatprep.subr.bf16.mxu0 0
      %3597 = vmatpush2.bf16.msra.mxu0 0
      %3598 = vmatprep.subr.bf16.mxu0 0
      %3599 = vmatpush2.bf16.msra.mxu0 0
      %3600 = vmatprep.subr.bf16.mxu0 0
      %3601 = vmatpush2.bf16.msra.mxu0 0
      %3602 = vmatprep.subr.bf16.mxu0 0
      %3603 = vmatpush2.bf16.msra.mxu0 0
      %3604 = vmatprep.subr.bf16.mxu0 0
      %3605 = vmatpush2.bf16.msra.mxu0 0
      %3606 = vmatprep.subr.bf16.mxu0 0
      %3607 = vmatpush2.bf16.msra.mxu0 0
      %3608 = vmatprep.subr.bf16.mxu0 0
      %3609 = vmatpush2.bf16.msra.mxu0 0
      %3610 = vmatprep.mubr.bf16.mxu0 0
      %3611 = vmatmul.mubr.bf16.gmra.mxu0 %v3509
      %v3612 = vpop.f32.mrf.mxu0
      %v3613 = vadd.f32 0.0, %v3612
      %v3614 = vpop.f32.mrf.mxu0
      %v3615 = vpop.f32.mrf.mxu0
      %v3616 = vadd.f32 0.0, %v3615
      %v3617 = vpop.f32.mrf.mxu0
      %3618 = vmatprep.mubr.bf16.mxu0 0
      %3619 = vmatmul.mubr.bf16.gmra.mxu0 %v3510
      %v3620 = vpop.f32.mrf.mxu0
      %v3621 = vadd.f32 0.0, %v3620
      %v3622 = vpop.f32.mrf.mxu0
      %v3623 = vpop.f32.mrf.mxu0
      %v3624 = vadd.f32 0.0, %v3623
      %v3625 = vpop.f32.mrf.mxu0
      %3626 = vmatprep.mubr.bf16.mxu0 0
      %3627 = vmatmul.mubr.bf16.gmra.mxu0 %v3511
      %v3628 = vpop.f32.mrf.mxu0
      %v3629 = vadd.f32 0.0, %v3628
      %v3630 = vpop.f32.mrf.mxu0
      %v3631 = vpop.f32.mrf.mxu0
      %v3632 = vadd.f32 0.0, %v3631
      %v3633 = vpop.f32.mrf.mxu0
      %3634 = vmatprep.mubr.bf16.mxu0 0
      %3635 = vmatmul.mubr.bf16.gmra.mxu0 %v3512
      %v3636 = vpop.f32.mrf.mxu0
      %v3637 = vadd.f32 0.0, %v3636
      %v3638 = vpop.f32.mrf.mxu0
      %v3639 = vpop.f32.mrf.mxu0
      %v3640 = vadd.f32 0.0, %v3639
      %v3641 = vpop.f32.mrf.mxu0
      %3642 = vdwg.mxu0
      %v3643 = vadd.f32 %v3453, %v3613
      %v3644 = vadd.f32 %v3454, %v3616
      %v3645 = vadd.f32 %v3455, %v3621
      %v3646 = vadd.f32 %v3456, %v3624
      %v3647 = vadd.f32 %v3457, %v3629
      %v3648 = vadd.f32 %v3458, %v3632
      %v3649 = vadd.f32 %v3459, %v3637
      %v3650 = vadd.f32 %v3460, %v3640
      %s3651 = scalar_lea.vmem %s230, 96
      %v3652 = vld [vmem:[%s3651] sm:$0xf]
      %v3653 = vld [vmem:[%s3651 + $0x8] sm:$0xf]
      %v3654 = vld [vmem:[%s3651 + $0x10] sm:$0xf]
      %v3655 = vld [vmem:[%s3651 + $0x18] sm:$0xf]
      %v3656 = vld [vmem:[%s3651 + $0x30] sm:$0xf]
      %v3657 = vld [vmem:[%s3651 + $0x38] sm:$0xf]
      %v3658 = vld [vmem:[%s3651 + $0x40] sm:$0xf]
      %v3659 = vld [vmem:[%s3651 + $0x48] sm:$0xf]
      %v3660 = vld [vmem:[%s3651 + $0x60] sm:$0xf]
      %v3661 = vld [vmem:[%s3651 + $0x68] sm:$0xf]
      %v3662 = vld [vmem:[%s3651 + $0x70] sm:$0xf]
      %v3663 = vld [vmem:[%s3651 + $0x78] sm:$0xf]
      %v3664 = vld [vmem:[%s3651 + $0x90] sm:$0xf]
      %v3665 = vld [vmem:[%s3651 + $0x98] sm:$0xf]
      %v3666 = vld [vmem:[%s3651 + $0xa0] sm:$0xf]
      %v3667 = vld [vmem:[%s3651 + $0xa8] sm:$0xf]
      %v3684 = vcombine.low %v3652, %v3653
      %v3685 = vcombine.low %v3654, %v3655
      %v3686 = vcombine.low %v3656, %v3657
      %v3687 = vcombine.low %v3658, %v3659
      %v3688 = vcombine.low %v3660, %v3661
      %v3689 = vcombine.low %v3662, %v3663
      %v3690 = vcombine.low %v3664, %v3665
      %v3691 = vcombine.low %v3666, %v3667
      %v3700 = vpack.c.bf16 %v3685, %v3684
      %v3701 = vpack.c.bf16 %v3687, %v3686
      %v3702 = vpack.c.bf16 %v3689, %v3688
      %v3703 = vpack.c.bf16 %v3691, %v3690
      %s3704 = scalar_lea.vmem %s1, 1152
      %v3705 = vld [vmem:[%s3704] sm:$0xf]
      %v3706 = vld [vmem:[%s3704 + $0x4] sm:$0xf]
      %v3707 = vld [vmem:[%s3704 + $0x8] sm:$0xf]
      %v3708 = vld [vmem:[%s3704 + $0xc] sm:$0xf]
      %v3709 = vld [vmem:[%s3704 + $0x10] sm:$0xf]
      %v3710 = vld [vmem:[%s3704 + $0x14] sm:$0xf]
      %v3711 = vld [vmem:[%s3704 + $0x18] sm:$0xf]
      %v3712 = vld [vmem:[%s3704 + $0x1c] sm:$0xf]
      %v3713 = vld [vmem:[%s3704 + $0x20] sm:$0xf]
      %v3714 = vld [vmem:[%s3704 + $0x24] sm:$0xf]
      %v3715 = vld [vmem:[%s3704 + $0x28] sm:$0xf]
      %v3716 = vld [vmem:[%s3704 + $0x2c] sm:$0xf]
      %v3717 = vld [vmem:[%s3704 + $0x30] sm:$0xf]
      %v3718 = vld [vmem:[%s3704 + $0x34] sm:$0xf]
      %v3719 = vld [vmem:[%s3704 + $0x38] sm:$0xf]
      %v3720 = vld [vmem:[%s3704 + $0x3c] sm:$0xf]
      %v3737 = vunpack.c.l.b16 %v3705
      %v3738 = vunpack.c.l.b16 %v3706
      %v3739 = vunpack.c.l.b16 %v3707
      %v3740 = vunpack.c.l.b16 %v3708
      %v3741 = vunpack.c.l.b16 %v3709
      %v3742 = vunpack.c.l.b16 %v3710
      %v3743 = vunpack.c.l.b16 %v3711
      %v3744 = vunpack.c.l.b16 %v3712
      %v3745 = vunpack.c.l.b16 %v3713
      %v3746 = vunpack.c.l.b16 %v3714
      %v3747 = vunpack.c.l.b16 %v3715
      %v3748 = vunpack.c.l.b16 %v3716
      %v3749 = vunpack.c.l.b16 %v3717
      %v3750 = vunpack.c.l.b16 %v3718
      %v3751 = vunpack.c.l.b16 %v3719
      %v3752 = vunpack.c.l.b16 %v3720
      %v3753 = vpack.c.b16 %v3738, %v3737
      %v3754 = vpack.c.b16 %v3740, %v3739
      %v3755 = vpack.c.b16 %v3742, %v3741
      %v3756 = vpack.c.b16 %v3744, %v3743
      %v3757 = vpack.c.b16 %v3746, %v3745
      %v3758 = vpack.c.b16 %v3748, %v3747
      %v3759 = vpack.c.b16 %v3750, %v3749
      %v3760 = vpack.c.b16 %v3752, %v3751
      %3769 = vmatprep.subr.bf16.mxu0 0
      %3770 = vmatpush1.bf16.msra.mxu0 %v3760
      %3771 = vmatprep.subr.bf16.mxu0 0
      %3772 = vmatpush1.bf16.msra.mxu0 %v3759
      %3773 = vmatprep.subr.bf16.mxu0 0
      %3774 = vmatpush1.bf16.msra.mxu0 %v3758
      %3775 = vmatprep.subr.bf16.mxu0 0
      %3776 = vmatpush1.bf16.msra.mxu0 %v3757
      %3777 = vmatprep.subr.bf16.mxu0 0
      %3778 = vmatpush1.bf16.msra.mxu0 %v3756
      %3779 = vmatprep.subr.bf16.mxu0 0
      %3780 = vmatpush1.bf16.msra.mxu0 %v3755
      %3781 = vmatprep.subr.bf16.mxu0 0
      %3782 = vmatpush1.bf16.msra.mxu0 %v3754
      %3783 = vmatprep.subr.bf16.mxu0 0
      %3784 = vmatpush1.bf16.msra.mxu0 %v3753
      %3785 = vmatprep.subr.bf16.mxu0 0
      %3786 = vmatpush2.bf16.msra.mxu0 0
      %3787 = vmatprep.subr.bf16.mxu0 0
      %3788 = vmatpush2.bf16.msra.mxu0 0
      %3789 = vmatprep.subr.bf16.mxu0 0
      %3790 = vmatpush2.bf16.msra.mxu0 0
      %3791 = vmatprep.subr.bf16.mxu0 0
      %3792 = vmatpush2.bf16.msra.mxu0 0
      %3793 = vmatprep.subr.bf16.mxu0 0
      %3794 = vmatpush2.bf16.msra.mxu0 0
      %3795 = vmatprep.subr.bf16.mxu0 0
      %3796 = vmatpush2.bf16.msra.mxu0 0
      %3797 = vmatprep.subr.bf16.mxu0 0
      %3798 = vmatpush2.bf16.msra.mxu0 0
      %3799 = vmatprep.subr.bf16.mxu0 0
      %3800 = vmatpush2.bf16.msra.mxu0 0
      %3801 = vmatprep.mubr.bf16.mxu0 0
      %3802 = vmatmul.mubr.bf16.gmra.mxu0 %v3700
      %v3803 = vpop.f32.mrf.mxu0
      %v3804 = vadd.f32 0.0, %v3803
      %v3805 = vpop.f32.mrf.mxu0
      %v3806 = vpop.f32.mrf.mxu0
      %v3807 = vadd.f32 0.0, %v3806
      %v3808 = vpop.f32.mrf.mxu0
      %3809 = vmatprep.mubr.bf16.mxu0 0
      %3810 = vmatmul.mubr.bf16.gmra.mxu0 %v3701
      %v3811 = vpop.f32.mrf.mxu0
      %v3812 = vadd.f32 0.0, %v3811
      %v3813 = vpop.f32.mrf.mxu0
      %v3814 = vpop.f32.mrf.mxu0
      %v3815 = vadd.f32 0.0, %v3814
      %v3816 = vpop.f32.mrf.mxu0
      %3817 = vmatprep.mubr.bf16.mxu0 0
      %3818 = vmatmul.mubr.bf16.gmra.mxu0 %v3702
      %v3819 = vpop.f32.mrf.mxu0
      %v3820 = vadd.f32 0.0, %v3819
      %v3821 = vpop.f32.mrf.mxu0
      %v3822 = vpop.f32.mrf.mxu0
      %v3823 = vadd.f32 0.0, %v3822
      %v3824 = vpop.f32.mrf.mxu0
      %3825 = vmatprep.mubr.bf16.mxu0 0
      %3826 = vmatmul.mubr.bf16.gmra.mxu0 %v3703
      %v3827 = vpop.f32.mrf.mxu0
      %v3828 = vadd.f32 0.0, %v3827
      %v3829 = vpop.f32.mrf.mxu0
      %v3830 = vpop.f32.mrf.mxu0
      %v3831 = vadd.f32 0.0, %v3830
      %v3832 = vpop.f32.mrf.mxu0
      %3833 = vdwg.mxu0
      %v3834 = vadd.f32 %v3643, %v3804
      %v3835 = vadd.f32 %v3644, %v3807
      %v3836 = vadd.f32 %v3645, %v3812
      %v3837 = vadd.f32 %v3646, %v3815
      %v3838 = vadd.f32 %v3647, %v3820
      %v3839 = vadd.f32 %v3648, %v3823
      %v3840 = vadd.f32 %v3649, %v3828
      %v3841 = vadd.f32 %v3650, %v3831
      %v3842 = vld [vmem:[%s3651 + $0x1] sm:$0xf]
      %v3843 = vld [vmem:[%s3651 + $0x9] sm:$0xf]
      %v3844 = vld [vmem:[%s3651 + $0x11] sm:$0xf]
      %v3845 = vld [vmem:[%s3651 + $0x19] sm:$0xf]
      %v3846 = vld [vmem:[%s3651 + $0x31] sm:$0xf]
      %v3847 = vld [vmem:[%s3651 + $0x39] sm:$0xf]
      %v3848 = vld [vmem:[%s3651 + $0x41] sm:$0xf]
      %v3849 = vld [vmem:[%s3651 + $0x49] sm:$0xf]
      %v3850 = vld [vmem:[%s3651 + $0x61] sm:$0xf]
      %v3851 = vld [vmem:[%s3651 + $0x69] sm:$0xf]
      %v3852 = vld [vmem:[%s3651 + $0x71] sm:$0xf]
      %v3853 = vld [vmem:[%s3651 + $0x79] sm:$0xf]
      %v3854 = vld [vmem:[%s3651 + $0x91] sm:$0xf]
      %v3855 = vld [vmem:[%s3651 + $0x99] sm:$0xf]
      %v3856 = vld [vmem:[%s3651 + $0xa1] sm:$0xf]
      %v3857 = vld [vmem:[%s3651 + $0xa9] sm:$0xf]
      %v3874 = vcombine.low %v3842, %v3843
      %v3875 = vcombine.low %v3844, %v3845
      %v3876 = vcombine.low %v3846, %v3847
      %v3877 = vcombine.low %v3848, %v3849
      %v3878 = vcombine.low %v3850, %v3851
      %v3879 = vcombine.low %v3852, %v3853
      %v3880 = vcombine.low %v3854, %v3855
      %v3881 = vcombine.low %v3856, %v3857
      %v3890 = vpack.c.bf16 %v3875, %v3874
      %v3891 = vpack.c.bf16 %v3877, %v3876
      %v3892 = vpack.c.bf16 %v3879, %v3878
      %v3893 = vpack.c.bf16 %v3881, %v3880
      %s3894 = scalar_lea.vmem %s1, 1216
      %v3895 = vld [vmem:[%s3894] sm:$0xf]
      %v3896 = vld [vmem:[%s3894 + $0x4] sm:$0xf]
      %v3897 = vld [vmem:[%s3894 + $0x8] sm:$0xf]
      %v3898 = vld [vmem:[%s3894 + $0xc] sm:$0xf]
      %v3899 = vld [vmem:[%s3894 + $0x10] sm:$0xf]
      %v3900 = vld [vmem:[%s3894 + $0x14] sm:$0xf]
      %v3901 = vld [vmem:[%s3894 + $0x18] sm:$0xf]
      %v3902 = vld [vmem:[%s3894 + $0x1c] sm:$0xf]
      %v3903 = vld [vmem:[%s3894 + $0x20] sm:$0xf]
      %v3904 = vld [vmem:[%s3894 + $0x24] sm:$0xf]
      %v3905 = vld [vmem:[%s3894 + $0x28] sm:$0xf]
      %v3906 = vld [vmem:[%s3894 + $0x2c] sm:$0xf]
      %v3907 = vld [vmem:[%s3894 + $0x30] sm:$0xf]
      %v3908 = vld [vmem:[%s3894 + $0x34] sm:$0xf]
      %v3909 = vld [vmem:[%s3894 + $0x38] sm:$0xf]
      %v3910 = vld [vmem:[%s3894 + $0x3c] sm:$0xf]
      %v3927 = vunpack.c.l.b16 %v3895
      %v3928 = vunpack.c.l.b16 %v3896
      %v3929 = vunpack.c.l.b16 %v3897
      %v3930 = vunpack.c.l.b16 %v3898
      %v3931 = vunpack.c.l.b16 %v3899
      %v3932 = vunpack.c.l.b16 %v3900
      %v3933 = vunpack.c.l.b16 %v3901
      %v3934 = vunpack.c.l.b16 %v3902
      %v3935 = vunpack.c.l.b16 %v3903
      %v3936 = vunpack.c.l.b16 %v3904
      %v3937 = vunpack.c.l.b16 %v3905
      %v3938 = vunpack.c.l.b16 %v3906
      %v3939 = vunpack.c.l.b16 %v3907
      %v3940 = vunpack.c.l.b16 %v3908
      %v3941 = vunpack.c.l.b16 %v3909
      %v3942 = vunpack.c.l.b16 %v3910
      %v3943 = vpack.c.b16 %v3928, %v3927
      %v3944 = vpack.c.b16 %v3930, %v3929
      %v3945 = vpack.c.b16 %v3932, %v3931
      %v3946 = vpack.c.b16 %v3934, %v3933
      %v3947 = vpack.c.b16 %v3936, %v3935
      %v3948 = vpack.c.b16 %v3938, %v3937
      %v3949 = vpack.c.b16 %v3940, %v3939
      %v3950 = vpack.c.b16 %v3942, %v3941
      %3959 = vmatprep.subr.bf16.mxu0 0
      %3960 = vmatpush1.bf16.msra.mxu0 %v3950
      %3961 = vmatprep.subr.bf16.mxu0 0
      %3962 = vmatpush1.bf16.msra.mxu0 %v3949
      %3963 = vmatprep.subr.bf16.mxu0 0
      %3964 = vmatpush1.bf16.msra.mxu0 %v3948
      %3965 = vmatprep.subr.bf16.mxu0 0
      %3966 = vmatpush1.bf16.msra.mxu0 %v3947
      %3967 = vmatprep.subr.bf16.mxu0 0
      %3968 = vmatpush1.bf16.msra.mxu0 %v3946
      %3969 = vmatprep.subr.bf16.mxu0 0
      %3970 = vmatpush1.bf16.msra.mxu0 %v3945
      %3971 = vmatprep.subr.bf16.mxu0 0
      %3972 = vmatpush1.bf16.msra.mxu0 %v3944
      %3973 = vmatprep.subr.bf16.mxu0 0
      %3974 = vmatpush1.bf16.msra.mxu0 %v3943
      %3975 = vmatprep.subr.bf16.mxu0 0
      %3976 = vmatpush2.bf16.msra.mxu0 0
      %3977 = vmatprep.subr.bf16.mxu0 0
      %3978 = vmatpush2.bf16.msra.mxu0 0
      %3979 = vmatprep.subr.bf16.mxu0 0
      %3980 = vmatpush2.bf16.msra.mxu0 0
      %3981 = vmatprep.subr.bf16.mxu0 0
      %3982 = vmatpush2.bf16.msra.mxu0 0
      %3983 = vmatprep.subr.bf16.mxu0 0
      %3984 = vmatpush2.bf16.msra.mxu0 0
      %3985 = vmatprep.subr.bf16.mxu0 0
      %3986 = vmatpush2.bf16.msra.mxu0 0
      %3987 = vmatprep.subr.bf16.mxu0 0
      %3988 = vmatpush2.bf16.msra.mxu0 0
      %3989 = vmatprep.subr.bf16.mxu0 0
      %3990 = vmatpush2.bf16.msra.mxu0 0
      %3991 = vmatprep.mubr.bf16.mxu0 0
      %3992 = vmatmul.mubr.bf16.gmra.mxu0 %v3890
      %v3993 = vpop.f32.mrf.mxu0
      %v3994 = vadd.f32 0.0, %v3993
      %v3995 = vpop.f32.mrf.mxu0
      %v3996 = vpop.f32.mrf.mxu0
      %v3997 = vadd.f32 0.0, %v3996
      %v3998 = vpop.f32.mrf.mxu0
      %3999 = vmatprep.mubr.bf16.mxu0 0
      %4000 = vmatmul.mubr.bf16.gmra.mxu0 %v3891
      %v4001 = vpop.f32.mrf.mxu0
      %v4002 = vadd.f32 0.0, %v4001
      %v4003 = vpop.f32.mrf.mxu0
      %v4004 = vpop.f32.mrf.mxu0
      %v4005 = vadd.f32 0.0, %v4004
      %v4006 = vpop.f32.mrf.mxu0
      %4007 = vmatprep.mubr.bf16.mxu0 0
      %4008 = vmatmul.mubr.bf16.gmra.mxu0 %v3892
      %v4009 = vpop.f32.mrf.mxu0
      %v4010 = vadd.f32 0.0, %v4009
      %v4011 = vpop.f32.mrf.mxu0
      %v4012 = vpop.f32.mrf.mxu0
      %v4013 = vadd.f32 0.0, %v4012
      %v4014 = vpop.f32.mrf.mxu0
      %4015 = vmatprep.mubr.bf16.mxu0 0
      %4016 = vmatmul.mubr.bf16.gmra.mxu0 %v3893
      %v4017 = vpop.f32.mrf.mxu0
      %v4018 = vadd.f32 0.0, %v4017
      %v4019 = vpop.f32.mrf.mxu0
      %v4020 = vpop.f32.mrf.mxu0
      %v4021 = vadd.f32 0.0, %v4020
      %v4022 = vpop.f32.mrf.mxu0
      %4023 = vdwg.mxu0
      %v4024 = vadd.f32 %v3834, %v3994
      %v4025 = vadd.f32 %v3835, %v3997
      %v4026 = vadd.f32 %v3836, %v4002
      %v4027 = vadd.f32 %v3837, %v4005
      %v4028 = vadd.f32 %v3838, %v4010
      %v4029 = vadd.f32 %v3839, %v4013
      %v4030 = vadd.f32 %v3840, %v4018
      %v4031 = vadd.f32 %v3841, %v4021
      %v4032 = vld [vmem:[%s3651 + $0x2] sm:$0xf]
      %v4033 = vld [vmem:[%s3651 + $0xa] sm:$0xf]
      %v4034 = vld [vmem:[%s3651 + $0x12] sm:$0xf]
      %v4035 = vld [vmem:[%s3651 + $0x1a] sm:$0xf]
      %v4036 = vld [vmem:[%s3651 + $0x32] sm:$0xf]
      %v4037 = vld [vmem:[%s3651 + $0x3a] sm:$0xf]
      %v4038 = vld [vmem:[%s3651 + $0x42] sm:$0xf]
      %v4039 = vld [vmem:[%s3651 + $0x4a] sm:$0xf]
      %v4040 = vld [vmem:[%s3651 + $0x62] sm:$0xf]
      %v4041 = vld [vmem:[%s3651 + $0x6a] sm:$0xf]
      %v4042 = vld [vmem:[%s3651 + $0x72] sm:$0xf]
      %v4043 = vld [vmem:[%s3651 + $0x7a] sm:$0xf]
      %v4044 = vld [vmem:[%s3651 + $0x92] sm:$0xf]
      %v4045 = vld [vmem:[%s3651 + $0x9a] sm:$0xf]
      %v4046 = vld [vmem:[%s3651 + $0xa2] sm:$0xf]
      %v4047 = vld [vmem:[%s3651 + $0xaa] sm:$0xf]
      %v4064 = vcombine.low %v4032, %v4033
      %v4065 = vcombine.low %v4034, %v4035
      %v4066 = vcombine.low %v4036, %v4037
      %v4067 = vcombine.low %v4038, %v4039
      %v4068 = vcombine.low %v4040, %v4041
      %v4069 = vcombine.low %v4042, %v4043
      %v4070 = vcombine.low %v4044, %v4045
      %v4071 = vcombine.low %v4046, %v4047
      %v4080 = vpack.c.bf16 %v4065, %v4064
      %v4081 = vpack.c.bf16 %v4067, %v4066
      %v4082 = vpack.c.bf16 %v4069, %v4068
      %v4083 = vpack.c.bf16 %v4071, %v4070
      %s4084 = scalar_lea.vmem %s1, 1280
      %v4085 = vld [vmem:[%s4084] sm:$0xf]
      %v4086 = vld [vmem:[%s4084 + $0x4] sm:$0xf]
      %v4087 = vld [vmem:[%s4084 + $0x8] sm:$0xf]
      %v4088 = vld [vmem:[%s4084 + $0xc] sm:$0xf]
      %v4089 = vld [vmem:[%s4084 + $0x10] sm:$0xf]
      %v4090 = vld [vmem:[%s4084 + $0x14] sm:$0xf]
      %v4091 = vld [vmem:[%s4084 + $0x18] sm:$0xf]
      %v4092 = vld [vmem:[%s4084 + $0x1c] sm:$0xf]
      %v4093 = vld [vmem:[%s4084 + $0x20] sm:$0xf]
      %v4094 = vld [vmem:[%s4084 + $0x24] sm:$0xf]
      %v4095 = vld [vmem:[%s4084 + $0x28] sm:$0xf]
      %v4096 = vld [vmem:[%s4084 + $0x2c] sm:$0xf]
      %v4097 = vld [vmem:[%s4084 + $0x30] sm:$0xf]
      %v4098 = vld [vmem:[%s4084 + $0x34] sm:$0xf]
      %v4099 = vld [vmem:[%s4084 + $0x38] sm:$0xf]
      %v4100 = vld [vmem:[%s4084 + $0x3c] sm:$0xf]
      %v4117 = vunpack.c.l.b16 %v4085
      %v4118 = vunpack.c.l.b16 %v4086
      %v4119 = vunpack.c.l.b16 %v4087
      %v4120 = vunpack.c.l.b16 %v4088
      %v4121 = vunpack.c.l.b16 %v4089
      %v4122 = vunpack.c.l.b16 %v4090
      %v4123 = vunpack.c.l.b16 %v4091
      %v4124 = vunpack.c.l.b16 %v4092
      %v4125 = vunpack.c.l.b16 %v4093
      %v4126 = vunpack.c.l.b16 %v4094
      %v4127 = vunpack.c.l.b16 %v4095
      %v4128 = vunpack.c.l.b16 %v4096
      %v4129 = vunpack.c.l.b16 %v4097
      %v4130 = vunpack.c.l.b16 %v4098
      %v4131 = vunpack.c.l.b16 %v4099
      %v4132 = vunpack.c.l.b16 %v4100
      %v4133 = vpack.c.b16 %v4118, %v4117
      %v4134 = vpack.c.b16 %v4120, %v4119
      %v4135 = vpack.c.b16 %v4122, %v4121
      %v4136 = vpack.c.b16 %v4124, %v4123
      %v4137 = vpack.c.b16 %v4126, %v4125
      %v4138 = vpack.c.b16 %v4128, %v4127
      %v4139 = vpack.c.b16 %v4130, %v4129
      %v4140 = vpack.c.b16 %v4132, %v4131
      %4149 = vmatprep.subr.bf16.mxu0 0
      %4150 = vmatpush1.bf16.msra.mxu0 %v4140
      %4151 = vmatprep.subr.bf16.mxu0 0
      %4152 = vmatpush1.bf16.msra.mxu0 %v4139
      %4153 = vmatprep.subr.bf16.mxu0 0
      %4154 = vmatpush1.bf16.msra.mxu0 %v4138
      %4155 = vmatprep.subr.bf16.mxu0 0
      %4156 = vmatpush1.bf16.msra.mxu0 %v4137
      %4157 = vmatprep.subr.bf16.mxu0 0
      %4158 = vmatpush1.bf16.msra.mxu0 %v4136
      %4159 = vmatprep.subr.bf16.mxu0 0
      %4160 = vmatpush1.bf16.msra.mxu0 %v4135
      %4161 = vmatprep.subr.bf16.mxu0 0
      %4162 = vmatpush1.bf16.msra.mxu0 %v4134
      %4163 = vmatprep.subr.bf16.mxu0 0
      %4164 = vmatpush1.bf16.msra.mxu0 %v4133
      %4165 = vmatprep.subr.bf16.mxu0 0
      %4166 = vmatpush2.bf16.msra.mxu0 0
      %4167 = vmatprep.subr.bf16.mxu0 0
      %4168 = vmatpush2.bf16.msra.mxu0 0
      %4169 = vmatprep.subr.bf16.mxu0 0
      %4170 = vmatpush2.bf16.msra.mxu0 0
      %4171 = vmatprep.subr.bf16.mxu0 0
      %4172 = vmatpush2.bf16.msra.mxu0 0
      %4173 = vmatprep.subr.bf16.mxu0 0
      %4174 = vmatpush2.bf16.msra.mxu0 0
      %4175 = vmatprep.subr.bf16.mxu0 0
      %4176 = vmatpush2.bf16.msra.mxu0 0
      %4177 = vmatprep.subr.bf16.mxu0 0
      %4178 = vmatpush2.bf16.msra.mxu0 0
      %4179 = vmatprep.subr.bf16.mxu0 0
      %4180 = vmatpush2.bf16.msra.mxu0 0
      %4181 = vmatprep.mubr.bf16.mxu0 0
      %4182 = vmatmul.mubr.bf16.gmra.mxu0 %v4080
      %v4183 = vpop.f32.mrf.mxu0
      %v4184 = vadd.f32 0.0, %v4183
      %v4185 = vpop.f32.mrf.mxu0
      %v4186 = vpop.f32.mrf.mxu0
      %v4187 = vadd.f32 0.0, %v4186
      %v4188 = vpop.f32.mrf.mxu0
      %4189 = vmatprep.mubr.bf16.mxu0 0
      %4190 = vmatmul.mubr.bf16.gmra.mxu0 %v4081
      %v4191 = vpop.f32.mrf.mxu0
      %v4192 = vadd.f32 0.0, %v4191
      %v4193 = vpop.f32.mrf.mxu0
      %v4194 = vpop.f32.mrf.mxu0
      %v4195 = vadd.f32 0.0, %v4194
      %v4196 = vpop.f32.mrf.mxu0
      %4197 = vmatprep.mubr.bf16.mxu0 0
      %4198 = vmatmul.mubr.bf16.gmra.mxu0 %v4082
      %v4199 = vpop.f32.mrf.mxu0
      %v4200 = vadd.f32 0.0, %v4199
      %v4201 = vpop.f32.mrf.mxu0
      %v4202 = vpop.f32.mrf.mxu0
      %v4203 = vadd.f32 0.0, %v4202
      %v4204 = vpop.f32.mrf.mxu0
      %4205 = vmatprep.mubr.bf16.mxu0 0
      %4206 = vmatmul.mubr.bf16.gmra.mxu0 %v4083
      %v4207 = vpop.f32.mrf.mxu0
      %v4208 = vadd.f32 0.0, %v4207
      %v4209 = vpop.f32.mrf.mxu0
      %v4210 = vpop.f32.mrf.mxu0
      %v4211 = vadd.f32 0.0, %v4210
      %v4212 = vpop.f32.mrf.mxu0
      %4213 = vdwg.mxu0
      %v4214 = vadd.f32 %v4024, %v4184
      %v4215 = vadd.f32 %v4025, %v4187
      %v4216 = vadd.f32 %v4026, %v4192
      %v4217 = vadd.f32 %v4027, %v4195
      %v4218 = vadd.f32 %v4028, %v4200
      %v4219 = vadd.f32 %v4029, %v4203
      %v4220 = vadd.f32 %v4030, %v4208
      %v4221 = vadd.f32 %v4031, %v4211
      %s4222 = scalar_lea.vmem %s230, 104
      %v4223 = vld [vmem:[%s4222] sm:$0xf]
      %v4224 = vld [vmem:[%s4222 + $0x8] sm:$0xf]
      %v4225 = vld [vmem:[%s4222 + $0x10] sm:$0xf]
      %v4226 = vld [vmem:[%s4222 + $0x18] sm:$0xf]
      %v4227 = vld [vmem:[%s4222 + $0x30] sm:$0xf]
      %v4228 = vld [vmem:[%s4222 + $0x38] sm:$0xf]
      %v4229 = vld [vmem:[%s4222 + $0x40] sm:$0xf]
      %v4230 = vld [vmem:[%s4222 + $0x48] sm:$0xf]
      %v4231 = vld [vmem:[%s4222 + $0x60] sm:$0xf]
      %v4232 = vld [vmem:[%s4222 + $0x68] sm:$0xf]
      %v4233 = vld [vmem:[%s4222 + $0x70] sm:$0xf]
      %v4234 = vld [vmem:[%s4222 + $0x78] sm:$0xf]
      %v4235 = vld [vmem:[%s4222 + $0x90] sm:$0xf]
      %v4236 = vld [vmem:[%s4222 + $0x98] sm:$0xf]
      %v4237 = vld [vmem:[%s4222 + $0xa0] sm:$0xf]
      %v4238 = vld [vmem:[%s4222 + $0xa8] sm:$0xf]
      %v4255 = vcombine.low %v4223, %v4224
      %v4256 = vcombine.low %v4225, %v4226
      %v4257 = vcombine.low %v4227, %v4228
      %v4258 = vcombine.low %v4229, %v4230
      %v4259 = vcombine.low %v4231, %v4232
      %v4260 = vcombine.low %v4233, %v4234
      %v4261 = vcombine.low %v4235, %v4236
      %v4262 = vcombine.low %v4237, %v4238
      %v4271 = vpack.c.bf16 %v4256, %v4255
      %v4272 = vpack.c.bf16 %v4258, %v4257
      %v4273 = vpack.c.bf16 %v4260, %v4259
      %v4274 = vpack.c.bf16 %v4262, %v4261
      %s4275 = scalar_lea.vmem %s1, 1344
      %v4276 = vld [vmem:[%s4275] sm:$0xf]
      %v4277 = vld [vmem:[%s4275 + $0x4] sm:$0xf]
      %v4278 = vld [vmem:[%s4275 + $0x8] sm:$0xf]
      %v4279 = vld [vmem:[%s4275 + $0xc] sm:$0xf]
      %v4280 = vld [vmem:[%s4275 + $0x10] sm:$0xf]
      %v4281 = vld [vmem:[%s4275 + $0x14] sm:$0xf]
      %v4282 = vld [vmem:[%s4275 + $0x18] sm:$0xf]
      %v4283 = vld [vmem:[%s4275 + $0x1c] sm:$0xf]
      %v4284 = vld [vmem:[%s4275 + $0x20] sm:$0xf]
      %v4285 = vld [vmem:[%s4275 + $0x24] sm:$0xf]
      %v4286 = vld [vmem:[%s4275 + $0x28] sm:$0xf]
      %v4287 = vld [vmem:[%s4275 + $0x2c] sm:$0xf]
      %v4288 = vld [vmem:[%s4275 + $0x30] sm:$0xf]
      %v4289 = vld [vmem:[%s4275 + $0x34] sm:$0xf]
      %v4290 = vld [vmem:[%s4275 + $0x38] sm:$0xf]
      %v4291 = vld [vmem:[%s4275 + $0x3c] sm:$0xf]
      %v4308 = vunpack.c.l.b16 %v4276
      %v4309 = vunpack.c.l.b16 %v4277
      %v4310 = vunpack.c.l.b16 %v4278
      %v4311 = vunpack.c.l.b16 %v4279
      %v4312 = vunpack.c.l.b16 %v4280
      %v4313 = vunpack.c.l.b16 %v4281
      %v4314 = vunpack.c.l.b16 %v4282
      %v4315 = vunpack.c.l.b16 %v4283
      %v4316 = vunpack.c.l.b16 %v4284
      %v4317 = vunpack.c.l.b16 %v4285
      %v4318 = vunpack.c.l.b16 %v4286
      %v4319 = vunpack.c.l.b16 %v4287
      %v4320 = vunpack.c.l.b16 %v4288
      %v4321 = vunpack.c.l.b16 %v4289
      %v4322 = vunpack.c.l.b16 %v4290
      %v4323 = vunpack.c.l.b16 %v4291
      %v4324 = vpack.c.b16 %v4309, %v4308
      %v4325 = vpack.c.b16 %v4311, %v4310
      %v4326 = vpack.c.b16 %v4313, %v4312
      %v4327 = vpack.c.b16 %v4315, %v4314
      %v4328 = vpack.c.b16 %v4317, %v4316
      %v4329 = vpack.c.b16 %v4319, %v4318
      %v4330 = vpack.c.b16 %v4321, %v4320
      %v4331 = vpack.c.b16 %v4323, %v4322
      %4340 = vmatprep.subr.bf16.mxu0 0
      %4341 = vmatpush1.bf16.msra.mxu0 %v4331
      %4342 = vmatprep.subr.bf16.mxu0 0
      %4343 = vmatpush1.bf16.msra.mxu0 %v4330
      %4344 = vmatprep.subr.bf16.mxu0 0
      %4345 = vmatpush1.bf16.msra.mxu0 %v4329
      %4346 = vmatprep.subr.bf16.mxu0 0
      %4347 = vmatpush1.bf16.msra.mxu0 %v4328
      %4348 = vmatprep.subr.bf16.mxu0 0
      %4349 = vmatpush1.bf16.msra.mxu0 %v4327
      %4350 = vmatprep.subr.bf16.mxu0 0
      %4351 = vmatpush1.bf16.msra.mxu0 %v4326
      %4352 = vmatprep.subr.bf16.mxu0 0
      %4353 = vmatpush1.bf16.msra.mxu0 %v4325
      %4354 = vmatprep.subr.bf16.mxu0 0
      %4355 = vmatpush1.bf16.msra.mxu0 %v4324
      %4356 = vmatprep.subr.bf16.mxu0 0
      %4357 = vmatpush2.bf16.msra.mxu0 0
      %4358 = vmatprep.subr.bf16.mxu0 0
      %4359 = vmatpush2.bf16.msra.mxu0 0
      %4360 = vmatprep.subr.bf16.mxu0 0
      %4361 = vmatpush2.bf16.msra.mxu0 0
      %4362 = vmatprep.subr.bf16.mxu0 0
      %4363 = vmatpush2.bf16.msra.mxu0 0
      %4364 = vmatprep.subr.bf16.mxu0 0
      %4365 = vmatpush2.bf16.msra.mxu0 0
      %4366 = vmatprep.subr.bf16.mxu0 0
      %4367 = vmatpush2.bf16.msra.mxu0 0
      %4368 = vmatprep.subr.bf16.mxu0 0
      %4369 = vmatpush2.bf16.msra.mxu0 0
      %4370 = vmatprep.subr.bf16.mxu0 0
      %4371 = vmatpush2.bf16.msra.mxu0 0
      %4372 = vmatprep.mubr.bf16.mxu0 0
      %4373 = vmatmul.mubr.bf16.gmra.mxu0 %v4271
      %v4374 = vpop.f32.mrf.mxu0
      %v4375 = vadd.f32 0.0, %v4374
      %v4376 = vpop.f32.mrf.mxu0
      %v4377 = vpop.f32.mrf.mxu0
      %v4378 = vadd.f32 0.0, %v4377
      %v4379 = vpop.f32.mrf.mxu0
      %4380 = vmatprep.mubr.bf16.mxu0 0
      %4381 = vmatmul.mubr.bf16.gmra.mxu0 %v4272
      %v4382 = vpop.f32.mrf.mxu0
      %v4383 = vadd.f32 0.0, %v4382
      %v4384 = vpop.f32.mrf.mxu0
      %v4385 = vpop.f32.mrf.mxu0
      %v4386 = vadd.f32 0.0, %v4385
      %v4387 = vpop.f32.mrf.mxu0
      %4388 = vmatprep.mubr.bf16.mxu0 0
      %4389 = vmatmul.mubr.bf16.gmra.mxu0 %v4273
      %v4390 = vpop.f32.mrf.mxu0
      %v4391 = vadd.f32 0.0, %v4390
      %v4392 = vpop.f32.mrf.mxu0
      %v4393 = vpop.f32.mrf.mxu0
      %v4394 = vadd.f32 0.0, %v4393
      %v4395 = vpop.f32.mrf.mxu0
      %4396 = vmatprep.mubr.bf16.mxu0 0
      %4397 = vmatmul.mubr.bf16.gmra.mxu0 %v4274
      %v4398 = vpop.f32.mrf.mxu0
      %v4399 = vadd.f32 0.0, %v4398
      %v4400 = vpop.f32.mrf.mxu0
      %v4401 = vpop.f32.mrf.mxu0
      %v4402 = vadd.f32 0.0, %v4401
      %v4403 = vpop.f32.mrf.mxu0
      %4404 = vdwg.mxu0
      %v4405 = vadd.f32 %v4214, %v4375
      %v4406 = vadd.f32 %v4215, %v4378
      %v4407 = vadd.f32 %v4216, %v4383
      %v4408 = vadd.f32 %v4217, %v4386
      %v4409 = vadd.f32 %v4218, %v4391
      %v4410 = vadd.f32 %v4219, %v4394
      %v4411 = vadd.f32 %v4220, %v4399
      %v4412 = vadd.f32 %v4221, %v4402
      %v4413 = vld [vmem:[%s4222 + $0x1] sm:$0xf]
      %v4414 = vld [vmem:[%s4222 + $0x9] sm:$0xf]
      %v4415 = vld [vmem:[%s4222 + $0x11] sm:$0xf]
      %v4416 = vld [vmem:[%s4222 + $0x19] sm:$0xf]
      %v4417 = vld [vmem:[%s4222 + $0x31] sm:$0xf]
      %v4418 = vld [vmem:[%s4222 + $0x39] sm:$0xf]
      %v4419 = vld [vmem:[%s4222 + $0x41] sm:$0xf]
      %v4420 = vld [vmem:[%s4222 + $0x49] sm:$0xf]
      %v4421 = vld [vmem:[%s4222 + $0x61] sm:$0xf]
      %v4422 = vld [vmem:[%s4222 + $0x69] sm:$0xf]
      %v4423 = vld [vmem:[%s4222 + $0x71] sm:$0xf]
      %v4424 = vld [vmem:[%s4222 + $0x79] sm:$0xf]
      %v4425 = vld [vmem:[%s4222 + $0x91] sm:$0xf]
      %v4426 = vld [vmem:[%s4222 + $0x99] sm:$0xf]
      %v4427 = vld [vmem:[%s4222 + $0xa1] sm:$0xf]
      %v4428 = vld [vmem:[%s4222 + $0xa9] sm:$0xf]
      %v4445 = vcombine.low %v4413, %v4414
      %v4446 = vcombine.low %v4415, %v4416
      %v4447 = vcombine.low %v4417, %v4418
      %v4448 = vcombine.low %v4419, %v4420
      %v4449 = vcombine.low %v4421, %v4422
      %v4450 = vcombine.low %v4423, %v4424
      %v4451 = vcombine.low %v4425, %v4426
      %v4452 = vcombine.low %v4427, %v4428
      %v4461 = vpack.c.bf16 %v4446, %v4445
      %v4462 = vpack.c.bf16 %v4448, %v4447
      %v4463 = vpack.c.bf16 %v4450, %v4449
      %v4464 = vpack.c.bf16 %v4452, %v4451
      %s4465 = scalar_lea.vmem %s1, 1408
      %v4466 = vld [vmem:[%s4465] sm:$0xf]
      %v4467 = vld [vmem:[%s4465 + $0x4] sm:$0xf]
      %v4468 = vld [vmem:[%s4465 + $0x8] sm:$0xf]
      %v4469 = vld [vmem:[%s4465 + $0xc] sm:$0xf]
      %v4470 = vld [vmem:[%s4465 + $0x10] sm:$0xf]
      %v4471 = vld [vmem:[%s4465 + $0x14] sm:$0xf]
      %v4472 = vld [vmem:[%s4465 + $0x18] sm:$0xf]
      %v4473 = vld [vmem:[%s4465 + $0x1c] sm:$0xf]
      %v4474 = vld [vmem:[%s4465 + $0x20] sm:$0xf]
      %v4475 = vld [vmem:[%s4465 + $0x24] sm:$0xf]
      %v4476 = vld [vmem:[%s4465 + $0x28] sm:$0xf]
      %v4477 = vld [vmem:[%s4465 + $0x2c] sm:$0xf]
      %v4478 = vld [vmem:[%s4465 + $0x30] sm:$0xf]
      %v4479 = vld [vmem:[%s4465 + $0x34] sm:$0xf]
      %v4480 = vld [vmem:[%s4465 + $0x38] sm:$0xf]
      %v4481 = vld [vmem:[%s4465 + $0x3c] sm:$0xf]
      %v4498 = vunpack.c.l.b16 %v4466
      %v4499 = vunpack.c.l.b16 %v4467
      %v4500 = vunpack.c.l.b16 %v4468
      %v4501 = vunpack.c.l.b16 %v4469
      %v4502 = vunpack.c.l.b16 %v4470
      %v4503 = vunpack.c.l.b16 %v4471
      %v4504 = vunpack.c.l.b16 %v4472
      %v4505 = vunpack.c.l.b16 %v4473
      %v4506 = vunpack.c.l.b16 %v4474
      %v4507 = vunpack.c.l.b16 %v4475
      %v4508 = vunpack.c.l.b16 %v4476
      %v4509 = vunpack.c.l.b16 %v4477
      %v4510 = vunpack.c.l.b16 %v4478
      %v4511 = vunpack.c.l.b16 %v4479
      %v4512 = vunpack.c.l.b16 %v4480
      %v4513 = vunpack.c.l.b16 %v4481
      %v4514 = vpack.c.b16 %v4499, %v4498
      %v4515 = vpack.c.b16 %v4501, %v4500
      %v4516 = vpack.c.b16 %v4503, %v4502
      %v4517 = vpack.c.b16 %v4505, %v4504
      %v4518 = vpack.c.b16 %v4507, %v4506
      %v4519 = vpack.c.b16 %v4509, %v4508
      %v4520 = vpack.c.b16 %v4511, %v4510
      %v4521 = vpack.c.b16 %v4513, %v4512
      %4530 = vmatprep.subr.bf16.mxu0 0
      %4531 = vmatpush1.bf16.msra.mxu0 %v4521
      %4532 = vmatprep.subr.bf16.mxu0 0
      %4533 = vmatpush1.bf16.msra.mxu0 %v4520
      %4534 = vmatprep.subr.bf16.mxu0 0
      %4535 = vmatpush1.bf16.msra.mxu0 %v4519
      %4536 = vmatprep.subr.bf16.mxu0 0
      %4537 = vmatpush1.bf16.msra.mxu0 %v4518
      %4538 = vmatprep.subr.bf16.mxu0 0
      %4539 = vmatpush1.bf16.msra.mxu0 %v4517
      %4540 = vmatprep.subr.bf16.mxu0 0
      %4541 = vmatpush1.bf16.msra.mxu0 %v4516
      %4542 = vmatprep.subr.bf16.mxu0 0
      %4543 = vmatpush1.bf16.msra.mxu0 %v4515
      %4544 = vmatprep.subr.bf16.mxu0 0
      %4545 = vmatpush1.bf16.msra.mxu0 %v4514
      %4546 = vmatprep.subr.bf16.mxu0 0
      %4547 = vmatpush2.bf16.msra.mxu0 0
      %4548 = vmatprep.subr.bf16.mxu0 0
      %4549 = vmatpush2.bf16.msra.mxu0 0
      %4550 = vmatprep.subr.bf16.mxu0 0
      %4551 = vmatpush2.bf16.msra.mxu0 0
      %4552 = vmatprep.subr.bf16.mxu0 0
      %4553 = vmatpush2.bf16.msra.mxu0 0
      %4554 = vmatprep.subr.bf16.mxu0 0
      %4555 = vmatpush2.bf16.msra.mxu0 0
      %4556 = vmatprep.subr.bf16.mxu0 0
      %4557 = vmatpush2.bf16.msra.mxu0 0
      %4558 = vmatprep.subr.bf16.mxu0 0
      %4559 = vmatpush2.bf16.msra.mxu0 0
      %4560 = vmatprep.subr.bf16.mxu0 0
      %4561 = vmatpush2.bf16.msra.mxu0 0
      %4562 = vmatprep.mubr.bf16.mxu0 0
      %4563 = vmatmul.mubr.bf16.gmra.mxu0 %v4461
      %v4564 = vpop.f32.mrf.mxu0
      %v4565 = vadd.f32 0.0, %v4564
      %v4566 = vpop.f32.mrf.mxu0
      %v4567 = vpop.f32.mrf.mxu0
      %v4568 = vadd.f32 0.0, %v4567
      %v4569 = vpop.f32.mrf.mxu0
      %4570 = vmatprep.mubr.bf16.mxu0 0
      %4571 = vmatmul.mubr.bf16.gmra.mxu0 %v4462
      %v4572 = vpop.f32.mrf.mxu0
      %v4573 = vadd.f32 0.0, %v4572
      %v4574 = vpop.f32.mrf.mxu0
      %v4575 = vpop.f32.mrf.mxu0
      %v4576 = vadd.f32 0.0, %v4575
      %v4577 = vpop.f32.mrf.mxu0
      %4578 = vmatprep.mubr.bf16.mxu0 0
      %4579 = vmatmul.mubr.bf16.gmra.mxu0 %v4463
      %v4580 = vpop.f32.mrf.mxu0
      %v4581 = vadd.f32 0.0, %v4580
      %v4582 = vpop.f32.mrf.mxu0
      %v4583 = vpop.f32.mrf.mxu0
      %v4584 = vadd.f32 0.0, %v4583
      %v4585 = vpop.f32.mrf.mxu0
      %4586 = vmatprep.mubr.bf16.mxu0 0
      %4587 = vmatmul.mubr.bf16.gmra.mxu0 %v4464
      %v4588 = vpop.f32.mrf.mxu0
      %v4589 = vadd.f32 0.0, %v4588
      %v4590 = vpop.f32.mrf.mxu0
      %v4591 = vpop.f32.mrf.mxu0
      %v4592 = vadd.f32 0.0, %v4591
      %v4593 = vpop.f32.mrf.mxu0
      %4594 = vdwg.mxu0
      %v4595 = vadd.f32 %v4405, %v4565
      %v4596 = vadd.f32 %v4406, %v4568
      %v4597 = vadd.f32 %v4407, %v4573
      %v4598 = vadd.f32 %v4408, %v4576
      %v4599 = vadd.f32 %v4409, %v4581
      %v4600 = vadd.f32 %v4410, %v4584
      %v4601 = vadd.f32 %v4411, %v4589
      %v4602 = vadd.f32 %v4412, %v4592
      %v4603 = vld [vmem:[%s4222 + $0x2] sm:$0xf]
      %v4604 = vld [vmem:[%s4222 + $0xa] sm:$0xf]
      %v4605 = vld [vmem:[%s4222 + $0x12] sm:$0xf]
      %v4606 = vld [vmem:[%s4222 + $0x1a] sm:$0xf]
      %v4607 = vld [vmem:[%s4222 + $0x32] sm:$0xf]
      %v4608 = vld [vmem:[%s4222 + $0x3a] sm:$0xf]
      %v4609 = vld [vmem:[%s4222 + $0x42] sm:$0xf]
      %v4610 = vld [vmem:[%s4222 + $0x4a] sm:$0xf]
      %v4611 = vld [vmem:[%s4222 + $0x62] sm:$0xf]
      %v4612 = vld [vmem:[%s4222 + $0x6a] sm:$0xf]
      %v4613 = vld [vmem:[%s4222 + $0x72] sm:$0xf]
      %v4614 = vld [vmem:[%s4222 + $0x7a] sm:$0xf]
      %v4615 = vld [vmem:[%s4222 + $0x92] sm:$0xf]
      %v4616 = vld [vmem:[%s4222 + $0x9a] sm:$0xf]
      %v4617 = vld [vmem:[%s4222 + $0xa2] sm:$0xf]
      %v4618 = vld [vmem:[%s4222 + $0xaa] sm:$0xf]
      %v4635 = vcombine.low %v4603, %v4604
      %v4636 = vcombine.low %v4605, %v4606
      %v4637 = vcombine.low %v4607, %v4608
      %v4638 = vcombine.low %v4609, %v4610
      %v4639 = vcombine.low %v4611, %v4612
      %v4640 = vcombine.low %v4613, %v4614
      %v4641 = vcombine.low %v4615, %v4616
      %v4642 = vcombine.low %v4617, %v4618
      %v4651 = vpack.c.bf16 %v4636, %v4635
      %v4652 = vpack.c.bf16 %v4638, %v4637
      %v4653 = vpack.c.bf16 %v4640, %v4639
      %v4654 = vpack.c.bf16 %v4642, %v4641
      %s4655 = scalar_lea.vmem %s1, 1472
      %v4656 = vld [vmem:[%s4655] sm:$0xf]
      %v4657 = vld [vmem:[%s4655 + $0x4] sm:$0xf]
      %v4658 = vld [vmem:[%s4655 + $0x8] sm:$0xf]
      %v4659 = vld [vmem:[%s4655 + $0xc] sm:$0xf]
      %v4660 = vld [vmem:[%s4655 + $0x10] sm:$0xf]
      %v4661 = vld [vmem:[%s4655 + $0x14] sm:$0xf]
      %v4662 = vld [vmem:[%s4655 + $0x18] sm:$0xf]
      %v4663 = vld [vmem:[%s4655 + $0x1c] sm:$0xf]
      %v4664 = vld [vmem:[%s4655 + $0x20] sm:$0xf]
      %v4665 = vld [vmem:[%s4655 + $0x24] sm:$0xf]
      %v4666 = vld [vmem:[%s4655 + $0x28] sm:$0xf]
      %v4667 = vld [vmem:[%s4655 + $0x2c] sm:$0xf]
      %v4668 = vld [vmem:[%s4655 + $0x30] sm:$0xf]
      %v4669 = vld [vmem:[%s4655 + $0x34] sm:$0xf]
      %v4670 = vld [vmem:[%s4655 + $0x38] sm:$0xf]
      %v4671 = vld [vmem:[%s4655 + $0x3c] sm:$0xf]
      %v4688 = vunpack.c.l.b16 %v4656
      %v4689 = vunpack.c.l.b16 %v4657
      %v4690 = vunpack.c.l.b16 %v4658
      %v4691 = vunpack.c.l.b16 %v4659
      %v4692 = vunpack.c.l.b16 %v4660
      %v4693 = vunpack.c.l.b16 %v4661
      %v4694 = vunpack.c.l.b16 %v4662
      %v4695 = vunpack.c.l.b16 %v4663
      %v4696 = vunpack.c.l.b16 %v4664
      %v4697 = vunpack.c.l.b16 %v4665
      %v4698 = vunpack.c.l.b16 %v4666
      %v4699 = vunpack.c.l.b16 %v4667
      %v4700 = vunpack.c.l.b16 %v4668
      %v4701 = vunpack.c.l.b16 %v4669
      %v4702 = vunpack.c.l.b16 %v4670
      %v4703 = vunpack.c.l.b16 %v4671
      %v4704 = vpack.c.b16 %v4689, %v4688
      %v4705 = vpack.c.b16 %v4691, %v4690
      %v4706 = vpack.c.b16 %v4693, %v4692
      %v4707 = vpack.c.b16 %v4695, %v4694
      %v4708 = vpack.c.b16 %v4697, %v4696
      %v4709 = vpack.c.b16 %v4699, %v4698
      %v4710 = vpack.c.b16 %v4701, %v4700
      %v4711 = vpack.c.b16 %v4703, %v4702
      %4720 = vmatprep.subr.bf16.mxu0 0
      %4721 = vmatpush1.bf16.msra.mxu0 %v4711
      %4722 = vmatprep.subr.bf16.mxu0 0
      %4723 = vmatpush1.bf16.msra.mxu0 %v4710
      %4724 = vmatprep.subr.bf16.mxu0 0
      %4725 = vmatpush1.bf16.msra.mxu0 %v4709
      %4726 = vmatprep.subr.bf16.mxu0 0
      %4727 = vmatpush1.bf16.msra.mxu0 %v4708
      %4728 = vmatprep.subr.bf16.mxu0 0
      %4729 = vmatpush1.bf16.msra.mxu0 %v4707
      %4730 = vmatprep.subr.bf16.mxu0 0
      %4731 = vmatpush1.bf16.msra.mxu0 %v4706
      %4732 = vmatprep.subr.bf16.mxu0 0
      %4733 = vmatpush1.bf16.msra.mxu0 %v4705
      %4734 = vmatprep.subr.bf16.mxu0 0
      %4735 = vmatpush1.bf16.msra.mxu0 %v4704
      %4736 = vmatprep.subr.bf16.mxu0 0
      %4737 = vmatpush2.bf16.msra.mxu0 0
      %4738 = vmatprep.subr.bf16.mxu0 0
      %4739 = vmatpush2.bf16.msra.mxu0 0
      %4740 = vmatprep.subr.bf16.mxu0 0
      %4741 = vmatpush2.bf16.msra.mxu0 0
      %4742 = vmatprep.subr.bf16.mxu0 0
      %4743 = vmatpush2.bf16.msra.mxu0 0
      %4744 = vmatprep.subr.bf16.mxu0 0
      %4745 = vmatpush2.bf16.msra.mxu0 0
      %4746 = vmatprep.subr.bf16.mxu0 0
      %4747 = vmatpush2.bf16.msra.mxu0 0
      %4748 = vmatprep.subr.bf16.mxu0 0
      %4749 = vmatpush2.bf16.msra.mxu0 0
      %4750 = vmatprep.subr.bf16.mxu0 0
      %4751 = vmatpush2.bf16.msra.mxu0 0
      %4752 = vmatprep.mubr.bf16.mxu0 0
      %4753 = vmatmul.mubr.bf16.gmra.mxu0 %v4651
      %v4754 = vpop.f32.mrf.mxu0
      %v4755 = vadd.f32 0.0, %v4754
      %v4756 = vpop.f32.mrf.mxu0
      %v4757 = vpop.f32.mrf.mxu0
      %v4758 = vadd.f32 0.0, %v4757
      %v4759 = vpop.f32.mrf.mxu0
      %4760 = vmatprep.mubr.bf16.mxu0 0
      %4761 = vmatmul.mubr.bf16.gmra.mxu0 %v4652
      %v4762 = vpop.f32.mrf.mxu0
      %v4763 = vadd.f32 0.0, %v4762
      %v4764 = vpop.f32.mrf.mxu0
      %v4765 = vpop.f32.mrf.mxu0
      %v4766 = vadd.f32 0.0, %v4765
      %v4767 = vpop.f32.mrf.mxu0
      %4768 = vmatprep.mubr.bf16.mxu0 0
      %4769 = vmatmul.mubr.bf16.gmra.mxu0 %v4653
      %v4770 = vpop.f32.mrf.mxu0
      %v4771 = vadd.f32 0.0, %v4770
      %v4772 = vpop.f32.mrf.mxu0
      %v4773 = vpop.f32.mrf.mxu0
      %v4774 = vadd.f32 0.0, %v4773
      %v4775 = vpop.f32.mrf.mxu0
      %4776 = vmatprep.mubr.bf16.mxu0 0
      %4777 = vmatmul.mubr.bf16.gmra.mxu0 %v4654
      %v4778 = vpop.f32.mrf.mxu0
      %v4779 = vadd.f32 0.0, %v4778
      %v4780 = vpop.f32.mrf.mxu0
      %v4781 = vpop.f32.mrf.mxu0
      %v4782 = vadd.f32 0.0, %v4781
      %v4783 = vpop.f32.mrf.mxu0
      %4784 = vdwg.mxu0
      %v4785 = vadd.f32 %v4595, %v4755
      %v4786 = vadd.f32 %v4596, %v4758
      %v4787 = vadd.f32 %v4597, %v4763
      %v4788 = vadd.f32 %v4598, %v4766
      %v4789 = vadd.f32 %v4599, %v4771
      %v4790 = vadd.f32 %v4600, %v4774
      %v4791 = vadd.f32 %v4601, %v4779
      %v4792 = vadd.f32 %v4602, %v4782
      %s4793 = scalar_lea.vmem %s230, 112
      %v4794 = vld [vmem:[%s4793] sm:$0xf]
      %v4795 = vld [vmem:[%s4793 + $0x8] sm:$0xf]
      %v4796 = vld [vmem:[%s4793 + $0x10] sm:$0xf]
      %v4797 = vld [vmem:[%s4793 + $0x18] sm:$0xf]
      %v4798 = vld [vmem:[%s4793 + $0x30] sm:$0xf]
      %v4799 = vld [vmem:[%s4793 + $0x38] sm:$0xf]
      %v4800 = vld [vmem:[%s4793 + $0x40] sm:$0xf]
      %v4801 = vld [vmem:[%s4793 + $0x48] sm:$0xf]
      %v4802 = vld [vmem:[%s4793 + $0x60] sm:$0xf]
      %v4803 = vld [vmem:[%s4793 + $0x68] sm:$0xf]
      %v4804 = vld [vmem:[%s4793 + $0x70] sm:$0xf]
      %v4805 = vld [vmem:[%s4793 + $0x78] sm:$0xf]
      %v4806 = vld [vmem:[%s4793 + $0x90] sm:$0xf]
      %v4807 = vld [vmem:[%s4793 + $0x98] sm:$0xf]
      %v4808 = vld [vmem:[%s4793 + $0xa0] sm:$0xf]
      %v4809 = vld [vmem:[%s4793 + $0xa8] sm:$0xf]
      %v4826 = vcombine.low %v4794, %v4795
      %v4827 = vcombine.low %v4796, %v4797
      %v4828 = vcombine.low %v4798, %v4799
      %v4829 = vcombine.low %v4800, %v4801
      %v4830 = vcombine.low %v4802, %v4803
      %v4831 = vcombine.low %v4804, %v4805
      %v4832 = vcombine.low %v4806, %v4807
      %v4833 = vcombine.low %v4808, %v4809
      %v4842 = vpack.c.bf16 %v4827, %v4826
      %v4843 = vpack.c.bf16 %v4829, %v4828
      %v4844 = vpack.c.bf16 %v4831, %v4830
      %v4845 = vpack.c.bf16 %v4833, %v4832
      %s4846 = scalar_lea.vmem %s1, 1536
      %v4847 = vld [vmem:[%s4846] sm:$0xf]
      %v4848 = vld [vmem:[%s4846 + $0x4] sm:$0xf]
      %v4849 = vld [vmem:[%s4846 + $0x8] sm:$0xf]
      %v4850 = vld [vmem:[%s4846 + $0xc] sm:$0xf]
      %v4851 = vld [vmem:[%s4846 + $0x10] sm:$0xf]
      %v4852 = vld [vmem:[%s4846 + $0x14] sm:$0xf]
      %v4853 = vld [vmem:[%s4846 + $0x18] sm:$0xf]
      %v4854 = vld [vmem:[%s4846 + $0x1c] sm:$0xf]
      %v4855 = vld [vmem:[%s4846 + $0x20] sm:$0xf]
      %v4856 = vld [vmem:[%s4846 + $0x24] sm:$0xf]
      %v4857 = vld [vmem:[%s4846 + $0x28] sm:$0xf]
      %v4858 = vld [vmem:[%s4846 + $0x2c] sm:$0xf]
      %v4859 = vld [vmem:[%s4846 + $0x30] sm:$0xf]
      %v4860 = vld [vmem:[%s4846 + $0x34] sm:$0xf]
      %v4861 = vld [vmem:[%s4846 + $0x38] sm:$0xf]
      %v4862 = vld [vmem:[%s4846 + $0x3c] sm:$0xf]
      %v4879 = vunpack.c.l.b16 %v4847
      %v4880 = vunpack.c.l.b16 %v4848
      %v4881 = vunpack.c.l.b16 %v4849
      %v4882 = vunpack.c.l.b16 %v4850
      %v4883 = vunpack.c.l.b16 %v4851
      %v4884 = vunpack.c.l.b16 %v4852
      %v4885 = vunpack.c.l.b16 %v4853
      %v4886 = vunpack.c.l.b16 %v4854
      %v4887 = vunpack.c.l.b16 %v4855
      %v4888 = vunpack.c.l.b16 %v4856
      %v4889 = vunpack.c.l.b16 %v4857
      %v4890 = vunpack.c.l.b16 %v4858
      %v4891 = vunpack.c.l.b16 %v4859
      %v4892 = vunpack.c.l.b16 %v4860
      %v4893 = vunpack.c.l.b16 %v4861
      %v4894 = vunpack.c.l.b16 %v4862
      %v4895 = vpack.c.b16 %v4880, %v4879
      %v4896 = vpack.c.b16 %v4882, %v4881
      %v4897 = vpack.c.b16 %v4884, %v4883
      %v4898 = vpack.c.b16 %v4886, %v4885
      %v4899 = vpack.c.b16 %v4888, %v4887
      %v4900 = vpack.c.b16 %v4890, %v4889
      %v4901 = vpack.c.b16 %v4892, %v4891
      %v4902 = vpack.c.b16 %v4894, %v4893
      %4911 = vmatprep.subr.bf16.mxu0 0
      %4912 = vmatpush1.bf16.msra.mxu0 %v4902
      %4913 = vmatprep.subr.bf16.mxu0 0
      %4914 = vmatpush1.bf16.msra.mxu0 %v4901
      %4915 = vmatprep.subr.bf16.mxu0 0
      %4916 = vmatpush1.bf16.msra.mxu0 %v4900
      %4917 = vmatprep.subr.bf16.mxu0 0
      %4918 = vmatpush1.bf16.msra.mxu0 %v4899
      %4919 = vmatprep.subr.bf16.mxu0 0
      %4920 = vmatpush1.bf16.msra.mxu0 %v4898
      %4921 = vmatprep.subr.bf16.mxu0 0
      %4922 = vmatpush1.bf16.msra.mxu0 %v4897
      %4923 = vmatprep.subr.bf16.mxu0 0
      %4924 = vmatpush1.bf16.msra.mxu0 %v4896
      %4925 = vmatprep.subr.bf16.mxu0 0
      %4926 = vmatpush1.bf16.msra.mxu0 %v4895
      %4927 = vmatprep.subr.bf16.mxu0 0
      %4928 = vmatpush2.bf16.msra.mxu0 0
      %4929 = vmatprep.subr.bf16.mxu0 0
      %4930 = vmatpush2.bf16.msra.mxu0 0
      %4931 = vmatprep.subr.bf16.mxu0 0
      %4932 = vmatpush2.bf16.msra.mxu0 0
      %4933 = vmatprep.subr.bf16.mxu0 0
      %4934 = vmatpush2.bf16.msra.mxu0 0
      %4935 = vmatprep.subr.bf16.mxu0 0
      %4936 = vmatpush2.bf16.msra.mxu0 0
      %4937 = vmatprep.subr.bf16.mxu0 0
      %4938 = vmatpush2.bf16.msra.mxu0 0
      %4939 = vmatprep.subr.bf16.mxu0 0
      %4940 = vmatpush2.bf16.msra.mxu0 0
      %4941 = vmatprep.subr.bf16.mxu0 0
      %4942 = vmatpush2.bf16.msra.mxu0 0
      %4943 = vmatprep.mubr.bf16.mxu0 0
      %4944 = vmatmul.mubr.bf16.gmra.mxu0 %v4842
      %v4945 = vpop.f32.mrf.mxu0
      %v4946 = vadd.f32 0.0, %v4945
      %v4947 = vpop.f32.mrf.mxu0
      %v4948 = vpop.f32.mrf.mxu0
      %v4949 = vadd.f32 0.0, %v4948
      %v4950 = vpop.f32.mrf.mxu0
      %4951 = vmatprep.mubr.bf16.mxu0 0
      %4952 = vmatmul.mubr.bf16.gmra.mxu0 %v4843
      %v4953 = vpop.f32.mrf.mxu0
      %v4954 = vadd.f32 0.0, %v4953
      %v4955 = vpop.f32.mrf.mxu0
      %v4956 = vpop.f32.mrf.mxu0
      %v4957 = vadd.f32 0.0, %v4956
      %v4958 = vpop.f32.mrf.mxu0
      %4959 = vmatprep.mubr.bf16.mxu0 0
      %4960 = vmatmul.mubr.bf16.gmra.mxu0 %v4844
      %v4961 = vpop.f32.mrf.mxu0
      %v4962 = vadd.f32 0.0, %v4961
      %v4963 = vpop.f32.mrf.mxu0
      %v4964 = vpop.f32.mrf.mxu0
      %v4965 = vadd.f32 0.0, %v4964
      %v4966 = vpop.f32.mrf.mxu0
      %4967 = vmatprep.mubr.bf16.mxu0 0
      %4968 = vmatmul.mubr.bf16.gmra.mxu0 %v4845
      %v4969 = vpop.f32.mrf.mxu0
      %v4970 = vadd.f32 0.0, %v4969
      %v4971 = vpop.f32.mrf.mxu0
      %v4972 = vpop.f32.mrf.mxu0
      %v4973 = vadd.f32 0.0, %v4972
      %v4974 = vpop.f32.mrf.mxu0
      %4975 = vdwg.mxu0
      %v4976 = vadd.f32 %v4785, %v4946
      %v4977 = vadd.f32 %v4786, %v4949
      %v4978 = vadd.f32 %v4787, %v4954
      %v4979 = vadd.f32 %v4788, %v4957
      %v4980 = vadd.f32 %v4789, %v4962
      %v4981 = vadd.f32 %v4790, %v4965
      %v4982 = vadd.f32 %v4791, %v4970
      %v4983 = vadd.f32 %v4792, %v4973
      %v4984 = vld [vmem:[%s4793 + $0x1] sm:$0xf]
      %v4985 = vld [vmem:[%s4793 + $0x9] sm:$0xf]
      %v4986 = vld [vmem:[%s4793 + $0x11] sm:$0xf]
      %v4987 = vld [vmem:[%s4793 + $0x19] sm:$0xf]
      %v4988 = vld [vmem:[%s4793 + $0x31] sm:$0xf]
      %v4989 = vld [vmem:[%s4793 + $0x39] sm:$0xf]
      %v4990 = vld [vmem:[%s4793 + $0x41] sm:$0xf]
      %v4991 = vld [vmem:[%s4793 + $0x49] sm:$0xf]
      %v4992 = vld [vmem:[%s4793 + $0x61] sm:$0xf]
      %v4993 = vld [vmem:[%s4793 + $0x69] sm:$0xf]
      %v4994 = vld [vmem:[%s4793 + $0x71] sm:$0xf]
      %v4995 = vld [vmem:[%s4793 + $0x79] sm:$0xf]
      %v4996 = vld [vmem:[%s4793 + $0x91] sm:$0xf]
      %v4997 = vld [vmem:[%s4793 + $0x99] sm:$0xf]
      %v4998 = vld [vmem:[%s4793 + $0xa1] sm:$0xf]
      %v4999 = vld [vmem:[%s4793 + $0xa9] sm:$0xf]
      %v5016 = vcombine.low %v4984, %v4985
      %v5017 = vcombine.low %v4986, %v4987
      %v5018 = vcombine.low %v4988, %v4989
      %v5019 = vcombine.low %v4990, %v4991
      %v5020 = vcombine.low %v4992, %v4993
      %v5021 = vcombine.low %v4994, %v4995
      %v5022 = vcombine.low %v4996, %v4997
      %v5023 = vcombine.low %v4998, %v4999
      %v5032 = vpack.c.bf16 %v5017, %v5016
      %v5033 = vpack.c.bf16 %v5019, %v5018
      %v5034 = vpack.c.bf16 %v5021, %v5020
      %v5035 = vpack.c.bf16 %v5023, %v5022
      %s5036 = scalar_lea.vmem %s1, 1600
      %v5037 = vld [vmem:[%s5036] sm:$0xf]
      %v5038 = vld [vmem:[%s5036 + $0x4] sm:$0xf]
      %v5039 = vld [vmem:[%s5036 + $0x8] sm:$0xf]
      %v5040 = vld [vmem:[%s5036 + $0xc] sm:$0xf]
      %v5041 = vld [vmem:[%s5036 + $0x10] sm:$0xf]
      %v5042 = vld [vmem:[%s5036 + $0x14] sm:$0xf]
      %v5043 = vld [vmem:[%s5036 + $0x18] sm:$0xf]
      %v5044 = vld [vmem:[%s5036 + $0x1c] sm:$0xf]
      %v5045 = vld [vmem:[%s5036 + $0x20] sm:$0xf]
      %v5046 = vld [vmem:[%s5036 + $0x24] sm:$0xf]
      %v5047 = vld [vmem:[%s5036 + $0x28] sm:$0xf]
      %v5048 = vld [vmem:[%s5036 + $0x2c] sm:$0xf]
      %v5049 = vld [vmem:[%s5036 + $0x30] sm:$0xf]
      %v5050 = vld [vmem:[%s5036 + $0x34] sm:$0xf]
      %v5051 = vld [vmem:[%s5036 + $0x38] sm:$0xf]
      %v5052 = vld [vmem:[%s5036 + $0x3c] sm:$0xf]
      %v5069 = vunpack.c.l.b16 %v5037
      %v5070 = vunpack.c.l.b16 %v5038
      %v5071 = vunpack.c.l.b16 %v5039
      %v5072 = vunpack.c.l.b16 %v5040
      %v5073 = vunpack.c.l.b16 %v5041
      %v5074 = vunpack.c.l.b16 %v5042
      %v5075 = vunpack.c.l.b16 %v5043
      %v5076 = vunpack.c.l.b16 %v5044
      %v5077 = vunpack.c.l.b16 %v5045
      %v5078 = vunpack.c.l.b16 %v5046
      %v5079 = vunpack.c.l.b16 %v5047
      %v5080 = vunpack.c.l.b16 %v5048
      %v5081 = vunpack.c.l.b16 %v5049
      %v5082 = vunpack.c.l.b16 %v5050
      %v5083 = vunpack.c.l.b16 %v5051
      %v5084 = vunpack.c.l.b16 %v5052
      %v5085 = vpack.c.b16 %v5070, %v5069
      %v5086 = vpack.c.b16 %v5072, %v5071
      %v5087 = vpack.c.b16 %v5074, %v5073
      %v5088 = vpack.c.b16 %v5076, %v5075
      %v5089 = vpack.c.b16 %v5078, %v5077
      %v5090 = vpack.c.b16 %v5080, %v5079
      %v5091 = vpack.c.b16 %v5082, %v5081
      %v5092 = vpack.c.b16 %v5084, %v5083
      %5101 = vmatprep.subr.bf16.mxu0 0
      %5102 = vmatpush1.bf16.msra.mxu0 %v5092
      %5103 = vmatprep.subr.bf16.mxu0 0
      %5104 = vmatpush1.bf16.msra.mxu0 %v5091
      %5105 = vmatprep.subr.bf16.mxu0 0
      %5106 = vmatpush1.bf16.msra.mxu0 %v5090
      %5107 = vmatprep.subr.bf16.mxu0 0
      %5108 = vmatpush1.bf16.msra.mxu0 %v5089
      %5109 = vmatprep.subr.bf16.mxu0 0
      %5110 = vmatpush1.bf16.msra.mxu0 %v5088
      %5111 = vmatprep.subr.bf16.mxu0 0
      %5112 = vmatpush1.bf16.msra.mxu0 %v5087
      %5113 = vmatprep.subr.bf16.mxu0 0
      %5114 = vmatpush1.bf16.msra.mxu0 %v5086
      %5115 = vmatprep.subr.bf16.mxu0 0
      %5116 = vmatpush1.bf16.msra.mxu0 %v5085
      %5117 = vmatprep.subr.bf16.mxu0 0
      %5118 = vmatpush2.bf16.msra.mxu0 0
      %5119 = vmatprep.subr.bf16.mxu0 0
      %5120 = vmatpush2.bf16.msra.mxu0 0
      %5121 = vmatprep.subr.bf16.mxu0 0
      %5122 = vmatpush2.bf16.msra.mxu0 0
      %5123 = vmatprep.subr.bf16.mxu0 0
      %5124 = vmatpush2.bf16.msra.mxu0 0
      %5125 = vmatprep.subr.bf16.mxu0 0
      %5126 = vmatpush2.bf16.msra.mxu0 0
      %5127 = vmatprep.subr.bf16.mxu0 0
      %5128 = vmatpush2.bf16.msra.mxu0 0
      %5129 = vmatprep.subr.bf16.mxu0 0
      %5130 = vmatpush2.bf16.msra.mxu0 0
      %5131 = vmatprep.subr.bf16.mxu0 0
      %5132 = vmatpush2.bf16.msra.mxu0 0
      %5133 = vmatprep.mubr.bf16.mxu0 0
      %5134 = vmatmul.mubr.bf16.gmra.mxu0 %v5032
      %v5135 = vpop.f32.mrf.mxu0
      %v5136 = vadd.f32 0.0, %v5135
      %v5137 = vpop.f32.mrf.mxu0
      %v5138 = vpop.f32.mrf.mxu0
      %v5139 = vadd.f32 0.0, %v5138
      %v5140 = vpop.f32.mrf.mxu0
      %5141 = vmatprep.mubr.bf16.mxu0 0
      %5142 = vmatmul.mubr.bf16.gmra.mxu0 %v5033
      %v5143 = vpop.f32.mrf.mxu0
      %v5144 = vadd.f32 0.0, %v5143
      %v5145 = vpop.f32.mrf.mxu0
      %v5146 = vpop.f32.mrf.mxu0
      %v5147 = vadd.f32 0.0, %v5146
      %v5148 = vpop.f32.mrf.mxu0
      %5149 = vmatprep.mubr.bf16.mxu0 0
      %5150 = vmatmul.mubr.bf16.gmra.mxu0 %v5034
      %v5151 = vpop.f32.mrf.mxu0
      %v5152 = vadd.f32 0.0, %v5151
      %v5153 = vpop.f32.mrf.mxu0
      %v5154 = vpop.f32.mrf.mxu0
      %v5155 = vadd.f32 0.0, %v5154
      %v5156 = vpop.f32.mrf.mxu0
      %5157 = vmatprep.mubr.bf16.mxu0 0
      %5158 = vmatmul.mubr.bf16.gmra.mxu0 %v5035
      %v5159 = vpop.f32.mrf.mxu0
      %v5160 = vadd.f32 0.0, %v5159
      %v5161 = vpop.f32.mrf.mxu0
      %v5162 = vpop.f32.mrf.mxu0
      %v5163 = vadd.f32 0.0, %v5162
      %v5164 = vpop.f32.mrf.mxu0
      %5165 = vdwg.mxu0
      %v5166 = vadd.f32 %v4976, %v5136
      %v5167 = vadd.f32 %v4977, %v5139
      %v5168 = vadd.f32 %v4978, %v5144
      %v5169 = vadd.f32 %v4979, %v5147
      %v5170 = vadd.f32 %v4980, %v5152
      %v5171 = vadd.f32 %v4981, %v5155
      %v5172 = vadd.f32 %v4982, %v5160
      %v5173 = vadd.f32 %v4983, %v5163
      %v5174 = vld [vmem:[%s4793 + $0x2] sm:$0xf]
      %v5175 = vld [vmem:[%s4793 + $0xa] sm:$0xf]
      %v5176 = vld [vmem:[%s4793 + $0x12] sm:$0xf]
      %v5177 = vld [vmem:[%s4793 + $0x1a] sm:$0xf]
      %v5178 = vld [vmem:[%s4793 + $0x32] sm:$0xf]
      %v5179 = vld [vmem:[%s4793 + $0x3a] sm:$0xf]
      %v5180 = vld [vmem:[%s4793 + $0x42] sm:$0xf]
      %v5181 = vld [vmem:[%s4793 + $0x4a] sm:$0xf]
      %v5182 = vld [vmem:[%s4793 + $0x62] sm:$0xf]
      %v5183 = vld [vmem:[%s4793 + $0x6a] sm:$0xf]
      %v5184 = vld [vmem:[%s4793 + $0x72] sm:$0xf]
      %v5185 = vld [vmem:[%s4793 + $0x7a] sm:$0xf]
      %v5186 = vld [vmem:[%s4793 + $0x92] sm:$0xf]
      %v5187 = vld [vmem:[%s4793 + $0x9a] sm:$0xf]
      %v5188 = vld [vmem:[%s4793 + $0xa2] sm:$0xf]
      %v5189 = vld [vmem:[%s4793 + $0xaa] sm:$0xf]
      %v5206 = vcombine.low %v5174, %v5175
      %v5207 = vcombine.low %v5176, %v5177
      %v5208 = vcombine.low %v5178, %v5179
      %v5209 = vcombine.low %v5180, %v5181
      %v5210 = vcombine.low %v5182, %v5183
      %v5211 = vcombine.low %v5184, %v5185
      %v5212 = vcombine.low %v5186, %v5187
      %v5213 = vcombine.low %v5188, %v5189
      %v5222 = vpack.c.bf16 %v5207, %v5206
      %v5223 = vpack.c.bf16 %v5209, %v5208
      %v5224 = vpack.c.bf16 %v5211, %v5210
      %v5225 = vpack.c.bf16 %v5213, %v5212
      %s5226 = scalar_lea.vmem %s1, 1664
      %v5227 = vld [vmem:[%s5226] sm:$0xf]
      %v5228 = vld [vmem:[%s5226 + $0x4] sm:$0xf]
      %v5229 = vld [vmem:[%s5226 + $0x8] sm:$0xf]
      %v5230 = vld [vmem:[%s5226 + $0xc] sm:$0xf]
      %v5231 = vld [vmem:[%s5226 + $0x10] sm:$0xf]
      %v5232 = vld [vmem:[%s5226 + $0x14] sm:$0xf]
      %v5233 = vld [vmem:[%s5226 + $0x18] sm:$0xf]
      %v5234 = vld [vmem:[%s5226 + $0x1c] sm:$0xf]
      %v5235 = vld [vmem:[%s5226 + $0x20] sm:$0xf]
      %v5236 = vld [vmem:[%s5226 + $0x24] sm:$0xf]
      %v5237 = vld [vmem:[%s5226 + $0x28] sm:$0xf]
      %v5238 = vld [vmem:[%s5226 + $0x2c] sm:$0xf]
      %v5239 = vld [vmem:[%s5226 + $0x30] sm:$0xf]
      %v5240 = vld [vmem:[%s5226 + $0x34] sm:$0xf]
      %v5241 = vld [vmem:[%s5226 + $0x38] sm:$0xf]
      %v5242 = vld [vmem:[%s5226 + $0x3c] sm:$0xf]
      %v5259 = vunpack.c.l.b16 %v5227
      %v5260 = vunpack.c.l.b16 %v5228
      %v5261 = vunpack.c.l.b16 %v5229
      %v5262 = vunpack.c.l.b16 %v5230
      %v5263 = vunpack.c.l.b16 %v5231
      %v5264 = vunpack.c.l.b16 %v5232
      %v5265 = vunpack.c.l.b16 %v5233
      %v5266 = vunpack.c.l.b16 %v5234
      %v5267 = vunpack.c.l.b16 %v5235
      %v5268 = vunpack.c.l.b16 %v5236
      %v5269 = vunpack.c.l.b16 %v5237
      %v5270 = vunpack.c.l.b16 %v5238
      %v5271 = vunpack.c.l.b16 %v5239
      %v5272 = vunpack.c.l.b16 %v5240
      %v5273 = vunpack.c.l.b16 %v5241
      %v5274 = vunpack.c.l.b16 %v5242
      %v5275 = vpack.c.b16 %v5260, %v5259
      %v5276 = vpack.c.b16 %v5262, %v5261
      %v5277 = vpack.c.b16 %v5264, %v5263
      %v5278 = vpack.c.b16 %v5266, %v5265
      %v5279 = vpack.c.b16 %v5268, %v5267
      %v5280 = vpack.c.b16 %v5270, %v5269
      %v5281 = vpack.c.b16 %v5272, %v5271
      %v5282 = vpack.c.b16 %v5274, %v5273
      %5291 = vmatprep.subr.bf16.mxu0 0
      %5292 = vmatpush1.bf16.msra.mxu0 %v5282
      %5293 = vmatprep.subr.bf16.mxu0 0
      %5294 = vmatpush1.bf16.msra.mxu0 %v5281
      %5295 = vmatprep.subr.bf16.mxu0 0
      %5296 = vmatpush1.bf16.msra.mxu0 %v5280
      %5297 = vmatprep.subr.bf16.mxu0 0
      %5298 = vmatpush1.bf16.msra.mxu0 %v5279
      %5299 = vmatprep.subr.bf16.mxu0 0
      %5300 = vmatpush1.bf16.msra.mxu0 %v5278
      %5301 = vmatprep.subr.bf16.mxu0 0
      %5302 = vmatpush1.bf16.msra.mxu0 %v5277
      %5303 = vmatprep.subr.bf16.mxu0 0
      %5304 = vmatpush1.bf16.msra.mxu0 %v5276
      %5305 = vmatprep.subr.bf16.mxu0 0
      %5306 = vmatpush1.bf16.msra.mxu0 %v5275
      %5307 = vmatprep.subr.bf16.mxu0 0
      %5308 = vmatpush2.bf16.msra.mxu0 0
      %5309 = vmatprep.subr.bf16.mxu0 0
      %5310 = vmatpush2.bf16.msra.mxu0 0
      %5311 = vmatprep.subr.bf16.mxu0 0
      %5312 = vmatpush2.bf16.msra.mxu0 0
      %5313 = vmatprep.subr.bf16.mxu0 0
      %5314 = vmatpush2.bf16.msra.mxu0 0
      %5315 = vmatprep.subr.bf16.mxu0 0
      %5316 = vmatpush2.bf16.msra.mxu0 0
      %5317 = vmatprep.subr.bf16.mxu0 0
      %5318 = vmatpush2.bf16.msra.mxu0 0
      %5319 = vmatprep.subr.bf16.mxu0 0
      %5320 = vmatpush2.bf16.msra.mxu0 0
      %5321 = vmatprep.subr.bf16.mxu0 0
      %5322 = vmatpush2.bf16.msra.mxu0 0
      %5323 = vmatprep.mubr.bf16.mxu0 0
      %5324 = vmatmul.mubr.bf16.gmra.mxu0 %v5222
      %v5325 = vpop.f32.mrf.mxu0
      %v5326 = vadd.f32 0.0, %v5325
      %v5327 = vpop.f32.mrf.mxu0
      %v5328 = vpop.f32.mrf.mxu0
      %v5329 = vadd.f32 0.0, %v5328
      %v5330 = vpop.f32.mrf.mxu0
      %5331 = vmatprep.mubr.bf16.mxu0 0
      %5332 = vmatmul.mubr.bf16.gmra.mxu0 %v5223
      %v5333 = vpop.f32.mrf.mxu0
      %v5334 = vadd.f32 0.0, %v5333
      %v5335 = vpop.f32.mrf.mxu0
      %v5336 = vpop.f32.mrf.mxu0
      %v5337 = vadd.f32 0.0, %v5336
      %v5338 = vpop.f32.mrf.mxu0
      %5339 = vmatprep.mubr.bf16.mxu0 0
      %5340 = vmatmul.mubr.bf16.gmra.mxu0 %v5224
      %v5341 = vpop.f32.mrf.mxu0
      %v5342 = vadd.f32 0.0, %v5341
      %v5343 = vpop.f32.mrf.mxu0
      %v5344 = vpop.f32.mrf.mxu0
      %v5345 = vadd.f32 0.0, %v5344
      %v5346 = vpop.f32.mrf.mxu0
      %5347 = vmatprep.mubr.bf16.mxu0 0
      %5348 = vmatmul.mubr.bf16.gmra.mxu0 %v5225
      %v5349 = vpop.f32.mrf.mxu0
      %v5350 = vadd.f32 0.0, %v5349
      %v5351 = vpop.f32.mrf.mxu0
      %v5352 = vpop.f32.mrf.mxu0
      %v5353 = vadd.f32 0.0, %v5352
      %v5354 = vpop.f32.mrf.mxu0
      %5355 = vdwg.mxu0
      %v5356 = vadd.f32 %v5166, %v5326
      %v5357 = vadd.f32 %v5167, %v5329
      %v5358 = vadd.f32 %v5168, %v5334
      %v5359 = vadd.f32 %v5169, %v5337
      %v5360 = vadd.f32 %v5170, %v5342
      %v5361 = vadd.f32 %v5171, %v5345
      %v5362 = vadd.f32 %v5172, %v5350
      %v5363 = vadd.f32 %v5173, %v5353
      %v5364 = vld [vmem:[%s2] sm:$0x1]
      %v5366 = vlaneseq
      %v5367 = vshrl.u32 %v5366, 7
      %v5368 = vsub.s32 0, %v5367
      %v5369 = vrot.slane %v5364, %v5368
      %v5371 = vadd.f32 %v5356, %v5369
      %v5372 = vadd.f32 %v5357, %v5369
      %v5373 = vadd.f32 %v5358, %v5369
      %v5374 = vadd.f32 %v5359, %v5369
      %v5375 = vadd.f32 %v5360, %v5369
      %v5376 = vadd.f32 %v5361, %v5369
      %v5377 = vadd.f32 %v5362, %v5369
      %v5378 = vadd.f32 %v5363, %v5369
      %5379 = vst [vmem:[%s235] sm:$0xff] %v5371
      %5380 = vst [vmem:[%s235 + $0x8] sm:$0xff] %v5372
      %5381 = vst [vmem:[%s235 + $0x10] sm:$0xff] %v5373
      %5382 = vst [vmem:[%s235 + $0x18] sm:$0xff] %v5374
      %5383 = vst [vmem:[%s235 + $0x20] sm:$0xff] %v5375
      %5384 = vst [vmem:[%s235 + $0x28] sm:$0xff] %v5376
      %5385 = vst [vmem:[%s235 + $0x30] sm:$0xff] %v5377
      %5386 = vst [vmem:[%s235 + $0x38] sm:$0xff] %v5378
      %v5387 = vadd.f32 %v5371, %v5372
      %v5388 = vadd.f32 %v5387, %v5373
      %v5389 = vadd.f32 %v5388, %v5374
      %v5390 = vadd.f32 %v5389, %v5375
      %v5391 = vadd.f32 %v5390, %v5376
      %v5392 = vadd.f32 %v5391, %v5377
      %v5393 = vadd.f32 %v5392, %v5378
      %v5394 = vrot.slane %v5393, 4
      %v5395 = vadd.f32 %v5393, %v5394
      %v5396 = vrot.slane %v5395, 2
      %v5397 = vadd.f32 %v5395, %v5396
      %v5398 = vrot.slane %v5397, 1
      %v5399 = vadd.f32 %v5397, %v5398
      %5400 = vst [vmem:[%s238] sm:$0x1] %v5399
      %v5401 = vmul.f32 %v5371, %v5371
      %v5402 = vmul.f32 %v5372, %v5372
      %v5403 = vmul.f32 %v5373, %v5373
      %v5404 = vmul.f32 %v5374, %v5374
      %v5405 = vmul.f32 %v5375, %v5375
      %v5406 = vmul.f32 %v5376, %v5376
      %v5407 = vmul.f32 %v5377, %v5377
      %v5408 = vmul.f32 %v5378, %v5378
      %v5409 = vadd.f32 %v5401, %v5402
      %v5410 = vadd.f32 %v5409, %v5403
      %v5411 = vadd.f32 %v5410, %v5404
      %v5412 = vadd.f32 %v5411, %v5405
      %v5413 = vadd.f32 %v5412, %v5406
      %v5414 = vadd.f32 %v5413, %v5407
      %v5415 = vadd.f32 %v5414, %v5408
      %v5416 = vrot.slane %v5415, 4
      %v5417 = vadd.f32 %v5415, %v5416
      %v5418 = vrot.slane %v5417, 2
      %v5419 = vadd.f32 %v5417, %v5418
      %v5420 = vrot.slane %v5419, 1
      %v5421 = vadd.f32 %v5419, %v5420
      %5422 = vst [vmem:[%s241] sm:$0x1] %v5421
      %p5423 = scmp.lt.s32.totalorder %s17, 1
      %s5424 = scalar_select %p5423, %s17, 1
      %s5425 = smul.addr %s5424, 8
      %s5426 = smul.addr %s5425, 8
      %s5427 = scalar_lea.vmem %s3, %s5426
      %p5428 = scmp.lt.s32.totalorder %s17, 1
      %s5429 = scalar_select %p5428, %s17, 1
      %s5430 = scalar_lea.vmem %s4, %s5429
      %p5431 = scmp.lt.s32.totalorder %s17, 1
      %s5432 = scalar_select %p5431, %s17, 1
      %s5433 = scalar_lea.vmem %s5, %s5432
      // Predicated region
      $region33: #{down_block_forward.8} parent=31 // pred_check
        %p5434 = pneg %p103
      $region34: #{down_block_forward.8} parent=31 // pred_check_branch
        %5436 = sbr.rel (%p5434) target = $region36
      $region35: #{down_block_forward.8} parent=31 // pred_region
        _
      $region36: #{down_block_forward.8} parent=31 // pred_fallthru
        _
      // Predicated region
      $region37: #{down_block_forward.8} parent=31 // pred_check
        %p5437 = pneg %p129
      $region38: #{down_block_forward.8} parent=31 // pred_check_branch
        %5439 = sbr.rel (%p5437) target = $region40
      $region39: #{down_block_forward.8} parent=31 // pred_region
        _
      $region40: #{down_block_forward.8} parent=31 // pred_fallthru
        _
      // Predicated region
      $region41: #{down_block_forward.8} parent=31 // pred_check
        %p5440 = pneg %p155
      $region42: #{down_block_forward.8} parent=31 // pred_check_branch
        %5442 = sbr.rel (%p5440) target = $region44
      $region43: #{down_block_forward.8} parent=31 // pred_region
        _
      $region44: #{down_block_forward.8} parent=31 // pred_fallthru
        _
    $region32: #{down_block_forward.8} parent=5 // pred_fallthru
      _
    %p5443 = scmp.le.s32.totalorder 2, %s12
    // Predicated region
    $region45: #{down_block_forward.8} parent=5 // pred_check
      %p5444 = pneg %p5443
    $region46: #{down_block_forward.8} parent=5 // pred_check_branch
      %5446 = sbr.rel (%p5444) target = $region48
    $region47: #{down_block_forward.8} parent=5 // pred_region
      %s5447 = ssub.s32 %s12, 2
      // Predicated region
      $region49: #{down_block_forward.8} parent=47 // pred_check
        %p5448 = pneg %p109
      $region50: #{down_block_forward.8} parent=47 // pred_check_branch
        %5450 = sbr.rel (%p5448) target = $region52
      $region51: #{down_block_forward.8} parent=47 // pred_region
        %p5451 = scmp.lt.s32.totalorder %s18, 1
        %s5452 = scalar_select %p5451, %s18, 1
        %s5453 = smul.addr %s5452, 8
        %s5454 = smul.addr %s5453, 8
        %s5455 = scalar_lea.vmem %s3, %s5454
      $region52: #{down_block_forward.8} parent=47 // pred_fallthru
        _
      // Predicated region
      $region53: #{down_block_forward.8} parent=47 // pred_check
        %p5456 = pneg %p135
      $region54: #{down_block_forward.8} parent=47 // pred_check_branch
        %5458 = sbr.rel (%p5456) target = $region56
      $region55: #{down_block_forward.8} parent=47 // pred_region
        %p5459 = scmp.lt.s32.totalorder %s18, 1
        %s5460 = scalar_select %p5459, %s18, 1
        %s5461 = scalar_lea.vmem %s4, %s5460
      $region56: #{down_block_forward.8} parent=47 // pred_fallthru
        _
      // Predicated region
      $region57: #{down_block_forward.8} parent=47 // pred_check
        %p5462 = pneg %p161
      $region58: #{down_block_forward.8} parent=47 // pred_check_branch
        %5464 = sbr.rel (%p5462) target = $region60
      $region59: #{down_block_forward.8} parent=47 // pred_region
        %p5465 = scmp.lt.s32.totalorder %s18, 1
        %s5466 = scalar_select %p5465, %s18, 1
        %s5467 = scalar_lea.vmem %s5, %s5466
      $region60: #{down_block_forward.8} parent=47 // pred_fallthru
        _
    $region48: #{down_block_forward.8} parent=5 // pred_fallthru
      _
  $region6: #{down_block_forward.8} parent=0 // loop_footer
    %s16 = sadd.s32 1, %s12
  $region7: #{down_block_forward.8} parent=0 // loop_footer_branch
    %11 = sbr.rel target = $region3
  $region8: #{down_block_forward.8} parent=0 // loop_exit
    _

</llo_original>
